<compile_context>
chip_gen: v5e
topology: v5e:2x2
jax: 0.10.0
libtpu: 0.0.40
codegen_flags: <defaults>
</compile_context>

<pallas_src>
import functools

import numpy as np
import jax
import jax.numpy as jnp
from jax.experimental import pallas as pl
from jax.experimental.pallas import tpu as pltpu

BN_EPS = 1e-5
ACT_DTYPE = jnp.bfloat16          # inter-layer activation storage dtype
MXU_DTYPE = jnp.bfloat16          # MXU operand dtype (f32 accumulation)
VMEM_LIMIT_BYTES = 48 * 1024 * 1024   # fits v5e/v6e (128 MiB) and v7x (64 MiB)


def _round_up(x, m):
    return ((x + m - 1) // m) * m


# -----------------------------------------------------------------------------
# Generic fused conv kernel: pending-BN(+ReLU) on load, K-stacked single matmul,
# bias + residual + halo mask + BN batch statistics in the epilogue.
# -----------------------------------------------------------------------------
def _conv_kernel(*refs, offs, gsizes, normalize_in, add_residual):
    """Single grid step, whole arrays resident in VMEM.

    Inputs (in order):
      x_g                 (C_g, Ltot)  per input group, ACT_DTYPE, halos/tail are zero
      w                   (Cout, ntaps*sum(C_g)) MXU_DTYPE, tap-major / channel-minor
      b                   (Cout, 1) f32
      [scale_g, shift_g]  (C_g, 1) f32 pending producer BN affine (if normalize_in)
      [res, r_scale, r_shift]          residual + its pending affine (if add_residual)
      mask                (1, Ltot) f32 interior mask of the output layout
    Outputs:
      o                   (Cout, Ltot) ACT_DTYPE, halo/junk/tail lanes zeroed
      sum, ssq            (Cout, 1) f32 per-channel batch statistics of o
    Scratch:
      stk                 (ntaps*sum(C_g), Ltot) f32 K-stacked tap windows
    """
    n_groups = len(gsizes)
    cin_tot = sum(gsizes)

    idx = 0
    x_refs = refs[idx:idx + n_groups]; idx += n_groups
    w_ref = refs[idx]; idx += 1
    b_ref = refs[idx]; idx += 1
    aff_refs = ()
    if normalize_in:
        aff_refs = refs[idx:idx + 2 * n_groups]; idx += 2 * n_groups
    if add_residual:
        res_ref, rsc_ref, rsh_ref = refs[idx:idx + 3]; idx += 3
    mask_ref = refs[idx]; idx += 1
    o_ref, sum_ref, ssq_ref = refs[idx:idx + 3]; idx += 3
    stk_ref = refs[idx]

    mask = mask_ref[...]                                  # (1, Ltot)
    ltot = mask.shape[1]

    # Apply the producer's pending BN affine + ReLU once per input group, then
    # build the K-stacked tap windows with lane rolls (XLU) into VMEM scratch.
    goff = 0
    for g in range(n_groups):
        xg = x_refs[g][...].astype(jnp.float32)
        if normalize_in:
            xg = jnp.maximum(xg * aff_refs[2 * g][...] + aff_refs[2 * g + 1][...], 0.0)
            xg = xg * mask                                # keep halo / tail lanes zero
        for t, off in enumerate(offs):
            shift = (-off) % ltot                         # win[l] = xg[l + off]
            win = xg if shift == 0 else pltpu.roll(xg, shift, axis=1)
            row = t * cin_tot + goff
            stk_ref[row:row + gsizes[g], :] = win
        goff += gsizes[g]

    # One MXU matmul over K = ntaps * Cin (bf16 operands, f32 accumulation).
    xs = stk_ref[...].astype(MXU_DTYPE)
    y = jnp.dot(w_ref[...], xs, preferred_element_type=jnp.float32)   # (Cout, Ltot)
    y = y + b_ref[...]

    # Fused residual add (R blocks): add relu(res * scale + shift).
    if add_residual:
        r = res_ref[...].astype(jnp.float32)
        y = y + jnp.maximum(r * rsc_ref[...] + rsh_ref[...], 0.0)

    y = y * mask                                          # zero halo / junk / tail lanes

    # Fused BatchNorm batch statistics (halos are zero => sums over real pixels).
    sum_ref[...] = jnp.sum(y, axis=1, keepdims=True)
    ssq_ref[...] = jnp.sum(y * y, axis=1, keepdims=True)
    o_ref[...] = y.astype(o_ref.dtype)


def _conv_call(x_groups, aff_groups, w, b, mask, offs, residual, normalize_in):
    """Launch one fused conv. Returns (raw output, per-channel sum, sum-of-squares)."""
    gsizes = tuple(int(x.shape[0]) for x in x_groups)
    cout = int(w.shape[0])
    ltot = int(mask.shape[1])
    inputs = list(x_groups) + [w, b]
    if normalize_in:
        for sc, sh in aff_groups:
            inputs += [sc, sh]
    add_res = residual is not None
    if add_res:
        rx, (rsc, rsh) = residual
        inputs += [rx, rsc, rsh]
    inputs.append(mask)
    kern = functools.partial(_conv_kernel, offs=tuple(int(o) for o in offs),
                             gsizes=gsizes, normalize_in=normalize_in,
                             add_residual=add_res)
    out_shape = (jax.ShapeDtypeStruct((cout, ltot), ACT_DTYPE),
                 jax.ShapeDtypeStruct((cout, 1), jnp.float32),
                 jax.ShapeDtypeStruct((cout, 1), jnp.float32))
    return pl.pallas_call(
        kern,
        out_shape=out_shape,
        scratch_shapes=[pltpu.VMEM((len(offs) * sum(gsizes), ltot), jnp.float32)],
        compiler_params=pltpu.CompilerParams(vmem_limit_bytes=VMEM_LIMIT_BYTES),
    )(*inputs)


# -----------------------------------------------------------------------------
# Layout helpers (per resolution level) and deferred-BatchNorm affine math.
# -----------------------------------------------------------------------------
def _make_level(H, W, N):
    Hp, Wp = H + 2, W + 2
    Lp = Hp * Wp
    Lpad = _round_up(Lp, 128)
    m = np.zeros((Hp, Wp), np.float32)
    m[1:H + 1, 1:W + 1] = 1.0
    m = np.concatenate([m.reshape(-1), np.zeros(Lpad - Lp, np.float32)])
    mask = jnp.asarray(np.tile(m, N)[None, :])            # (1, N*Lpad)
    return dict(H=H, W=W, Hp=Hp, Wp=Wp, Lp=Lp, Lpad=Lpad, mask=mask,
                count=float(N * H * W))


def _bn_affine(s, ss, bn, count):
    """Training-mode BatchNorm batch statistics -> per-channel (scale, shift)."""
    mean = s / count
    var = jnp.maximum(ss / count - mean * mean, 0.0)      # biased var; clamp cancellation
    scale = bn["g"] * jax.lax.rsqrt(var + BN_EPS)
    shift = bn["b"] - mean * scale
    return scale, shift


def _identity_affine(c):
    return jnp.ones((c, 1), jnp.float32), jnp.zeros((c, 1), jnp.float32)


def _pack_nchw(x, lev):
    N, C, H, W = x.shape
    xp = jnp.pad(x, ((0, 0), (0, 0), (1, 1), (1, 1))).reshape(N, C, lev["Lp"])
    xp = jnp.pad(xp, ((0, 0), (0, 0), (0, lev["Lpad"] - lev["Lp"])))
    return xp.transpose(1, 0, 2).reshape(C, N * lev["Lpad"]).astype(ACT_DTYPE)


def _unpack_nchw(y, lev, N):
    C = y.shape[0]
    H, W = lev["H"], lev["W"]
    y = y.reshape(C, N, lev["Lpad"])[:, :, :lev["Lp"]].reshape(C, N, lev["Hp"], lev["Wp"])
    return y[:, :, 1:H + 1, 1:W + 1].transpose(1, 0, 2, 3).astype(jnp.float32)


# ------------------------------- conv wrappers --------------------------------
def _conv3x3_s1(x_groups, aff_groups, w, b, lev, residual=None, normalize_in=True):
    """Conv2d(k=3, pad=1, stride=1), padded layout in -> padded layout out."""
    Wp = lev["Wp"]
    offs = tuple((dy - 1) * Wp + (dx - 1) for dy in range(3) for dx in range(3))
    return _conv_call(x_groups, aff_groups, w, b, lev["mask"], offs,
                      residual, normalize_in)


def _conv3x3_s2(x, aff, w, b, lev_in, lev_out, N):
    """Conv2d(k=3, pad=1, stride=2): producer's pending affine + halo mask applied
    in XLA, space-to-depth of the 1-padded image, then a 4-tap fused conv whose
    output is already in the lower level's padded layout."""
    C = x.shape[0]
    Hp, Wp = lev_in["Hp"], lev_in["Wp"]
    Hs, Ws = lev_out["Hp"], lev_out["Wp"]                 # == H/2+2, W/2+2
    xn = jnp.maximum(x.astype(jnp.float32) * aff[0] + aff[1], 0.0) * lev_in["mask"]
    xn = xn.reshape(C, N, lev_in["Lpad"])[:, :, :lev_in["Lp"]].reshape(C, N, Hp, Wp)
    xn = jnp.pad(xn, ((0, 0), (0, 0), (0, 2), (0, 2)))    # (C, N, H+4, W+4)
    xn = xn.reshape(C, N, Hs, 2, Ws, 2).transpose(3, 5, 0, 1, 2, 4)   # (py,px,C,N,Hs,Ws)
    xn = xn.reshape(4 * C, N, Hs * Ws)
    xn = jnp.pad(xn, ((0, 0), (0, 0), (0, lev_out["Lpad"] - lev_out["Lp"])))
    xn = xn.reshape(4 * C, N * lev_out["Lpad"]).astype(ACT_DTYPE)
    offs = tuple((by - 1) * Ws + (bx - 1) for by in range(2) for bx in range(2))
    return _conv_call([xn], None, w, b, lev_out["mask"], offs, None, False)


def _convT2x2_s2(x, aff, w4, b4, lev_in, lev_out, N):
    """ConvTranspose2d(k=2, s=2): 1-tap conv to 4*Cout sub-position channels at the
    lower level (BN statistics computed there, on the UNSHUFFLED layout), then a
    small XLA pixel-shuffle + re-pad into the upper level's padded layout."""
    cout4 = int(w4.shape[0])
    cout = cout4 // 4
    y4, s4, ss4 = _conv_call([x], [aff], w4, b4, lev_in["mask"], (0,), None, True)
    h, w_ = lev_in["H"], lev_in["W"]
    y = y4.reshape(2, 2, cout, N, lev_in["Lpad"])[..., :lev_in["Lp"]]
    y = y.reshape(2, 2, cout, N, lev_in["Hp"], lev_in["Wp"])[:, :, :, :, 1:h + 1, 1:w_ + 1]
    y = y.transpose(2, 3, 4, 0, 5, 1).reshape(cout, N, 2 * h, 2 * w_)   # (o,n,H,W)
    y = jnp.pad(y, ((0, 0), (0, 0), (1, 1), (1, 1))).reshape(cout, N, lev_out["Lp"])
    y = jnp.pad(y, ((0, 0), (0, 0), (0, lev_out["Lpad"] - lev_out["Lp"])))
    y = y.reshape(cout, N * lev_out["Lpad"])
    s = s4.reshape(4, cout, 1).sum(axis=0)
    ss = ss4.reshape(4, cout, 1).sum(axis=0)
    return y, s, ss


# ------------------------ parameter init & kernel layouts ----------------------
def _init_conv_torch(key, cout, cin, k):
    wkey, bkey = jax.random.split(key)
    bound = 1.0 / np.sqrt(cin * k * k)
    w = np.asarray(jax.random.uniform(wkey, (cout, cin, k, k), jnp.float32, -bound, bound))
    b = np.asarray(jax.random.uniform(bkey, (cout,), jnp.float32, -bound, bound))
    return w, b


def _init_convT_torch(key, cin, cout, k):
    wkey, bkey = jax.random.split(key)
    bound = 1.0 / np.sqrt(cout * k * k)
    w = np.asarray(jax.random.uniform(wkey, (cin, cout, k, k), jnp.float32, -bound, bound))
    b = np.asarray(jax.random.uniform(bkey, (cout,), jnp.float32, -bound, bound))
    return w, b


def _prep_w_s1(w, b):      # torch (Cout,Cin,3,3) -> (Cout, 9*Cin) tap-major, bf16
    cout, cin = w.shape[:2]
    wf = np.transpose(w, (0, 2, 3, 1)).reshape(cout, 9 * cin)
    return jnp.asarray(wf, MXU_DTYPE), jnp.asarray(b.reshape(cout, 1), jnp.float32)


def _prep_w_s2(w, b):      # torch (Cout,Cin,3,3) -> s2d (Cout, 4 taps * 4*Cin), bf16
    cout, cin = w.shape[:2]
    wk = np.zeros((2, 2, cout, 2, 2, cin), np.float32)     # (by,bx,o,py,px,ci)
    for dy in range(3):
        for dx in range(3):
            wk[dy // 2, dx // 2, :, dy % 2, dx % 2, :] = w[:, :, dy, dx]
    wf = np.transpose(wk, (2, 0, 1, 3, 4, 5)).reshape(cout, 4 * 4 * cin)
    return jnp.asarray(wf, MXU_DTYPE), jnp.asarray(b.reshape(cout, 1), jnp.float32)


def _prep_w_convT(w, b):   # torch (Cin,Cout,2,2) -> (4*Cout, Cin) rows (di,dj,o), bf16
    cin, cout = w.shape[:2]
    wf = np.transpose(w, (2, 3, 1, 0)).reshape(4 * cout, cin)
    b4 = np.tile(b.reshape(1, cout), (4, 1)).reshape(4 * cout, 1)
    return jnp.asarray(wf, MXU_DTYPE), jnp.asarray(b4, jnp.float32)


def _init_bn(c):
    return {"g": jnp.ones((c, 1), jnp.float32), "b": jnp.zeros((c, 1), jnp.float32)}


def init_model(key, img_depth, res_blocks, block_channels):
    keys = iter(jax.random.split(key, 64))
    P = {}
    w, b = _prep_w_s1(*_init_conv_torch(next(keys), block_channels[0], img_depth, 3))
    P["ci"] = {"w": w, "b": b}
    P["D"] = []
    for i in range(len(block_channels) - 1):
        cin, cout = block_channels[i], block_channels[i + 1]
        w1, b1 = _prep_w_s2(*_init_conv_torch(next(keys), cout, cin, 3))
        w2, b2 = _prep_w_s1(*_init_conv_torch(next(keys), cout, cout, 3))
        P["D"].append({"c1_w": w1, "c1_b": b1, "bn1": _init_bn(cout),
                       "c2_w": w2, "c2_b": b2, "bn2": _init_bn(cout)})
    P["R"] = []
    c = block_channels[-1]
    for _ in range(res_blocks):
        w1, b1 = _prep_w_s1(*_init_conv_torch(next(keys), c, c, 3))
        w2, b2 = _prep_w_s1(*_init_conv_torch(next(keys), c, c, 3))
        P["R"].append({"c1_w": w1, "c1_b": b1, "bn1": _init_bn(c),
                       "c2_w": w2, "c2_b": b2, "bn2": _init_bn(c)})
    P["U"] = []
    for i in reversed(range(len(block_channels) - 1)):
        cin, cout = block_channels[i + 1], block_channels[i]
        w1, b14 = _prep_w_convT(*_init_convT_torch(next(keys), cin, cout, 2))
        w2, b2 = _prep_w_s1(*_init_conv_torch(next(keys), cout, cin, 3))
        P["U"].append({"c1_w": w1, "c1_b4": b14, "bn1": _init_bn(cout),
                       "c2_w": w2, "c2_b": b2, "bn2": _init_bn(cout)})
    w, b = _prep_w_s1(*_init_conv_torch(next(keys), img_depth, block_channels[0], 3))
    P["cf"] = {"w": w, "b": b}
    return P


# ----------------------------------- forward -----------------------------------
def model_forward(params, x, t):
    del t                                      # FirstModel ignores the timestep
    N, _, H0, W0 = x.shape
    n_down = len(params["D"])
    assert H0 % (1 << n_down) == 0 and W0 % (1 << n_down) == 0
    levels = [_make_level(H0 >> d, W0 >> d, N) for d in range(n_down + 1)]
    lev0 = levels[0]

    xf = _pack_nchw(x, lev0)

    # ci + ReLU (ReLU deferred: consumers apply an identity affine + relu on load)
    y, _, _ = _conv3x3_s1([xf], None, params["ci"]["w"], params["ci"]["b"],
                          lev0, normalize_in=False)
    cur, cur_aff = y, _identity_affine(int(params["ci"]["w"].shape[0]))
    skips = [(cur, cur_aff)]

    # ---- down path ----------------------------------------------------------
    for i, blk in enumerate(params["D"]):
        lev_in, lev_out = levels[i], levels[i + 1]
        y, s, ss = _conv3x3_s2(cur, cur_aff, blk["c1_w"], blk["c1_b"], lev_in, lev_out, N)
        a1 = _bn_affine(s, ss, blk["bn1"], lev_out["count"])
        y, s, ss = _conv3x3_s1([y], [a1], blk["c2_w"], blk["c2_b"], lev_out)
        cur = y
        cur_aff = _bn_affine(s, ss, blk["bn2"], lev_out["count"])
        skips.append((cur, cur_aff))

    # ---- residual (middle) blocks --------------------------------------------
    lev_b = levels[-1]
    for blk in params["R"]:
        y, s, ss = _conv3x3_s1([cur], [cur_aff], blk["c1_w"], blk["c1_b"], lev_b)
        a1 = _bn_affine(s, ss, blk["bn1"], lev_b["count"])
        y, s, ss = _conv3x3_s1([y], [a1], blk["c2_w"], blk["c2_b"], lev_b,
                               residual=(cur, cur_aff))      # relu(bn2(conv + x)) fused
        cur = y
        cur_aff = _bn_affine(s, ss, blk["bn2"], lev_b["count"])

    # ---- up path --------------------------------------------------------------
    for i, blk in enumerate(params["U"]):
        lev_in, lev_out = levels[n_down - i], levels[n_down - i - 1]
        yu, s, ss = _convT2x2_s2(cur, cur_aff, blk["c1_w"], blk["c1_b4"],
                                 lev_in, lev_out, N)
        a1 = _bn_affine(s, ss, blk["bn1"], lev_out["count"])
        skip_x, skip_aff = skips[-i - 2]
        # channel concat fused: two input groups, each normalized with its own affine
        y, s, ss = _conv3x3_s1([yu, skip_x], [a1, skip_aff],
                               blk["c2_w"], blk["c2_b"], lev_out)
        cur = y
        cur_aff = _bn_affine(s, ss, blk["bn2"], lev_out["count"])

    # ---- final conv (no BN / ReLU after it) ------------------------------------
    y, _, _ = _conv3x3_s1([cur], [cur_aff], params["cf"]["w"], params["cf"]["b"], lev0)
    return _unpack_nchw(y, lev0, N)


# ------------------------------------- main -------------------------------------
if __name__ == "__main__":
    key = jax.random.PRNGKey(0)
    kp, kx, kt = jax.random.split(key, 3)

    img_depth = 4
    block_channels = [8, 16, 32]   # scaled-down from [8, 16, 32, 64, 128]
    res_blocks = 2
    N, H, W = 2, 16, 16

    params = init_model(kp, img_depth, res_blocks, block_channels)
    x = jax.random.normal(kx, (N, img_depth, H, W), dtype=jnp.float32)
    t = jax.random.randint(kt, (N,), 0, 1000)              # ignored by the model

    fwd = jax.jit(model_forward)
    out = jax.block_until_ready(fwd(params, x, t))
    assert out.shape == (N, img_depth, H, W), out.shape
    assert bool(jnp.all(jnp.isfinite(out)))
    print("KERNEL_OK")
</pallas_src>

<mosaic_0001>
module attributes {stable_mosaic.version = 11 : i64} {
  func.func @_conv_kernel(%arg0: memref<4x768xbf16, #tpu.memory_space<vmem>>, %arg1: memref<8x36xbf16, #tpu.memory_space<vmem>>, %arg2: memref<8x1xf32, #tpu.memory_space<vmem>>, %arg3: memref<1x768xf32, #tpu.memory_space<vmem>>, %arg4: memref<8x768xbf16, #tpu.memory_space<vmem>>, %arg5: memref<8x1xf32, #tpu.memory_space<vmem>>, %arg6: memref<8x1xf32, #tpu.memory_space<vmem>>, %arg7: memref<36x768xf32, #tpu.memory_space<vmem>>) attributes {dimension_semantics = [], scalar_prefetch = 0 : i64, scratch_operands = 1 : i64, tpu.core_type = #tpu.core_type<tc>} {
    %c0 = arith.constant 0 : index
    %c0_0 = arith.constant 0 : index
    %0 = vector.load %arg3[%c0, %c0_0] : memref<1x768xf32, #tpu.memory_space<vmem>>, vector<1x768xf32>
    %c0_1 = arith.constant 0 : index
    %c0_2 = arith.constant 0 : index
    %1 = vector.load %arg0[%c0_1, %c0_2] : memref<4x768xbf16, #tpu.memory_space<vmem>>, vector<4x768xbf16>
    %2 = arith.extf %1 : vector<4x768xbf16> to vector<4x768xf32>
    %c19_i32 = arith.constant 19 : i32
    %3 = tpu.dynamic_rotate %2 by %c19_i32 dim 1 : vector<4x768xf32>, i32 -> vector<4x768xf32>
    %c0_3 = arith.constant 0 : index
    %c0_4 = arith.constant 0 : index
    %4 = vector.load %arg7[%c0_3, %c0_4] : memref<36x768xf32, #tpu.memory_space<vmem>>, vector<4x768xf32>
    tpu.vector_store %arg7[%c0_3, %c0_4], %3 {strides = array<i32>} : memref<36x768xf32, #tpu.memory_space<vmem>>, vector<4x768xf32>,
    %c18_i32 = arith.constant 18 : i32
    %5 = tpu.dynamic_rotate %2 by %c18_i32 dim 1 : vector<4x768xf32>, i32 -> vector<4x768xf32>
    %c4 = arith.constant 4 : index
    %c0_5 = arith.constant 0 : index
    %6 = vector.load %arg7[%c4, %c0_5] : memref<36x768xf32, #tpu.memory_space<vmem>>, vector<4x768xf32>
    tpu.vector_store %arg7[%c4, %c0_5], %5 {strides = array<i32>} : memref<36x768xf32, #tpu.memory_space<vmem>>, vector<4x768xf32>,
    %c17_i32 = arith.constant 17 : i32
    %7 = tpu.dynamic_rotate %2 by %c17_i32 dim 1 : vector<4x768xf32>, i32 -> vector<4x768xf32>
    %c8 = arith.constant 8 : index
    %c0_6 = arith.constant 0 : index
    %8 = vector.load %arg7[%c8, %c0_6] : memref<36x768xf32, #tpu.memory_space<vmem>>, vector<4x768xf32>
    tpu.vector_store %arg7[%c8, %c0_6], %7 {strides = array<i32>} : memref<36x768xf32, #tpu.memory_space<vmem>>, vector<4x768xf32>,
    %c1_i32 = arith.constant 1 : i32
    %9 = tpu.dynamic_rotate %2 by %c1_i32 dim 1 : vector<4x768xf32>, i32 -> vector<4x768xf32>
    %c12 = arith.constant 12 : index
    %c0_7 = arith.constant 0 : index
    %10 = vector.load %arg7[%c12, %c0_7] : memref<36x768xf32, #tpu.memory_space<vmem>>, vector<4x768xf32>
    tpu.vector_store %arg7[%c12, %c0_7], %9 {strides = array<i32>} : memref<36x768xf32, #tpu.memory_space<vmem>>, vector<4x768xf32>,
    %c16 = arith.constant 16 : index
    %c0_8 = arith.constant 0 : index
    %11 = vector.load %arg7[%c16, %c0_8] : memref<36x768xf32, #tpu.memory_space<vmem>>, vector<4x768xf32>
    tpu.vector_store %arg7[%c16, %c0_8], %2 {strides = array<i32>} : memref<36x768xf32, #tpu.memory_space<vmem>>, vector<4x768xf32>,
    %c767_i32 = arith.constant 767 : i32
    %12 = tpu.dynamic_rotate %2 by %c767_i32 dim 1 : vector<4x768xf32>, i32 -> vector<4x768xf32>
    %c20 = arith.constant 20 : index
    %c0_9 = arith.constant 0 : index
    %13 = vector.load %arg7[%c20, %c0_9] : memref<36x768xf32, #tpu.memory_space<vmem>>, vector<4x768xf32>
    tpu.vector_store %arg7[%c20, %c0_9], %12 {strides = array<i32>} : memref<36x768xf32, #tpu.memory_space<vmem>>, vector<4x768xf32>,
    %c751_i32 = arith.constant 751 : i32
    %14 = tpu.dynamic_rotate %2 by %c751_i32 dim 1 : vector<4x768xf32>, i32 -> vector<4x768xf32>
    %c24 = arith.constant 24 : index
    %c0_10 = arith.constant 0 : index
    %15 = vector.load %arg7[%c24, %c0_10] : memref<36x768xf32, #tpu.memory_space<vmem>>, vector<4x768xf32>
    tpu.vector_store %arg7[%c24, %c0_10], %14 {strides = array<i32>} : memref<36x768xf32, #tpu.memory_space<vmem>>, vector<4x768xf32>,
    %c750_i32 = arith.constant 750 : i32
    %16 = tpu.dynamic_rotate %2 by %c750_i32 dim 1 : vector<4x768xf32>, i32 -> vector<4x768xf32>
    %c28 = arith.constant 28 : index
    %c0_11 = arith.constant 0 : index
    %17 = vector.load %arg7[%c28, %c0_11] : memref<36x768xf32, #tpu.memory_space<vmem>>, vector<4x768xf32>
    tpu.vector_store %arg7[%c28, %c0_11], %16 {strides = array<i32>} : memref<36x768xf32, #tpu.memory_space<vmem>>, vector<4x768xf32>,
    %c749_i32 = arith.constant 749 : i32
    %18 = tpu.dynamic_rotate %2 by %c749_i32 dim 1 : vector<4x768xf32>, i32 -> vector<4x768xf32>
    %c32 = arith.constant 32 : index
    %c0_12 = arith.constant 0 : index
    %19 = vector.load %arg7[%c32, %c0_12] : memref<36x768xf32, #tpu.memory_space<vmem>>, vector<4x768xf32>
    tpu.vector_store %arg7[%c32, %c0_12], %18 {strides = array<i32>} : memref<36x768xf32, #tpu.memory_space<vmem>>, vector<4x768xf32>,
    %c0_13 = arith.constant 0 : index
    %c0_14 = arith.constant 0 : index
    %20 = vector.load %arg7[%c0_13, %c0_14] : memref<36x768xf32, #tpu.memory_space<vmem>>, vector<36x768xf32>
    %21 = arith.truncf %20 : vector<36x768xf32> to vector<36x768xbf16>
    %c0_15 = arith.constant 0 : index
    %c0_16 = arith.constant 0 : index
    %22 = vector.load %arg1[%c0_15, %c0_16] : memref<8x36xbf16, #tpu.memory_space<vmem>>, vector<8x36xbf16>
    %cst = arith.constant dense<0.000000e+00> : vector<8x768xf32>
    %23 = tpu.matmul %22, %21, %cst {dimension_numbers = #tpu.dot_dimension_numbers<[1], [0], [0], [1], [0, 0, 1, 1], [], []>} : vector<8x36xbf16>, vector<36x768xbf16>, vector<8x768xf32> -> vector<8x768xf32>
    %c0_17 = arith.constant 0 : index
    %c0_18 = arith.constant 0 : index
    %24 = vector.load %arg2[%c0_17, %c0_18] : memref<8x1xf32, #tpu.memory_space<vmem>>, vector<8x1xf32>
    %25 = vector.broadcast %24 : vector<8x1xf32> to vector<8x768xf32>
    %26 = arith.addf %23, %25 : vector<8x768xf32>
    %27 = vector.broadcast %0 : vector<1x768xf32> to vector<8x768xf32>
    %28 = arith.mulf %26, %27 : vector<8x768xf32>
    %cst_19 = arith.constant dense<0.000000e+00> : vector<8xf32>
    %29 = vector.multi_reduction <add>, %28, %cst_19 [1] : vector<8x768xf32> to vector<8xf32>
    %30 = vector.shape_cast %29 : vector<8xf32> to vector<8x1xf32>
    %c0_20 = arith.constant 0 : index
    %c0_21 = arith.constant 0 : index
    %31 = vector.load %arg5[%c0_20, %c0_21] : memref<8x1xf32, #tpu.memory_space<vmem>>, vector<8x1xf32>
    tpu.vector_store %arg5[%c0_20, %c0_21], %30 {strides = array<i32>} : memref<8x1xf32, #tpu.memory_space<vmem>>, vector<8x1xf32>,
    %32 = arith.mulf %28, %28 : vector<8x768xf32>
    %cst_22 = arith.constant dense<0.000000e+00> : vector<8xf32>
    %33 = vector.multi_reduction <add>, %32, %cst_22 [1] : vector<8x768xf32> to vector<8xf32>
    %34 = vector.shape_cast %33 : vector<8xf32> to vector<8x1xf32>
    %c0_23 = arith.constant 0 : index
    %c0_24 = arith.constant 0 : index
    %35 = vector.load %arg6[%c0_23, %c0_24] : memref<8x1xf32, #tpu.memory_space<vmem>>, vector<8x1xf32>
    tpu.vector_store %arg6[%c0_23, %c0_24], %34 {strides = array<i32>} : memref<8x1xf32, #tpu.memory_space<vmem>>, vector<8x1xf32>,
    %36 = arith.truncf %28 : vector<8x768xf32> to vector<8x768xbf16>
    %c0_25 = arith.constant 0 : index
    %c0_26 = arith.constant 0 : index
    %37 = vector.load %arg4[%c0_25, %c0_26] : memref<8x768xbf16, #tpu.memory_space<vmem>>, vector<8x768xbf16>
    tpu.vector_store %arg4[%c0_25, %c0_26], %36 {strides = array<i32>} : memref<8x768xbf16, #tpu.memory_space<vmem>>, vector<8x768xbf16>,
    return
  }
}

module attributes {stable_mosaic.version = 11 : i64} {
  func.func @_conv_kernel(%arg0: memref<32x256xbf16, #tpu.memory_space<vmem>>, %arg1: memref<16x128xbf16, #tpu.memory_space<vmem>>, %arg2: memref<16x1xf32, #tpu.memory_space<vmem>>, %arg3: memref<1x256xf32, #tpu.memory_space<vmem>>, %arg4: memref<16x256xbf16, #tpu.memory_space<vmem>>, %arg5: memref<16x1xf32, #tpu.memory_space<vmem>>, %arg6: memref<16x1xf32, #tpu.memory_space<vmem>>, %arg7: memref<128x256xf32, #tpu.memory_space<vmem>>) attributes {dimension_semantics = [], scalar_prefetch = 0 : i64, scratch_operands = 1 : i64, tpu.core_type = #tpu.core_type<tc>} {
    %c0 = arith.constant 0 : index
    %c0_0 = arith.constant 0 : index
    %0 = vector.load %arg3[%c0, %c0_0] : memref<1x256xf32, #tpu.memory_space<vmem>>, vector<1x256xf32>
    %c0_1 = arith.constant 0 : index
    %c0_2 = arith.constant 0 : index
    %1 = vector.load %arg0[%c0_1, %c0_2] : memref<32x256xbf16, #tpu.memory_space<vmem>>, vector<32x256xbf16>
    %2 = arith.extf %1 : vector<32x256xbf16> to vector<32x256xf32>
    %c11_i32 = arith.constant 11 : i32
    %3 = tpu.dynamic_rotate %2 by %c11_i32 dim 1 : vector<32x256xf32>, i32 -> vector<32x256xf32>
    %c0_3 = arith.constant 0 : index
    %c0_4 = arith.constant 0 : index
    %4 = vector.load %arg7[%c0_3, %c0_4] : memref<128x256xf32, #tpu.memory_space<vmem>>, vector<32x256xf32>
    tpu.vector_store %arg7[%c0_3, %c0_4], %3 {strides = array<i32>} : memref<128x256xf32, #tpu.memory_space<vmem>>, vector<32x256xf32>,
    %c10_i32 = arith.constant 10 : i32
    %5 = tpu.dynamic_rotate %2 by %c10_i32 dim 1 : vector<32x256xf32>, i32 -> vector<32x256xf32>
    %c32 = arith.constant 32 : index
    %c0_5 = arith.constant 0 : index
    %6 = vector.load %arg7[%c32, %c0_5] : memref<128x256xf32, #tpu.memory_space<vmem>>, vector<32x256xf32>
    tpu.vector_store %arg7[%c32, %c0_5], %5 {strides = array<i32>} : memref<128x256xf32, #tpu.memory_space<vmem>>, vector<32x256xf32>,
    %c1_i32 = arith.constant 1 : i32
    %7 = tpu.dynamic_rotate %2 by %c1_i32 dim 1 : vector<32x256xf32>, i32 -> vector<32x256xf32>
    %c64 = arith.constant 64 : index
    %c0_6 = arith.constant 0 : index
    %8 = vector.load %arg7[%c64, %c0_6] : memref<128x256xf32, #tpu.memory_space<vmem>>, vector<32x256xf32>
    tpu.vector_store %arg7[%c64, %c0_6], %7 {strides = array<i32>} : memref<128x256xf32, #tpu.memory_space<vmem>>, vector<32x256xf32>,
    %c96 = arith.constant 96 : index
    %c0_7 = arith.constant 0 : index
    %9 = vector.load %arg7[%c96, %c0_7] : memref<128x256xf32, #tpu.memory_space<vmem>>, vector<32x256xf32>
    tpu.vector_store %arg7[%c96, %c0_7], %2 {strides = array<i32>} : memref<128x256xf32, #tpu.memory_space<vmem>>, vector<32x256xf32>,
    %c0_8 = arith.constant 0 : index
    %c0_9 = arith.constant 0 : index
    %10 = vector.load %arg7[%c0_8, %c0_9] : memref<128x256xf32, #tpu.memory_space<vmem>>, vector<128x256xf32>
    %11 = arith.truncf %10 : vector<128x256xf32> to vector<128x256xbf16>
    %c0_10 = arith.constant 0 : index
    %c0_11 = arith.constant 0 : index
    %12 = vector.load %arg1[%c0_10, %c0_11] : memref<16x128xbf16, #tpu.memory_space<vmem>>, vector<16x128xbf16>
    %cst = arith.constant dense<0.000000e+00> : vector<16x256xf32>
    %13 = tpu.matmul %12, %11, %cst {dimension_numbers = #tpu.dot_dimension_numbers<[1], [0], [0], [1], [0, 0, 1, 1], [], []>} : vector<16x128xbf16>, vector<128x256xbf16>, vector<16x256xf32> -> vector<16x256xf32>
    %c0_12 = arith.constant 0 : index
    %c0_13 = arith.constant 0 : index
    %14 = vector.load %arg2[%c0_12, %c0_13] : memref<16x1xf32, #tpu.memory_space<vmem>>, vector<16x1xf32>
    %15 = vector.broadcast %14 : vector<16x1xf32> to vector<16x256xf32>
    %16 = arith.addf %13, %15 : vector<16x256xf32>
    %17 = vector.broadcast %0 : vector<1x256xf32> to vector<16x256xf32>
    %18 = arith.mulf %16, %17 : vector<16x256xf32>
    %cst_14 = arith.constant dense<0.000000e+00> : vector<16xf32>
    %19 = vector.multi_reduction <add>, %18, %cst_14 [1] : vector<16x256xf32> to vector<16xf32>
    %20 = vector.shape_cast %19 : vector<16xf32> to vector<16x1xf32>
    %c0_15 = arith.constant 0 : index
    %c0_16 = arith.constant 0 : index
    %21 = vector.load %arg5[%c0_15, %c0_16] : memref<16x1xf32, #tpu.memory_space<vmem>>, vector<16x1xf32>
    tpu.vector_store %arg5[%c0_15, %c0_16], %20 {strides = array<i32>} : memref<16x1xf32, #tpu.memory_space<vmem>>, vector<16x1xf32>,
    %22 = arith.mulf %18, %18 : vector<16x256xf32>
    %cst_17 = arith.constant dense<0.000000e+00> : vector<16xf32>
    %23 = vector.multi_reduction <add>, %22, %cst_17 [1] : vector<16x256xf32> to vector<16xf32>
    %24 = vector.shape_cast %23 : vector<16xf32> to vector<16x1xf32>
    %c0_18 = arith.constant 0 : index
    %c0_19 = arith.constant 0 : index
    %25 = vector.load %arg6[%c0_18, %c0_19] : memref<16x1xf32, #tpu.memory_space<vmem>>, vector<16x1xf32>
    tpu.vector_store %arg6[%c0_18, %c0_19], %24 {strides = array<i32>} : memref<16x1xf32, #tpu.memory_space<vmem>>, vector<16x1xf32>,
    %26 = arith.truncf %18 : vector<16x256xf32> to vector<16x256xbf16>
    %c0_20 = arith.constant 0 : index
    %c0_21 = arith.constant 0 : index
    %27 = vector.load %arg4[%c0_20, %c0_21] : memref<16x256xbf16, #tpu.memory_space<vmem>>, vector<16x256xbf16>
    tpu.vector_store %arg4[%c0_20, %c0_21], %26 {strides = array<i32>} : memref<16x256xbf16, #tpu.memory_space<vmem>>, vector<16x256xbf16>,
    return
  }
}

module attributes {stable_mosaic.version = 11 : i64} {
  func.func @_conv_kernel(%arg0: memref<16x256xbf16, #tpu.memory_space<vmem>>, %arg1: memref<16x144xbf16, #tpu.memory_space<vmem>>, %arg2: memref<16x1xf32, #tpu.memory_space<vmem>>, %arg3: memref<16x1xf32, #tpu.memory_space<vmem>>, %arg4: memref<16x1xf32, #tpu.memory_space<vmem>>, %arg5: memref<1x256xf32, #tpu.memory_space<vmem>>, %arg6: memref<16x256xbf16, #tpu.memory_space<vmem>>, %arg7: memref<16x1xf32, #tpu.memory_space<vmem>>, %arg8: memref<16x1xf32, #tpu.memory_space<vmem>>, %arg9: memref<144x256xf32, #tpu.memory_space<vmem>>) attributes {dimension_semantics = [], scalar_prefetch = 0 : i64, scratch_operands = 1 : i64, tpu.core_type = #tpu.core_type<tc>} {
    %c0 = arith.constant 0 : index
    %c0_0 = arith.constant 0 : index
    %0 = vector.load %arg5[%c0, %c0_0] : memref<1x256xf32, #tpu.memory_space<vmem>>, vector<1x256xf32>
    %c0_1 = arith.constant 0 : index
    %c0_2 = arith.constant 0 : index
    %1 = vector.load %arg0[%c0_1, %c0_2] : memref<16x256xbf16, #tpu.memory_space<vmem>>, vector<16x256xbf16>
    %2 = arith.extf %1 : vector<16x256xbf16> to vector<16x256xf32>
    %c0_3 = arith.constant 0 : index
    %c0_4 = arith.constant 0 : index
    %3 = vector.load %arg3[%c0_3, %c0_4] : memref<16x1xf32, #tpu.memory_space<vmem>>, vector<16x1xf32>
    %4 = vector.broadcast %3 : vector<16x1xf32> to vector<16x256xf32>
    %5 = arith.mulf %2, %4 : vector<16x256xf32>
    %c0_5 = arith.constant 0 : index
    %c0_6 = arith.constant 0 : index
    %6 = vector.load %arg4[%c0_5, %c0_6] : memref<16x1xf32, #tpu.memory_space<vmem>>, vector<16x1xf32>
    %7 = vector.broadcast %6 : vector<16x1xf32> to vector<16x256xf32>
    %8 = arith.addf %5, %7 : vector<16x256xf32>
    %cst = arith.constant 0.000000e+00 : f32
    %9 = vector.broadcast %cst : f32 to vector<16x256xf32>
    %10 = arith.maximumf %8, %9 : vector<16x256xf32>
    %11 = vector.broadcast %0 : vector<1x256xf32> to vector<16x256xf32>
    %12 = arith.mulf %10, %11 : vector<16x256xf32>
    %c11_i32 = arith.constant 11 : i32
    %13 = tpu.dynamic_rotate %12 by %c11_i32 dim 1 : vector<16x256xf32>, i32 -> vector<16x256xf32>
    %c0_7 = arith.constant 0 : index
    %c0_8 = arith.constant 0 : index
    %14 = vector.load %arg9[%c0_7, %c0_8] : memref<144x256xf32, #tpu.memory_space<vmem>>, vector<16x256xf32>
    tpu.vector_store %arg9[%c0_7, %c0_8], %13 {strides = array<i32>} : memref<144x256xf32, #tpu.memory_space<vmem>>, vector<16x256xf32>,
    %c10_i32 = arith.constant 10 : i32
    %15 = tpu.dynamic_rotate %12 by %c10_i32 dim 1 : vector<16x256xf32>, i32 -> vector<16x256xf32>
    %c16 = arith.constant 16 : index
    %c0_9 = arith.constant 0 : index
    %16 = vector.load %arg9[%c16, %c0_9] : memref<144x256xf32, #tpu.memory_space<vmem>>, vector<16x256xf32>
    tpu.vector_store %arg9[%c16, %c0_9], %15 {strides = array<i32>} : memref<144x256xf32, #tpu.memory_space<vmem>>, vector<16x256xf32>,
    %c9_i32 = arith.constant 9 : i32
    %17 = tpu.dynamic_rotate %12 by %c9_i32 dim 1 : vector<16x256xf32>, i32 -> vector<16x256xf32>
    %c32 = arith.constant 32 : index
    %c0_10 = arith.constant 0 : index
    %18 = vector.load %arg9[%c32, %c0_10] : memref<144x256xf32, #tpu.memory_space<vmem>>, vector<16x256xf32>
    tpu.vector_store %arg9[%c32, %c0_10], %17 {strides = array<i32>} : memref<144x256xf32, #tpu.memory_space<vmem>>, vector<16x256xf32>,
    %c1_i32 = arith.constant 1 : i32
    %19 = tpu.dynamic_rotate %12 by %c1_i32 dim 1 : vector<16x256xf32>, i32 -> vector<16x256xf32>
    %c48 = arith.constant 48 : index
    %c0_11 = arith.constant 0 : index
    %20 = vector.load %arg9[%c48, %c0_11] : memref<144x256xf32, #tpu.memory_space<vmem>>, vector<16x256xf32>
    tpu.vector_store %arg9[%c48, %c0_11], %19 {strides = array<i32>} : memref<144x256xf32, #tpu.memory_space<vmem>>, vector<16x256xf32>,
    %c64 = arith.constant 64 : index
    %c0_12 = arith.constant 0 : index
    %21 = vector.load %arg9[%c64, %c0_12] : memref<144x256xf32, #tpu.memory_space<vmem>>, vector<16x256xf32>
    tpu.vector_store %arg9[%c64, %c0_12], %12 {strides = array<i32>} : memref<144x256xf32, #tpu.memory_space<vmem>>, vector<16x256xf32>,
    %c255_i32 = arith.constant 255 : i32
    %22 = tpu.dynamic_rotate %12 by %c255_i32 dim 1 : vector<16x256xf32>, i32 -> vector<16x256xf32>
    %c80 = arith.constant 80 : index
    %c0_13 = arith.constant 0 : index
    %23 = vector.load %arg9[%c80, %c0_13] : memref<144x256xf32, #tpu.memory_space<vmem>>, vector<16x256xf32>
    tpu.vector_store %arg9[%c80, %c0_13], %22 {strides = array<i32>} : memref<144x256xf32, #tpu.memory_space<vmem>>, vector<16x256xf32>,
    %c247_i32 = arith.constant 247 : i32
    %24 = tpu.dynamic_rotate %12 by %c247_i32 dim 1 : vector<16x256xf32>, i32 -> vector<16x256xf32>
    %c96 = arith.constant 96 : index
    %c0_14 = arith.constant 0 : index
    %25 = vector.load %arg9[%c96, %c0_14] : memref<144x256xf32, #tpu.memory_space<vmem>>, vector<16x256xf32>
    tpu.vector_store %arg9[%c96, %c0_14], %24 {strides = array<i32>} : memref<144x256xf32, #tpu.memory_space<vmem>>, vector<16x256xf32>,
    %c246_i32 = arith.constant 246 : i32
    %26 = tpu.dynamic_rotate %12 by %c246_i32 dim 1 : vector<16x256xf32>, i32 -> vector<16x256xf32>
    %c112 = arith.constant 112 : index
    %c0_15 = arith.constant 0 : index
    %27 = vector.load %arg9[%c112, %c0_15] : memref<144x256xf32, #tpu.memory_space<vmem>>, vector<16x256xf32>
    tpu.vector_store %arg9[%c112, %c0_15], %26 {strides = array<i32>} : memref<144x256xf32, #tpu.memory_space<vmem>>, vector<16x256xf32>,
    %c245_i32 = arith.constant 245 : i32
    %28 = tpu.dynamic_rotate %12 by %c245_i32 dim 1 : vector<16x256xf32>, i32 -> vector<16x256xf32>
    %c128 = arith.constant 128 : index
    %c0_16 = arith.constant 0 : index
    %29 = vector.load %arg9[%c128, %c0_16] : memref<144x256xf32, #tpu.memory_space<vmem>>, vector<16x256xf32>
    tpu.vector_store %arg9[%c128, %c0_16], %28 {strides = array<i32>} : memref<144x256xf32, #tpu.memory_space<vmem>>, vector<16x256xf32>,
    %c0_17 = arith.constant 0 : index
    %c0_18 = arith.constant 0 : index
    %30 = vector.load %arg9[%c0_17, %c0_18] : memref<144x256xf32, #tpu.memory_space<vmem>>, vector<144x256xf32>
    %31 = arith.truncf %30 : vector<144x256xf32> to vector<144x256xbf16>
    %c0_19 = arith.constant 0 : index
    %c0_20 = arith.constant 0 : index
    %32 = vector.load %arg1[%c0_19, %c0_20] : memref<16x144xbf16, #tpu.memory_space<vmem>>, vector<16x144xbf16>
    %cst_21 = arith.constant dense<0.000000e+00> : vector<16x256xf32>
    %33 = tpu.matmul %32, %31, %cst_21 {dimension_numbers = #tpu.dot_dimension_numbers<[1], [0], [0], [1], [0, 0, 1, 1], [], []>} : vector<16x144xbf16>, vector<144x256xbf16>, vector<16x256xf32> -> vector<16x256xf32>
    %c0_22 = arith.constant 0 : index
    %c0_23 = arith.constant 0 : index
    %34 = vector.load %arg2[%c0_22, %c0_23] : memref<16x1xf32, #tpu.memory_space<vmem>>, vector<16x1xf32>
    %35 = vector.broadcast %34 : vector<16x1xf32> to vector<16x256xf32>
    %36 = arith.addf %33, %35 : vector<16x256xf32>
    %37 = vector.broadcast %0 : vector<1x256xf32> to vector<16x256xf32>
    %38 = arith.mulf %36, %37 : vector<16x256xf32>
    %cst_24 = arith.constant dense<0.000000e+00> : vector<16xf32>
    %39 = vector.multi_reduction <add>, %38, %cst_24 [1] : vector<16x256xf32> to vector<16xf32>
    %40 = vector.shape_cast %39 : vector<16xf32> to vector<16x1xf32>
    %c0_25 = arith.constant 0 : index
    %c0_26 = arith.constant 0 : index
    %41 = vector.load %arg7[%c0_25, %c0_26] : memref<16x1xf32, #tpu.memory_space<vmem>>, vector<16x1xf32>
    tpu.vector_store %arg7[%c0_25, %c0_26], %40 {strides = array<i32>} : memref<16x1xf32, #tpu.memory_space<vmem>>, vector<16x1xf32>,
    %42 = arith.mulf %38, %38 : vector<16x256xf32>
    %cst_27 = arith.constant dense<0.000000e+00> : vector<16xf32>
    %43 = vector.multi_reduction <add>, %42, %cst_27 [1] : vector<16x256xf32> to vector<16xf32>
    %44 = vector.shape_cast %43 : vector<16xf32> to vector<16x1xf32>
    %c0_28 = arith.constant 0 : index
    %c0_29 = arith.constant 0 : index
    %45 = vector.load %arg8[%c0_28, %c0_29] : memref<16x1xf32, #tpu.memory_space<vmem>>, vector<16x1xf32>
    tpu.vector_store %arg8[%c0_28, %c0_29], %44 {strides = array<i32>} : memref<16x1xf32, #tpu.memory_space<vmem>>, vector<16x1xf32>,
    %46 = arith.truncf %38 : vector<16x256xf32> to vector<16x256xbf16>
    %c0_30 = arith.constant 0 : index
    %c0_31 = arith.constant 0 : index
    %47 = vector.load %arg6[%c0_30, %c0_31] : memref<16x256xbf16, #tpu.memory_space<vmem>>, vector<16x256xbf16>
    tpu.vector_store %arg6[%c0_30, %c0_31], %46 {strides = array<i32>} : memref<16x256xbf16, #tpu.memory_space<vmem>>, vector<16x256xbf16>,
    return
  }
}

module attributes {stable_mosaic.version = 11 : i64} {
  func.func @_conv_kernel(%arg0: memref<64x256xbf16, #tpu.memory_space<vmem>>, %arg1: memref<32x256xbf16, #tpu.memory_space<vmem>>, %arg2: memref<32x1xf32, #tpu.memory_space<vmem>>, %arg3: memref<1x256xf32, #tpu.memory_space<vmem>>, %arg4: memref<32x256xbf16, #tpu.memory_space<vmem>>, %arg5: memref<32x1xf32, #tpu.memory_space<vmem>>, %arg6: memref<32x1xf32, #tpu.memory_space<vmem>>, %arg7: memref<256x256xf32, #tpu.memory_space<vmem>>) attributes {dimension_semantics = [], scalar_prefetch = 0 : i64, scratch_operands = 1 : i64, tpu.core_type = #tpu.core_type<tc>} {
    %c0 = arith.constant 0 : index
    %c0_0 = arith.constant 0 : index
    %0 = vector.load %arg3[%c0, %c0_0] : memref<1x256xf32, #tpu.memory_space<vmem>>, vector<1x256xf32>
    %c0_1 = arith.constant 0 : index
    %c0_2 = arith.constant 0 : index
    %1 = vector.load %arg0[%c0_1, %c0_2] : memref<64x256xbf16, #tpu.memory_space<vmem>>, vector<64x256xbf16>
    %2 = arith.extf %1 : vector<64x256xbf16> to vector<64x256xf32>
    %c7_i32 = arith.constant 7 : i32
    %3 = tpu.dynamic_rotate %2 by %c7_i32 dim 1 : vector<64x256xf32>, i32 -> vector<64x256xf32>
    %c0_3 = arith.constant 0 : index
    %c0_4 = arith.constant 0 : index
    %4 = vector.load %arg7[%c0_3, %c0_4] : memref<256x256xf32, #tpu.memory_space<vmem>>, vector<64x256xf32>
    tpu.vector_store %arg7[%c0_3, %c0_4], %3 {strides = array<i32>} : memref<256x256xf32, #tpu.memory_space<vmem>>, vector<64x256xf32>,
    %c6_i32 = arith.constant 6 : i32
    %5 = tpu.dynamic_rotate %2 by %c6_i32 dim 1 : vector<64x256xf32>, i32 -> vector<64x256xf32>
    %c64 = arith.constant 64 : index
    %c0_5 = arith.constant 0 : index
    %6 = vector.load %arg7[%c64, %c0_5] : memref<256x256xf32, #tpu.memory_space<vmem>>, vector<64x256xf32>
    tpu.vector_store %arg7[%c64, %c0_5], %5 {strides = array<i32>} : memref<256x256xf32, #tpu.memory_space<vmem>>, vector<64x256xf32>,
    %c1_i32 = arith.constant 1 : i32
    %7 = tpu.dynamic_rotate %2 by %c1_i32 dim 1 : vector<64x256xf32>, i32 -> vector<64x256xf32>
    %c128 = arith.constant 128 : index
    %c0_6 = arith.constant 0 : index
    %8 = vector.load %arg7[%c128, %c0_6] : memref<256x256xf32, #tpu.memory_space<vmem>>, vector<64x256xf32>
    tpu.vector_store %arg7[%c128, %c0_6], %7 {strides = array<i32>} : memref<256x256xf32, #tpu.memory_space<vmem>>, vector<64x256xf32>,
    %c192 = arith.constant 192 : index
    %c0_7 = arith.constant 0 : index
    %9 = vector.load %arg7[%c192, %c0_7] : memref<256x256xf32, #tpu.memory_space<vmem>>, vector<64x256xf32>
    tpu.vector_store %arg7[%c192, %c0_7], %2 {strides = array<i32>} : memref<256x256xf32, #tpu.memory_space<vmem>>, vector<64x256xf32>,
    %c0_8 = arith.constant 0 : index
    %c0_9 = arith.constant 0 : index
    %10 = vector.load %arg7[%c0_8, %c0_9] : memref<256x256xf32, #tpu.memory_space<vmem>>, vector<256x256xf32>
    %11 = arith.truncf %10 : vector<256x256xf32> to vector<256x256xbf16>
    %c0_10 = arith.constant 0 : index
    %c0_11 = arith.constant 0 : index
    %12 = vector.load %arg1[%c0_10, %c0_11] : memref<32x256xbf16, #tpu.memory_space<vmem>>, vector<32x256xbf16>
    %cst = arith.constant dense<0.000000e+00> : vector<32x256xf32>
    %13 = tpu.matmul %12, %11, %cst {dimension_numbers = #tpu.dot_dimension_numbers<[1], [0], [0], [1], [0, 0, 1, 1], [], []>} : vector<32x256xbf16>, vector<256x256xbf16>, vector<32x256xf32> -> vector<32x256xf32>
    %c0_12 = arith.constant 0 : index
    %c0_13 = arith.constant 0 : index
    %14 = vector.load %arg2[%c0_12, %c0_13] : memref<32x1xf32, #tpu.memory_space<vmem>>, vector<32x1xf32>
    %15 = vector.broadcast %14 : vector<32x1xf32> to vector<32x256xf32>
    %16 = arith.addf %13, %15 : vector<32x256xf32>
    %17 = vector.broadcast %0 : vector<1x256xf32> to vector<32x256xf32>
    %18 = arith.mulf %16, %17 : vector<32x256xf32>
    %cst_14 = arith.constant dense<0.000000e+00> : vector<32xf32>
    %19 = vector.multi_reduction <add>, %18, %cst_14 [1] : vector<32x256xf32> to vector<32xf32>
    %20 = vector.shape_cast %19 : vector<32xf32> to vector<32x1xf32>
    %c0_15 = arith.constant 0 : index
    %c0_16 = arith.constant 0 : index
    %21 = vector.load %arg5[%c0_15, %c0_16] : memref<32x1xf32, #tpu.memory_space<vmem>>, vector<32x1xf32>
    tpu.vector_store %arg5[%c0_15, %c0_16], %20 {strides = array<i32>} : memref<32x1xf32, #tpu.memory_space<vmem>>, vector<32x1xf32>,
    %22 = arith.mulf %18, %18 : vector<32x256xf32>
    %cst_17 = arith.constant dense<0.000000e+00> : vector<32xf32>
    %23 = vector.multi_reduction <add>, %22, %cst_17 [1] : vector<32x256xf32> to vector<32xf32>
    %24 = vector.shape_cast %23 : vector<32xf32> to vector<32x1xf32>
    %c0_18 = arith.constant 0 : index
    %c0_19 = arith.constant 0 : index
    %25 = vector.load %arg6[%c0_18, %c0_19] : memref<32x1xf32, #tpu.memory_space<vmem>>, vector<32x1xf32>
    tpu.vector_store %arg6[%c0_18, %c0_19], %24 {strides = array<i32>} : memref<32x1xf32, #tpu.memory_space<vmem>>, vector<32x1xf32>,
    %26 = arith.truncf %18 : vector<32x256xf32> to vector<32x256xbf16>
    %c0_20 = arith.constant 0 : index
    %c0_21 = arith.constant 0 : index
    %27 = vector.load %arg4[%c0_20, %c0_21] : memref<32x256xbf16, #tpu.memory_space<vmem>>, vector<32x256xbf16>
    tpu.vector_store %arg4[%c0_20, %c0_21], %26 {strides = array<i32>} : memref<32x256xbf16, #tpu.memory_space<vmem>>, vector<32x256xbf16>,
    return
  }
}

module attributes {stable_mosaic.version = 11 : i64} {
  func.func @_conv_kernel(%arg0: memref<32x256xbf16, #tpu.memory_space<vmem>>, %arg1: memref<32x288xbf16, #tpu.memory_space<vmem>>, %arg2: memref<32x1xf32, #tpu.memory_space<vmem>>, %arg3: memref<32x1xf32, #tpu.memory_space<vmem>>, %arg4: memref<32x1xf32, #tpu.memory_space<vmem>>, %arg5: memref<1x256xf32, #tpu.memory_space<vmem>>, %arg6: memref<32x256xbf16, #tpu.memory_space<vmem>>, %arg7: memref<32x1xf32, #tpu.memory_space<vmem>>, %arg8: memref<32x1xf32, #tpu.memory_space<vmem>>, %arg9: memref<288x256xf32, #tpu.memory_space<vmem>>) attributes {dimension_semantics = [], scalar_prefetch = 0 : i64, scratch_operands = 1 : i64, tpu.core_type = #tpu.core_type<tc>} {
    %c0 = arith.constant 0 : index
    %c0_0 = arith.constant 0 : index
    %0 = vector.load %arg5[%c0, %c0_0] : memref<1x256xf32, #tpu.memory_space<vmem>>, vector<1x256xf32>
    %c0_1 = arith.constant 0 : index
    %c0_2 = arith.constant 0 : index
    %1 = vector.load %arg0[%c0_1, %c0_2] : memref<32x256xbf16, #tpu.memory_space<vmem>>, vector<32x256xbf16>
    %2 = arith.extf %1 : vector<32x256xbf16> to vector<32x256xf32>
    %c0_3 = arith.constant 0 : index
    %c0_4 = arith.constant 0 : index
    %3 = vector.load %arg3[%c0_3, %c0_4] : memref<32x1xf32, #tpu.memory_space<vmem>>, vector<32x1xf32>
    %4 = vector.broadcast %3 : vector<32x1xf32> to vector<32x256xf32>
    %5 = arith.mulf %2, %4 : vector<32x256xf32>
    %c0_5 = arith.constant 0 : index
    %c0_6 = arith.constant 0 : index
    %6 = vector.load %arg4[%c0_5, %c0_6] : memref<32x1xf32, #tpu.memory_space<vmem>>, vector<32x1xf32>
    %7 = vector.broadcast %6 : vector<32x1xf32> to vector<32x256xf32>
    %8 = arith.addf %5, %7 : vector<32x256xf32>
    %cst = arith.constant 0.000000e+00 : f32
    %9 = vector.broadcast %cst : f32 to vector<32x256xf32>
    %10 = arith.maximumf %8, %9 : vector<32x256xf32>
    %11 = vector.broadcast %0 : vector<1x256xf32> to vector<32x256xf32>
    %12 = arith.mulf %10, %11 : vector<32x256xf32>
    %c7_i32 = arith.constant 7 : i32
    %13 = tpu.dynamic_rotate %12 by %c7_i32 dim 1 : vector<32x256xf32>, i32 -> vector<32x256xf32>
    %c0_7 = arith.constant 0 : index
    %c0_8 = arith.constant 0 : index
    %14 = vector.load %arg9[%c0_7, %c0_8] : memref<288x256xf32, #tpu.memory_space<vmem>>, vector<32x256xf32>
    tpu.vector_store %arg9[%c0_7, %c0_8], %13 {strides = array<i32>} : memref<288x256xf32, #tpu.memory_space<vmem>>, vector<32x256xf32>,
    %c6_i32 = arith.constant 6 : i32
    %15 = tpu.dynamic_rotate %12 by %c6_i32 dim 1 : vector<32x256xf32>, i32 -> vector<32x256xf32>
    %c32 = arith.constant 32 : index
    %c0_9 = arith.constant 0 : index
    %16 = vector.load %arg9[%c32, %c0_9] : memref<288x256xf32, #tpu.memory_space<vmem>>, vector<32x256xf32>
    tpu.vector_store %arg9[%c32, %c0_9], %15 {strides = array<i32>} : memref<288x256xf32, #tpu.memory_space<vmem>>, vector<32x256xf32>,
    %c5_i32 = arith.constant 5 : i32
    %17 = tpu.dynamic_rotate %12 by %c5_i32 dim 1 : vector<32x256xf32>, i32 -> vector<32x256xf32>
    %c64 = arith.constant 64 : index
    %c0_10 = arith.constant 0 : index
    %18 = vector.load %arg9[%c64, %c0_10] : memref<288x256xf32, #tpu.memory_space<vmem>>, vector<32x256xf32>
    tpu.vector_store %arg9[%c64, %c0_10], %17 {strides = array<i32>} : memref<288x256xf32, #tpu.memory_space<vmem>>, vector<32x256xf32>,
    %c1_i32 = arith.constant 1 : i32
    %19 = tpu.dynamic_rotate %12 by %c1_i32 dim 1 : vector<32x256xf32>, i32 -> vector<32x256xf32>
    %c96 = arith.constant 96 : index
    %c0_11 = arith.constant 0 : index
    %20 = vector.load %arg9[%c96, %c0_11] : memref<288x256xf32, #tpu.memory_space<vmem>>, vector<32x256xf32>
    tpu.vector_store %arg9[%c96, %c0_11], %19 {strides = array<i32>} : memref<288x256xf32, #tpu.memory_space<vmem>>, vector<32x256xf32>,
    %c128 = arith.constant 128 : index
    %c0_12 = arith.constant 0 : index
    %21 = vector.load %arg9[%c128, %c0_12] : memref<288x256xf32, #tpu.memory_space<vmem>>, vector<32x256xf32>
    tpu.vector_store %arg9[%c128, %c0_12], %12 {strides = array<i32>} : memref<288x256xf32, #tpu.memory_space<vmem>>, vector<32x256xf32>,
    %c255_i32 = arith.constant 255 : i32
    %22 = tpu.dynamic_rotate %12 by %c255_i32 dim 1 : vector<32x256xf32>, i32 -> vector<32x256xf32>
    %c160 = arith.constant 160 : index
    %c0_13 = arith.constant 0 : index
    %23 = vector.load %arg9[%c160, %c0_13] : memref<288x256xf32, #tpu.memory_space<vmem>>, vector<32x256xf32>
    tpu.vector_store %arg9[%c160, %c0_13], %22 {strides = array<i32>} : memref<288x256xf32, #tpu.memory_space<vmem>>, vector<32x256xf32>,
    %c251_i32 = arith.constant 251 : i32
    %24 = tpu.dynamic_rotate %12 by %c251_i32 dim 1 : vector<32x256xf32>, i32 -> vector<32x256xf32>
    %c192 = arith.constant 192 : index
    %c0_14 = arith.constant 0 : index
    %25 = vector.load %arg9[%c192, %c0_14] : memref<288x256xf32, #tpu.memory_space<vmem>>, vector<32x256xf32>
    tpu.vector_store %arg9[%c192, %c0_14], %24 {strides = array<i32>} : memref<288x256xf32, #tpu.memory_space<vmem>>, vector<32x256xf32>,
    %c250_i32 = arith.constant 250 : i32
    %26 = tpu.dynamic_rotate %12 by %c250_i32 dim 1 : vector<32x256xf32>, i32 -> vector<32x256xf32>
    %c224 = arith.constant 224 : index
    %c0_15 = arith.constant 0 : index
    %27 = vector.load %arg9[%c224, %c0_15] : memref<288x256xf32, #tpu.memory_space<vmem>>, vector<32x256xf32>
    tpu.vector_store %arg9[%c224, %c0_15], %26 {strides = array<i32>} : memref<288x256xf32, #tpu.memory_space<vmem>>, vector<32x256xf32>,
    %c249_i32 = arith.constant 249 : i32
    %28 = tpu.dynamic_rotate %12 by %c249_i32 dim 1 : vector<32x256xf32>, i32 -> vector<32x256xf32>
    %c256 = arith.constant 256 : index
    %c0_16 = arith.constant 0 : index
    %29 = vector.load %arg9[%c256, %c0_16] : memref<288x256xf32, #tpu.memory_space<vmem>>, vector<32x256xf32>
    tpu.vector_store %arg9[%c256, %c0_16], %28 {strides = array<i32>} : memref<288x256xf32, #tpu.memory_space<vmem>>, vector<32x256xf32>,
    %c0_17 = arith.constant 0 : index
    %c0_18 = arith.constant 0 : index
    %30 = vector.load %arg9[%c0_17, %c0_18] : memref<288x256xf32, #tpu.memory_space<vmem>>, vector<288x256xf32>
    %31 = arith.truncf %30 : vector<288x256xf32> to vector<288x256xbf16>
    %c0_19 = arith.constant 0 : index
    %c0_20 = arith.constant 0 : index
    %32 = vector.load %arg1[%c0_19, %c0_20] : memref<32x288xbf16, #tpu.memory_space<vmem>>, vector<32x288xbf16>
    %cst_21 = arith.constant dense<0.000000e+00> : vector<32x256xf32>
    %33 = tpu.matmul %32, %31, %cst_21 {dimension_numbers = #tpu.dot_dimension_numbers<[1], [0], [0], [1], [0, 0, 1, 1], [], []>} : vector<32x288xbf16>, vector<288x256xbf16>, vector<32x256xf32> -> vector<32x256xf32>
    %c0_22 = arith.constant 0 : index
    %c0_23 = arith.constant 0 : index
    %34 = vector.load %arg2[%c0_22, %c0_23] : memref<32x1xf32, #tpu.memory_space<vmem>>, vector<32x1xf32>
    %35 = vector.broadcast %34 : vector<32x1xf32> to vector<32x256xf32>
    %36 = arith.addf %33, %35 : vector<32x256xf32>
    %37 = vector.broadcast %0 : vector<1x256xf32> to vector<32x256xf32>
    %38 = arith.mulf %36, %37 : vector<32x256xf32>
    %cst_24 = arith.constant dense<0.000000e+00> : vector<32xf32>
    %39 = vector.multi_reduction <add>, %38, %cst_24 [1] : vector<32x256xf32> to vector<32xf32>
    %40 = vector.shape_cast %39 : vector<32xf32> to vector<32x1xf32>
    %c0_25 = arith.constant 0 : index
    %c0_26 = arith.constant 0 : index
    %41 = vector.load %arg7[%c0_25, %c0_26] : memref<32x1xf32, #tpu.memory_space<vmem>>, vector<32x1xf32>
    tpu.vector_store %arg7[%c0_25, %c0_26], %40 {strides = array<i32>} : memref<32x1xf32, #tpu.memory_space<vmem>>, vector<32x1xf32>,
    %42 = arith.mulf %38, %38 : vector<32x256xf32>
    %cst_27 = arith.constant dense<0.000000e+00> : vector<32xf32>
    %43 = vector.multi_reduction <add>, %42, %cst_27 [1] : vector<32x256xf32> to vector<32xf32>
    %44 = vector.shape_cast %43 : vector<32xf32> to vector<32x1xf32>
    %c0_28 = arith.constant 0 : index
    %c0_29 = arith.constant 0 : index
    %45 = vector.load %arg8[%c0_28, %c0_29] : memref<32x1xf32, #tpu.memory_space<vmem>>, vector<32x1xf32>
    tpu.vector_store %arg8[%c0_28, %c0_29], %44 {strides = array<i32>} : memref<32x1xf32, #tpu.memory_space<vmem>>, vector<32x1xf32>,
    %46 = arith.truncf %38 : vector<32x256xf32> to vector<32x256xbf16>
    %c0_30 = arith.constant 0 : index
    %c0_31 = arith.constant 0 : index
    %47 = vector.load %arg6[%c0_30, %c0_31] : memref<32x256xbf16, #tpu.memory_space<vmem>>, vector<32x256xbf16>
    tpu.vector_store %arg6[%c0_30, %c0_31], %46 {strides = array<i32>} : memref<32x256xbf16, #tpu.memory_space<vmem>>, vector<32x256xbf16>,
    return
  }
}

module attributes {stable_mosaic.version = 11 : i64} {
  func.func @_conv_kernel(%arg0: memref<32x256xbf16, #tpu.memory_space<vmem>>, %arg1: memref<32x288xbf16, #tpu.memory_space<vmem>>, %arg2: memref<32x1xf32, #tpu.memory_space<vmem>>, %arg3: memref<32x1xf32, #tpu.memory_space<vmem>>, %arg4: memref<32x1xf32, #tpu.memory_space<vmem>>, %arg5: memref<32x256xbf16, #tpu.memory_space<vmem>>, %arg6: memref<32x1xf32, #tpu.memory_space<vmem>>, %arg7: memref<32x1xf32, #tpu.memory_space<vmem>>, %arg8: memref<1x256xf32, #tpu.memory_space<vmem>>, %arg9: memref<32x256xbf16, #tpu.memory_space<vmem>>, %arg10: memref<32x1xf32, #tpu.memory_space<vmem>>, %arg11: memref<32x1xf32, #tpu.memory_space<vmem>>, %arg12: memref<288x256xf32, #tpu.memory_space<vmem>>) attributes {dimension_semantics = [], scalar_prefetch = 0 : i64, scratch_operands = 1 : i64, tpu.core_type = #tpu.core_type<tc>} {
    %c0 = arith.constant 0 : index
    %c0_0 = arith.constant 0 : index
    %0 = vector.load %arg8[%c0, %c0_0] : memref<1x256xf32, #tpu.memory_space<vmem>>, vector<1x256xf32>
    %c0_1 = arith.constant 0 : index
    %c0_2 = arith.constant 0 : index
    %1 = vector.load %arg0[%c0_1, %c0_2] : memref<32x256xbf16, #tpu.memory_space<vmem>>, vector<32x256xbf16>
    %2 = arith.extf %1 : vector<32x256xbf16> to vector<32x256xf32>
    %c0_3 = arith.constant 0 : index
    %c0_4 = arith.constant 0 : index
    %3 = vector.load %arg3[%c0_3, %c0_4] : memref<32x1xf32, #tpu.memory_space<vmem>>, vector<32x1xf32>
    %4 = vector.broadcast %3 : vector<32x1xf32> to vector<32x256xf32>
    %5 = arith.mulf %2, %4 : vector<32x256xf32>
    %c0_5 = arith.constant 0 : index
    %c0_6 = arith.constant 0 : index
    %6 = vector.load %arg4[%c0_5, %c0_6] : memref<32x1xf32, #tpu.memory_space<vmem>>, vector<32x1xf32>
    %7 = vector.broadcast %6 : vector<32x1xf32> to vector<32x256xf32>
    %8 = arith.addf %5, %7 : vector<32x256xf32>
    %cst = arith.constant 0.000000e+00 : f32
    %9 = vector.broadcast %cst : f32 to vector<32x256xf32>
    %10 = arith.maximumf %8, %9 : vector<32x256xf32>
    %11 = vector.broadcast %0 : vector<1x256xf32> to vector<32x256xf32>
    %12 = arith.mulf %10, %11 : vector<32x256xf32>
    %c7_i32 = arith.constant 7 : i32
    %13 = tpu.dynamic_rotate %12 by %c7_i32 dim 1 : vector<32x256xf32>, i32 -> vector<32x256xf32>
    %c0_7 = arith.constant 0 : index
    %c0_8 = arith.constant 0 : index
    %14 = vector.load %arg12[%c0_7, %c0_8] : memref<288x256xf32, #tpu.memory_space<vmem>>, vector<32x256xf32>
    tpu.vector_store %arg12[%c0_7, %c0_8], %13 {strides = array<i32>} : memref<288x256xf32, #tpu.memory_space<vmem>>, vector<32x256xf32>,
    %c6_i32 = arith.constant 6 : i32
    %15 = tpu.dynamic_rotate %12 by %c6_i32 dim 1 : vector<32x256xf32>, i32 -> vector<32x256xf32>
    %c32 = arith.constant 32 : index
    %c0_9 = arith.constant 0 : index
    %16 = vector.load %arg12[%c32, %c0_9] : memref<288x256xf32, #tpu.memory_space<vmem>>, vector<32x256xf32>
    tpu.vector_store %arg12[%c32, %c0_9], %15 {strides = array<i32>} : memref<288x256xf32, #tpu.memory_space<vmem>>, vector<32x256xf32>,
    %c5_i32 = arith.constant 5 : i32
    %17 = tpu.dynamic_rotate %12 by %c5_i32 dim 1 : vector<32x256xf32>, i32 -> vector<32x256xf32>
    %c64 = arith.constant 64 : index
    %c0_10 = arith.constant 0 : index
    %18 = vector.load %arg12[%c64, %c0_10] : memref<288x256xf32, #tpu.memory_space<vmem>>, vector<32x256xf32>
    tpu.vector_store %arg12[%c64, %c0_10], %17 {strides = array<i32>} : memref<288x256xf32, #tpu.memory_space<vmem>>, vector<32x256xf32>,
    %c1_i32 = arith.constant 1 : i32
    %19 = tpu.dynamic_rotate %12 by %c1_i32 dim 1 : vector<32x256xf32>, i32 -> vector<32x256xf32>
    %c96 = arith.constant 96 : index
    %c0_11 = arith.constant 0 : index
    %20 = vector.load %arg12[%c96, %c0_11] : memref<288x256xf32, #tpu.memory_space<vmem>>, vector<32x256xf32>
    tpu.vector_store %arg12[%c96, %c0_11], %19 {strides = array<i32>} : memref<288x256xf32, #tpu.memory_space<vmem>>, vector<32x256xf32>,
    %c128 = arith.constant 128 : index
    %c0_12 = arith.constant 0 : index
    %21 = vector.load %arg12[%c128, %c0_12] : memref<288x256xf32, #tpu.memory_space<vmem>>, vector<32x256xf32>
    tpu.vector_store %arg12[%c128, %c0_12], %12 {strides = array<i32>} : memref<288x256xf32, #tpu.memory_space<vmem>>, vector<32x256xf32>,
    %c255_i32 = arith.constant 255 : i32
    %22 = tpu.dynamic_rotate %12 by %c255_i32 dim 1 : vector<32x256xf32>, i32 -> vector<32x256xf32>
    %c160 = arith.constant 160 : index
    %c0_13 = arith.constant 0 : index
    %23 = vector.load %arg12[%c160, %c0_13] : memref<288x256xf32, #tpu.memory_space<vmem>>, vector<32x256xf32>
    tpu.vector_store %arg12[%c160, %c0_13], %22 {strides = array<i32>} : memref<288x256xf32, #tpu.memory_space<vmem>>, vector<32x256xf32>,
    %c251_i32 = arith.constant 251 : i32
    %24 = tpu.dynamic_rotate %12 by %c251_i32 dim 1 : vector<32x256xf32>, i32 -> vector<32x256xf32>
    %c192 = arith.constant 192 : index
    %c0_14 = arith.constant 0 : index
    %25 = vector.load %arg12[%c192, %c0_14] : memref<288x256xf32, #tpu.memory_space<vmem>>, vector<32x256xf32>
    tpu.vector_store %arg12[%c192, %c0_14], %24 {strides = array<i32>} : memref<288x256xf32, #tpu.memory_space<vmem>>, vector<32x256xf32>,
    %c250_i32 = arith.constant 250 : i32
    %26 = tpu.dynamic_rotate %12 by %c250_i32 dim 1 : vector<32x256xf32>, i32 -> vector<32x256xf32>
    %c224 = arith.constant 224 : index
    %c0_15 = arith.constant 0 : index
    %27 = vector.load %arg12[%c224, %c0_15] : memref<288x256xf32, #tpu.memory_space<vmem>>, vector<32x256xf32>
    tpu.vector_store %arg12[%c224, %c0_15], %26 {strides = array<i32>} : memref<288x256xf32, #tpu.memory_space<vmem>>, vector<32x256xf32>,
    %c249_i32 = arith.constant 249 : i32
    %28 = tpu.dynamic_rotate %12 by %c249_i32 dim 1 : vector<32x256xf32>, i32 -> vector<32x256xf32>
    %c256 = arith.constant 256 : index
    %c0_16 = arith.constant 0 : index
    %29 = vector.load %arg12[%c256, %c0_16] : memref<288x256xf32, #tpu.memory_space<vmem>>, vector<32x256xf32>
    tpu.vector_store %arg12[%c256, %c0_16], %28 {strides = array<i32>} : memref<288x256xf32, #tpu.memory_space<vmem>>, vector<32x256xf32>,
    %c0_17 = arith.constant 0 : index
    %c0_18 = arith.constant 0 : index
    %30 = vector.load %arg12[%c0_17, %c0_18] : memref<288x256xf32, #tpu.memory_space<vmem>>, vector<288x256xf32>
    %31 = arith.truncf %30 : vector<288x256xf32> to vector<288x256xbf16>
    %c0_19 = arith.constant 0 : index
    %c0_20 = arith.constant 0 : index
    %32 = vector.load %arg1[%c0_19, %c0_20] : memref<32x288xbf16, #tpu.memory_space<vmem>>, vector<32x288xbf16>
    %cst_21 = arith.constant dense<0.000000e+00> : vector<32x256xf32>
    %33 = tpu.matmul %32, %31, %cst_21 {dimension_numbers = #tpu.dot_dimension_numbers<[1], [0], [0], [1], [0, 0, 1, 1], [], []>} : vector<32x288xbf16>, vector<288x256xbf16>, vector<32x256xf32> -> vector<32x256xf32>
    %c0_22 = arith.constant 0 : index
    %c0_23 = arith.constant 0 : index
    %34 = vector.load %arg2[%c0_22, %c0_23] : memref<32x1xf32, #tpu.memory_space<vmem>>, vector<32x1xf32>
    %35 = vector.broadcast %34 : vector<32x1xf32> to vector<32x256xf32>
    %36 = arith.addf %33, %35 : vector<32x256xf32>
    %c0_24 = arith.constant 0 : index
    %c0_25 = arith.constant 0 : index
    %37 = vector.load %arg5[%c0_24, %c0_25] : memref<32x256xbf16, #tpu.memory_space<vmem>>, vector<32x256xbf16>
    %38 = arith.extf %37 : vector<32x256xbf16> to vector<32x256xf32>
    %c0_26 = arith.constant 0 : index
    %c0_27 = arith.constant 0 : index
    %39 = vector.load %arg6[%c0_26, %c0_27] : memref<32x1xf32, #tpu.memory_space<vmem>>, vector<32x1xf32>
    %40 = vector.broadcast %39 : vector<32x1xf32> to vector<32x256xf32>
    %41 = arith.mulf %38, %40 : vector<32x256xf32>
    %c0_28 = arith.constant 0 : index
    %c0_29 = arith.constant 0 : index
    %42 = vector.load %arg7[%c0_28, %c0_29] : memref<32x1xf32, #tpu.memory_space<vmem>>, vector<32x1xf32>
    %43 = vector.broadcast %42 : vector<32x1xf32> to vector<32x256xf32>
    %44 = arith.addf %41, %43 : vector<32x256xf32>
    %cst_30 = arith.constant 0.000000e+00 : f32
    %45 = vector.broadcast %cst_30 : f32 to vector<32x256xf32>
    %46 = arith.maximumf %44, %45 : vector<32x256xf32>
    %47 = arith.addf %36, %46 : vector<32x256xf32>
    %48 = vector.broadcast %0 : vector<1x256xf32> to vector<32x256xf32>
    %49 = arith.mulf %47, %48 : vector<32x256xf32>
    %cst_31 = arith.constant dense<0.000000e+00> : vector<32xf32>
    %50 = vector.multi_reduction <add>, %49, %cst_31 [1] : vector<32x256xf32> to vector<32xf32>
    %51 = vector.shape_cast %50 : vector<32xf32> to vector<32x1xf32>
    %c0_32 = arith.constant 0 : index
    %c0_33 = arith.constant 0 : index
    %52 = vector.load %arg10[%c0_32, %c0_33] : memref<32x1xf32, #tpu.memory_space<vmem>>, vector<32x1xf32>
    tpu.vector_store %arg10[%c0_32, %c0_33], %51 {strides = array<i32>} : memref<32x1xf32, #tpu.memory_space<vmem>>, vector<32x1xf32>,
    %53 = arith.mulf %49, %49 : vector<32x256xf32>
    %cst_34 = arith.constant dense<0.000000e+00> : vector<32xf32>
    %54 = vector.multi_reduction <add>, %53, %cst_34 [1] : vector<32x256xf32> to vector<32xf32>
    %55 = vector.shape_cast %54 : vector<32xf32> to vector<32x1xf32>
    %c0_35 = arith.constant 0 : index
    %c0_36 = arith.constant 0 : index
    %56 = vector.load %arg11[%c0_35, %c0_36] : memref<32x1xf32, #tpu.memory_space<vmem>>, vector<32x1xf32>
    tpu.vector_store %arg11[%c0_35, %c0_36], %55 {strides = array<i32>} : memref<32x1xf32, #tpu.memory_space<vmem>>, vector<32x1xf32>,
    %57 = arith.truncf %49 : vector<32x256xf32> to vector<32x256xbf16>
    %c0_37 = arith.constant 0 : index
    %c0_38 = arith.constant 0 : index
    %58 = vector.load %arg9[%c0_37, %c0_38] : memref<32x256xbf16, #tpu.memory_space<vmem>>, vector<32x256xbf16>
    tpu.vector_store %arg9[%c0_37, %c0_38], %57 {strides = array<i32>} : memref<32x256xbf16, #tpu.memory_space<vmem>>, vector<32x256xbf16>,
    return
  }
}

module attributes {stable_mosaic.version = 11 : i64} {
  func.func @_conv_kernel(%arg0: memref<32x256xbf16, #tpu.memory_space<vmem>>, %arg1: memref<64x32xbf16, #tpu.memory_space<vmem>>, %arg2: memref<64x1xf32, #tpu.memory_space<vmem>>, %arg3: memref<32x1xf32, #tpu.memory_space<vmem>>, %arg4: memref<32x1xf32, #tpu.memory_space<vmem>>, %arg5: memref<1x256xf32, #tpu.memory_space<vmem>>, %arg6: memref<64x256xbf16, #tpu.memory_space<vmem>>, %arg7: memref<64x1xf32, #tpu.memory_space<vmem>>, %arg8: memref<64x1xf32, #tpu.memory_space<vmem>>, %arg9: memref<32x256xf32, #tpu.memory_space<vmem>>) attributes {dimension_semantics = [], scalar_prefetch = 0 : i64, scratch_operands = 1 : i64, tpu.core_type = #tpu.core_type<tc>} {
    %c0 = arith.constant 0 : index
    %c0_0 = arith.constant 0 : index
    %0 = vector.load %arg5[%c0, %c0_0] : memref<1x256xf32, #tpu.memory_space<vmem>>, vector<1x256xf32>
    %c0_1 = arith.constant 0 : index
    %c0_2 = arith.constant 0 : index
    %1 = vector.load %arg0[%c0_1, %c0_2] : memref<32x256xbf16, #tpu.memory_space<vmem>>, vector<32x256xbf16>
    %2 = arith.extf %1 : vector<32x256xbf16> to vector<32x256xf32>
    %c0_3 = arith.constant 0 : index
    %c0_4 = arith.constant 0 : index
    %3 = vector.load %arg3[%c0_3, %c0_4] : memref<32x1xf32, #tpu.memory_space<vmem>>, vector<32x1xf32>
    %4 = vector.broadcast %3 : vector<32x1xf32> to vector<32x256xf32>
    %5 = arith.mulf %2, %4 : vector<32x256xf32>
    %c0_5 = arith.constant 0 : index
    %c0_6 = arith.constant 0 : index
    %6 = vector.load %arg4[%c0_5, %c0_6] : memref<32x1xf32, #tpu.memory_space<vmem>>, vector<32x1xf32>
    %7 = vector.broadcast %6 : vector<32x1xf32> to vector<32x256xf32>
    %8 = arith.addf %5, %7 : vector<32x256xf32>
    %cst = arith.constant 0.000000e+00 : f32
    %9 = vector.broadcast %cst : f32 to vector<32x256xf32>
    %10 = arith.maximumf %8, %9 : vector<32x256xf32>
    %11 = vector.broadcast %0 : vector<1x256xf32> to vector<32x256xf32>
    %12 = arith.mulf %10, %11 : vector<32x256xf32>
    %c0_7 = arith.constant 0 : index
    %c0_8 = arith.constant 0 : index
    %13 = vector.load %arg9[%c0_7, %c0_8] : memref<32x256xf32, #tpu.memory_space<vmem>>, vector<32x256xf32>
    tpu.vector_store %arg9[%c0_7, %c0_8], %12 {strides = array<i32>} : memref<32x256xf32, #tpu.memory_space<vmem>>, vector<32x256xf32>,
    %c0_9 = arith.constant 0 : index
    %c0_10 = arith.constant 0 : index
    %14 = vector.load %arg9[%c0_9, %c0_10] : memref<32x256xf32, #tpu.memory_space<vmem>>, vector<32x256xf32>
    %15 = arith.truncf %14 : vector<32x256xf32> to vector<32x256xbf16>
    %c0_11 = arith.constant 0 : index
    %c0_12 = arith.constant 0 : index
    %16 = vector.load %arg1[%c0_11, %c0_12] : memref<64x32xbf16, #tpu.memory_space<vmem>>, vector<64x32xbf16>
    %cst_13 = arith.constant dense<0.000000e+00> : vector<64x256xf32>
    %17 = tpu.matmul %16, %15, %cst_13 {dimension_numbers = #tpu.dot_dimension_numbers<[1], [0], [0], [1], [0, 0, 1, 1], [], []>} : vector<64x32xbf16>, vector<32x256xbf16>, vector<64x256xf32> -> vector<64x256xf32>
    %c0_14 = arith.constant 0 : index
    %c0_15 = arith.constant 0 : index
    %18 = vector.load %arg2[%c0_14, %c0_15] : memref<64x1xf32, #tpu.memory_space<vmem>>, vector<64x1xf32>
    %19 = vector.broadcast %18 : vector<64x1xf32> to vector<64x256xf32>
    %20 = arith.addf %17, %19 : vector<64x256xf32>
    %21 = vector.broadcast %0 : vector<1x256xf32> to vector<64x256xf32>
    %22 = arith.mulf %20, %21 : vector<64x256xf32>
    %cst_16 = arith.constant dense<0.000000e+00> : vector<64xf32>
    %23 = vector.multi_reduction <add>, %22, %cst_16 [1] : vector<64x256xf32> to vector<64xf32>
    %24 = vector.shape_cast %23 : vector<64xf32> to vector<64x1xf32>
    %c0_17 = arith.constant 0 : index
    %c0_18 = arith.constant 0 : index
    %25 = vector.load %arg7[%c0_17, %c0_18] : memref<64x1xf32, #tpu.memory_space<vmem>>, vector<64x1xf32>
    tpu.vector_store %arg7[%c0_17, %c0_18], %24 {strides = array<i32>} : memref<64x1xf32, #tpu.memory_space<vmem>>, vector<64x1xf32>,
    %26 = arith.mulf %22, %22 : vector<64x256xf32>
    %cst_19 = arith.constant dense<0.000000e+00> : vector<64xf32>
    %27 = vector.multi_reduction <add>, %26, %cst_19 [1] : vector<64x256xf32> to vector<64xf32>
    %28 = vector.shape_cast %27 : vector<64xf32> to vector<64x1xf32>
    %c0_20 = arith.constant 0 : index
    %c0_21 = arith.constant 0 : index
    %29 = vector.load %arg8[%c0_20, %c0_21] : memref<64x1xf32, #tpu.memory_space<vmem>>, vector<64x1xf32>
    tpu.vector_store %arg8[%c0_20, %c0_21], %28 {strides = array<i32>} : memref<64x1xf32, #tpu.memory_space<vmem>>, vector<64x1xf32>,
    %30 = arith.truncf %22 : vector<64x256xf32> to vector<64x256xbf16>
    %c0_22 = arith.constant 0 : index
    %c0_23 = arith.constant 0 : index
    %31 = vector.load %arg6[%c0_22, %c0_23] : memref<64x256xbf16, #tpu.memory_space<vmem>>, vector<64x256xbf16>
    tpu.vector_store %arg6[%c0_22, %c0_23], %30 {strides = array<i32>} : memref<64x256xbf16, #tpu.memory_space<vmem>>, vector<64x256xbf16>,
    return
  }
}

module attributes {stable_mosaic.version = 11 : i64} {
  func.func @_conv_kernel(%arg0: memref<16x256xbf16, #tpu.memory_space<vmem>>, %arg1: memref<32x16xbf16, #tpu.memory_space<vmem>>, %arg2: memref<32x1xf32, #tpu.memory_space<vmem>>, %arg3: memref<16x1xf32, #tpu.memory_space<vmem>>, %arg4: memref<16x1xf32, #tpu.memory_space<vmem>>, %arg5: memref<1x256xf32, #tpu.memory_space<vmem>>, %arg6: memref<32x256xbf16, #tpu.memory_space<vmem>>, %arg7: memref<32x1xf32, #tpu.memory_space<vmem>>, %arg8: memref<32x1xf32, #tpu.memory_space<vmem>>, %arg9: memref<16x256xf32, #tpu.memory_space<vmem>>) attributes {dimension_semantics = [], scalar_prefetch = 0 : i64, scratch_operands = 1 : i64, tpu.core_type = #tpu.core_type<tc>} {
    %c0 = arith.constant 0 : index
    %c0_0 = arith.constant 0 : index
    %0 = vector.load %arg5[%c0, %c0_0] : memref<1x256xf32, #tpu.memory_space<vmem>>, vector<1x256xf32>
    %c0_1 = arith.constant 0 : index
    %c0_2 = arith.constant 0 : index
    %1 = vector.load %arg0[%c0_1, %c0_2] : memref<16x256xbf16, #tpu.memory_space<vmem>>, vector<16x256xbf16>
    %2 = arith.extf %1 : vector<16x256xbf16> to vector<16x256xf32>
    %c0_3 = arith.constant 0 : index
    %c0_4 = arith.constant 0 : index
    %3 = vector.load %arg3[%c0_3, %c0_4] : memref<16x1xf32, #tpu.memory_space<vmem>>, vector<16x1xf32>
    %4 = vector.broadcast %3 : vector<16x1xf32> to vector<16x256xf32>
    %5 = arith.mulf %2, %4 : vector<16x256xf32>
    %c0_5 = arith.constant 0 : index
    %c0_6 = arith.constant 0 : index
    %6 = vector.load %arg4[%c0_5, %c0_6] : memref<16x1xf32, #tpu.memory_space<vmem>>, vector<16x1xf32>
    %7 = vector.broadcast %6 : vector<16x1xf32> to vector<16x256xf32>
    %8 = arith.addf %5, %7 : vector<16x256xf32>
    %cst = arith.constant 0.000000e+00 : f32
    %9 = vector.broadcast %cst : f32 to vector<16x256xf32>
    %10 = arith.maximumf %8, %9 : vector<16x256xf32>
    %11 = vector.broadcast %0 : vector<1x256xf32> to vector<16x256xf32>
    %12 = arith.mulf %10, %11 : vector<16x256xf32>
    %c0_7 = arith.constant 0 : index
    %c0_8 = arith.constant 0 : index
    %13 = vector.load %arg9[%c0_7, %c0_8] : memref<16x256xf32, #tpu.memory_space<vmem>>, vector<16x256xf32>
    tpu.vector_store %arg9[%c0_7, %c0_8], %12 {strides = array<i32>} : memref<16x256xf32, #tpu.memory_space<vmem>>, vector<16x256xf32>,
    %c0_9 = arith.constant 0 : index
    %c0_10 = arith.constant 0 : index
    %14 = vector.load %arg9[%c0_9, %c0_10] : memref<16x256xf32, #tpu.memory_space<vmem>>, vector<16x256xf32>
    %15 = arith.truncf %14 : vector<16x256xf32> to vector<16x256xbf16>
    %c0_11 = arith.constant 0 : index
    %c0_12 = arith.constant 0 : index
    %16 = vector.load %arg1[%c0_11, %c0_12] : memref<32x16xbf16, #tpu.memory_space<vmem>>, vector<32x16xbf16>
    %cst_13 = arith.constant dense<0.000000e+00> : vector<32x256xf32>
    %17 = tpu.matmul %16, %15, %cst_13 {dimension_numbers = #tpu.dot_dimension_numbers<[1], [0], [0], [1], [0, 0, 1, 1], [], []>} : vector<32x16xbf16>, vector<16x256xbf16>, vector<32x256xf32> -> vector<32x256xf32>
    %c0_14 = arith.constant 0 : index
    %c0_15 = arith.constant 0 : index
    %18 = vector.load %arg2[%c0_14, %c0_15] : memref<32x1xf32, #tpu.memory_space<vmem>>, vector<32x1xf32>
    %19 = vector.broadcast %18 : vector<32x1xf32> to vector<32x256xf32>
    %20 = arith.addf %17, %19 : vector<32x256xf32>
    %21 = vector.broadcast %0 : vector<1x256xf32> to vector<32x256xf32>
    %22 = arith.mulf %20, %21 : vector<32x256xf32>
    %cst_16 = arith.constant dense<0.000000e+00> : vector<32xf32>
    %23 = vector.multi_reduction <add>, %22, %cst_16 [1] : vector<32x256xf32> to vector<32xf32>
    %24 = vector.shape_cast %23 : vector<32xf32> to vector<32x1xf32>
    %c0_17 = arith.constant 0 : index
    %c0_18 = arith.constant 0 : index
    %25 = vector.load %arg7[%c0_17, %c0_18] : memref<32x1xf32, #tpu.memory_space<vmem>>, vector<32x1xf32>
    tpu.vector_store %arg7[%c0_17, %c0_18], %24 {strides = array<i32>} : memref<32x1xf32, #tpu.memory_space<vmem>>, vector<32x1xf32>,
    %26 = arith.mulf %22, %22 : vector<32x256xf32>
    %cst_19 = arith.constant dense<0.000000e+00> : vector<32xf32>
    %27 = vector.multi_reduction <add>, %26, %cst_19 [1] : vector<32x256xf32> to vector<32xf32>
    %28 = vector.shape_cast %27 : vector<32xf32> to vector<32x1xf32>
    %c0_20 = arith.constant 0 : index
    %c0_21 = arith.constant 0 : index
    %29 = vector.load %arg8[%c0_20, %c0_21] : memref<32x1xf32, #tpu.memory_space<vmem>>, vector<32x1xf32>
    tpu.vector_store %arg8[%c0_20, %c0_21], %28 {strides = array<i32>} : memref<32x1xf32, #tpu.memory_space<vmem>>, vector<32x1xf32>,
    %30 = arith.truncf %22 : vector<32x256xf32> to vector<32x256xbf16>
    %c0_22 = arith.constant 0 : index
    %c0_23 = arith.constant 0 : index
    %31 = vector.load %arg6[%c0_22, %c0_23] : memref<32x256xbf16, #tpu.memory_space<vmem>>, vector<32x256xbf16>
    tpu.vector_store %arg6[%c0_22, %c0_23], %30 {strides = array<i32>} : memref<32x256xbf16, #tpu.memory_space<vmem>>, vector<32x256xbf16>,
    return
  }
}

module attributes {stable_mosaic.version = 11 : i64} {
  func.func @_conv_kernel(%arg0: memref<16x256xbf16, #tpu.memory_space<vmem>>, %arg1: memref<16x256xbf16, #tpu.memory_space<vmem>>, %arg2: memref<16x288xbf16, #tpu.memory_space<vmem>>, %arg3: memref<16x1xf32, #tpu.memory_space<vmem>>, %arg4: memref<16x1xf32, #tpu.memory_space<vmem>>, %arg5: memref<16x1xf32, #tpu.memory_space<vmem>>, %arg6: memref<16x1xf32, #tpu.memory_space<vmem>>, %arg7: memref<16x1xf32, #tpu.memory_space<vmem>>, %arg8: memref<1x256xf32, #tpu.memory_space<vmem>>, %arg9: memref<16x256xbf16, #tpu.memory_space<vmem>>, %arg10: memref<16x1xf32, #tpu.memory_space<vmem>>, %arg11: memref<16x1xf32, #tpu.memory_space<vmem>>, %arg12: memref<288x256xf32, #tpu.memory_space<vmem>>) attributes {dimension_semantics = [], scalar_prefetch = 0 : i64, scratch_operands = 1 : i64, tpu.core_type = #tpu.core_type<tc>} {
    %c0 = arith.constant 0 : index
    %c0_0 = arith.constant 0 : index
    %0 = vector.load %arg8[%c0, %c0_0] : memref<1x256xf32, #tpu.memory_space<vmem>>, vector<1x256xf32>
    %c0_1 = arith.constant 0 : index
    %c0_2 = arith.constant 0 : index
    %1 = vector.load %arg0[%c0_1, %c0_2] : memref<16x256xbf16, #tpu.memory_space<vmem>>, vector<16x256xbf16>
    %2 = arith.extf %1 : vector<16x256xbf16> to vector<16x256xf32>
    %c0_3 = arith.constant 0 : index
    %c0_4 = arith.constant 0 : index
    %3 = vector.load %arg4[%c0_3, %c0_4] : memref<16x1xf32, #tpu.memory_space<vmem>>, vector<16x1xf32>
    %4 = vector.broadcast %3 : vector<16x1xf32> to vector<16x256xf32>
    %5 = arith.mulf %2, %4 : vector<16x256xf32>
    %c0_5 = arith.constant 0 : index
    %c0_6 = arith.constant 0 : index
    %6 = vector.load %arg5[%c0_5, %c0_6] : memref<16x1xf32, #tpu.memory_space<vmem>>, vector<16x1xf32>
    %7 = vector.broadcast %6 : vector<16x1xf32> to vector<16x256xf32>
    %8 = arith.addf %5, %7 : vector<16x256xf32>
    %cst = arith.constant 0.000000e+00 : f32
    %9 = vector.broadcast %cst : f32 to vector<16x256xf32>
    %10 = arith.maximumf %8, %9 : vector<16x256xf32>
    %11 = vector.broadcast %0 : vector<1x256xf32> to vector<16x256xf32>
    %12 = arith.mulf %10, %11 : vector<16x256xf32>
    %c11_i32 = arith.constant 11 : i32
    %13 = tpu.dynamic_rotate %12 by %c11_i32 dim 1 : vector<16x256xf32>, i32 -> vector<16x256xf32>
    %c0_7 = arith.constant 0 : index
    %c0_8 = arith.constant 0 : index
    %14 = vector.load %arg12[%c0_7, %c0_8] : memref<288x256xf32, #tpu.memory_space<vmem>>, vector<16x256xf32>
    tpu.vector_store %arg12[%c0_7, %c0_8], %13 {strides = array<i32>} : memref<288x256xf32, #tpu.memory_space<vmem>>, vector<16x256xf32>,
    %c10_i32 = arith.constant 10 : i32
    %15 = tpu.dynamic_rotate %12 by %c10_i32 dim 1 : vector<16x256xf32>, i32 -> vector<16x256xf32>
    %c32 = arith.constant 32 : index
    %c0_9 = arith.constant 0 : index
    %16 = vector.load %arg12[%c32, %c0_9] : memref<288x256xf32, #tpu.memory_space<vmem>>, vector<16x256xf32>
    tpu.vector_store %arg12[%c32, %c0_9], %15 {strides = array<i32>} : memref<288x256xf32, #tpu.memory_space<vmem>>, vector<16x256xf32>,
    %c9_i32 = arith.constant 9 : i32
    %17 = tpu.dynamic_rotate %12 by %c9_i32 dim 1 : vector<16x256xf32>, i32 -> vector<16x256xf32>
    %c64 = arith.constant 64 : index
    %c0_10 = arith.constant 0 : index
    %18 = vector.load %arg12[%c64, %c0_10] : memref<288x256xf32, #tpu.memory_space<vmem>>, vector<16x256xf32>
    tpu.vector_store %arg12[%c64, %c0_10], %17 {strides = array<i32>} : memref<288x256xf32, #tpu.memory_space<vmem>>, vector<16x256xf32>,
    %c1_i32 = arith.constant 1 : i32
    %19 = tpu.dynamic_rotate %12 by %c1_i32 dim 1 : vector<16x256xf32>, i32 -> vector<16x256xf32>
    %c96 = arith.constant 96 : index
    %c0_11 = arith.constant 0 : index
    %20 = vector.load %arg12[%c96, %c0_11] : memref<288x256xf32, #tpu.memory_space<vmem>>, vector<16x256xf32>
    tpu.vector_store %arg12[%c96, %c0_11], %19 {strides = array<i32>} : memref<288x256xf32, #tpu.memory_space<vmem>>, vector<16x256xf32>,
    %c128 = arith.constant 128 : index
    %c0_12 = arith.constant 0 : index
    %21 = vector.load %arg12[%c128, %c0_12] : memref<288x256xf32, #tpu.memory_space<vmem>>, vector<16x256xf32>
    tpu.vector_store %arg12[%c128, %c0_12], %12 {strides = array<i32>} : memref<288x256xf32, #tpu.memory_space<vmem>>, vector<16x256xf32>,
    %c255_i32 = arith.constant 255 : i32
    %22 = tpu.dynamic_rotate %12 by %c255_i32 dim 1 : vector<16x256xf32>, i32 -> vector<16x256xf32>
    %c160 = arith.constant 160 : index
    %c0_13 = arith.constant 0 : index
    %23 = vector.load %arg12[%c160, %c0_13] : memref<288x256xf32, #tpu.memory_space<vmem>>, vector<16x256xf32>
    tpu.vector_store %arg12[%c160, %c0_13], %22 {strides = array<i32>} : memref<288x256xf32, #tpu.memory_space<vmem>>, vector<16x256xf32>,
    %c247_i32 = arith.constant 247 : i32
    %24 = tpu.dynamic_rotate %12 by %c247_i32 dim 1 : vector<16x256xf32>, i32 -> vector<16x256xf32>
    %c192 = arith.constant 192 : index
    %c0_14 = arith.constant 0 : index
    %25 = vector.load %arg12[%c192, %c0_14] : memref<288x256xf32, #tpu.memory_space<vmem>>, vector<16x256xf32>
    tpu.vector_store %arg12[%c192, %c0_14], %24 {strides = array<i32>} : memref<288x256xf32, #tpu.memory_space<vmem>>, vector<16x256xf32>,
    %c246_i32 = arith.constant 246 : i32
    %26 = tpu.dynamic_rotate %12 by %c246_i32 dim 1 : vector<16x256xf32>, i32 -> vector<16x256xf32>
    %c224 = arith.constant 224 : index
    %c0_15 = arith.constant 0 : index
    %27 = vector.load %arg12[%c224, %c0_15] : memref<288x256xf32, #tpu.memory_space<vmem>>, vector<16x256xf32>
    tpu.vector_store %arg12[%c224, %c0_15], %26 {strides = array<i32>} : memref<288x256xf32, #tpu.memory_space<vmem>>, vector<16x256xf32>,
    %c245_i32 = arith.constant 245 : i32
    %28 = tpu.dynamic_rotate %12 by %c245_i32 dim 1 : vector<16x256xf32>, i32 -> vector<16x256xf32>
    %c256 = arith.constant 256 : index
    %c0_16 = arith.constant 0 : index
    %29 = vector.load %arg12[%c256, %c0_16] : memref<288x256xf32, #tpu.memory_space<vmem>>, vector<16x256xf32>
    tpu.vector_store %arg12[%c256, %c0_16], %28 {strides = array<i32>} : memref<288x256xf32, #tpu.memory_space<vmem>>, vector<16x256xf32>,
    %c0_17 = arith.constant 0 : index
    %c0_18 = arith.constant 0 : index
    %30 = vector.load %arg1[%c0_17, %c0_18] : memref<16x256xbf16, #tpu.memory_space<vmem>>, vector<16x256xbf16>
    %31 = arith.extf %30 : vector<16x256xbf16> to vector<16x256xf32>
    %c0_19 = arith.constant 0 : index
    %c0_20 = arith.constant 0 : index
    %32 = vector.load %arg6[%c0_19, %c0_20] : memref<16x1xf32, #tpu.memory_space<vmem>>, vector<16x1xf32>
    %33 = vector.broadcast %32 : vector<16x1xf32> to vector<16x256xf32>
    %34 = arith.mulf %31, %33 : vector<16x256xf32>
    %c0_21 = arith.constant 0 : index
    %c0_22 = arith.constant 0 : index
    %35 = vector.load %arg7[%c0_21, %c0_22] : memref<16x1xf32, #tpu.memory_space<vmem>>, vector<16x1xf32>
    %36 = vector.broadcast %35 : vector<16x1xf32> to vector<16x256xf32>
    %37 = arith.addf %34, %36 : vector<16x256xf32>
    %cst_23 = arith.constant 0.000000e+00 : f32
    %38 = vector.broadcast %cst_23 : f32 to vector<16x256xf32>
    %39 = arith.maximumf %37, %38 : vector<16x256xf32>
    %40 = vector.broadcast %0 : vector<1x256xf32> to vector<16x256xf32>
    %41 = arith.mulf %39, %40 : vector<16x256xf32>
    %c11_i32_24 = arith.constant 11 : i32
    %42 = tpu.dynamic_rotate %41 by %c11_i32_24 dim 1 : vector<16x256xf32>, i32 -> vector<16x256xf32>
    %c16 = arith.constant 16 : index
    %c0_25 = arith.constant 0 : index
    %43 = vector.load %arg12[%c16, %c0_25] : memref<288x256xf32, #tpu.memory_space<vmem>>, vector<16x256xf32>
    tpu.vector_store %arg12[%c16, %c0_25], %42 {strides = array<i32>} : memref<288x256xf32, #tpu.memory_space<vmem>>, vector<16x256xf32>,
    %c10_i32_26 = arith.constant 10 : i32
    %44 = tpu.dynamic_rotate %41 by %c10_i32_26 dim 1 : vector<16x256xf32>, i32 -> vector<16x256xf32>
    %c48 = arith.constant 48 : index
    %c0_27 = arith.constant 0 : index
    %45 = vector.load %arg12[%c48, %c0_27] : memref<288x256xf32, #tpu.memory_space<vmem>>, vector<16x256xf32>
    tpu.vector_store %arg12[%c48, %c0_27], %44 {strides = array<i32>} : memref<288x256xf32, #tpu.memory_space<vmem>>, vector<16x256xf32>,
    %c9_i32_28 = arith.constant 9 : i32
    %46 = tpu.dynamic_rotate %41 by %c9_i32_28 dim 1 : vector<16x256xf32>, i32 -> vector<16x256xf32>
    %c80 = arith.constant 80 : index
    %c0_29 = arith.constant 0 : index
    %47 = vector.load %arg12[%c80, %c0_29] : memref<288x256xf32, #tpu.memory_space<vmem>>, vector<16x256xf32>
    tpu.vector_store %arg12[%c80, %c0_29], %46 {strides = array<i32>} : memref<288x256xf32, #tpu.memory_space<vmem>>, vector<16x256xf32>,
    %c1_i32_30 = arith.constant 1 : i32
    %48 = tpu.dynamic_rotate %41 by %c1_i32_30 dim 1 : vector<16x256xf32>, i32 -> vector<16x256xf32>
    %c112 = arith.constant 112 : index
    %c0_31 = arith.constant 0 : index
    %49 = vector.load %arg12[%c112, %c0_31] : memref<288x256xf32, #tpu.memory_space<vmem>>, vector<16x256xf32>
    tpu.vector_store %arg12[%c112, %c0_31], %48 {strides = array<i32>} : memref<288x256xf32, #tpu.memory_space<vmem>>, vector<16x256xf32>,
    %c144 = arith.constant 144 : index
    %c0_32 = arith.constant 0 : index
    %50 = vector.load %arg12[%c144, %c0_32] : memref<288x256xf32, #tpu.memory_space<vmem>>, vector<16x256xf32>
    tpu.vector_store %arg12[%c144, %c0_32], %41 {strides = array<i32>} : memref<288x256xf32, #tpu.memory_space<vmem>>, vector<16x256xf32>,
    %c255_i32_33 = arith.constant 255 : i32
    %51 = tpu.dynamic_rotate %41 by %c255_i32_33 dim 1 : vector<16x256xf32>, i32 -> vector<16x256xf32>
    %c176 = arith.constant 176 : index
    %c0_34 = arith.constant 0 : index
    %52 = vector.load %arg12[%c176, %c0_34] : memref<288x256xf32, #tpu.memory_space<vmem>>, vector<16x256xf32>
    tpu.vector_store %arg12[%c176, %c0_34], %51 {strides = array<i32>} : memref<288x256xf32, #tpu.memory_space<vmem>>, vector<16x256xf32>,
    %c247_i32_35 = arith.constant 247 : i32
    %53 = tpu.dynamic_rotate %41 by %c247_i32_35 dim 1 : vector<16x256xf32>, i32 -> vector<16x256xf32>
    %c208 = arith.constant 208 : index
    %c0_36 = arith.constant 0 : index
    %54 = vector.load %arg12[%c208, %c0_36] : memref<288x256xf32, #tpu.memory_space<vmem>>, vector<16x256xf32>
    tpu.vector_store %arg12[%c208, %c0_36], %53 {strides = array<i32>} : memref<288x256xf32, #tpu.memory_space<vmem>>, vector<16x256xf32>,
    %c246_i32_37 = arith.constant 246 : i32
    %55 = tpu.dynamic_rotate %41 by %c246_i32_37 dim 1 : vector<16x256xf32>, i32 -> vector<16x256xf32>
    %c240 = arith.constant 240 : index
    %c0_38 = arith.constant 0 : index
    %56 = vector.load %arg12[%c240, %c0_38] : memref<288x256xf32, #tpu.memory_space<vmem>>, vector<16x256xf32>
    tpu.vector_store %arg12[%c240, %c0_38], %55 {strides = array<i32>} : memref<288x256xf32, #tpu.memory_space<vmem>>, vector<16x256xf32>,
    %c245_i32_39 = arith.constant 245 : i32
    %57 = tpu.dynamic_rotate %41 by %c245_i32_39 dim 1 : vector<16x256xf32>, i32 -> vector<16x256xf32>
    %c272 = arith.constant 272 : index
    %c0_40 = arith.constant 0 : index
    %58 = vector.load %arg12[%c272, %c0_40] : memref<288x256xf32, #tpu.memory_space<vmem>>, vector<16x256xf32>
    tpu.vector_store %arg12[%c272, %c0_40], %57 {strides = array<i32>} : memref<288x256xf32, #tpu.memory_space<vmem>>, vector<16x256xf32>,
    %c0_41 = arith.constant 0 : index
    %c0_42 = arith.constant 0 : index
    %59 = vector.load %arg12[%c0_41, %c0_42] : memref<288x256xf32, #tpu.memory_space<vmem>>, vector<288x256xf32>
    %60 = arith.truncf %59 : vector<288x256xf32> to vector<288x256xbf16>
    %c0_43 = arith.constant 0 : index
    %c0_44 = arith.constant 0 : index
    %61 = vector.load %arg2[%c0_43, %c0_44] : memref<16x288xbf16, #tpu.memory_space<vmem>>, vector<16x288xbf16>
    %cst_45 = arith.constant dense<0.000000e+00> : vector<16x256xf32>
    %62 = tpu.matmul %61, %60, %cst_45 {dimension_numbers = #tpu.dot_dimension_numbers<[1], [0], [0], [1], [0, 0, 1, 1], [], []>} : vector<16x288xbf16>, vector<288x256xbf16>, vector<16x256xf32> -> vector<16x256xf32>
    %c0_46 = arith.constant 0 : index
    %c0_47 = arith.constant 0 : index
    %63 = vector.load %arg3[%c0_46, %c0_47] : memref<16x1xf32, #tpu.memory_space<vmem>>, vector<16x1xf32>
    %64 = vector.broadcast %63 : vector<16x1xf32> to vector<16x256xf32>
    %65 = arith.addf %62, %64 : vector<16x256xf32>
    %66 = vector.broadcast %0 : vector<1x256xf32> to vector<16x256xf32>
    %67 = arith.mulf %65, %66 : vector<16x256xf32>
    %cst_48 = arith.constant dense<0.000000e+00> : vector<16xf32>
    %68 = vector.multi_reduction <add>, %67, %cst_48 [1] : vector<16x256xf32> to vector<16xf32>
    %69 = vector.shape_cast %68 : vector<16xf32> to vector<16x1xf32>
    %c0_49 = arith.constant 0 : index
    %c0_50 = arith.constant 0 : index
    %70 = vector.load %arg10[%c0_49, %c0_50] : memref<16x1xf32, #tpu.memory_space<vmem>>, vector<16x1xf32>
    tpu.vector_store %arg10[%c0_49, %c0_50], %69 {strides = array<i32>} : memref<16x1xf32, #tpu.memory_space<vmem>>, vector<16x1xf32>,
    %71 = arith.mulf %67, %67 : vector<16x256xf32>
    %cst_51 = arith.constant dense<0.000000e+00> : vector<16xf32>
    %72 = vector.multi_reduction <add>, %71, %cst_51 [1] : vector<16x256xf32> to vector<16xf32>
    %73 = vector.shape_cast %72 : vector<16xf32> to vector<16x1xf32>
    %c0_52 = arith.constant 0 : index
    %c0_53 = arith.constant 0 : index
    %74 = vector.load %arg11[%c0_52, %c0_53] : memref<16x1xf32, #tpu.memory_space<vmem>>, vector<16x1xf32>
    tpu.vector_store %arg11[%c0_52, %c0_53], %73 {strides = array<i32>} : memref<16x1xf32, #tpu.memory_space<vmem>>, vector<16x1xf32>,
    %75 = arith.truncf %67 : vector<16x256xf32> to vector<16x256xbf16>
    %c0_54 = arith.constant 0 : index
    %c0_55 = arith.constant 0 : index
    %76 = vector.load %arg9[%c0_54, %c0_55] : memref<16x256xbf16, #tpu.memory_space<vmem>>, vector<16x256xbf16>
    tpu.vector_store %arg9[%c0_54, %c0_55], %75 {strides = array<i32>} : memref<16x256xbf16, #tpu.memory_space<vmem>>, vector<16x256xbf16>,
    return
  }
}

module attributes {stable_mosaic.version = 11 : i64} {
  func.func @_conv_kernel(%arg0: memref<8x768xbf16, #tpu.memory_space<vmem>>, %arg1: memref<8x768xbf16, #tpu.memory_space<vmem>>, %arg2: memref<8x144xbf16, #tpu.memory_space<vmem>>, %arg3: memref<8x1xf32, #tpu.memory_space<vmem>>, %arg4: memref<8x1xf32, #tpu.memory_space<vmem>>, %arg5: memref<8x1xf32, #tpu.memory_space<vmem>>, %arg6: memref<8x1xf32, #tpu.memory_space<vmem>>, %arg7: memref<8x1xf32, #tpu.memory_space<vmem>>, %arg8: memref<1x768xf32, #tpu.memory_space<vmem>>, %arg9: memref<8x768xbf16, #tpu.memory_space<vmem>>, %arg10: memref<8x1xf32, #tpu.memory_space<vmem>>, %arg11: memref<8x1xf32, #tpu.memory_space<vmem>>, %arg12: memref<144x768xf32, #tpu.memory_space<vmem>>) attributes {dimension_semantics = [], scalar_prefetch = 0 : i64, scratch_operands = 1 : i64, tpu.core_type = #tpu.core_type<tc>} {
    %c0 = arith.constant 0 : index
    %c0_0 = arith.constant 0 : index
    %0 = vector.load %arg8[%c0, %c0_0] : memref<1x768xf32, #tpu.memory_space<vmem>>, vector<1x768xf32>
    %c0_1 = arith.constant 0 : index
    %c0_2 = arith.constant 0 : index
    %1 = vector.load %arg0[%c0_1, %c0_2] : memref<8x768xbf16, #tpu.memory_space<vmem>>, vector<8x768xbf16>
    %2 = arith.extf %1 : vector<8x768xbf16> to vector<8x768xf32>
    %c0_3 = arith.constant 0 : index
    %c0_4 = arith.constant 0 : index
    %3 = vector.load %arg4[%c0_3, %c0_4] : memref<8x1xf32, #tpu.memory_space<vmem>>, vector<8x1xf32>
    %4 = vector.broadcast %3 : vector<8x1xf32> to vector<8x768xf32>
    %5 = arith.mulf %2, %4 : vector<8x768xf32>
    %c0_5 = arith.constant 0 : index
    %c0_6 = arith.constant 0 : index
    %6 = vector.load %arg5[%c0_5, %c0_6] : memref<8x1xf32, #tpu.memory_space<vmem>>, vector<8x1xf32>
    %7 = vector.broadcast %6 : vector<8x1xf32> to vector<8x768xf32>
    %8 = arith.addf %5, %7 : vector<8x768xf32>
    %cst = arith.constant 0.000000e+00 : f32
    %9 = vector.broadcast %cst : f32 to vector<8x768xf32>
    %10 = arith.maximumf %8, %9 : vector<8x768xf32>
    %11 = vector.broadcast %0 : vector<1x768xf32> to vector<8x768xf32>
    %12 = arith.mulf %10, %11 : vector<8x768xf32>
    %c19_i32 = arith.constant 19 : i32
    %13 = tpu.dynamic_rotate %12 by %c19_i32 dim 1 : vector<8x768xf32>, i32 -> vector<8x768xf32>
    %c0_7 = arith.constant 0 : index
    %c0_8 = arith.constant 0 : index
    %14 = vector.load %arg12[%c0_7, %c0_8] : memref<144x768xf32, #tpu.memory_space<vmem>>, vector<8x768xf32>
    tpu.vector_store %arg12[%c0_7, %c0_8], %13 {strides = array<i32>} : memref<144x768xf32, #tpu.memory_space<vmem>>, vector<8x768xf32>,
    %c18_i32 = arith.constant 18 : i32
    %15 = tpu.dynamic_rotate %12 by %c18_i32 dim 1 : vector<8x768xf32>, i32 -> vector<8x768xf32>
    %c16 = arith.constant 16 : index
    %c0_9 = arith.constant 0 : index
    %16 = vector.load %arg12[%c16, %c0_9] : memref<144x768xf32, #tpu.memory_space<vmem>>, vector<8x768xf32>
    tpu.vector_store %arg12[%c16, %c0_9], %15 {strides = array<i32>} : memref<144x768xf32, #tpu.memory_space<vmem>>, vector<8x768xf32>,
    %c17_i32 = arith.constant 17 : i32
    %17 = tpu.dynamic_rotate %12 by %c17_i32 dim 1 : vector<8x768xf32>, i32 -> vector<8x768xf32>
    %c32 = arith.constant 32 : index
    %c0_10 = arith.constant 0 : index
    %18 = vector.load %arg12[%c32, %c0_10] : memref<144x768xf32, #tpu.memory_space<vmem>>, vector<8x768xf32>
    tpu.vector_store %arg12[%c32, %c0_10], %17 {strides = array<i32>} : memref<144x768xf32, #tpu.memory_space<vmem>>, vector<8x768xf32>,
    %c1_i32 = arith.constant 1 : i32
    %19 = tpu.dynamic_rotate %12 by %c1_i32 dim 1 : vector<8x768xf32>, i32 -> vector<8x768xf32>
    %c48 = arith.constant 48 : index
    %c0_11 = arith.constant 0 : index
    %20 = vector.load %arg12[%c48, %c0_11] : memref<144x768xf32, #tpu.memory_space<vmem>>, vector<8x768xf32>
    tpu.vector_store %arg12[%c48, %c0_11], %19 {strides = array<i32>} : memref<144x768xf32, #tpu.memory_space<vmem>>, vector<8x768xf32>,
    %c64 = arith.constant 64 : index
    %c0_12 = arith.constant 0 : index
    %21 = vector.load %arg12[%c64, %c0_12] : memref<144x768xf32, #tpu.memory_space<vmem>>, vector<8x768xf32>
    tpu.vector_store %arg12[%c64, %c0_12], %12 {strides = array<i32>} : memref<144x768xf32, #tpu.memory_space<vmem>>, vector<8x768xf32>,
    %c767_i32 = arith.constant 767 : i32
    %22 = tpu.dynamic_rotate %12 by %c767_i32 dim 1 : vector<8x768xf32>, i32 -> vector<8x768xf32>
    %c80 = arith.constant 80 : index
    %c0_13 = arith.constant 0 : index
    %23 = vector.load %arg12[%c80, %c0_13] : memref<144x768xf32, #tpu.memory_space<vmem>>, vector<8x768xf32>
    tpu.vector_store %arg12[%c80, %c0_13], %22 {strides = array<i32>} : memref<144x768xf32, #tpu.memory_space<vmem>>, vector<8x768xf32>,
    %c751_i32 = arith.constant 751 : i32
    %24 = tpu.dynamic_rotate %12 by %c751_i32 dim 1 : vector<8x768xf32>, i32 -> vector<8x768xf32>
    %c96 = arith.constant 96 : index
    %c0_14 = arith.constant 0 : index
    %25 = vector.load %arg12[%c96, %c0_14] : memref<144x768xf32, #tpu.memory_space<vmem>>, vector<8x768xf32>
    tpu.vector_store %arg12[%c96, %c0_14], %24 {strides = array<i32>} : memref<144x768xf32, #tpu.memory_space<vmem>>, vector<8x768xf32>,
    %c750_i32 = arith.constant 750 : i32
    %26 = tpu.dynamic_rotate %12 by %c750_i32 dim 1 : vector<8x768xf32>, i32 -> vector<8x768xf32>
    %c112 = arith.constant 112 : index
    %c0_15 = arith.constant 0 : index
    %27 = vector.load %arg12[%c112, %c0_15] : memref<144x768xf32, #tpu.memory_space<vmem>>, vector<8x768xf32>
    tpu.vector_store %arg12[%c112, %c0_15], %26 {strides = array<i32>} : memref<144x768xf32, #tpu.memory_space<vmem>>, vector<8x768xf32>,
    %c749_i32 = arith.constant 749 : i32
    %28 = tpu.dynamic_rotate %12 by %c749_i32 dim 1 : vector<8x768xf32>, i32 -> vector<8x768xf32>
    %c128 = arith.constant 128 : index
    %c0_16 = arith.constant 0 : index
    %29 = vector.load %arg12[%c128, %c0_16] : memref<144x768xf32, #tpu.memory_space<vmem>>, vector<8x768xf32>
    tpu.vector_store %arg12[%c128, %c0_16], %28 {strides = array<i32>} : memref<144x768xf32, #tpu.memory_space<vmem>>, vector<8x768xf32>,
    %c0_17 = arith.constant 0 : index
    %c0_18 = arith.constant 0 : index
    %30 = vector.load %arg1[%c0_17, %c0_18] : memref<8x768xbf16, #tpu.memory_space<vmem>>, vector<8x768xbf16>
    %31 = arith.extf %30 : vector<8x768xbf16> to vector<8x768xf32>
    %c0_19 = arith.constant 0 : index
    %c0_20 = arith.constant 0 : index
    %32 = vector.load %arg6[%c0_19, %c0_20] : memref<8x1xf32, #tpu.memory_space<vmem>>, vector<8x1xf32>
    %33 = vector.broadcast %32 : vector<8x1xf32> to vector<8x768xf32>
    %34 = arith.mulf %31, %33 : vector<8x768xf32>
    %c0_21 = arith.constant 0 : index
    %c0_22 = arith.constant 0 : index
    %35 = vector.load %arg7[%c0_21, %c0_22] : memref<8x1xf32, #tpu.memory_space<vmem>>, vector<8x1xf32>
    %36 = vector.broadcast %35 : vector<8x1xf32> to vector<8x768xf32>
    %37 = arith.addf %34, %36 : vector<8x768xf32>
    %cst_23 = arith.constant 0.000000e+00 : f32
    %38 = vector.broadcast %cst_23 : f32 to vector<8x768xf32>
    %39 = arith.maximumf %37, %38 : vector<8x768xf32>
    %40 = vector.broadcast %0 : vector<1x768xf32> to vector<8x768xf32>
    %41 = arith.mulf %39, %40 : vector<8x768xf32>
    %c19_i32_24 = arith.constant 19 : i32
    %42 = tpu.dynamic_rotate %41 by %c19_i32_24 dim 1 : vector<8x768xf32>, i32 -> vector<8x768xf32>
    %c8 = arith.constant 8 : index
    %c0_25 = arith.constant 0 : index
    %43 = vector.load %arg12[%c8, %c0_25] : memref<144x768xf32, #tpu.memory_space<vmem>>, vector<8x768xf32>
    tpu.vector_store %arg12[%c8, %c0_25], %42 {strides = array<i32>} : memref<144x768xf32, #tpu.memory_space<vmem>>, vector<8x768xf32>,
    %c18_i32_26 = arith.constant 18 : i32
    %44 = tpu.dynamic_rotate %41 by %c18_i32_26 dim 1 : vector<8x768xf32>, i32 -> vector<8x768xf32>
    %c24 = arith.constant 24 : index
    %c0_27 = arith.constant 0 : index
    %45 = vector.load %arg12[%c24, %c0_27] : memref<144x768xf32, #tpu.memory_space<vmem>>, vector<8x768xf32>
    tpu.vector_store %arg12[%c24, %c0_27], %44 {strides = array<i32>} : memref<144x768xf32, #tpu.memory_space<vmem>>, vector<8x768xf32>,
    %c17_i32_28 = arith.constant 17 : i32
    %46 = tpu.dynamic_rotate %41 by %c17_i32_28 dim 1 : vector<8x768xf32>, i32 -> vector<8x768xf32>
    %c40 = arith.constant 40 : index
    %c0_29 = arith.constant 0 : index
    %47 = vector.load %arg12[%c40, %c0_29] : memref<144x768xf32, #tpu.memory_space<vmem>>, vector<8x768xf32>
    tpu.vector_store %arg12[%c40, %c0_29], %46 {strides = array<i32>} : memref<144x768xf32, #tpu.memory_space<vmem>>, vector<8x768xf32>,
    %c1_i32_30 = arith.constant 1 : i32
    %48 = tpu.dynamic_rotate %41 by %c1_i32_30 dim 1 : vector<8x768xf32>, i32 -> vector<8x768xf32>
    %c56 = arith.constant 56 : index
    %c0_31 = arith.constant 0 : index
    %49 = vector.load %arg12[%c56, %c0_31] : memref<144x768xf32, #tpu.memory_space<vmem>>, vector<8x768xf32>
    tpu.vector_store %arg12[%c56, %c0_31], %48 {strides = array<i32>} : memref<144x768xf32, #tpu.memory_space<vmem>>, vector<8x768xf32>,
    %c72 = arith.constant 72 : index
    %c0_32 = arith.constant 0 : index
    %50 = vector.load %arg12[%c72, %c0_32] : memref<144x768xf32, #tpu.memory_space<vmem>>, vector<8x768xf32>
    tpu.vector_store %arg12[%c72, %c0_32], %41 {strides = array<i32>} : memref<144x768xf32, #tpu.memory_space<vmem>>, vector<8x768xf32>,
    %c767_i32_33 = arith.constant 767 : i32
    %51 = tpu.dynamic_rotate %41 by %c767_i32_33 dim 1 : vector<8x768xf32>, i32 -> vector<8x768xf32>
    %c88 = arith.constant 88 : index
    %c0_34 = arith.constant 0 : index
    %52 = vector.load %arg12[%c88, %c0_34] : memref<144x768xf32, #tpu.memory_space<vmem>>, vector<8x768xf32>
    tpu.vector_store %arg12[%c88, %c0_34], %51 {strides = array<i32>} : memref<144x768xf32, #tpu.memory_space<vmem>>, vector<8x768xf32>,
    %c751_i32_35 = arith.constant 751 : i32
    %53 = tpu.dynamic_rotate %41 by %c751_i32_35 dim 1 : vector<8x768xf32>, i32 -> vector<8x768xf32>
    %c104 = arith.constant 104 : index
    %c0_36 = arith.constant 0 : index
    %54 = vector.load %arg12[%c104, %c0_36] : memref<144x768xf32, #tpu.memory_space<vmem>>, vector<8x768xf32>
    tpu.vector_store %arg12[%c104, %c0_36], %53 {strides = array<i32>} : memref<144x768xf32, #tpu.memory_space<vmem>>, vector<8x768xf32>,
    %c750_i32_37 = arith.constant 750 : i32
    %55 = tpu.dynamic_rotate %41 by %c750_i32_37 dim 1 : vector<8x768xf32>, i32 -> vector<8x768xf32>
    %c120 = arith.constant 120 : index
    %c0_38 = arith.constant 0 : index
    %56 = vector.load %arg12[%c120, %c0_38] : memref<144x768xf32, #tpu.memory_space<vmem>>, vector<8x768xf32>
    tpu.vector_store %arg12[%c120, %c0_38], %55 {strides = array<i32>} : memref<144x768xf32, #tpu.memory_space<vmem>>, vector<8x768xf32>,
    %c749_i32_39 = arith.constant 749 : i32
    %57 = tpu.dynamic_rotate %41 by %c749_i32_39 dim 1 : vector<8x768xf32>, i32 -> vector<8x768xf32>
    %c136 = arith.constant 136 : index
    %c0_40 = arith.constant 0 : index
    %58 = vector.load %arg12[%c136, %c0_40] : memref<144x768xf32, #tpu.memory_space<vmem>>, vector<8x768xf32>
    tpu.vector_store %arg12[%c136, %c0_40], %57 {strides = array<i32>} : memref<144x768xf32, #tpu.memory_space<vmem>>, vector<8x768xf32>,
    %c0_41 = arith.constant 0 : index
    %c0_42 = arith.constant 0 : index
    %59 = vector.load %arg12[%c0_41, %c0_42] : memref<144x768xf32, #tpu.memory_space<vmem>>, vector<144x768xf32>
    %60 = arith.truncf %59 : vector<144x768xf32> to vector<144x768xbf16>
    %c0_43 = arith.constant 0 : index
    %c0_44 = arith.constant 0 : index
    %61 = vector.load %arg2[%c0_43, %c0_44] : memref<8x144xbf16, #tpu.memory_space<vmem>>, vector<8x144xbf16>
    %cst_45 = arith.constant dense<0.000000e+00> : vector<8x768xf32>
    %62 = tpu.matmul %61, %60, %cst_45 {dimension_numbers = #tpu.dot_dimension_numbers<[1], [0], [0], [1], [0, 0, 1, 1], [], []>} : vector<8x144xbf16>, vector<144x768xbf16>, vector<8x768xf32> -> vector<8x768xf32>
    %c0_46 = arith.constant 0 : index
    %c0_47 = arith.constant 0 : index
    %63 = vector.load %arg3[%c0_46, %c0_47] : memref<8x1xf32, #tpu.memory_space<vmem>>, vector<8x1xf32>
    %64 = vector.broadcast %63 : vector<8x1xf32> to vector<8x768xf32>
    %65 = arith.addf %62, %64 : vector<8x768xf32>
    %66 = vector.broadcast %0 : vector<1x768xf32> to vector<8x768xf32>
    %67 = arith.mulf %65, %66 : vector<8x768xf32>
    %cst_48 = arith.constant dense<0.000000e+00> : vector<8xf32>
    %68 = vector.multi_reduction <add>, %67, %cst_48 [1] : vector<8x768xf32> to vector<8xf32>
    %69 = vector.shape_cast %68 : vector<8xf32> to vector<8x1xf32>
    %c0_49 = arith.constant 0 : index
    %c0_50 = arith.constant 0 : index
    %70 = vector.load %arg10[%c0_49, %c0_50] : memref<8x1xf32, #tpu.memory_space<vmem>>, vector<8x1xf32>
    tpu.vector_store %arg10[%c0_49, %c0_50], %69 {strides = array<i32>} : memref<8x1xf32, #tpu.memory_space<vmem>>, vector<8x1xf32>,
    %71 = arith.mulf %67, %67 : vector<8x768xf32>
    %cst_51 = arith.constant dense<0.000000e+00> : vector<8xf32>
    %72 = vector.multi_reduction <add>, %71, %cst_51 [1] : vector<8x768xf32> to vector<8xf32>
    %73 = vector.shape_cast %72 : vector<8xf32> to vector<8x1xf32>
    %c0_52 = arith.constant 0 : index
    %c0_53 = arith.constant 0 : index
    %74 = vector.load %arg11[%c0_52, %c0_53] : memref<8x1xf32, #tpu.memory_space<vmem>>, vector<8x1xf32>
    tpu.vector_store %arg11[%c0_52, %c0_53], %73 {strides = array<i32>} : memref<8x1xf32, #tpu.memory_space<vmem>>, vector<8x1xf32>,
    %75 = arith.truncf %67 : vector<8x768xf32> to vector<8x768xbf16>
    %c0_54 = arith.constant 0 : index
    %c0_55 = arith.constant 0 : index
    %76 = vector.load %arg9[%c0_54, %c0_55] : memref<8x768xbf16, #tpu.memory_space<vmem>>, vector<8x768xbf16>
    tpu.vector_store %arg9[%c0_54, %c0_55], %75 {strides = array<i32>} : memref<8x768xbf16, #tpu.memory_space<vmem>>, vector<8x768xbf16>,
    return
  }
}

module attributes {stable_mosaic.version = 11 : i64} {
  func.func @_conv_kernel(%arg0: memref<8x768xbf16, #tpu.memory_space<vmem>>, %arg1: memref<4x72xbf16, #tpu.memory_space<vmem>>, %arg2: memref<4x1xf32, #tpu.memory_space<vmem>>, %arg3: memref<8x1xf32, #tpu.memory_space<vmem>>, %arg4: memref<8x1xf32, #tpu.memory_space<vmem>>, %arg5: memref<1x768xf32, #tpu.memory_space<vmem>>, %arg6: memref<4x768xbf16, #tpu.memory_space<vmem>>, %arg7: memref<4x1xf32, #tpu.memory_space<vmem>>, %arg8: memref<4x1xf32, #tpu.memory_space<vmem>>, %arg9: memref<72x768xf32, #tpu.memory_space<vmem>>) attributes {dimension_semantics = [], scalar_prefetch = 0 : i64, scratch_operands = 1 : i64, tpu.core_type = #tpu.core_type<tc>} {
    %c0 = arith.constant 0 : index
    %c0_0 = arith.constant 0 : index
    %0 = vector.load %arg5[%c0, %c0_0] : memref<1x768xf32, #tpu.memory_space<vmem>>, vector<1x768xf32>
    %c0_1 = arith.constant 0 : index
    %c0_2 = arith.constant 0 : index
    %1 = vector.load %arg0[%c0_1, %c0_2] : memref<8x768xbf16, #tpu.memory_space<vmem>>, vector<8x768xbf16>
    %2 = arith.extf %1 : vector<8x768xbf16> to vector<8x768xf32>
    %c0_3 = arith.constant 0 : index
    %c0_4 = arith.constant 0 : index
    %3 = vector.load %arg3[%c0_3, %c0_4] : memref<8x1xf32, #tpu.memory_space<vmem>>, vector<8x1xf32>
    %4 = vector.broadcast %3 : vector<8x1xf32> to vector<8x768xf32>
    %5 = arith.mulf %2, %4 : vector<8x768xf32>
    %c0_5 = arith.constant 0 : index
    %c0_6 = arith.constant 0 : index
    %6 = vector.load %arg4[%c0_5, %c0_6] : memref<8x1xf32, #tpu.memory_space<vmem>>, vector<8x1xf32>
    %7 = vector.broadcast %6 : vector<8x1xf32> to vector<8x768xf32>
    %8 = arith.addf %5, %7 : vector<8x768xf32>
    %cst = arith.constant 0.000000e+00 : f32
    %9 = vector.broadcast %cst : f32 to vector<8x768xf32>
    %10 = arith.maximumf %8, %9 : vector<8x768xf32>
    %11 = vector.broadcast %0 : vector<1x768xf32> to vector<8x768xf32>
    %12 = arith.mulf %10, %11 : vector<8x768xf32>
    %c19_i32 = arith.constant 19 : i32
    %13 = tpu.dynamic_rotate %12 by %c19_i32 dim 1 : vector<8x768xf32>, i32 -> vector<8x768xf32>
    %c0_7 = arith.constant 0 : index
    %c0_8 = arith.constant 0 : index
    %14 = vector.load %arg9[%c0_7, %c0_8] : memref<72x768xf32, #tpu.memory_space<vmem>>, vector<8x768xf32>
    tpu.vector_store %arg9[%c0_7, %c0_8], %13 {strides = array<i32>} : memref<72x768xf32, #tpu.memory_space<vmem>>, vector<8x768xf32>,
    %c18_i32 = arith.constant 18 : i32
    %15 = tpu.dynamic_rotate %12 by %c18_i32 dim 1 : vector<8x768xf32>, i32 -> vector<8x768xf32>
    %c8 = arith.constant 8 : index
    %c0_9 = arith.constant 0 : index
    %16 = vector.load %arg9[%c8, %c0_9] : memref<72x768xf32, #tpu.memory_space<vmem>>, vector<8x768xf32>
    tpu.vector_store %arg9[%c8, %c0_9], %15 {strides = array<i32>} : memref<72x768xf32, #tpu.memory_space<vmem>>, vector<8x768xf32>,
    %c17_i32 = arith.constant 17 : i32
    %17 = tpu.dynamic_rotate %12 by %c17_i32 dim 1 : vector<8x768xf32>, i32 -> vector<8x768xf32>
    %c16 = arith.constant 16 : index
    %c0_10 = arith.constant 0 : index
    %18 = vector.load %arg9[%c16, %c0_10] : memref<72x768xf32, #tpu.memory_space<vmem>>, vector<8x768xf32>
    tpu.vector_store %arg9[%c16, %c0_10], %17 {strides = array<i32>} : memref<72x768xf32, #tpu.memory_space<vmem>>, vector<8x768xf32>,
    %c1_i32 = arith.constant 1 : i32
    %19 = tpu.dynamic_rotate %12 by %c1_i32 dim 1 : vector<8x768xf32>, i32 -> vector<8x768xf32>
    %c24 = arith.constant 24 : index
    %c0_11 = arith.constant 0 : index
    %20 = vector.load %arg9[%c24, %c0_11] : memref<72x768xf32, #tpu.memory_space<vmem>>, vector<8x768xf32>
    tpu.vector_store %arg9[%c24, %c0_11], %19 {strides = array<i32>} : memref<72x768xf32, #tpu.memory_space<vmem>>, vector<8x768xf32>,
    %c32 = arith.constant 32 : index
    %c0_12 = arith.constant 0 : index
    %21 = vector.load %arg9[%c32, %c0_12] : memref<72x768xf32, #tpu.memory_space<vmem>>, vector<8x768xf32>
    tpu.vector_store %arg9[%c32, %c0_12], %12 {strides = array<i32>} : memref<72x768xf32, #tpu.memory_space<vmem>>, vector<8x768xf32>,
    %c767_i32 = arith.constant 767 : i32
    %22 = tpu.dynamic_rotate %12 by %c767_i32 dim 1 : vector<8x768xf32>, i32 -> vector<8x768xf32>
    %c40 = arith.constant 40 : index
    %c0_13 = arith.constant 0 : index
    %23 = vector.load %arg9[%c40, %c0_13] : memref<72x768xf32, #tpu.memory_space<vmem>>, vector<8x768xf32>
    tpu.vector_store %arg9[%c40, %c0_13], %22 {strides = array<i32>} : memref<72x768xf32, #tpu.memory_space<vmem>>, vector<8x768xf32>,
    %c751_i32 = arith.constant 751 : i32
    %24 = tpu.dynamic_rotate %12 by %c751_i32 dim 1 : vector<8x768xf32>, i32 -> vector<8x768xf32>
    %c48 = arith.constant 48 : index
    %c0_14 = arith.constant 0 : index
    %25 = vector.load %arg9[%c48, %c0_14] : memref<72x768xf32, #tpu.memory_space<vmem>>, vector<8x768xf32>
    tpu.vector_store %arg9[%c48, %c0_14], %24 {strides = array<i32>} : memref<72x768xf32, #tpu.memory_space<vmem>>, vector<8x768xf32>,
    %c750_i32 = arith.constant 750 : i32
    %26 = tpu.dynamic_rotate %12 by %c750_i32 dim 1 : vector<8x768xf32>, i32 -> vector<8x768xf32>
    %c56 = arith.constant 56 : index
    %c0_15 = arith.constant 0 : index
    %27 = vector.load %arg9[%c56, %c0_15] : memref<72x768xf32, #tpu.memory_space<vmem>>, vector<8x768xf32>
    tpu.vector_store %arg9[%c56, %c0_15], %26 {strides = array<i32>} : memref<72x768xf32, #tpu.memory_space<vmem>>, vector<8x768xf32>,
    %c749_i32 = arith.constant 749 : i32
    %28 = tpu.dynamic_rotate %12 by %c749_i32 dim 1 : vector<8x768xf32>, i32 -> vector<8x768xf32>
    %c64 = arith.constant 64 : index
    %c0_16 = arith.constant 0 : index
    %29 = vector.load %arg9[%c64, %c0_16] : memref<72x768xf32, #tpu.memory_space<vmem>>, vector<8x768xf32>
    tpu.vector_store %arg9[%c64, %c0_16], %28 {strides = array<i32>} : memref<72x768xf32, #tpu.memory_space<vmem>>, vector<8x768xf32>,
    %c0_17 = arith.constant 0 : index
    %c0_18 = arith.constant 0 : index
    %30 = vector.load %arg9[%c0_17, %c0_18] : memref<72x768xf32, #tpu.memory_space<vmem>>, vector<72x768xf32>
    %31 = arith.truncf %30 : vector<72x768xf32> to vector<72x768xbf16>
    %c0_19 = arith.constant 0 : index
    %c0_20 = arith.constant 0 : index
    %32 = vector.load %arg1[%c0_19, %c0_20] : memref<4x72xbf16, #tpu.memory_space<vmem>>, vector<4x72xbf16>
    %cst_21 = arith.constant dense<0.000000e+00> : vector<4x768xf32>
    %33 = tpu.matmul %32, %31, %cst_21 {dimension_numbers = #tpu.dot_dimension_numbers<[1], [0], [0], [1], [0, 0, 1, 1], [], []>} : vector<4x72xbf16>, vector<72x768xbf16>, vector<4x768xf32> -> vector<4x768xf32>
    %c0_22 = arith.constant 0 : index
    %c0_23 = arith.constant 0 : index
    %34 = vector.load %arg2[%c0_22, %c0_23] : memref<4x1xf32, #tpu.memory_space<vmem>>, vector<4x1xf32>
    %35 = vector.broadcast %34 : vector<4x1xf32> to vector<4x768xf32>
    %36 = arith.addf %33, %35 : vector<4x768xf32>
    %37 = vector.broadcast %0 : vector<1x768xf32> to vector<4x768xf32>
    %38 = arith.mulf %36, %37 : vector<4x768xf32>
    %cst_24 = arith.constant dense<0.000000e+00> : vector<4xf32>
    %39 = vector.multi_reduction <add>, %38, %cst_24 [1] : vector<4x768xf32> to vector<4xf32>
    %40 = vector.shape_cast %39 : vector<4xf32> to vector<4x1xf32>
    %c0_25 = arith.constant 0 : index
    %c0_26 = arith.constant 0 : index
    %41 = vector.load %arg7[%c0_25, %c0_26] : memref<4x1xf32, #tpu.memory_space<vmem>>, vector<4x1xf32>
    tpu.vector_store %arg7[%c0_25, %c0_26], %40 {strides = array<i32>} : memref<4x1xf32, #tpu.memory_space<vmem>>, vector<4x1xf32>,
    %42 = arith.mulf %38, %38 : vector<4x768xf32>
    %cst_27 = arith.constant dense<0.000000e+00> : vector<4xf32>
    %43 = vector.multi_reduction <add>, %42, %cst_27 [1] : vector<4x768xf32> to vector<4xf32>
    %44 = vector.shape_cast %43 : vector<4xf32> to vector<4x1xf32>
    %c0_28 = arith.constant 0 : index
    %c0_29 = arith.constant 0 : index
    %45 = vector.load %arg8[%c0_28, %c0_29] : memref<4x1xf32, #tpu.memory_space<vmem>>, vector<4x1xf32>
    tpu.vector_store %arg8[%c0_28, %c0_29], %44 {strides = array<i32>} : memref<4x1xf32, #tpu.memory_space<vmem>>, vector<4x1xf32>,
    %46 = arith.truncf %38 : vector<4x768xf32> to vector<4x768xbf16>
    %c0_30 = arith.constant 0 : index
    %c0_31 = arith.constant 0 : index
    %47 = vector.load %arg6[%c0_30, %c0_31] : memref<4x768xbf16, #tpu.memory_space<vmem>>, vector<4x768xbf16>
    tpu.vector_store %arg6[%c0_30, %c0_31], %46 {strides = array<i32>} : memref<4x768xbf16, #tpu.memory_space<vmem>>, vector<4x768xbf16>,
    return
  }
}

</mosaic_0001>

<llo_original>
// kernel: model_forward.14
$region0: #{model_forward.14}
  #allocation0 [shape = 'u32[]', space=smem, size = 0x4, offset = 0x4, fixed_abs, tag = 'smem constant byte address 0x4 - core index']
  #allocation1 [shape = 'u32[72,128]{1,0:T(1,128)}', space=vmem, size = 0x9000, scoped, tag = 'internal scratch']
  #allocation2 [shape = 'f32[36,768]{1,0:T(8,128)}', space=vmem, size = 0x1e000, scoped, tag = 'scratch operand']
  %s0 = inlined_call_operand.vmem [shape: bf16[4,768], index: 0, kind: input, shape index: {}]
  %s1 = inlined_call_operand.vmem [shape: bf16[8,36], index: 1, kind: input, shape index: {}]
  %s2 = inlined_call_operand.vmem [shape: f32[8,1], index: 2, kind: input, shape index: {}]
  %s3 = inlined_call_operand.vmem [shape: f32[1,768], index: 3, kind: input, shape index: {}]
  %s4 = inlined_call_operand.vmem [shape: bf16[8,768], index: 4, kind: output, shape index: {0}]
  %s5 = inlined_call_operand.hbm [shape: f32[8,1], index: 5, kind: output, shape index: {1}]
  %s6 = inlined_call_operand.hbm [shape: f32[8,1], index: 6, kind: output, shape index: {2}]
  %7 = xla_tuple %s4, %s5, %s6
  %s8 = sld [smem:[#allocation0]]
  $region42: #{model_forward.14} parent=0
    _
  %s10 = ssub.s32 1, %s8
  %s11 = scalar_select 0, %s10, %s8
  $region1: #{model_forward.14} parent=0
    #allocation3 [shape = 'u8[4096]{0}', space=vmem, size = 0x1000, scoped, tag = 'output window, operand 1, single buffered']
    #allocation4 [shape = 's32[1]{0}', space=sflag, size = 0x4, scoped, tag = 'scoped memory for model_forward.14']
    #allocation5 [shape = 'u8[4096]{0}', space=vmem, size = 0x1000, scoped, tag = 'output window, operand 2, single buffered']
    #allocation6 [shape = 's32[1]{0}', space=sflag, size = 0x4, scoped, tag = 'scoped memory for model_forward.14']
    %12 = vsyncpa [#allocation4], 0
    %13 = vsyncpa [#allocation6], 0
    // Predicated region
    $region2: #{model_forward.14} parent=1 // pred_check
      _
    $region3: #{model_forward.14} parent=1 // pred_check_branch
      %15 = sbr.rel (0) target = $region5
    $region4: #{model_forward.14} parent=1 // pred_region
      _
    $region5: #{model_forward.14} parent=1 // pred_fallthru
      _
    // Predicated region
    $region6: #{model_forward.14} parent=1 // pred_check
      _
    $region7: #{model_forward.14} parent=1 // pred_check_branch
      %17 = sbr.rel (0) target = $region9
    $region8: #{model_forward.14} parent=1 // pred_region
      _
    $region9: #{model_forward.14} parent=1 // pred_fallthru
      _
    // Predicated region
    $region10: #{model_forward.14} parent=1 // pred_check
      _
    $region11: #{model_forward.14} parent=1 // pred_check_branch
      %19 = sbr.rel (0) target = $region13
    $region12: #{model_forward.14} parent=1 // pred_region
      _
    $region13: #{model_forward.14} parent=1 // pred_fallthru
      _
    // Predicated region
    $region14: #{model_forward.14} parent=1 // pred_check
      _
    $region15: #{model_forward.14} parent=1 // pred_check_branch
      %21 = sbr.rel (0) target = $region17
    $region16: #{model_forward.14} parent=1 // pred_region
      _
    $region17: #{model_forward.14} parent=1 // pred_fallthru
      _
    %v23 = vld [vmem:[%s3] sm:$0x3f]
    %v24 = vld [vmem:[%s0] sm:$0xff]
    %v25 = vld [vmem:[%s0 + $0x8] sm:$0xf]
    %v26 = vunpack.c.l.bf16 %v24
    %v27 = vunpack.c.h.bf16 %v24
    %v28 = vunpack.c.l.bf16 %v25
    %32 = vst [vmem:[#allocation1] ss:$2 sm:$0xff] %v26
    %s33 = scalar_lea.vmem [#allocation1], 16
    %34 = vst [vmem:[%s33] ss:$2 sm:$0xff] %v27
    %s35 = scalar_lea.vmem [#allocation1], 32
    %36 = vst [vmem:[%s35] ss:$2 sm:$0xff] %v28
    %v37 = vld.sshfl [vmem:[#allocation1] sm:$0xff pattern:$0x75316420]
    %v38 = vld.sshfl [vmem:[#allocation1 + $0x8] sm:$0xff pattern:$0x75316420]
    %v39 = vld.sshfl [vmem:[#allocation1 + $0x10] sm:$0xff pattern:$0x75316420]
    %v40 = vld.sshfl [vmem:[#allocation1 + $0x18] sm:$0xff pattern:$0x75316420]
    %v41 = vld.sshfl [vmem:[#allocation1 + $0x20] sm:$0xff pattern:$0x75316420]
    %v42 = vld.sshfl [vmem:[#allocation1 + $0x28] sm:$0xff pattern:$0x75316420]
    %49 = vrot.lane.b32.xlu0 %v37, 19
    %v50 = vpop.permute.xlu0 %49
    %51 = vrot.lane.b32.xlu0 %v38, 19
    %v52 = vpop.permute.xlu0 %51
    %53 = vrot.lane.b32.xlu0 %v39, 19
    %v54 = vpop.permute.xlu0 %53
    %55 = vrot.lane.b32.xlu0 %v40, 19
    %v56 = vpop.permute.xlu0 %55
    %57 = vrot.lane.b32.xlu0 %v41, 19
    %v58 = vpop.permute.xlu0 %57
    %59 = vrot.lane.b32.xlu0 %v42, 19
    %v60 = vpop.permute.xlu0 %59
    %v61 = vlaneseq
    %v62 = vand.u32 %v61, 127
    %vm63 = vcmp.lt.s32.totalorder %v62, 19
    %v64 = vsel %vm63, %v58, %v60
    %v65 = vsel %vm63, %v56, %v58
    %v66 = vsel %vm63, %v54, %v56
    %v67 = vsel %vm63, %v52, %v54
    %v68 = vsel %vm63, %v50, %v52
    %v69 = vsel %vm63, %v60, %v50
    %70 = vst [vmem:[#allocation2] sm:$0xf] %v69
    %71 = vst [vmem:[#allocation2 + $0x8] sm:$0xf] %v68
    %72 = vst [vmem:[#allocation2 + $0x10] sm:$0xf] %v67
    %73 = vst [vmem:[#allocation2 + $0x18] sm:$0xf] %v66
    %74 = vst [vmem:[#allocation2 + $0x20] sm:$0xf] %v65
    %75 = vst [vmem:[#allocation2 + $0x28] sm:$0xf] %v64
    %76 = vst [vmem:[#allocation1] ss:$2 sm:$0xff] %v26
    %s77 = scalar_lea.vmem [#allocation1], 16
    %78 = vst [vmem:[%s77] ss:$2 sm:$0xff] %v27
    %s79 = scalar_lea.vmem [#allocation1], 32
    %80 = vst [vmem:[%s79] ss:$2 sm:$0xff] %v28
    %v81 = vld.sshfl [vmem:[#allocation1] sm:$0xff pattern:$0x75316420]
    %v82 = vld.sshfl [vmem:[#allocation1 + $0x8] sm:$0xff pattern:$0x75316420]
    %v83 = vld.sshfl [vmem:[#allocation1 + $0x10] sm:$0xff pattern:$0x75316420]
    %v84 = vld.sshfl [vmem:[#allocation1 + $0x18] sm:$0xff pattern:$0x75316420]
    %v85 = vld.sshfl [vmem:[#allocation1 + $0x20] sm:$0xff pattern:$0x75316420]
    %v86 = vld.sshfl [vmem:[#allocation1 + $0x28] sm:$0xff pattern:$0x75316420]
    %93 = vrot.lane.b32.xlu0 %v81, 18
    %v94 = vpop.permute.xlu0 %93
    %95 = vrot.lane.b32.xlu0 %v82, 18
    %v96 = vpop.permute.xlu0 %95
    %97 = vrot.lane.b32.xlu0 %v83, 18
    %v98 = vpop.permute.xlu0 %97
    %99 = vrot.lane.b32.xlu0 %v84, 18
    %v100 = vpop.permute.xlu0 %99
    %101 = vrot.lane.b32.xlu0 %v85, 18
    %v102 = vpop.permute.xlu0 %101
    %103 = vrot.lane.b32.xlu0 %v86, 18
    %v104 = vpop.permute.xlu0 %103
    %vm105 = vcmp.lt.s32.totalorder %v62, 18
    %v106 = vsel %vm105, %v102, %v104
    %v107 = vsel %vm105, %v100, %v102
    %v108 = vsel %vm105, %v98, %v100
    %v109 = vsel %vm105, %v96, %v98
    %v110 = vsel %vm105, %v94, %v96
    %v111 = vsel %vm105, %v104, %v94
    %v118 = vrot.slane %v111, 4
    %v119 = vrot.slane %v110, 4
    %v120 = vrot.slane %v109, 4
    %v121 = vrot.slane %v108, 4
    %v122 = vrot.slane %v107, 4
    %v123 = vrot.slane %v106, 4
    %130 = vst [vmem:[#allocation2] sm:$0xf0] %v118
    %131 = vst [vmem:[#allocation2 + $0x8] sm:$0xf0] %v119
    %132 = vst [vmem:[#allocation2 + $0x10] sm:$0xf0] %v120
    %133 = vst [vmem:[#allocation2 + $0x18] sm:$0xf0] %v121
    %134 = vst [vmem:[#allocation2 + $0x20] sm:$0xf0] %v122
    %135 = vst [vmem:[#allocation2 + $0x28] sm:$0xf0] %v123
    %136 = vst [vmem:[#allocation1] ss:$2 sm:$0xff] %v26
    %s137 = scalar_lea.vmem [#allocation1], 16
    %138 = vst [vmem:[%s137] ss:$2 sm:$0xff] %v27
    %s139 = scalar_lea.vmem [#allocation1], 32
    %140 = vst [vmem:[%s139] ss:$2 sm:$0xff] %v28
    %v141 = vld.sshfl [vmem:[#allocation1] sm:$0xff pattern:$0x75316420]
    %v142 = vld.sshfl [vmem:[#allocation1 + $0x8] sm:$0xff pattern:$0x75316420]
    %v143 = vld.sshfl [vmem:[#allocation1 + $0x10] sm:$0xff pattern:$0x75316420]
    %v144 = vld.sshfl [vmem:[#allocation1 + $0x18] sm:$0xff pattern:$0x75316420]
    %v145 = vld.sshfl [vmem:[#allocation1 + $0x20] sm:$0xff pattern:$0x75316420]
    %v146 = vld.sshfl [vmem:[#allocation1 + $0x28] sm:$0xff pattern:$0x75316420]
    %153 = vrot.lane.b32.xlu0 %v141, 17
    %v154 = vpop.permute.xlu0 %153
    %155 = vrot.lane.b32.xlu0 %v142, 17
    %v156 = vpop.permute.xlu0 %155
    %157 = vrot.lane.b32.xlu0 %v143, 17
    %v158 = vpop.permute.xlu0 %157
    %159 = vrot.lane.b32.xlu0 %v144, 17
    %v160 = vpop.permute.xlu0 %159
    %161 = vrot.lane.b32.xlu0 %v145, 17
    %v162 = vpop.permute.xlu0 %161
    %163 = vrot.lane.b32.xlu0 %v146, 17
    %v164 = vpop.permute.xlu0 %163
    %vm165 = vcmp.lt.s32.totalorder %v62, 17
    %v166 = vsel %vm165, %v162, %v164
    %v167 = vsel %vm165, %v160, %v162
    %v168 = vsel %vm165, %v158, %v160
    %v169 = vsel %vm165, %v156, %v158
    %v170 = vsel %vm165, %v154, %v156
    %v171 = vsel %vm165, %v164, %v154
    %172 = vst [vmem:[#allocation2 + $0x30] sm:$0xf] %v171
    %173 = vst [vmem:[#allocation2 + $0x38] sm:$0xf] %v170
    %174 = vst [vmem:[#allocation2 + $0x40] sm:$0xf] %v169
    %175 = vst [vmem:[#allocation2 + $0x48] sm:$0xf] %v168
    %176 = vst [vmem:[#allocation2 + $0x50] sm:$0xf] %v167
    %177 = vst [vmem:[#allocation2 + $0x58] sm:$0xf] %v166
    %178 = vst [vmem:[#allocation1] ss:$2 sm:$0xff] %v26
    %s179 = scalar_lea.vmem [#allocation1], 16
    %180 = vst [vmem:[%s179] ss:$2 sm:$0xff] %v27
    %s181 = scalar_lea.vmem [#allocation1], 32
    %182 = vst [vmem:[%s181] ss:$2 sm:$0xff] %v28
    %v183 = vld.sshfl [vmem:[#allocation1] sm:$0xff pattern:$0x75316420]
    %v184 = vld.sshfl [vmem:[#allocation1 + $0x8] sm:$0xff pattern:$0x75316420]
    %v185 = vld.sshfl [vmem:[#allocation1 + $0x10] sm:$0xff pattern:$0x75316420]
    %v186 = vld.sshfl [vmem:[#allocation1 + $0x18] sm:$0xff pattern:$0x75316420]
    %v187 = vld.sshfl [vmem:[#allocation1 + $0x20] sm:$0xff pattern:$0x75316420]
    %v188 = vld.sshfl [vmem:[#allocation1 + $0x28] sm:$0xff pattern:$0x75316420]
    %195 = vrot.lane.b32.xlu0 %v183, 1
    %v196 = vpop.permute.xlu0 %195
    %197 = vrot.lane.b32.xlu0 %v184, 1
    %v198 = vpop.permute.xlu0 %197
    %199 = vrot.lane.b32.xlu0 %v185, 1
    %v200 = vpop.permute.xlu0 %199
    %201 = vrot.lane.b32.xlu0 %v186, 1
    %v202 = vpop.permute.xlu0 %201
    %203 = vrot.lane.b32.xlu0 %v187, 1
    %v204 = vpop.permute.xlu0 %203
    %205 = vrot.lane.b32.xlu0 %v188, 1
    %v206 = vpop.permute.xlu0 %205
    %vm207 = vcmp.lt.s32.totalorder %v62, 1
    %v208 = vsel %vm207, %v204, %v206
    %v209 = vsel %vm207, %v202, %v204
    %v210 = vsel %vm207, %v200, %v202
    %v211 = vsel %vm207, %v198, %v200
    %v212 = vsel %vm207, %v196, %v198
    %v213 = vsel %vm207, %v206, %v196
    %v220 = vrot.slane %v213, 4
    %v221 = vrot.slane %v212, 4
    %v222 = vrot.slane %v211, 4
    %v223 = vrot.slane %v210, 4
    %v224 = vrot.slane %v209, 4
    %v225 = vrot.slane %v208, 4
    %232 = vst [vmem:[#allocation2 + $0x30] sm:$0xf0] %v220
    %233 = vst [vmem:[#allocation2 + $0x38] sm:$0xf0] %v221
    %234 = vst [vmem:[#allocation2 + $0x40] sm:$0xf0] %v222
    %235 = vst [vmem:[#allocation2 + $0x48] sm:$0xf0] %v223
    %236 = vst [vmem:[#allocation2 + $0x50] sm:$0xf0] %v224
    %237 = vst [vmem:[#allocation2 + $0x58] sm:$0xf0] %v225
    %238 = vst [vmem:[#allocation1] ss:$2 sm:$0xff] %v26
    %s239 = scalar_lea.vmem [#allocation1], 16
    %240 = vst [vmem:[%s239] ss:$2 sm:$0xff] %v27
    %s241 = scalar_lea.vmem [#allocation1], 32
    %242 = vst [vmem:[%s241] ss:$2 sm:$0xff] %v28
    %v243 = vld.sshfl [vmem:[#allocation1] sm:$0xff pattern:$0x75316420]
    %v244 = vld.sshfl [vmem:[#allocation1 + $0x8] sm:$0xff pattern:$0x75316420]
    %v245 = vld.sshfl [vmem:[#allocation1 + $0x10] sm:$0xff pattern:$0x75316420]
    %v246 = vld.sshfl [vmem:[#allocation1 + $0x18] sm:$0xff pattern:$0x75316420]
    %v247 = vld.sshfl [vmem:[#allocation1 + $0x20] sm:$0xff pattern:$0x75316420]
    %v248 = vld.sshfl [vmem:[#allocation1 + $0x28] sm:$0xff pattern:$0x75316420]
    %255 = vst [vmem:[#allocation2 + $0x60] sm:$0xf] %v243
    %256 = vst [vmem:[#allocation2 + $0x68] sm:$0xf] %v244
    %257 = vst [vmem:[#allocation2 + $0x70] sm:$0xf] %v245
    %258 = vst [vmem:[#allocation2 + $0x78] sm:$0xf] %v246
    %259 = vst [vmem:[#allocation2 + $0x80] sm:$0xf] %v247
    %260 = vst [vmem:[#allocation2 + $0x88] sm:$0xf] %v248
    %261 = vst [vmem:[#allocation1] ss:$2 sm:$0xff] %v26
    %s262 = scalar_lea.vmem [#allocation1], 16
    %263 = vst [vmem:[%s262] ss:$2 sm:$0xff] %v27
    %s264 = scalar_lea.vmem [#allocation1], 32
    %265 = vst [vmem:[%s264] ss:$2 sm:$0xff] %v28
    %v266 = vld.sshfl [vmem:[#allocation1] sm:$0xff pattern:$0x75316420]
    %v267 = vld.sshfl [vmem:[#allocation1 + $0x8] sm:$0xff pattern:$0x75316420]
    %v268 = vld.sshfl [vmem:[#allocation1 + $0x10] sm:$0xff pattern:$0x75316420]
    %v269 = vld.sshfl [vmem:[#allocation1 + $0x18] sm:$0xff pattern:$0x75316420]
    %v270 = vld.sshfl [vmem:[#allocation1 + $0x20] sm:$0xff pattern:$0x75316420]
    %v271 = vld.sshfl [vmem:[#allocation1 + $0x28] sm:$0xff pattern:$0x75316420]
    %278 = vrot.lane.b32.xlu0 %v266, 127
    %v279 = vpop.permute.xlu0 %278
    %280 = vrot.lane.b32.xlu0 %v267, 127
    %v281 = vpop.permute.xlu0 %280
    %282 = vrot.lane.b32.xlu0 %v268, 127
    %v283 = vpop.permute.xlu0 %282
    %284 = vrot.lane.b32.xlu0 %v269, 127
    %v285 = vpop.permute.xlu0 %284
    %286 = vrot.lane.b32.xlu0 %v270, 127
    %v287 = vpop.permute.xlu0 %286
    %288 = vrot.lane.b32.xlu0 %v271, 127
    %v289 = vpop.permute.xlu0 %288
    %vm290 = vcmp.lt.s32.totalorder %v62, 127
    %v291 = vsel %vm290, %v287, %v289
    %v292 = vsel %vm290, %v285, %v287
    %v293 = vsel %vm290, %v283, %v285
    %v294 = vsel %vm290, %v281, %v283
    %v295 = vsel %vm290, %v279, %v281
    %v296 = vsel %vm290, %v289, %v279
    %v303 = vrot.slane %v295, 4
    %v304 = vrot.slane %v294, 4
    %v305 = vrot.slane %v293, 4
    %v306 = vrot.slane %v292, 4
    %v307 = vrot.slane %v291, 4
    %v308 = vrot.slane %v296, 4
    %315 = vst [vmem:[#allocation2 + $0x60] sm:$0xf0] %v303
    %316 = vst [vmem:[#allocation2 + $0x68] sm:$0xf0] %v304
    %317 = vst [vmem:[#allocation2 + $0x70] sm:$0xf0] %v305
    %318 = vst [vmem:[#allocation2 + $0x78] sm:$0xf0] %v306
    %319 = vst [vmem:[#allocation2 + $0x80] sm:$0xf0] %v307
    %320 = vst [vmem:[#allocation2 + $0x88] sm:$0xf0] %v308
    %321 = vst [vmem:[#allocation1] ss:$2 sm:$0xff] %v26
    %s322 = scalar_lea.vmem [#allocation1], 16
    %323 = vst [vmem:[%s322] ss:$2 sm:$0xff] %v27
    %s324 = scalar_lea.vmem [#allocation1], 32
    %325 = vst [vmem:[%s324] ss:$2 sm:$0xff] %v28
    %v326 = vld.sshfl [vmem:[#allocation1] sm:$0xff pattern:$0x75316420]
    %v327 = vld.sshfl [vmem:[#allocation1 + $0x8] sm:$0xff pattern:$0x75316420]
    %v328 = vld.sshfl [vmem:[#allocation1 + $0x10] sm:$0xff pattern:$0x75316420]
    %v329 = vld.sshfl [vmem:[#allocation1 + $0x18] sm:$0xff pattern:$0x75316420]
    %v330 = vld.sshfl [vmem:[#allocation1 + $0x20] sm:$0xff pattern:$0x75316420]
    %v331 = vld.sshfl [vmem:[#allocation1 + $0x28] sm:$0xff pattern:$0x75316420]
    %338 = vrot.lane.b32.xlu0 %v326, 111
    %v339 = vpop.permute.xlu0 %338
    %340 = vrot.lane.b32.xlu0 %v327, 111
    %v341 = vpop.permute.xlu0 %340
    %342 = vrot.lane.b32.xlu0 %v328, 111
    %v343 = vpop.permute.xlu0 %342
    %344 = vrot.lane.b32.xlu0 %v329, 111
    %v345 = vpop.permute.xlu0 %344
    %346 = vrot.lane.b32.xlu0 %v330, 111
    %v347 = vpop.permute.xlu0 %346
    %348 = vrot.lane.b32.xlu0 %v331, 111
    %v349 = vpop.permute.xlu0 %348
    %vm350 = vcmp.lt.s32.totalorder %v62, 111
    %v351 = vsel %vm350, %v347, %v349
    %v352 = vsel %vm350, %v345, %v347
    %v353 = vsel %vm350, %v343, %v345
    %v354 = vsel %vm350, %v341, %v343
    %v355 = vsel %vm350, %v339, %v341
    %v356 = vsel %vm350, %v349, %v339
    %357 = vst [vmem:[#allocation2 + $0x90] sm:$0xf] %v355
    %358 = vst [vmem:[#allocation2 + $0x98] sm:$0xf] %v354
    %359 = vst [vmem:[#allocation2 + $0xa0] sm:$0xf] %v353
    %360 = vst [vmem:[#allocation2 + $0xa8] sm:$0xf] %v352
    %361 = vst [vmem:[#allocation2 + $0xb0] sm:$0xf] %v351
    %362 = vst [vmem:[#allocation2 + $0xb8] sm:$0xf] %v356
    %363 = vst [vmem:[#allocation1] ss:$2 sm:$0xff] %v26
    %s364 = scalar_lea.vmem [#allocation1], 16
    %365 = vst [vmem:[%s364] ss:$2 sm:$0xff] %v27
    %s366 = scalar_lea.vmem [#allocation1], 32
    %367 = vst [vmem:[%s366] ss:$2 sm:$0xff] %v28
    %v368 = vld.sshfl [vmem:[#allocation1] sm:$0xff pattern:$0x75316420]
    %v369 = vld.sshfl [vmem:[#allocation1 + $0x8] sm:$0xff pattern:$0x75316420]
    %v370 = vld.sshfl [vmem:[#allocation1 + $0x10] sm:$0xff pattern:$0x75316420]
    %v371 = vld.sshfl [vmem:[#allocation1 + $0x18] sm:$0xff pattern:$0x75316420]
    %v372 = vld.sshfl [vmem:[#allocation1 + $0x20] sm:$0xff pattern:$0x75316420]
    %v373 = vld.sshfl [vmem:[#allocation1 + $0x28] sm:$0xff pattern:$0x75316420]
    %380 = vrot.lane.b32.xlu0 %v368, 110
    %v381 = vpop.permute.xlu0 %380
    %382 = vrot.lane.b32.xlu0 %v369, 110
    %v383 = vpop.permute.xlu0 %382
    %384 = vrot.lane.b32.xlu0 %v370, 110
    %v385 = vpop.permute.xlu0 %384
    %386 = vrot.lane.b32.xlu0 %v371, 110
    %v387 = vpop.permute.xlu0 %386
    %388 = vrot.lane.b32.xlu0 %v372, 110
    %v389 = vpop.permute.xlu0 %388
    %390 = vrot.lane.b32.xlu0 %v373, 110
    %v391 = vpop.permute.xlu0 %390
    %vm392 = vcmp.lt.s32.totalorder %v62, 110
    %v393 = vsel %vm392, %v389, %v391
    %v394 = vsel %vm392, %v387, %v389
    %v395 = vsel %vm392, %v385, %v387
    %v396 = vsel %vm392, %v383, %v385
    %v397 = vsel %vm392, %v381, %v383
    %v398 = vsel %vm392, %v391, %v381
    %v405 = vrot.slane %v397, 4
    %v406 = vrot.slane %v396, 4
    %v407 = vrot.slane %v395, 4
    %v408 = vrot.slane %v394, 4
    %v409 = vrot.slane %v393, 4
    %v410 = vrot.slane %v398, 4
    %417 = vst [vmem:[#allocation2 + $0x90] sm:$0xf0] %v405
    %418 = vst [vmem:[#allocation2 + $0x98] sm:$0xf0] %v406
    %419 = vst [vmem:[#allocation2 + $0xa0] sm:$0xf0] %v407
    %420 = vst [vmem:[#allocation2 + $0xa8] sm:$0xf0] %v408
    %421 = vst [vmem:[#allocation2 + $0xb0] sm:$0xf0] %v409
    %422 = vst [vmem:[#allocation2 + $0xb8] sm:$0xf0] %v410
    %423 = vst [vmem:[#allocation1] ss:$2 sm:$0xff] %v26
    %s424 = scalar_lea.vmem [#allocation1], 16
    %425 = vst [vmem:[%s424] ss:$2 sm:$0xff] %v27
    %s426 = scalar_lea.vmem [#allocation1], 32
    %427 = vst [vmem:[%s426] ss:$2 sm:$0xff] %v28
    %v428 = vld.sshfl [vmem:[#allocation1] sm:$0xff pattern:$0x75316420]
    %v429 = vld.sshfl [vmem:[#allocation1 + $0x8] sm:$0xff pattern:$0x75316420]
    %v430 = vld.sshfl [vmem:[#allocation1 + $0x10] sm:$0xff pattern:$0x75316420]
    %v431 = vld.sshfl [vmem:[#allocation1 + $0x18] sm:$0xff pattern:$0x75316420]
    %v432 = vld.sshfl [vmem:[#allocation1 + $0x20] sm:$0xff pattern:$0x75316420]
    %v433 = vld.sshfl [vmem:[#allocation1 + $0x28] sm:$0xff pattern:$0x75316420]
    %440 = vrot.lane.b32.xlu0 %v428, 109
    %v441 = vpop.permute.xlu0 %440
    %442 = vrot.lane.b32.xlu0 %v429, 109
    %v443 = vpop.permute.xlu0 %442
    %444 = vrot.lane.b32.xlu0 %v430, 109
    %v445 = vpop.permute.xlu0 %444
    %446 = vrot.lane.b32.xlu0 %v431, 109
    %v447 = vpop.permute.xlu0 %446
    %448 = vrot.lane.b32.xlu0 %v432, 109
    %v449 = vpop.permute.xlu0 %448
    %450 = vrot.lane.b32.xlu0 %v433, 109
    %v451 = vpop.permute.xlu0 %450
    %vm452 = vcmp.lt.s32.totalorder %v62, 109
    %v453 = vsel %vm452, %v449, %v451
    %v454 = vsel %vm452, %v447, %v449
    %v455 = vsel %vm452, %v445, %v447
    %v456 = vsel %vm452, %v443, %v445
    %v457 = vsel %vm452, %v441, %v443
    %v458 = vsel %vm452, %v451, %v441
    %459 = vst [vmem:[#allocation2 + $0xc0] sm:$0xf] %v457
    %460 = vst [vmem:[#allocation2 + $0xc8] sm:$0xf] %v456
    %461 = vst [vmem:[#allocation2 + $0xd0] sm:$0xf] %v455
    %462 = vst [vmem:[#allocation2 + $0xd8] sm:$0xf] %v454
    %463 = vst [vmem:[#allocation2 + $0xe0] sm:$0xf] %v453
    %464 = vst [vmem:[#allocation2 + $0xe8] sm:$0xf] %v458
    %v465 = vld [vmem:[#allocation2] sm:$0xff]
    %v466 = vld [vmem:[#allocation2 + $0x8] sm:$0xff]
    %v467 = vld [vmem:[#allocation2 + $0x10] sm:$0xff]
    %v468 = vld [vmem:[#allocation2 + $0x18] sm:$0xff]
    %v469 = vld [vmem:[#allocation2 + $0x20] sm:$0xff]
    %v470 = vld [vmem:[#allocation2 + $0x28] sm:$0xff]
    %v471 = vld [vmem:[#allocation2 + $0x30] sm:$0xff]
    %v472 = vld [vmem:[#allocation2 + $0x38] sm:$0xff]
    %v473 = vld [vmem:[#allocation2 + $0x40] sm:$0xff]
    %v474 = vld [vmem:[#allocation2 + $0x48] sm:$0xff]
    %v475 = vld [vmem:[#allocation2 + $0x50] sm:$0xff]
    %v476 = vld [vmem:[#allocation2 + $0x58] sm:$0xff]
    %v477 = vld [vmem:[#allocation2 + $0x60] sm:$0xff]
    %v478 = vld [vmem:[#allocation2 + $0x68] sm:$0xff]
    %v479 = vld [vmem:[#allocation2 + $0x70] sm:$0xff]
    %v480 = vld [vmem:[#allocation2 + $0x78] sm:$0xff]
    %v481 = vld [vmem:[#allocation2 + $0x80] sm:$0xff]
    %v482 = vld [vmem:[#allocation2 + $0x88] sm:$0xff]
    %v483 = vld [vmem:[#allocation2 + $0x90] sm:$0xff]
    %v484 = vld [vmem:[#allocation2 + $0x98] sm:$0xff]
    %v485 = vld [vmem:[#allocation2 + $0xa0] sm:$0xff]
    %v486 = vld [vmem:[#allocation2 + $0xa8] sm:$0xff]
    %v487 = vld [vmem:[#allocation2 + $0xb0] sm:$0xff]
    %v488 = vld [vmem:[#allocation2 + $0xb8] sm:$0xff]
    %v489 = vld [vmem:[#allocation2 + $0xc0] sm:$0xf]
    %v490 = vld [vmem:[#allocation2 + $0xc8] sm:$0xf]
    %v491 = vld [vmem:[#allocation2 + $0xd0] sm:$0xf]
    %v492 = vld [vmem:[#allocation2 + $0xd8] sm:$0xf]
    %v493 = vld [vmem:[#allocation2 + $0xe0] sm:$0xf]
    %v494 = vld [vmem:[#allocation2 + $0xe8] sm:$0xf]
    %v495 = vpack.c.bf16 %v471, %v465
    %v496 = vpack.c.bf16 %v472, %v466
    %v497 = vpack.c.bf16 %v473, %v467
    %v498 = vpack.c.bf16 %v474, %v468
    %v499 = vpack.c.bf16 %v475, %v469
    %v500 = vpack.c.bf16 %v476, %v470
    %v501 = vpack.c.bf16 %v483, %v477
    %v502 = vpack.c.bf16 %v484, %v478
    %v503 = vpack.c.bf16 %v485, %v479
    %v504 = vpack.c.bf16 %v486, %v480
    %v505 = vpack.c.bf16 %v487, %v481
    %v506 = vpack.c.bf16 %v488, %v482
    %v507 = vpack.c.bf16 %v489, %v489
    %v508 = vpack.c.bf16 %v490, %v490
    %v509 = vpack.c.bf16 %v491, %v491
    %v510 = vpack.c.bf16 %v492, %v492
    %v511 = vpack.c.bf16 %v493, %v493
    %v512 = vpack.c.bf16 %v494, %v494
    %v513 = vld [vmem:[%s1] sm:$0xf]
    %v514 = vld [vmem:[%s2] sm:$0xff]
    %516 = vset.pattern.permute.xlu0 0
    %517 = vperm.xlu0 %516, %v514
    %v518 = vpop.permute.xlu0 %517
    %vm520 = vcmask 293888
    %v522 = vsel %vm520, %v513, 0
    %vm524 = vcmask 1041408
    %v526 = vsel %vm524, %v507, 0
    %v529 = vsel %vm524, %v508, 0
    %v532 = vsel %vm524, %v509, 0
    %v535 = vsel %vm524, %v510, 0
    %v538 = vsel %vm524, %v511, 0
    %v541 = vsel %vm524, %v512, 0
    %543 = vmatpush.bf16.msra.mxu0 0
    %544 = vmatpush.bf16.msra.mxu0 0
    %545 = vmatpush.bf16.msra.mxu0 0
    %546 = vmatpush.bf16.msra.mxu0 0
    %547 = vmatpush.bf16.msra.mxu0 0
    %548 = vmatpush.bf16.msra.mxu0 %v526
    %549 = vmatpush.bf16.msra.mxu0 %v501
    %550 = vmatpush.bf16.msra.mxu0 %v495
    %551 = vmatmul.bf16.gmra.mxu0 %v522
    %v552 = vpop.f32.mrf.mxu0
    %v553 = vadd.f32 %v518, %v552
    %v554 = vpop.f32.mrf.mxu0
    %555 = vdwg.mxu0
    %556 = vmatpush.bf16.msra.mxu0 0
    %557 = vmatpush.bf16.msra.mxu0 0
    %558 = vmatpush.bf16.msra.mxu0 0
    %559 = vmatpush.bf16.msra.mxu0 0
    %560 = vmatpush.bf16.msra.mxu0 0
    %561 = vmatpush.bf16.msra.mxu0 %v529
    %562 = vmatpush.bf16.msra.mxu0 %v502
    %563 = vmatpush.bf16.msra.mxu0 %v496
    %564 = vmatmul.bf16.gmra.mxu0 %v522
    %v565 = vpop.f32.mrf.mxu0
    %v566 = vadd.f32 %v518, %v565
    %v567 = vpop.f32.mrf.mxu0
    %568 = vdwg.mxu0
    %569 = vmatpush.bf16.msra.mxu0 0
    %570 = vmatpush.bf16.msra.mxu0 0
    %571 = vmatpush.bf16.msra.mxu0 0
    %572 = vmatpush.bf16.msra.mxu0 0
    %573 = vmatpush.bf16.msra.mxu0 0
    %574 = vmatpush.bf16.msra.mxu0 %v532
    %575 = vmatpush.bf16.msra.mxu0 %v503
    %576 = vmatpush.bf16.msra.mxu0 %v497
    %577 = vmatmul.bf16.gmra.mxu0 %v522
    %v578 = vpop.f32.mrf.mxu0
    %v579 = vadd.f32 %v518, %v578
    %v580 = vpop.f32.mrf.mxu0
    %581 = vdwg.mxu0
    %582 = vmatpush.bf16.msra.mxu0 0
    %583 = vmatpush.bf16.msra.mxu0 0
    %584 = vmatpush.bf16.msra.mxu0 0
    %585 = vmatpush.bf16.msra.mxu0 0
    %586 = vmatpush.bf16.msra.mxu0 0
    %587 = vmatpush.bf16.msra.mxu0 %v535
    %588 = vmatpush.bf16.msra.mxu0 %v504
    %589 = vmatpush.bf16.msra.mxu0 %v498
    %590 = vmatmul.bf16.gmra.mxu0 %v522
    %v591 = vpop.f32.mrf.mxu0
    %v592 = vadd.f32 %v518, %v591
    %v593 = vpop.f32.mrf.mxu0
    %594 = vdwg.mxu0
    %595 = vmatpush.bf16.msra.mxu0 0
    %596 = vmatpush.bf16.msra.mxu0 0
    %597 = vmatpush.bf16.msra.mxu0 0
    %598 = vmatpush.bf16.msra.mxu0 0
    %599 = vmatpush.bf16.msra.mxu0 0
    %600 = vmatpush.bf16.msra.mxu0 %v538
    %601 = vmatpush.bf16.msra.mxu0 %v505
    %602 = vmatpush.bf16.msra.mxu0 %v499
    %603 = vmatmul.bf16.gmra.mxu0 %v522
    %v604 = vpop.f32.mrf.mxu0
    %v605 = vadd.f32 %v518, %v604
    %v606 = vpop.f32.mrf.mxu0
    %607 = vdwg.mxu0
    %608 = vmatpush.bf16.msra.mxu0 0
    %609 = vmatpush.bf16.msra.mxu0 0
    %610 = vmatpush.bf16.msra.mxu0 0
    %611 = vmatpush.bf16.msra.mxu0 0
    %612 = vmatpush.bf16.msra.mxu0 0
    %613 = vmatpush.bf16.msra.mxu0 %v541
    %614 = vmatpush.bf16.msra.mxu0 %v506
    %615 = vmatpush.bf16.msra.mxu0 %v500
    %616 = vmatmul.bf16.gmra.mxu0 %v522
    %v617 = vpop.f32.mrf.mxu0
    %v618 = vadd.f32 %v518, %v617
    %v619 = vpop.f32.mrf.mxu0
    %620 = vdwg.mxu0
    %v622 = vperm.slane %v23, 0
    %v623 = vperm.slane %v23, 1
    %v624 = vperm.slane %v23, 2
    %v625 = vperm.slane %v23, 3
    %v626 = vperm.slane %v23, 4
    %v627 = vperm.slane %v23, 5
    %v634 = vmul.f32 %v553, %v622
    %v635 = vmul.f32 %v566, %v623
    %v636 = vmul.f32 %v579, %v624
    %v637 = vmul.f32 %v592, %v625
    %v638 = vmul.f32 %v605, %v626
    %v639 = vmul.f32 %v618, %v627
    %v640 = vadd.f32 %v634, %v635
    %v641 = vadd.f32 %v640, %v636
    %v642 = vadd.f32 %v641, %v637
    %v643 = vadd.f32 %v642, %v638
    %v644 = vadd.f32 %v643, %v639
    %645 = vadd.xlane.f32.xlu0 %v644
    %v646 = vpop.xlane.xlu0 %645
    %vm647 = vcmask 7168
    %648 = vst.msk [vmem:[#allocation3] sm:$0xff] %vm647, %v646
    %v649 = vmul.f32 %v634, %v634
    %v650 = vmul.f32 %v635, %v635
    %v651 = vmul.f32 %v636, %v636
    %v652 = vmul.f32 %v637, %v637
    %v653 = vmul.f32 %v638, %v638
    %v654 = vmul.f32 %v639, %v639
    %v655 = vadd.f32 %v649, %v650
    %v656 = vadd.f32 %v655, %v651
    %v657 = vadd.f32 %v656, %v652
    %v658 = vadd.f32 %v657, %v653
    %v659 = vadd.f32 %v658, %v654
    %660 = vadd.xlane.f32.xlu0 %v659
    %v661 = vpop.xlane.xlu0 %660
    %662 = vst.msk [vmem:[#allocation5] sm:$0xff] %vm647, %v661
    %v663 = vpack.c.bf16 %v635, %v634
    %v664 = vpack.c.bf16 %v637, %v636
    %v665 = vpack.c.bf16 %v639, %v638
    %666 = vst [vmem:[%s4] sm:$0xff] %v663
    %667 = vst [vmem:[%s4 + $0x8] sm:$0xff] %v664
    %668 = vst [vmem:[%s4 + $0x10] sm:$0xff] %v665
    // Predicated region
    $region18: #{model_forward.14} parent=1 // pred_check
      _
    $region19: #{model_forward.14} parent=1 // pred_check_branch
      %670 = sbr.rel (0) target = $region21
    $region20: #{model_forward.14} parent=1 // pred_region
      _
    $region21: #{model_forward.14} parent=1 // pred_fallthru
      _
    // Predicated region
    $region22: #{model_forward.14} parent=1 // pred_check
      _
    $region23: #{model_forward.14} parent=1 // pred_check_branch
      %672 = sbr.rel (0) target = $region25
    $region24: #{model_forward.14} parent=1 // pred_region
      %674 = vsyncadd [#allocation4], 0
      %s676 = sshll.u32 [#allocation3], 4
      %s677 = int_to_ptr.vmem [resolvable:$true] %s676
      %s678 = sshll.u32 %s5, 4
      %s679 = int_to_ptr.hbm [resolvable:$true] %s678
      %681 = dma.vmem_to_hbm [thread:$0]  %s677, 128, %s679, [#allocation4]
    $region25: #{model_forward.14} parent=1 // pred_fallthru
      _
    // Predicated region
    $region26: #{model_forward.14} parent=1 // pred_check
      _
    $region27: #{model_forward.14} parent=1 // pred_check_branch
      %683 = sbr.rel (0) target = $region29
    $region28: #{model_forward.14} parent=1 // pred_region
      %685 = vsyncadd [#allocation6], 0
      %s687 = sshll.u32 [#allocation5], 4
      %s688 = int_to_ptr.vmem [resolvable:$true] %s687
      %s689 = sshll.u32 %s6, 4
      %s690 = int_to_ptr.hbm [resolvable:$true] %s689
      %692 = dma.vmem_to_hbm [thread:$0]  %s688, 128, %s690, [#allocation6]
    $region29: #{model_forward.14} parent=1 // pred_fallthru
      _
    // Predicated region
    $region30: #{model_forward.14} parent=1 // pred_check
      _
    $region31: #{model_forward.14} parent=1 // pred_check_branch
      %694 = sbr.rel (0) target = $region33
    $region32: #{model_forward.14} parent=1 // pred_region
      _
    $region33: #{model_forward.14} parent=1 // pred_fallthru
      _
    // Predicated region
    $region34: #{model_forward.14} parent=1 // pred_check
      _
    $region35: #{model_forward.14} parent=1 // pred_check_branch
      %696 = sbr.rel (0) target = $region37
    $region36: #{model_forward.14} parent=1 // pred_region
      %698 = dma.done [#allocation4], 128
    $region37: #{model_forward.14} parent=1 // pred_fallthru
      _
    // Predicated region
    $region38: #{model_forward.14} parent=1 // pred_check
      _
    $region39: #{model_forward.14} parent=1 // pred_check_branch
      %700 = sbr.rel (0) target = $region41
    $region40: #{model_forward.14} parent=1 // pred_region
      %702 = dma.done [#allocation6], 128
    $region41: #{model_forward.14} parent=1 // pred_fallthru
      _
    %703 = vsyncpa [#allocation4], 1
    %704 = vsyncpa [#allocation6], 1

// kernel: model_forward.15
$region0: #{model_forward.15}
  #allocation0 [shape = 'u32[]', space=smem, size = 0x4, offset = 0x4, fixed_abs, tag = 'smem constant byte address 0x4 - core index']
  #allocation1 [shape = 'u32[72,128]{1,0:T(1,128)}', space=vmem, size = 0x9000, scoped, tag = 'internal scratch']
  #allocation2 [shape = 'f32[128,256]{1,0:T(8,128)}', space=vmem, size = 0x20000, scoped, tag = 'scratch operand']
  %s0 = inlined_call_operand.vmem [shape: bf16[32,256], index: 0, kind: input, shape index: {}]
  %s1 = inlined_call_operand.vmem [shape: bf16[16,128], index: 1, kind: input, shape index: {}]
  %s2 = inlined_call_operand.vmem [shape: f32[16,1], index: 2, kind: input, shape index: {}]
  %s3 = inlined_call_operand.vmem [shape: f32[1,256], index: 3, kind: input, shape index: {}]
  %s4 = inlined_call_operand.vmem [shape: bf16[16,256], index: 4, kind: output, shape index: {0}]
  %s5 = inlined_call_operand.vmem [shape: f32[16,1], index: 5, kind: output, shape index: {1}]
  %s6 = inlined_call_operand.vmem [shape: f32[16,1], index: 6, kind: output, shape index: {2}]
  %7 = xla_tuple %s4, %s5, %s6
  %s8 = sld [smem:[#allocation0]]
  $region42: #{model_forward.15} parent=0
    _
  %s10 = ssub.s32 1, %s8
  %s11 = scalar_select 0, %s10, %s8
  // Predicated region
  $region2: #{model_forward.15} parent=0 // pred_check
    _
  $region3: #{model_forward.15} parent=0 // pred_check_branch
    %13 = sbr.rel (0) target = $region5
  $region4: #{model_forward.15} parent=0 // pred_region
    _
  $region5: #{model_forward.15} parent=0 // pred_fallthru
    _
  // Predicated region
  $region6: #{model_forward.15} parent=0 // pred_check
    _
  $region7: #{model_forward.15} parent=0 // pred_check_branch
    %15 = sbr.rel (0) target = $region9
  $region8: #{model_forward.15} parent=0 // pred_region
    _
  $region9: #{model_forward.15} parent=0 // pred_fallthru
    _
  // Predicated region
  $region10: #{model_forward.15} parent=0 // pred_check
    _
  $region11: #{model_forward.15} parent=0 // pred_check_branch
    %17 = sbr.rel (0) target = $region13
  $region12: #{model_forward.15} parent=0 // pred_region
    _
  $region13: #{model_forward.15} parent=0 // pred_fallthru
    _
  // Predicated region
  $region14: #{model_forward.15} parent=0 // pred_check
    _
  $region15: #{model_forward.15} parent=0 // pred_check_branch
    %19 = sbr.rel (0) target = $region17
  $region16: #{model_forward.15} parent=0 // pred_region
    _
  $region17: #{model_forward.15} parent=0 // pred_fallthru
    _
  %v20 = vld [vmem:[%s3] sm:$0x3]
  %v21 = vld [vmem:[%s0] sm:$0xff]
  %v22 = vld [vmem:[%s0 + $0x8] sm:$0xff]
  %v23 = vld [vmem:[%s0 + $0x10] sm:$0xff]
  %v24 = vld [vmem:[%s0 + $0x18] sm:$0xff]
  %v25 = vunpack.c.l.bf16 %v21
  %v26 = vunpack.c.h.bf16 %v21
  %v27 = vunpack.c.l.bf16 %v22
  %v28 = vunpack.c.h.bf16 %v22
  %v29 = vunpack.c.l.bf16 %v23
  %v30 = vunpack.c.h.bf16 %v23
  %v31 = vunpack.c.l.bf16 %v24
  %v32 = vunpack.c.h.bf16 %v24
  %33 = vrot.lane.b32.xlu0 %v25, 11
  %v34 = vpop.permute.xlu0 %33
  %35 = vrot.lane.b32.xlu0 %v27, 11
  %v36 = vpop.permute.xlu0 %35
  %37 = vrot.lane.b32.xlu0 %v29, 11
  %v38 = vpop.permute.xlu0 %37
  %39 = vrot.lane.b32.xlu0 %v31, 11
  %v40 = vpop.permute.xlu0 %39
  %41 = vrot.lane.b32.xlu0 %v26, 11
  %v42 = vpop.permute.xlu0 %41
  %43 = vrot.lane.b32.xlu0 %v28, 11
  %v44 = vpop.permute.xlu0 %43
  %45 = vrot.lane.b32.xlu0 %v30, 11
  %v46 = vpop.permute.xlu0 %45
  %47 = vrot.lane.b32.xlu0 %v32, 11
  %v48 = vpop.permute.xlu0 %47
  %v49 = vlaneseq
  %v50 = vand.u32 %v49, 127
  %vm51 = vcmp.lt.s32.totalorder %v50, 11
  %v52 = vsel %vm51, %v34, %v42
  %v53 = vsel %vm51, %v36, %v44
  %v54 = vsel %vm51, %v38, %v46
  %v55 = vsel %vm51, %v40, %v48
  %v56 = vsel %vm51, %v42, %v34
  %v57 = vsel %vm51, %v44, %v36
  %v58 = vsel %vm51, %v46, %v38
  %v59 = vsel %vm51, %v48, %v40
  %60 = vst [vmem:[#allocation2] sm:$0xff] %v56
  %61 = vst [vmem:[#allocation2 + $0x8] sm:$0xff] %v52
  %62 = vst [vmem:[#allocation2 + $0x10] sm:$0xff] %v57
  %63 = vst [vmem:[#allocation2 + $0x18] sm:$0xff] %v53
  %64 = vst [vmem:[#allocation2 + $0x20] sm:$0xff] %v58
  %65 = vst [vmem:[#allocation2 + $0x28] sm:$0xff] %v54
  %66 = vst [vmem:[#allocation2 + $0x30] sm:$0xff] %v59
  %67 = vst [vmem:[#allocation2 + $0x38] sm:$0xff] %v55
  %68 = vrot.lane.b32.xlu0 %v25, 10
  %v69 = vpop.permute.xlu0 %68
  %70 = vrot.lane.b32.xlu0 %v27, 10
  %v71 = vpop.permute.xlu0 %70
  %72 = vrot.lane.b32.xlu0 %v29, 10
  %v73 = vpop.permute.xlu0 %72
  %74 = vrot.lane.b32.xlu0 %v31, 10
  %v75 = vpop.permute.xlu0 %74
  %76 = vrot.lane.b32.xlu0 %v26, 10
  %v77 = vpop.permute.xlu0 %76
  %78 = vrot.lane.b32.xlu0 %v28, 10
  %v79 = vpop.permute.xlu0 %78
  %80 = vrot.lane.b32.xlu0 %v30, 10
  %v81 = vpop.permute.xlu0 %80
  %82 = vrot.lane.b32.xlu0 %v32, 10
  %v83 = vpop.permute.xlu0 %82
  %vm84 = vcmp.lt.s32.totalorder %v50, 10
  %v85 = vsel %vm84, %v69, %v77
  %v86 = vsel %vm84, %v71, %v79
  %v87 = vsel %vm84, %v73, %v81
  %v88 = vsel %vm84, %v75, %v83
  %v89 = vsel %vm84, %v77, %v69
  %v90 = vsel %vm84, %v79, %v71
  %v91 = vsel %vm84, %v81, %v73
  %v92 = vsel %vm84, %v83, %v75
  %93 = vst [vmem:[#allocation2 + $0x40] sm:$0xff] %v89
  %94 = vst [vmem:[#allocation2 + $0x48] sm:$0xff] %v85
  %95 = vst [vmem:[#allocation2 + $0x50] sm:$0xff] %v90
  %96 = vst [vmem:[#allocation2 + $0x58] sm:$0xff] %v86
  %97 = vst [vmem:[#allocation2 + $0x60] sm:$0xff] %v91
  %98 = vst [vmem:[#allocation2 + $0x68] sm:$0xff] %v87
  %99 = vst [vmem:[#allocation2 + $0x70] sm:$0xff] %v92
  %100 = vst [vmem:[#allocation2 + $0x78] sm:$0xff] %v88
  %101 = vrot.lane.b32.xlu0 %v25, 1
  %v102 = vpop.permute.xlu0 %101
  %103 = vrot.lane.b32.xlu0 %v27, 1
  %v104 = vpop.permute.xlu0 %103
  %105 = vrot.lane.b32.xlu0 %v29, 1
  %v106 = vpop.permute.xlu0 %105
  %107 = vrot.lane.b32.xlu0 %v31, 1
  %v108 = vpop.permute.xlu0 %107
  %109 = vrot.lane.b32.xlu0 %v26, 1
  %v110 = vpop.permute.xlu0 %109
  %111 = vrot.lane.b32.xlu0 %v28, 1
  %v112 = vpop.permute.xlu0 %111
  %113 = vrot.lane.b32.xlu0 %v30, 1
  %v114 = vpop.permute.xlu0 %113
  %115 = vrot.lane.b32.xlu0 %v32, 1
  %v116 = vpop.permute.xlu0 %115
  %vm117 = vcmp.lt.s32.totalorder %v50, 1
  %v118 = vsel %vm117, %v102, %v110
  %v119 = vsel %vm117, %v104, %v112
  %v120 = vsel %vm117, %v106, %v114
  %v121 = vsel %vm117, %v108, %v116
  %v122 = vsel %vm117, %v110, %v102
  %v123 = vsel %vm117, %v112, %v104
  %v124 = vsel %vm117, %v114, %v106
  %v125 = vsel %vm117, %v116, %v108
  %126 = vst [vmem:[#allocation2 + $0x80] sm:$0xff] %v122
  %127 = vst [vmem:[#allocation2 + $0x88] sm:$0xff] %v118
  %128 = vst [vmem:[#allocation2 + $0x90] sm:$0xff] %v123
  %129 = vst [vmem:[#allocation2 + $0x98] sm:$0xff] %v119
  %130 = vst [vmem:[#allocation2 + $0xa0] sm:$0xff] %v124
  %131 = vst [vmem:[#allocation2 + $0xa8] sm:$0xff] %v120
  %132 = vst [vmem:[#allocation2 + $0xb0] sm:$0xff] %v125
  %133 = vst [vmem:[#allocation2 + $0xb8] sm:$0xff] %v121
  %134 = vst [vmem:[#allocation2 + $0xc0] sm:$0xff] %v25
  %135 = vst [vmem:[#allocation2 + $0xc8] sm:$0xff] %v26
  %136 = vst [vmem:[#allocation2 + $0xd0] sm:$0xff] %v27
  %137 = vst [vmem:[#allocation2 + $0xd8] sm:$0xff] %v28
  %138 = vst [vmem:[#allocation2 + $0xe0] sm:$0xff] %v29
  %139 = vst [vmem:[#allocation2 + $0xe8] sm:$0xff] %v30
  %140 = vst [vmem:[#allocation2 + $0xf0] sm:$0xff] %v31
  %141 = vst [vmem:[#allocation2 + $0xf8] sm:$0xff] %v32
  %v142 = vld [vmem:[#allocation2] sm:$0xff]
  %v143 = vld [vmem:[#allocation2 + $0x8] sm:$0xff]
  %v144 = vld [vmem:[#allocation2 + $0x10] sm:$0xff]
  %v145 = vld [vmem:[#allocation2 + $0x18] sm:$0xff]
  %v146 = vld [vmem:[#allocation2 + $0x20] sm:$0xff]
  %v147 = vld [vmem:[#allocation2 + $0x28] sm:$0xff]
  %v148 = vld [vmem:[#allocation2 + $0x30] sm:$0xff]
  %v149 = vld [vmem:[#allocation2 + $0x38] sm:$0xff]
  %v150 = vld [vmem:[#allocation2 + $0x40] sm:$0xff]
  %v151 = vld [vmem:[#allocation2 + $0x48] sm:$0xff]
  %v152 = vld [vmem:[#allocation2 + $0x50] sm:$0xff]
  %v153 = vld [vmem:[#allocation2 + $0x58] sm:$0xff]
  %v154 = vld [vmem:[#allocation2 + $0x60] sm:$0xff]
  %v155 = vld [vmem:[#allocation2 + $0x68] sm:$0xff]
  %v156 = vld [vmem:[#allocation2 + $0x70] sm:$0xff]
  %v157 = vld [vmem:[#allocation2 + $0x78] sm:$0xff]
  %v158 = vld [vmem:[#allocation2 + $0x80] sm:$0xff]
  %v159 = vld [vmem:[#allocation2 + $0x88] sm:$0xff]
  %v160 = vld [vmem:[#allocation2 + $0x90] sm:$0xff]
  %v161 = vld [vmem:[#allocation2 + $0x98] sm:$0xff]
  %v162 = vld [vmem:[#allocation2 + $0xa0] sm:$0xff]
  %v163 = vld [vmem:[#allocation2 + $0xa8] sm:$0xff]
  %v164 = vld [vmem:[#allocation2 + $0xb0] sm:$0xff]
  %v165 = vld [vmem:[#allocation2 + $0xb8] sm:$0xff]
  %v166 = vld [vmem:[#allocation2 + $0xc0] sm:$0xff]
  %v167 = vld [vmem:[#allocation2 + $0xc8] sm:$0xff]
  %v168 = vld [vmem:[#allocation2 + $0xd0] sm:$0xff]
  %v169 = vld [vmem:[#allocation2 + $0xd8] sm:$0xff]
  %v170 = vld [vmem:[#allocation2 + $0xe0] sm:$0xff]
  %v171 = vld [vmem:[#allocation2 + $0xe8] sm:$0xff]
  %v172 = vld [vmem:[#allocation2 + $0xf0] sm:$0xff]
  %v173 = vld [vmem:[#allocation2 + $0xf8] sm:$0xff]
  %v174 = vpack.c.bf16 %v144, %v142
  %v175 = vpack.c.bf16 %v145, %v143
  %v176 = vpack.c.bf16 %v148, %v146
  %v177 = vpack.c.bf16 %v149, %v147
  %v178 = vpack.c.bf16 %v152, %v150
  %v179 = vpack.c.bf16 %v153, %v151
  %v180 = vpack.c.bf16 %v156, %v154
  %v181 = vpack.c.bf16 %v157, %v155
  %v182 = vpack.c.bf16 %v160, %v158
  %v183 = vpack.c.bf16 %v161, %v159
  %v184 = vpack.c.bf16 %v164, %v162
  %v185 = vpack.c.bf16 %v165, %v163
  %v186 = vpack.c.bf16 %v168, %v166
  %v187 = vpack.c.bf16 %v169, %v167
  %v188 = vpack.c.bf16 %v172, %v170
  %v189 = vpack.c.bf16 %v173, %v171
  %v190 = vld [vmem:[%s1] sm:$0xf]
  %v191 = vld [vmem:[%s1 + $0x4] sm:$0xf]
  %v192 = vld [vmem:[%s2] sm:$0xff]
  %v193 = vld [vmem:[%s2 + $0x8] sm:$0xff]
  %195 = vset.pattern.permute.xlu0 0
  %196 = vperm.xlu0 %195, %v192
  %v197 = vpop.permute.xlu0 %196
  %200 = vset.pattern.permute.xlu0 0
  %201 = vperm.xlu0 %200, %v193
  %v202 = vpop.permute.xlu0 %201
  %v206 = vunpack.c.l.b16 %v190
  %v207 = vunpack.c.l.b16 %v191
  %v208 = vpack.c.b16 %v207, %v206
  %210 = vmatpush.bf16.msra.mxu0 %v188
  %211 = vmatpush.bf16.msra.mxu0 %v186
  %212 = vmatpush.bf16.msra.mxu0 %v184
  %213 = vmatpush.bf16.msra.mxu0 %v182
  %214 = vmatpush.bf16.msra.mxu0 %v180
  %215 = vmatpush.bf16.msra.mxu0 %v178
  %216 = vmatpush.bf16.msra.mxu0 %v176
  %217 = vmatpush.bf16.msra.mxu0 %v174
  %218 = vmatmul.bf16.gmra.mxu0 %v208
  %v219 = vpop.f32.mrf.mxu0
  %v220 = vadd.f32 %v197, %v219
  %v221 = vpop.f32.mrf.mxu0
  %v222 = vadd.f32 %v202, %v221
  %223 = vdwg.mxu0
  %224 = vmatpush.bf16.msra.mxu0 %v189
  %225 = vmatpush.bf16.msra.mxu0 %v187
  %226 = vmatpush.bf16.msra.mxu0 %v185
  %227 = vmatpush.bf16.msra.mxu0 %v183
  %228 = vmatpush.bf16.msra.mxu0 %v181
  %229 = vmatpush.bf16.msra.mxu0 %v179
  %230 = vmatpush.bf16.msra.mxu0 %v177
  %231 = vmatpush.bf16.msra.mxu0 %v175
  %232 = vmatmul.bf16.gmra.mxu0 %v208
  %v233 = vpop.f32.mrf.mxu0
  %v234 = vadd.f32 %v197, %v233
  %v235 = vpop.f32.mrf.mxu0
  %v236 = vadd.f32 %v202, %v235
  %237 = vdwg.mxu0
  %v239 = vperm.slane %v20, 0
  %v240 = vperm.slane %v20, 1
  %v243 = vmul.f32 %v220, %v239
  %v244 = vmul.f32 %v234, %v240
  %v245 = vmul.f32 %v222, %v239
  %v246 = vmul.f32 %v236, %v240
  %v247 = vadd.f32 %v243, %v244
  %248 = vadd.xlane.f32.xlu0 %v247
  %v249 = vpop.xlane.xlu0 %248
  %v250 = vadd.f32 %v245, %v246
  %251 = vadd.xlane.f32.xlu0 %v250
  %v252 = vpop.xlane.xlu0 %251
  %vm253 = vcmask 7168
  %254 = vst.msk [vmem:[%s5] sm:$0xff] %vm253, %v249
  %255 = vst.msk [vmem:[%s5 + $0x8] sm:$0xff] %vm253, %v252
  %v256 = vmul.f32 %v243, %v243
  %v257 = vmul.f32 %v244, %v244
  %v258 = vmul.f32 %v245, %v245
  %v259 = vmul.f32 %v246, %v246
  %v260 = vadd.f32 %v256, %v257
  %261 = vadd.xlane.f32.xlu0 %v260
  %v262 = vpop.xlane.xlu0 %261
  %v263 = vadd.f32 %v258, %v259
  %264 = vadd.xlane.f32.xlu0 %v263
  %v265 = vpop.xlane.xlu0 %264
  %266 = vst.msk [vmem:[%s6] sm:$0xff] %vm253, %v262
  %267 = vst.msk [vmem:[%s6 + $0x8] sm:$0xff] %vm253, %v265
  %v268 = vpack.c.bf16 %v244, %v243
  %v269 = vpack.c.bf16 %v246, %v245
  %270 = vst [vmem:[%s4] sm:$0xff] %v268
  %271 = vst [vmem:[%s4 + $0x8] sm:$0xff] %v269
  // Predicated region
  $region18: #{model_forward.15} parent=0 // pred_check
    _
  $region19: #{model_forward.15} parent=0 // pred_check_branch
    %273 = sbr.rel (0) target = $region21
  $region20: #{model_forward.15} parent=0 // pred_region
    _
  $region21: #{model_forward.15} parent=0 // pred_fallthru
    _
  // Predicated region
  $region22: #{model_forward.15} parent=0 // pred_check
    _
  $region23: #{model_forward.15} parent=0 // pred_check_branch
    %275 = sbr.rel (0) target = $region25
  $region24: #{model_forward.15} parent=0 // pred_region
    _
  $region25: #{model_forward.15} parent=0 // pred_fallthru
    _
  // Predicated region
  $region26: #{model_forward.15} parent=0 // pred_check
    _
  $region27: #{model_forward.15} parent=0 // pred_check_branch
    %277 = sbr.rel (0) target = $region29
  $region28: #{model_forward.15} parent=0 // pred_region
    _
  $region29: #{model_forward.15} parent=0 // pred_fallthru
    _
  // Predicated region
  $region30: #{model_forward.15} parent=0 // pred_check
    _
  $region31: #{model_forward.15} parent=0 // pred_check_branch
    %279 = sbr.rel (0) target = $region33
  $region32: #{model_forward.15} parent=0 // pred_region
    _
  $region33: #{model_forward.15} parent=0 // pred_fallthru
    _
  // Predicated region
  $region34: #{model_forward.15} parent=0 // pred_check
    _
  $region35: #{model_forward.15} parent=0 // pred_check_branch
    %281 = sbr.rel (0) target = $region37
  $region36: #{model_forward.15} parent=0 // pred_region
    _
  $region37: #{model_forward.15} parent=0 // pred_fallthru
    _
  // Predicated region
  $region38: #{model_forward.15} parent=0 // pred_check
    _
  $region39: #{model_forward.15} parent=0 // pred_check_branch
    %283 = sbr.rel (0) target = $region41
  $region40: #{model_forward.15} parent=0 // pred_region
    _
  $region41: #{model_forward.15} parent=0 // pred_fallthru
    _

// kernel: model_forward.16
$region0: #{model_forward.16}
  #allocation0 [shape = 'u32[]', space=smem, size = 0x4, offset = 0x4, fixed_abs, tag = 'smem constant byte address 0x4 - core index']
  #allocation1 [shape = 'u32[72,128]{1,0:T(1,128)}', space=vmem, size = 0x9000, scoped, tag = 'internal scratch']
  #allocation2 [shape = 'f32[144,256]{1,0:T(8,128)}', space=vmem, size = 0x24000, scoped, tag = 'scratch operand']
  %s0 = inlined_call_operand.vmem [shape: bf16[16,256], index: 0, kind: input, shape index: {}]
  %s1 = inlined_call_operand.vmem [shape: bf16[16,144], index: 1, kind: input, shape index: {}]
  %s2 = inlined_call_operand.vmem [shape: f32[16,1], index: 2, kind: input, shape index: {}]
  %s3 = inlined_call_operand.vmem [shape: f32[16,1], index: 3, kind: input, shape index: {}]
  %s4 = inlined_call_operand.vmem [shape: f32[16,1], index: 4, kind: input, shape index: {}]
  %s5 = inlined_call_operand.vmem [shape: f32[1,256], index: 5, kind: input, shape index: {}]
  %s6 = inlined_call_operand.vmem [shape: bf16[16,256], index: 6, kind: output, shape index: {0}]
  %s7 = inlined_call_operand.vmem [shape: f32[16,1], index: 7, kind: output, shape index: {1}]
  %s8 = inlined_call_operand.vmem [shape: f32[16,1], index: 8, kind: output, shape index: {2}]
  %9 = xla_tuple %s6, %s7, %s8
  %s10 = sld [smem:[#allocation0]]
  $region50: #{model_forward.16} parent=0
    _
  %s12 = ssub.s32 1, %s10
  %s13 = scalar_select 0, %s12, %s10
  // Predicated region
  $region2: #{model_forward.16} parent=0 // pred_check
    _
  $region3: #{model_forward.16} parent=0 // pred_check_branch
    %15 = sbr.rel (0) target = $region5
  $region4: #{model_forward.16} parent=0 // pred_region
    _
  $region5: #{model_forward.16} parent=0 // pred_fallthru
    _
  // Predicated region
  $region6: #{model_forward.16} parent=0 // pred_check
    _
  $region7: #{model_forward.16} parent=0 // pred_check_branch
    %17 = sbr.rel (0) target = $region9
  $region8: #{model_forward.16} parent=0 // pred_region
    _
  $region9: #{model_forward.16} parent=0 // pred_fallthru
    _
  // Predicated region
  $region10: #{model_forward.16} parent=0 // pred_check
    _
  $region11: #{model_forward.16} parent=0 // pred_check_branch
    %19 = sbr.rel (0) target = $region13
  $region12: #{model_forward.16} parent=0 // pred_region
    _
  $region13: #{model_forward.16} parent=0 // pred_fallthru
    _
  // Predicated region
  $region14: #{model_forward.16} parent=0 // pred_check
    _
  $region15: #{model_forward.16} parent=0 // pred_check_branch
    %21 = sbr.rel (0) target = $region17
  $region16: #{model_forward.16} parent=0 // pred_region
    _
  $region17: #{model_forward.16} parent=0 // pred_fallthru
    _
  // Predicated region
  $region18: #{model_forward.16} parent=0 // pred_check
    _
  $region19: #{model_forward.16} parent=0 // pred_check_branch
    %23 = sbr.rel (0) target = $region21
  $region20: #{model_forward.16} parent=0 // pred_region
    _
  $region21: #{model_forward.16} parent=0 // pred_fallthru
    _
  // Predicated region
  $region22: #{model_forward.16} parent=0 // pred_check
    _
  $region23: #{model_forward.16} parent=0 // pred_check_branch
    %25 = sbr.rel (0) target = $region25
  $region24: #{model_forward.16} parent=0 // pred_region
    _
  $region25: #{model_forward.16} parent=0 // pred_fallthru
    _
  %v27 = vld [vmem:[%s5] sm:$0x3]
  %v28 = vld [vmem:[%s0] sm:$0xff]
  %v29 = vld [vmem:[%s0 + $0x8] sm:$0xff]
  %v30 = vunpack.c.l.bf16 %v28
  %v31 = vunpack.c.h.bf16 %v28
  %v32 = vunpack.c.l.bf16 %v29
  %v33 = vunpack.c.h.bf16 %v29
  %v34 = vld [vmem:[%s3] sm:$0xff]
  %v35 = vld [vmem:[%s3 + $0x8] sm:$0xff]
  %37 = vset.pattern.permute.xlu0 0
  %38 = vperm.xlu0 %37, %v34
  %v39 = vpop.permute.xlu0 %38
  %42 = vset.pattern.permute.xlu0 0
  %43 = vperm.xlu0 %42, %v35
  %v44 = vpop.permute.xlu0 %43
  %v46 = vmul.f32 %v30, %v39
  %v47 = vmul.f32 %v31, %v39
  %v48 = vmul.f32 %v32, %v44
  %v49 = vmul.f32 %v33, %v44
  %v50 = vld [vmem:[%s4] sm:$0xff]
  %v51 = vld [vmem:[%s4 + $0x8] sm:$0xff]
  %53 = vset.pattern.permute.xlu0 0
  %54 = vperm.xlu0 %53, %v50
  %v55 = vpop.permute.xlu0 %54
  %58 = vset.pattern.permute.xlu0 0
  %59 = vperm.xlu0 %58, %v51
  %v60 = vpop.permute.xlu0 %59
  %v62 = vadd.f32 %v46, %v55
  %v63 = vadd.f32 %v47, %v55
  %v64 = vadd.f32 %v48, %v60
  %v65 = vadd.f32 %v49, %v60
  %v66 = vmax.f32 %v62, 0.0
  %v67 = vmax.f32 %v63, 0.0
  %v68 = vmax.f32 %v64, 0.0
  %v69 = vmax.f32 %v65, 0.0
  %v71 = vperm.slane %v27, 0
  %v72 = vperm.slane %v27, 1
  %v75 = vmul.f32 %v66, %v71
  %v76 = vmul.f32 %v67, %v72
  %v77 = vmul.f32 %v68, %v71
  %v78 = vmul.f32 %v69, %v72
  %79 = vrot.lane.b32.xlu0 %v75, 11
  %v80 = vpop.permute.xlu0 %79
  %81 = vrot.lane.b32.xlu0 %v77, 11
  %v82 = vpop.permute.xlu0 %81
  %83 = vrot.lane.b32.xlu0 %v76, 11
  %v84 = vpop.permute.xlu0 %83
  %85 = vrot.lane.b32.xlu0 %v78, 11
  %v86 = vpop.permute.xlu0 %85
  %v87 = vlaneseq
  %v88 = vand.u32 %v87, 127
  %vm89 = vcmp.lt.s32.totalorder %v88, 11
  %v90 = vsel %vm89, %v80, %v84
  %v91 = vsel %vm89, %v82, %v86
  %v92 = vsel %vm89, %v84, %v80
  %v93 = vsel %vm89, %v86, %v82
  %94 = vst [vmem:[#allocation2] sm:$0xff] %v92
  %95 = vst [vmem:[#allocation2 + $0x8] sm:$0xff] %v90
  %96 = vst [vmem:[#allocation2 + $0x10] sm:$0xff] %v93
  %97 = vst [vmem:[#allocation2 + $0x18] sm:$0xff] %v91
  %98 = vrot.lane.b32.xlu0 %v75, 10
  %v99 = vpop.permute.xlu0 %98
  %100 = vrot.lane.b32.xlu0 %v77, 10
  %v101 = vpop.permute.xlu0 %100
  %102 = vrot.lane.b32.xlu0 %v76, 10
  %v103 = vpop.permute.xlu0 %102
  %104 = vrot.lane.b32.xlu0 %v78, 10
  %v105 = vpop.permute.xlu0 %104
  %vm106 = vcmp.lt.s32.totalorder %v88, 10
  %v107 = vsel %vm106, %v99, %v103
  %v108 = vsel %vm106, %v101, %v105
  %v109 = vsel %vm106, %v103, %v99
  %v110 = vsel %vm106, %v105, %v101
  %111 = vst [vmem:[#allocation2 + $0x20] sm:$0xff] %v109
  %112 = vst [vmem:[#allocation2 + $0x28] sm:$0xff] %v107
  %113 = vst [vmem:[#allocation2 + $0x30] sm:$0xff] %v110
  %114 = vst [vmem:[#allocation2 + $0x38] sm:$0xff] %v108
  %115 = vrot.lane.b32.xlu0 %v75, 9
  %v116 = vpop.permute.xlu0 %115
  %117 = vrot.lane.b32.xlu0 %v77, 9
  %v118 = vpop.permute.xlu0 %117
  %119 = vrot.lane.b32.xlu0 %v76, 9
  %v120 = vpop.permute.xlu0 %119
  %121 = vrot.lane.b32.xlu0 %v78, 9
  %v122 = vpop.permute.xlu0 %121
  %vm123 = vcmp.lt.s32.totalorder %v88, 9
  %v124 = vsel %vm123, %v116, %v120
  %v125 = vsel %vm123, %v118, %v122
  %v126 = vsel %vm123, %v120, %v116
  %v127 = vsel %vm123, %v122, %v118
  %128 = vst [vmem:[#allocation2 + $0x40] sm:$0xff] %v126
  %129 = vst [vmem:[#allocation2 + $0x48] sm:$0xff] %v124
  %130 = vst [vmem:[#allocation2 + $0x50] sm:$0xff] %v127
  %131 = vst [vmem:[#allocation2 + $0x58] sm:$0xff] %v125
  %132 = vrot.lane.b32.xlu0 %v75, 1
  %v133 = vpop.permute.xlu0 %132
  %134 = vrot.lane.b32.xlu0 %v77, 1
  %v135 = vpop.permute.xlu0 %134
  %136 = vrot.lane.b32.xlu0 %v76, 1
  %v137 = vpop.permute.xlu0 %136
  %138 = vrot.lane.b32.xlu0 %v78, 1
  %v139 = vpop.permute.xlu0 %138
  %vm140 = vcmp.lt.s32.totalorder %v88, 1
  %v141 = vsel %vm140, %v133, %v137
  %v142 = vsel %vm140, %v135, %v139
  %v143 = vsel %vm140, %v137, %v133
  %v144 = vsel %vm140, %v139, %v135
  %145 = vst [vmem:[#allocation2 + $0x60] sm:$0xff] %v143
  %146 = vst [vmem:[#allocation2 + $0x68] sm:$0xff] %v141
  %147 = vst [vmem:[#allocation2 + $0x70] sm:$0xff] %v144
  %148 = vst [vmem:[#allocation2 + $0x78] sm:$0xff] %v142
  %149 = vst [vmem:[#allocation2 + $0x80] sm:$0xff] %v75
  %150 = vst [vmem:[#allocation2 + $0x88] sm:$0xff] %v76
  %151 = vst [vmem:[#allocation2 + $0x90] sm:$0xff] %v77
  %152 = vst [vmem:[#allocation2 + $0x98] sm:$0xff] %v78
  %153 = vrot.lane.b32.xlu0 %v75, 127
  %v154 = vpop.permute.xlu0 %153
  %155 = vrot.lane.b32.xlu0 %v77, 127
  %v156 = vpop.permute.xlu0 %155
  %157 = vrot.lane.b32.xlu0 %v76, 127
  %v158 = vpop.permute.xlu0 %157
  %159 = vrot.lane.b32.xlu0 %v78, 127
  %v160 = vpop.permute.xlu0 %159
  %vm161 = vcmp.lt.s32.totalorder %v88, 127
  %v162 = vsel %vm161, %v154, %v158
  %v163 = vsel %vm161, %v156, %v160
  %v164 = vsel %vm161, %v158, %v154
  %v165 = vsel %vm161, %v160, %v156
  %166 = vst [vmem:[#allocation2 + $0xa0] sm:$0xff] %v162
  %167 = vst [vmem:[#allocation2 + $0xa8] sm:$0xff] %v164
  %168 = vst [vmem:[#allocation2 + $0xb0] sm:$0xff] %v163
  %169 = vst [vmem:[#allocation2 + $0xb8] sm:$0xff] %v165
  %170 = vrot.lane.b32.xlu0 %v75, 119
  %v171 = vpop.permute.xlu0 %170
  %172 = vrot.lane.b32.xlu0 %v77, 119
  %v173 = vpop.permute.xlu0 %172
  %174 = vrot.lane.b32.xlu0 %v76, 119
  %v175 = vpop.permute.xlu0 %174
  %176 = vrot.lane.b32.xlu0 %v78, 119
  %v177 = vpop.permute.xlu0 %176
  %vm178 = vcmp.lt.s32.totalorder %v88, 119
  %v179 = vsel %vm178, %v171, %v175
  %v180 = vsel %vm178, %v173, %v177
  %v181 = vsel %vm178, %v175, %v171
  %v182 = vsel %vm178, %v177, %v173
  %183 = vst [vmem:[#allocation2 + $0xc0] sm:$0xff] %v179
  %184 = vst [vmem:[#allocation2 + $0xc8] sm:$0xff] %v181
  %185 = vst [vmem:[#allocation2 + $0xd0] sm:$0xff] %v180
  %186 = vst [vmem:[#allocation2 + $0xd8] sm:$0xff] %v182
  %187 = vrot.lane.b32.xlu0 %v75, 118
  %v188 = vpop.permute.xlu0 %187
  %189 = vrot.lane.b32.xlu0 %v77, 118
  %v190 = vpop.permute.xlu0 %189
  %191 = vrot.lane.b32.xlu0 %v76, 118
  %v192 = vpop.permute.xlu0 %191
  %193 = vrot.lane.b32.xlu0 %v78, 118
  %v194 = vpop.permute.xlu0 %193
  %vm195 = vcmp.lt.s32.totalorder %v88, 118
  %v196 = vsel %vm195, %v188, %v192
  %v197 = vsel %vm195, %v190, %v194
  %v198 = vsel %vm195, %v192, %v188
  %v199 = vsel %vm195, %v194, %v190
  %200 = vst [vmem:[#allocation2 + $0xe0] sm:$0xff] %v196
  %201 = vst [vmem:[#allocation2 + $0xe8] sm:$0xff] %v198
  %202 = vst [vmem:[#allocation2 + $0xf0] sm:$0xff] %v197
  %203 = vst [vmem:[#allocation2 + $0xf8] sm:$0xff] %v199
  %204 = vrot.lane.b32.xlu0 %v75, 117
  %v205 = vpop.permute.xlu0 %204
  %206 = vrot.lane.b32.xlu0 %v77, 117
  %v207 = vpop.permute.xlu0 %206
  %208 = vrot.lane.b32.xlu0 %v76, 117
  %v209 = vpop.permute.xlu0 %208
  %210 = vrot.lane.b32.xlu0 %v78, 117
  %v211 = vpop.permute.xlu0 %210
  %vm212 = vcmp.lt.s32.totalorder %v88, 117
  %v213 = vsel %vm212, %v205, %v209
  %v214 = vsel %vm212, %v207, %v211
  %v215 = vsel %vm212, %v209, %v205
  %v216 = vsel %vm212, %v211, %v207
  %217 = vst [vmem:[#allocation2 + $0x100] sm:$0xff] %v213
  %218 = vst [vmem:[#allocation2 + $0x108] sm:$0xff] %v215
  %219 = vst [vmem:[#allocation2 + $0x110] sm:$0xff] %v214
  %220 = vst [vmem:[#allocation2 + $0x118] sm:$0xff] %v216
  %v221 = vld [vmem:[#allocation2] sm:$0xff]
  %v222 = vld [vmem:[#allocation2 + $0x8] sm:$0xff]
  %v223 = vld [vmem:[#allocation2 + $0x10] sm:$0xff]
  %v224 = vld [vmem:[#allocation2 + $0x18] sm:$0xff]
  %v225 = vld [vmem:[#allocation2 + $0x20] sm:$0xff]
  %v226 = vld [vmem:[#allocation2 + $0x28] sm:$0xff]
  %v227 = vld [vmem:[#allocation2 + $0x30] sm:$0xff]
  %v228 = vld [vmem:[#allocation2 + $0x38] sm:$0xff]
  %v229 = vld [vmem:[#allocation2 + $0x40] sm:$0xff]
  %v230 = vld [vmem:[#allocation2 + $0x48] sm:$0xff]
  %v231 = vld [vmem:[#allocation2 + $0x50] sm:$0xff]
  %v232 = vld [vmem:[#allocation2 + $0x58] sm:$0xff]
  %v233 = vld [vmem:[#allocation2 + $0x60] sm:$0xff]
  %v234 = vld [vmem:[#allocation2 + $0x68] sm:$0xff]
  %v235 = vld [vmem:[#allocation2 + $0x70] sm:$0xff]
  %v236 = vld [vmem:[#allocation2 + $0x78] sm:$0xff]
  %v237 = vld [vmem:[#allocation2 + $0x80] sm:$0xff]
  %v238 = vld [vmem:[#allocation2 + $0x88] sm:$0xff]
  %v239 = vld [vmem:[#allocation2 + $0x90] sm:$0xff]
  %v240 = vld [vmem:[#allocation2 + $0x98] sm:$0xff]
  %v241 = vld [vmem:[#allocation2 + $0xa0] sm:$0xff]
  %v242 = vld [vmem:[#allocation2 + $0xa8] sm:$0xff]
  %v243 = vld [vmem:[#allocation2 + $0xb0] sm:$0xff]
  %v244 = vld [vmem:[#allocation2 + $0xb8] sm:$0xff]
  %v245 = vld [vmem:[#allocation2 + $0xc0] sm:$0xff]
  %v246 = vld [vmem:[#allocation2 + $0xc8] sm:$0xff]
  %v247 = vld [vmem:[#allocation2 + $0xd0] sm:$0xff]
  %v248 = vld [vmem:[#allocation2 + $0xd8] sm:$0xff]
  %v249 = vld [vmem:[#allocation2 + $0xe0] sm:$0xff]
  %v250 = vld [vmem:[#allocation2 + $0xe8] sm:$0xff]
  %v251 = vld [vmem:[#allocation2 + $0xf0] sm:$0xff]
  %v252 = vld [vmem:[#allocation2 + $0xf8] sm:$0xff]
  %v253 = vld [vmem:[#allocation2 + $0x100] sm:$0xff]
  %v254 = vld [vmem:[#allocation2 + $0x108] sm:$0xff]
  %v255 = vld [vmem:[#allocation2 + $0x110] sm:$0xff]
  %v256 = vld [vmem:[#allocation2 + $0x118] sm:$0xff]
  %v257 = vpack.c.bf16 %v223, %v221
  %v258 = vpack.c.bf16 %v224, %v222
  %v259 = vpack.c.bf16 %v227, %v225
  %v260 = vpack.c.bf16 %v228, %v226
  %v261 = vpack.c.bf16 %v231, %v229
  %v262 = vpack.c.bf16 %v232, %v230
  %v263 = vpack.c.bf16 %v235, %v233
  %v264 = vpack.c.bf16 %v236, %v234
  %v265 = vpack.c.bf16 %v239, %v237
  %v266 = vpack.c.bf16 %v240, %v238
  %v267 = vpack.c.bf16 %v243, %v241
  %v268 = vpack.c.bf16 %v244, %v242
  %v269 = vpack.c.bf16 %v247, %v245
  %v270 = vpack.c.bf16 %v248, %v246
  %v271 = vpack.c.bf16 %v251, %v249
  %v272 = vpack.c.bf16 %v252, %v250
  %v273 = vpack.c.bf16 %v255, %v253
  %v274 = vpack.c.bf16 %v256, %v254
  %v275 = vld [vmem:[%s1] sm:$0xff]
  %v276 = vld [vmem:[%s1 + $0x8] sm:$0xff]
  %v277 = vld [vmem:[%s2] sm:$0xff]
  %v278 = vld [vmem:[%s2 + $0x8] sm:$0xff]
  %280 = vset.pattern.permute.xlu0 0
  %281 = vperm.xlu0 %280, %v277
  %v282 = vpop.permute.xlu0 %281
  %285 = vset.pattern.permute.xlu0 0
  %286 = vperm.xlu0 %285, %v278
  %v287 = vpop.permute.xlu0 %286
  %v291 = vunpack.c.l.b16 %v275
  %v292 = vunpack.c.h.b16 %v275
  %v293 = vunpack.c.l.b16 %v276
  %v294 = vunpack.c.h.b16 %v276
  %v295 = vpack.c.b16 %v293, %v291
  %v296 = vpack.c.b16 %v294, %v292
  %vm298 = vcmask 130048
  %v300 = vsel %vm298, %v296, 0
  %302 = vmatpush.bf16.msra.mxu0 %v271
  %303 = vmatpush.bf16.msra.mxu0 %v269
  %304 = vmatpush.bf16.msra.mxu0 %v267
  %305 = vmatpush.bf16.msra.mxu0 %v265
  %306 = vmatpush.bf16.msra.mxu0 %v263
  %307 = vmatpush.bf16.msra.mxu0 %v261
  %308 = vmatpush.bf16.msra.mxu0 %v259
  %309 = vmatpush.bf16.msra.mxu0 %v257
  %310 = vmatmul.bf16.gmra.mxu0 %v295
  %v311 = vpop.f32.mrf.mxu0
  %v312 = vadd.f32 %v282, %v311
  %v313 = vpop.f32.mrf.mxu0
  %v314 = vadd.f32 %v287, %v313
  %315 = vdwg.mxu0
  %316 = vmatpush.bf16.msra.mxu0 0
  %317 = vmatpush.bf16.msra.mxu0 0
  %318 = vmatpush.bf16.msra.mxu0 0
  %319 = vmatpush.bf16.msra.mxu0 0
  %320 = vmatpush.bf16.msra.mxu0 0
  %321 = vmatpush.bf16.msra.mxu0 0
  %322 = vmatpush.bf16.msra.mxu0 0
  %323 = vmatpush.bf16.msra.mxu0 %v273
  %324 = vmatmul.bf16.gmra.mxu0 %v300
  %v325 = vpop.f32.mrf.mxu0
  %v326 = vadd.f32 %v312, %v325
  %v327 = vpop.f32.mrf.mxu0
  %v328 = vadd.f32 %v314, %v327
  %329 = vdwg.mxu0
  %330 = vmatpush.bf16.msra.mxu0 %v272
  %331 = vmatpush.bf16.msra.mxu0 %v270
  %332 = vmatpush.bf16.msra.mxu0 %v268
  %333 = vmatpush.bf16.msra.mxu0 %v266
  %334 = vmatpush.bf16.msra.mxu0 %v264
  %335 = vmatpush.bf16.msra.mxu0 %v262
  %336 = vmatpush.bf16.msra.mxu0 %v260
  %337 = vmatpush.bf16.msra.mxu0 %v258
  %338 = vmatmul.bf16.gmra.mxu0 %v295
  %v339 = vpop.f32.mrf.mxu0
  %v340 = vadd.f32 %v282, %v339
  %v341 = vpop.f32.mrf.mxu0
  %v342 = vadd.f32 %v287, %v341
  %343 = vdwg.mxu0
  %344 = vmatpush.bf16.msra.mxu0 0
  %345 = vmatpush.bf16.msra.mxu0 0
  %346 = vmatpush.bf16.msra.mxu0 0
  %347 = vmatpush.bf16.msra.mxu0 0
  %348 = vmatpush.bf16.msra.mxu0 0
  %349 = vmatpush.bf16.msra.mxu0 0
  %350 = vmatpush.bf16.msra.mxu0 0
  %351 = vmatpush.bf16.msra.mxu0 %v274
  %352 = vmatmul.bf16.gmra.mxu0 %v300
  %v353 = vpop.f32.mrf.mxu0
  %v354 = vadd.f32 %v340, %v353
  %v355 = vpop.f32.mrf.mxu0
  %v356 = vadd.f32 %v342, %v355
  %357 = vdwg.mxu0
  %v358 = vmul.f32 %v326, %v71
  %v359 = vmul.f32 %v354, %v72
  %v360 = vmul.f32 %v328, %v71
  %v361 = vmul.f32 %v356, %v72
  %v362 = vadd.f32 %v358, %v359
  %363 = vadd.xlane.f32.xlu0 %v362
  %v364 = vpop.xlane.xlu0 %363
  %v365 = vadd.f32 %v360, %v361
  %366 = vadd.xlane.f32.xlu0 %v365
  %v367 = vpop.xlane.xlu0 %366
  %vm368 = vcmask 7168
  %369 = vst.msk [vmem:[%s7] sm:$0xff] %vm368, %v364
  %370 = vst.msk [vmem:[%s7 + $0x8] sm:$0xff] %vm368, %v367
  %v371 = vmul.f32 %v358, %v358
  %v372 = vmul.f32 %v359, %v359
  %v373 = vmul.f32 %v360, %v360
  %v374 = vmul.f32 %v361, %v361
  %v375 = vadd.f32 %v371, %v372
  %376 = vadd.xlane.f32.xlu0 %v375
  %v377 = vpop.xlane.xlu0 %376
  %v378 = vadd.f32 %v373, %v374
  %379 = vadd.xlane.f32.xlu0 %v378
  %v380 = vpop.xlane.xlu0 %379
  %381 = vst.msk [vmem:[%s8] sm:$0xff] %vm368, %v377
  %382 = vst.msk [vmem:[%s8 + $0x8] sm:$0xff] %vm368, %v380
  %v383 = vpack.c.bf16 %v359, %v358
  %v384 = vpack.c.bf16 %v361, %v360
  %385 = vst [vmem:[%s6] sm:$0xff] %v383
  %386 = vst [vmem:[%s6 + $0x8] sm:$0xff] %v384
  // Predicated region
  $region26: #{model_forward.16} parent=0 // pred_check
    _
  $region27: #{model_forward.16} parent=0 // pred_check_branch
    %388 = sbr.rel (0) target = $region29
  $region28: #{model_forward.16} parent=0 // pred_region
    _
  $region29: #{model_forward.16} parent=0 // pred_fallthru
    _
  // Predicated region
  $region30: #{model_forward.16} parent=0 // pred_check
    _
  $region31: #{model_forward.16} parent=0 // pred_check_branch
    %390 = sbr.rel (0) target = $region33
  $region32: #{model_forward.16} parent=0 // pred_region
    _
  $region33: #{model_forward.16} parent=0 // pred_fallthru
    _
  // Predicated region
  $region34: #{model_forward.16} parent=0 // pred_check
    _
  $region35: #{model_forward.16} parent=0 // pred_check_branch
    %392 = sbr.rel (0) target = $region37
  $region36: #{model_forward.16} parent=0 // pred_region
    _
  $region37: #{model_forward.16} parent=0 // pred_fallthru
    _
  // Predicated region
  $region38: #{model_forward.16} parent=0 // pred_check
    _
  $region39: #{model_forward.16} parent=0 // pred_check_branch
    %394 = sbr.rel (0) target = $region41
  $region40: #{model_forward.16} parent=0 // pred_region
    _
  $region41: #{model_forward.16} parent=0 // pred_fallthru
    _
  // Predicated region
  $region42: #{model_forward.16} parent=0 // pred_check
    _
  $region43: #{model_forward.16} parent=0 // pred_check_branch
    %396 = sbr.rel (0) target = $region45
  $region44: #{model_forward.16} parent=0 // pred_region
    _
  $region45: #{model_forward.16} parent=0 // pred_fallthru
    _
  // Predicated region
  $region46: #{model_forward.16} parent=0 // pred_check
    _
  $region47: #{model_forward.16} parent=0 // pred_check_branch
    %398 = sbr.rel (0) target = $region49
  $region48: #{model_forward.16} parent=0 // pred_region
    _
  $region49: #{model_forward.16} parent=0 // pred_fallthru
    _

// kernel: model_forward.17
$region0: #{model_forward.17}
  #allocation0 [shape = 'u32[]', space=smem, size = 0x4, offset = 0x4, fixed_abs, tag = 'smem constant byte address 0x4 - core index']
  #allocation1 [shape = 'u32[72,128]{1,0:T(1,128)}', space=vmem, size = 0x9000, scoped, tag = 'internal scratch']
  #allocation2 [shape = 'f32[256,256]{1,0:T(8,128)}', space=vmem, size = 0x40000, scoped, tag = 'scratch operand']
  %s0 = inlined_call_operand.vmem [shape: bf16[64,256], index: 0, kind: input, shape index: {}]
  %s1 = inlined_call_operand.vmem [shape: bf16[32,256], index: 1, kind: input, shape index: {}]
  %s2 = inlined_call_operand.vmem [shape: f32[32,1], index: 2, kind: input, shape index: {}]
  %s3 = inlined_call_operand.vmem [shape: f32[1,256], index: 3, kind: input, shape index: {}]
  %s4 = inlined_call_operand.vmem [shape: bf16[32,256], index: 4, kind: output, shape index: {0}]
  %s5 = inlined_call_operand.vmem [shape: f32[32,1], index: 5, kind: output, shape index: {1}]
  %s6 = inlined_call_operand.vmem [shape: f32[32,1], index: 6, kind: output, shape index: {2}]
  %7 = xla_tuple %s4, %s5, %s6
  %s8 = sld [smem:[#allocation0]]
  $region42: #{model_forward.17} parent=0
    _
  %s10 = ssub.s32 1, %s8
  %s11 = scalar_select 0, %s10, %s8
  // Predicated region
  $region2: #{model_forward.17} parent=0 // pred_check
    _
  $region3: #{model_forward.17} parent=0 // pred_check_branch
    %13 = sbr.rel (0) target = $region5
  $region4: #{model_forward.17} parent=0 // pred_region
    _
  $region5: #{model_forward.17} parent=0 // pred_fallthru
    _
  // Predicated region
  $region6: #{model_forward.17} parent=0 // pred_check
    _
  $region7: #{model_forward.17} parent=0 // pred_check_branch
    %15 = sbr.rel (0) target = $region9
  $region8: #{model_forward.17} parent=0 // pred_region
    _
  $region9: #{model_forward.17} parent=0 // pred_fallthru
    _
  // Predicated region
  $region10: #{model_forward.17} parent=0 // pred_check
    _
  $region11: #{model_forward.17} parent=0 // pred_check_branch
    %17 = sbr.rel (0) target = $region13
  $region12: #{model_forward.17} parent=0 // pred_region
    _
  $region13: #{model_forward.17} parent=0 // pred_fallthru
    _
  // Predicated region
  $region14: #{model_forward.17} parent=0 // pred_check
    _
  $region15: #{model_forward.17} parent=0 // pred_check_branch
    %19 = sbr.rel (0) target = $region17
  $region16: #{model_forward.17} parent=0 // pred_region
    _
  $region17: #{model_forward.17} parent=0 // pred_fallthru
    _
  %v20 = vld [vmem:[%s3] sm:$0x3]
  %v21 = vld [vmem:[%s0] sm:$0xff]
  %v22 = vld [vmem:[%s0 + $0x8] sm:$0xff]
  %v23 = vld [vmem:[%s0 + $0x10] sm:$0xff]
  %v24 = vld [vmem:[%s0 + $0x18] sm:$0xff]
  %v25 = vld [vmem:[%s0 + $0x20] sm:$0xff]
  %v26 = vld [vmem:[%s0 + $0x28] sm:$0xff]
  %v27 = vld [vmem:[%s0 + $0x30] sm:$0xff]
  %v28 = vld [vmem:[%s0 + $0x38] sm:$0xff]
  %v29 = vunpack.c.l.bf16 %v21
  %v30 = vunpack.c.h.bf16 %v21
  %v31 = vunpack.c.l.bf16 %v22
  %v32 = vunpack.c.h.bf16 %v22
  %v33 = vunpack.c.l.bf16 %v23
  %v34 = vunpack.c.h.bf16 %v23
  %v35 = vunpack.c.l.bf16 %v24
  %v36 = vunpack.c.h.bf16 %v24
  %v37 = vunpack.c.l.bf16 %v25
  %v38 = vunpack.c.h.bf16 %v25
  %v39 = vunpack.c.l.bf16 %v26
  %v40 = vunpack.c.h.bf16 %v26
  %v41 = vunpack.c.l.bf16 %v27
  %v42 = vunpack.c.h.bf16 %v27
  %v43 = vunpack.c.l.bf16 %v28
  %v44 = vunpack.c.h.bf16 %v28
  %45 = vrot.lane.b32.xlu0 %v29, 7
  %v46 = vpop.permute.xlu0 %45
  %47 = vrot.lane.b32.xlu0 %v31, 7
  %v48 = vpop.permute.xlu0 %47
  %49 = vrot.lane.b32.xlu0 %v33, 7
  %v50 = vpop.permute.xlu0 %49
  %51 = vrot.lane.b32.xlu0 %v35, 7
  %v52 = vpop.permute.xlu0 %51
  %53 = vrot.lane.b32.xlu0 %v37, 7
  %v54 = vpop.permute.xlu0 %53
  %55 = vrot.lane.b32.xlu0 %v39, 7
  %v56 = vpop.permute.xlu0 %55
  %57 = vrot.lane.b32.xlu0 %v41, 7
  %v58 = vpop.permute.xlu0 %57
  %59 = vrot.lane.b32.xlu0 %v43, 7
  %v60 = vpop.permute.xlu0 %59
  %61 = vrot.lane.b32.xlu0 %v30, 7
  %v62 = vpop.permute.xlu0 %61
  %63 = vrot.lane.b32.xlu0 %v32, 7
  %v64 = vpop.permute.xlu0 %63
  %65 = vrot.lane.b32.xlu0 %v34, 7
  %v66 = vpop.permute.xlu0 %65
  %67 = vrot.lane.b32.xlu0 %v36, 7
  %v68 = vpop.permute.xlu0 %67
  %69 = vrot.lane.b32.xlu0 %v38, 7
  %v70 = vpop.permute.xlu0 %69
  %71 = vrot.lane.b32.xlu0 %v40, 7
  %v72 = vpop.permute.xlu0 %71
  %73 = vrot.lane.b32.xlu0 %v42, 7
  %v74 = vpop.permute.xlu0 %73
  %75 = vrot.lane.b32.xlu0 %v44, 7
  %v76 = vpop.permute.xlu0 %75
  %v77 = vlaneseq
  %v78 = vand.u32 %v77, 127
  %vm79 = vcmp.lt.s32.totalorder %v78, 7
  %v80 = vsel %vm79, %v46, %v62
  %v81 = vsel %vm79, %v48, %v64
  %v82 = vsel %vm79, %v50, %v66
  %v83 = vsel %vm79, %v52, %v68
  %v84 = vsel %vm79, %v54, %v70
  %v85 = vsel %vm79, %v56, %v72
  %v86 = vsel %vm79, %v58, %v74
  %v87 = vsel %vm79, %v60, %v76
  %v88 = vsel %vm79, %v62, %v46
  %v89 = vsel %vm79, %v64, %v48
  %v90 = vsel %vm79, %v66, %v50
  %v91 = vsel %vm79, %v68, %v52
  %v92 = vsel %vm79, %v70, %v54
  %v93 = vsel %vm79, %v72, %v56
  %v94 = vsel %vm79, %v74, %v58
  %v95 = vsel %vm79, %v76, %v60
  %96 = vst [vmem:[#allocation2] sm:$0xff] %v88
  %97 = vst [vmem:[#allocation2 + $0x8] sm:$0xff] %v80
  %98 = vst [vmem:[#allocation2 + $0x10] sm:$0xff] %v89
  %99 = vst [vmem:[#allocation2 + $0x18] sm:$0xff] %v81
  %100 = vst [vmem:[#allocation2 + $0x20] sm:$0xff] %v90
  %101 = vst [vmem:[#allocation2 + $0x28] sm:$0xff] %v82
  %102 = vst [vmem:[#allocation2 + $0x30] sm:$0xff] %v91
  %103 = vst [vmem:[#allocation2 + $0x38] sm:$0xff] %v83
  %104 = vst [vmem:[#allocation2 + $0x40] sm:$0xff] %v92
  %105 = vst [vmem:[#allocation2 + $0x48] sm:$0xff] %v84
  %106 = vst [vmem:[#allocation2 + $0x50] sm:$0xff] %v93
  %107 = vst [vmem:[#allocation2 + $0x58] sm:$0xff] %v85
  %108 = vst [vmem:[#allocation2 + $0x60] sm:$0xff] %v94
  %109 = vst [vmem:[#allocation2 + $0x68] sm:$0xff] %v86
  %110 = vst [vmem:[#allocation2 + $0x70] sm:$0xff] %v95
  %111 = vst [vmem:[#allocation2 + $0x78] sm:$0xff] %v87
  %112 = vrot.lane.b32.xlu0 %v29, 6
  %v113 = vpop.permute.xlu0 %112
  %114 = vrot.lane.b32.xlu0 %v31, 6
  %v115 = vpop.permute.xlu0 %114
  %116 = vrot.lane.b32.xlu0 %v33, 6
  %v117 = vpop.permute.xlu0 %116
  %118 = vrot.lane.b32.xlu0 %v35, 6
  %v119 = vpop.permute.xlu0 %118
  %120 = vrot.lane.b32.xlu0 %v37, 6
  %v121 = vpop.permute.xlu0 %120
  %122 = vrot.lane.b32.xlu0 %v39, 6
  %v123 = vpop.permute.xlu0 %122
  %124 = vrot.lane.b32.xlu0 %v41, 6
  %v125 = vpop.permute.xlu0 %124
  %126 = vrot.lane.b32.xlu0 %v43, 6
  %v127 = vpop.permute.xlu0 %126
  %128 = vrot.lane.b32.xlu0 %v30, 6
  %v129 = vpop.permute.xlu0 %128
  %130 = vrot.lane.b32.xlu0 %v32, 6
  %v131 = vpop.permute.xlu0 %130
  %132 = vrot.lane.b32.xlu0 %v34, 6
  %v133 = vpop.permute.xlu0 %132
  %134 = vrot.lane.b32.xlu0 %v36, 6
  %v135 = vpop.permute.xlu0 %134
  %136 = vrot.lane.b32.xlu0 %v38, 6
  %v137 = vpop.permute.xlu0 %136
  %138 = vrot.lane.b32.xlu0 %v40, 6
  %v139 = vpop.permute.xlu0 %138
  %140 = vrot.lane.b32.xlu0 %v42, 6
  %v141 = vpop.permute.xlu0 %140
  %142 = vrot.lane.b32.xlu0 %v44, 6
  %v143 = vpop.permute.xlu0 %142
  %vm144 = vcmp.lt.s32.totalorder %v78, 6
  %v145 = vsel %vm144, %v113, %v129
  %v146 = vsel %vm144, %v115, %v131
  %v147 = vsel %vm144, %v117, %v133
  %v148 = vsel %vm144, %v119, %v135
  %v149 = vsel %vm144, %v121, %v137
  %v150 = vsel %vm144, %v123, %v139
  %v151 = vsel %vm144, %v125, %v141
  %v152 = vsel %vm144, %v127, %v143
  %v153 = vsel %vm144, %v129, %v113
  %v154 = vsel %vm144, %v131, %v115
  %v155 = vsel %vm144, %v133, %v117
  %v156 = vsel %vm144, %v135, %v119
  %v157 = vsel %vm144, %v137, %v121
  %v158 = vsel %vm144, %v139, %v123
  %v159 = vsel %vm144, %v141, %v125
  %v160 = vsel %vm144, %v143, %v127
  %161 = vst [vmem:[#allocation2 + $0x80] sm:$0xff] %v153
  %162 = vst [vmem:[#allocation2 + $0x88] sm:$0xff] %v145
  %163 = vst [vmem:[#allocation2 + $0x90] sm:$0xff] %v154
  %164 = vst [vmem:[#allocation2 + $0x98] sm:$0xff] %v146
  %165 = vst [vmem:[#allocation2 + $0xa0] sm:$0xff] %v155
  %166 = vst [vmem:[#allocation2 + $0xa8] sm:$0xff] %v147
  %167 = vst [vmem:[#allocation2 + $0xb0] sm:$0xff] %v156
  %168 = vst [vmem:[#allocation2 + $0xb8] sm:$0xff] %v148
  %169 = vst [vmem:[#allocation2 + $0xc0] sm:$0xff] %v157
  %170 = vst [vmem:[#allocation2 + $0xc8] sm:$0xff] %v149
  %171 = vst [vmem:[#allocation2 + $0xd0] sm:$0xff] %v158
  %172 = vst [vmem:[#allocation2 + $0xd8] sm:$0xff] %v150
  %173 = vst [vmem:[#allocation2 + $0xe0] sm:$0xff] %v159
  %174 = vst [vmem:[#allocation2 + $0xe8] sm:$0xff] %v151
  %175 = vst [vmem:[#allocation2 + $0xf0] sm:$0xff] %v160
  %176 = vst [vmem:[#allocation2 + $0xf8] sm:$0xff] %v152
  %177 = vrot.lane.b32.xlu0 %v29, 1
  %v178 = vpop.permute.xlu0 %177
  %179 = vrot.lane.b32.xlu0 %v31, 1
  %v180 = vpop.permute.xlu0 %179
  %181 = vrot.lane.b32.xlu0 %v33, 1
  %v182 = vpop.permute.xlu0 %181
  %183 = vrot.lane.b32.xlu0 %v35, 1
  %v184 = vpop.permute.xlu0 %183
  %185 = vrot.lane.b32.xlu0 %v37, 1
  %v186 = vpop.permute.xlu0 %185
  %187 = vrot.lane.b32.xlu0 %v39, 1
  %v188 = vpop.permute.xlu0 %187
  %189 = vrot.lane.b32.xlu0 %v41, 1
  %v190 = vpop.permute.xlu0 %189
  %191 = vrot.lane.b32.xlu0 %v43, 1
  %v192 = vpop.permute.xlu0 %191
  %193 = vrot.lane.b32.xlu0 %v30, 1
  %v194 = vpop.permute.xlu0 %193
  %195 = vrot.lane.b32.xlu0 %v32, 1
  %v196 = vpop.permute.xlu0 %195
  %197 = vrot.lane.b32.xlu0 %v34, 1
  %v198 = vpop.permute.xlu0 %197
  %199 = vrot.lane.b32.xlu0 %v36, 1
  %v200 = vpop.permute.xlu0 %199
  %201 = vrot.lane.b32.xlu0 %v38, 1
  %v202 = vpop.permute.xlu0 %201
  %203 = vrot.lane.b32.xlu0 %v40, 1
  %v204 = vpop.permute.xlu0 %203
  %205 = vrot.lane.b32.xlu0 %v42, 1
  %v206 = vpop.permute.xlu0 %205
  %207 = vrot.lane.b32.xlu0 %v44, 1
  %v208 = vpop.permute.xlu0 %207
  %vm209 = vcmp.lt.s32.totalorder %v78, 1
  %v210 = vsel %vm209, %v178, %v194
  %v211 = vsel %vm209, %v180, %v196
  %v212 = vsel %vm209, %v182, %v198
  %v213 = vsel %vm209, %v184, %v200
  %v214 = vsel %vm209, %v186, %v202
  %v215 = vsel %vm209, %v188, %v204
  %v216 = vsel %vm209, %v190, %v206
  %v217 = vsel %vm209, %v192, %v208
  %v218 = vsel %vm209, %v194, %v178
  %v219 = vsel %vm209, %v196, %v180
  %v220 = vsel %vm209, %v198, %v182
  %v221 = vsel %vm209, %v200, %v184
  %v222 = vsel %vm209, %v202, %v186
  %v223 = vsel %vm209, %v204, %v188
  %v224 = vsel %vm209, %v206, %v190
  %v225 = vsel %vm209, %v208, %v192
  %226 = vst [vmem:[#allocation2 + $0x100] sm:$0xff] %v218
  %227 = vst [vmem:[#allocation2 + $0x108] sm:$0xff] %v210
  %228 = vst [vmem:[#allocation2 + $0x110] sm:$0xff] %v219
  %229 = vst [vmem:[#allocation2 + $0x118] sm:$0xff] %v211
  %230 = vst [vmem:[#allocation2 + $0x120] sm:$0xff] %v220
  %231 = vst [vmem:[#allocation2 + $0x128] sm:$0xff] %v212
  %232 = vst [vmem:[#allocation2 + $0x130] sm:$0xff] %v221
  %233 = vst [vmem:[#allocation2 + $0x138] sm:$0xff] %v213
  %234 = vst [vmem:[#allocation2 + $0x140] sm:$0xff] %v222
  %235 = vst [vmem:[#allocation2 + $0x148] sm:$0xff] %v214
  %236 = vst [vmem:[#allocation2 + $0x150] sm:$0xff] %v223
  %237 = vst [vmem:[#allocation2 + $0x158] sm:$0xff] %v215
  %238 = vst [vmem:[#allocation2 + $0x160] sm:$0xff] %v224
  %239 = vst [vmem:[#allocation2 + $0x168] sm:$0xff] %v216
  %240 = vst [vmem:[#allocation2 + $0x170] sm:$0xff] %v225
  %241 = vst [vmem:[#allocation2 + $0x178] sm:$0xff] %v217
  %242 = vst [vmem:[#allocation2 + $0x180] sm:$0xff] %v29
  %243 = vst [vmem:[#allocation2 + $0x188] sm:$0xff] %v30
  %244 = vst [vmem:[#allocation2 + $0x190] sm:$0xff] %v31
  %245 = vst [vmem:[#allocation2 + $0x198] sm:$0xff] %v32
  %246 = vst [vmem:[#allocation2 + $0x1a0] sm:$0xff] %v33
  %247 = vst [vmem:[#allocation2 + $0x1a8] sm:$0xff] %v34
  %248 = vst [vmem:[#allocation2 + $0x1b0] sm:$0xff] %v35
  %249 = vst [vmem:[#allocation2 + $0x1b8] sm:$0xff] %v36
  %250 = vst [vmem:[#allocation2 + $0x1c0] sm:$0xff] %v37
  %251 = vst [vmem:[#allocation2 + $0x1c8] sm:$0xff] %v38
  %252 = vst [vmem:[#allocation2 + $0x1d0] sm:$0xff] %v39
  %253 = vst [vmem:[#allocation2 + $0x1d8] sm:$0xff] %v40
  %254 = vst [vmem:[#allocation2 + $0x1e0] sm:$0xff] %v41
  %255 = vst [vmem:[#allocation2 + $0x1e8] sm:$0xff] %v42
  %256 = vst [vmem:[#allocation2 + $0x1f0] sm:$0xff] %v43
  %257 = vst [vmem:[#allocation2 + $0x1f8] sm:$0xff] %v44
  %v258 = vld [vmem:[#allocation2] sm:$0xff]
  %v259 = vld [vmem:[#allocation2 + $0x8] sm:$0xff]
  %v260 = vld [vmem:[#allocation2 + $0x10] sm:$0xff]
  %v261 = vld [vmem:[#allocation2 + $0x18] sm:$0xff]
  %v262 = vld [vmem:[#allocation2 + $0x20] sm:$0xff]
  %v263 = vld [vmem:[#allocation2 + $0x28] sm:$0xff]
  %v264 = vld [vmem:[#allocation2 + $0x30] sm:$0xff]
  %v265 = vld [vmem:[#allocation2 + $0x38] sm:$0xff]
  %v266 = vld [vmem:[#allocation2 + $0x40] sm:$0xff]
  %v267 = vld [vmem:[#allocation2 + $0x48] sm:$0xff]
  %v268 = vld [vmem:[#allocation2 + $0x50] sm:$0xff]
  %v269 = vld [vmem:[#allocation2 + $0x58] sm:$0xff]
  %v270 = vld [vmem:[#allocation2 + $0x60] sm:$0xff]
  %v271 = vld [vmem:[#allocation2 + $0x68] sm:$0xff]
  %v272 = vld [vmem:[#allocation2 + $0x70] sm:$0xff]
  %v273 = vld [vmem:[#allocation2 + $0x78] sm:$0xff]
  %v274 = vld [vmem:[#allocation2 + $0x80] sm:$0xff]
  %v275 = vld [vmem:[#allocation2 + $0x88] sm:$0xff]
  %v276 = vld [vmem:[#allocation2 + $0x90] sm:$0xff]
  %v277 = vld [vmem:[#allocation2 + $0x98] sm:$0xff]
  %v278 = vld [vmem:[#allocation2 + $0xa0] sm:$0xff]
  %v279 = vld [vmem:[#allocation2 + $0xa8] sm:$0xff]
  %v280 = vld [vmem:[#allocation2 + $0xb0] sm:$0xff]
  %v281 = vld [vmem:[#allocation2 + $0xb8] sm:$0xff]
  %v282 = vld [vmem:[#allocation2 + $0xc0] sm:$0xff]
  %v283 = vld [vmem:[#allocation2 + $0xc8] sm:$0xff]
  %v284 = vld [vmem:[#allocation2 + $0xd0] sm:$0xff]
  %v285 = vld [vmem:[#allocation2 + $0xd8] sm:$0xff]
  %v286 = vld [vmem:[#allocation2 + $0xe0] sm:$0xff]
  %v287 = vld [vmem:[#allocation2 + $0xe8] sm:$0xff]
  %v288 = vld [vmem:[#allocation2 + $0xf0] sm:$0xff]
  %v289 = vld [vmem:[#allocation2 + $0xf8] sm:$0xff]
  %v290 = vld [vmem:[#allocation2 + $0x100] sm:$0xff]
  %v291 = vld [vmem:[#allocation2 + $0x108] sm:$0xff]
  %v292 = vld [vmem:[#allocation2 + $0x110] sm:$0xff]
  %v293 = vld [vmem:[#allocation2 + $0x118] sm:$0xff]
  %v294 = vld [vmem:[#allocation2 + $0x120] sm:$0xff]
  %v295 = vld [vmem:[#allocation2 + $0x128] sm:$0xff]
  %v296 = vld [vmem:[#allocation2 + $0x130] sm:$0xff]
  %v297 = vld [vmem:[#allocation2 + $0x138] sm:$0xff]
  %v298 = vld [vmem:[#allocation2 + $0x140] sm:$0xff]
  %v299 = vld [vmem:[#allocation2 + $0x148] sm:$0xff]
  %v300 = vld [vmem:[#allocation2 + $0x150] sm:$0xff]
  %v301 = vld [vmem:[#allocation2 + $0x158] sm:$0xff]
  %v302 = vld [vmem:[#allocation2 + $0x160] sm:$0xff]
  %v303 = vld [vmem:[#allocation2 + $0x168] sm:$0xff]
  %v304 = vld [vmem:[#allocation2 + $0x170] sm:$0xff]
  %v305 = vld [vmem:[#allocation2 + $0x178] sm:$0xff]
  %v306 = vld [vmem:[#allocation2 + $0x180] sm:$0xff]
  %v307 = vld [vmem:[#allocation2 + $0x188] sm:$0xff]
  %v308 = vld [vmem:[#allocation2 + $0x190] sm:$0xff]
  %v309 = vld [vmem:[#allocation2 + $0x198] sm:$0xff]
  %v310 = vld [vmem:[#allocation2 + $0x1a0] sm:$0xff]
  %v311 = vld [vmem:[#allocation2 + $0x1a8] sm:$0xff]
  %v312 = vld [vmem:[#allocation2 + $0x1b0] sm:$0xff]
  %v313 = vld [vmem:[#allocation2 + $0x1b8] sm:$0xff]
  %v314 = vld [vmem:[#allocation2 + $0x1c0] sm:$0xff]
  %v315 = vld [vmem:[#allocation2 + $0x1c8] sm:$0xff]
  %v316 = vld [vmem:[#allocation2 + $0x1d0] sm:$0xff]
  %v317 = vld [vmem:[#allocation2 + $0x1d8] sm:$0xff]
  %v318 = vld [vmem:[#allocation2 + $0x1e0] sm:$0xff]
  %v319 = vld [vmem:[#allocation2 + $0x1e8] sm:$0xff]
  %v320 = vld [vmem:[#allocation2 + $0x1f0] sm:$0xff]
  %v321 = vld [vmem:[#allocation2 + $0x1f8] sm:$0xff]
  %v322 = vpack.c.bf16 %v260, %v258
  %v323 = vpack.c.bf16 %v261, %v259
  %v324 = vpack.c.bf16 %v264, %v262
  %v325 = vpack.c.bf16 %v265, %v263
  %v326 = vpack.c.bf16 %v268, %v266
  %v327 = vpack.c.bf16 %v269, %v267
  %v328 = vpack.c.bf16 %v272, %v270
  %v329 = vpack.c.bf16 %v273, %v271
  %v330 = vpack.c.bf16 %v276, %v274
  %v331 = vpack.c.bf16 %v277, %v275
  %v332 = vpack.c.bf16 %v280, %v278
  %v333 = vpack.c.bf16 %v281, %v279
  %v334 = vpack.c.bf16 %v284, %v282
  %v335 = vpack.c.bf16 %v285, %v283
  %v336 = vpack.c.bf16 %v288, %v286
  %v337 = vpack.c.bf16 %v289, %v287
  %v338 = vpack.c.bf16 %v292, %v290
  %v339 = vpack.c.bf16 %v293, %v291
  %v340 = vpack.c.bf16 %v296, %v294
  %v341 = vpack.c.bf16 %v297, %v295
  %v342 = vpack.c.bf16 %v300, %v298
  %v343 = vpack.c.bf16 %v301, %v299
  %v344 = vpack.c.bf16 %v304, %v302
  %v345 = vpack.c.bf16 %v305, %v303
  %v346 = vpack.c.bf16 %v308, %v306
  %v347 = vpack.c.bf16 %v309, %v307
  %v348 = vpack.c.bf16 %v312, %v310
  %v349 = vpack.c.bf16 %v313, %v311
  %v350 = vpack.c.bf16 %v316, %v314
  %v351 = vpack.c.bf16 %v317, %v315
  %v352 = vpack.c.bf16 %v320, %v318
  %v353 = vpack.c.bf16 %v321, %v319
  %v354 = vld [vmem:[%s1] sm:$0xff]
  %v355 = vld [vmem:[%s1 + $0x8] sm:$0xff]
  %v356 = vld [vmem:[%s1 + $0x10] sm:$0xff]
  %v357 = vld [vmem:[%s1 + $0x18] sm:$0xff]
  %v358 = vld [vmem:[%s2] sm:$0xff]
  %v359 = vld [vmem:[%s2 + $0x8] sm:$0xff]
  %v360 = vld [vmem:[%s2 + $0x10] sm:$0xff]
  %v361 = vld [vmem:[%s2 + $0x18] sm:$0xff]
  %363 = vset.pattern.permute.xlu0 0
  %364 = vperm.xlu0 %363, %v358
  %v365 = vpop.permute.xlu0 %364
  %368 = vset.pattern.permute.xlu0 0
  %369 = vperm.xlu0 %368, %v359
  %v370 = vpop.permute.xlu0 %369
  %373 = vset.pattern.permute.xlu0 0
  %374 = vperm.xlu0 %373, %v360
  %v375 = vpop.permute.xlu0 %374
  %378 = vset.pattern.permute.xlu0 0
  %379 = vperm.xlu0 %378, %v361
  %v380 = vpop.permute.xlu0 %379
  %v386 = vunpack.c.l.b16 %v354
  %v387 = vunpack.c.h.b16 %v354
  %v388 = vunpack.c.l.b16 %v355
  %v389 = vunpack.c.h.b16 %v355
  %v390 = vunpack.c.l.b16 %v356
  %v391 = vunpack.c.h.b16 %v356
  %v392 = vunpack.c.l.b16 %v357
  %v393 = vunpack.c.h.b16 %v357
  %v394 = vpack.c.b16 %v388, %v386
  %v395 = vpack.c.b16 %v389, %v387
  %v396 = vpack.c.b16 %v392, %v390
  %v397 = vpack.c.b16 %v393, %v391
  %402 = vmatpush.bf16.msra.mxu0 %v336
  %403 = vmatpush.bf16.msra.mxu0 %v334
  %404 = vmatpush.bf16.msra.mxu0 %v332
  %405 = vmatpush.bf16.msra.mxu0 %v330
  %406 = vmatpush.bf16.msra.mxu0 %v328
  %407 = vmatpush.bf16.msra.mxu0 %v326
  %408 = vmatpush.bf16.msra.mxu0 %v324
  %409 = vmatpush.bf16.msra.mxu0 %v322
  %410 = vmatmul.bf16.gmra.mxu0 %v394
  %v411 = vpop.f32.mrf.mxu0
  %v412 = vadd.f32 %v365, %v411
  %v413 = vpop.f32.mrf.mxu0
  %v414 = vadd.f32 %v370, %v413
  %415 = vmatmul.bf16.gmra.mxu0 %v396
  %v416 = vpop.f32.mrf.mxu0
  %v417 = vadd.f32 %v375, %v416
  %v418 = vpop.f32.mrf.mxu0
  %v419 = vadd.f32 %v380, %v418
  %420 = vdwg.mxu0
  %421 = vmatpush.bf16.msra.mxu0 %v352
  %422 = vmatpush.bf16.msra.mxu0 %v350
  %423 = vmatpush.bf16.msra.mxu0 %v348
  %424 = vmatpush.bf16.msra.mxu0 %v346
  %425 = vmatpush.bf16.msra.mxu0 %v344
  %426 = vmatpush.bf16.msra.mxu0 %v342
  %427 = vmatpush.bf16.msra.mxu0 %v340
  %428 = vmatpush.bf16.msra.mxu0 %v338
  %429 = vmatmul.bf16.gmra.mxu0 %v395
  %v430 = vpop.f32.mrf.mxu0
  %v431 = vadd.f32 %v412, %v430
  %v432 = vpop.f32.mrf.mxu0
  %v433 = vadd.f32 %v414, %v432
  %434 = vmatmul.bf16.gmra.mxu0 %v397
  %v435 = vpop.f32.mrf.mxu0
  %v436 = vadd.f32 %v417, %v435
  %v437 = vpop.f32.mrf.mxu0
  %v438 = vadd.f32 %v419, %v437
  %439 = vdwg.mxu0
  %440 = vmatpush.bf16.msra.mxu0 %v337
  %441 = vmatpush.bf16.msra.mxu0 %v335
  %442 = vmatpush.bf16.msra.mxu0 %v333
  %443 = vmatpush.bf16.msra.mxu0 %v331
  %444 = vmatpush.bf16.msra.mxu0 %v329
  %445 = vmatpush.bf16.msra.mxu0 %v327
  %446 = vmatpush.bf16.msra.mxu0 %v325
  %447 = vmatpush.bf16.msra.mxu0 %v323
  %448 = vmatmul.bf16.gmra.mxu0 %v394
  %v449 = vpop.f32.mrf.mxu0
  %v450 = vadd.f32 %v365, %v449
  %v451 = vpop.f32.mrf.mxu0
  %v452 = vadd.f32 %v370, %v451
  %453 = vmatmul.bf16.gmra.mxu0 %v396
  %v454 = vpop.f32.mrf.mxu0
  %v455 = vadd.f32 %v375, %v454
  %v456 = vpop.f32.mrf.mxu0
  %v457 = vadd.f32 %v380, %v456
  %458 = vdwg.mxu0
  %459 = vmatpush.bf16.msra.mxu0 %v353
  %460 = vmatpush.bf16.msra.mxu0 %v351
  %461 = vmatpush.bf16.msra.mxu0 %v349
  %462 = vmatpush.bf16.msra.mxu0 %v347
  %463 = vmatpush.bf16.msra.mxu0 %v345
  %464 = vmatpush.bf16.msra.mxu0 %v343
  %465 = vmatpush.bf16.msra.mxu0 %v341
  %466 = vmatpush.bf16.msra.mxu0 %v339
  %467 = vmatmul.bf16.gmra.mxu0 %v395
  %v468 = vpop.f32.mrf.mxu0
  %v469 = vadd.f32 %v450, %v468
  %v470 = vpop.f32.mrf.mxu0
  %v471 = vadd.f32 %v452, %v470
  %472 = vmatmul.bf16.gmra.mxu0 %v397
  %v473 = vpop.f32.mrf.mxu0
  %v474 = vadd.f32 %v455, %v473
  %v475 = vpop.f32.mrf.mxu0
  %v476 = vadd.f32 %v457, %v475
  %477 = vdwg.mxu0
  %v479 = vperm.slane %v20, 0
  %v480 = vperm.slane %v20, 1
  %v483 = vmul.f32 %v431, %v479
  %v484 = vmul.f32 %v469, %v480
  %v485 = vmul.f32 %v433, %v479
  %v486 = vmul.f32 %v471, %v480
  %v487 = vmul.f32 %v436, %v479
  %v488 = vmul.f32 %v474, %v480
  %v489 = vmul.f32 %v438, %v479
  %v490 = vmul.f32 %v476, %v480
  %v491 = vadd.f32 %v483, %v484
  %492 = vadd.xlane.f32.xlu0 %v491
  %v493 = vpop.xlane.xlu0 %492
  %v494 = vadd.f32 %v485, %v486
  %495 = vadd.xlane.f32.xlu0 %v494
  %v496 = vpop.xlane.xlu0 %495
  %v497 = vadd.f32 %v487, %v488
  %498 = vadd.xlane.f32.xlu0 %v497
  %v499 = vpop.xlane.xlu0 %498
  %v500 = vadd.f32 %v489, %v490
  %501 = vadd.xlane.f32.xlu0 %v500
  %v502 = vpop.xlane.xlu0 %501
  %vm503 = vcmask 7168
  %504 = vst.msk [vmem:[%s5] sm:$0xff] %vm503, %v493
  %505 = vst.msk [vmem:[%s5 + $0x8] sm:$0xff] %vm503, %v496
  %506 = vst.msk [vmem:[%s5 + $0x10] sm:$0xff] %vm503, %v499
  %507 = vst.msk [vmem:[%s5 + $0x18] sm:$0xff] %vm503, %v502
  %v508 = vmul.f32 %v483, %v483
  %v509 = vmul.f32 %v484, %v484
  %v510 = vmul.f32 %v485, %v485
  %v511 = vmul.f32 %v486, %v486
  %v512 = vmul.f32 %v487, %v487
  %v513 = vmul.f32 %v488, %v488
  %v514 = vmul.f32 %v489, %v489
  %v515 = vmul.f32 %v490, %v490
  %v516 = vadd.f32 %v508, %v509
  %517 = vadd.xlane.f32.xlu0 %v516
  %v518 = vpop.xlane.xlu0 %517
  %v519 = vadd.f32 %v510, %v511
  %520 = vadd.xlane.f32.xlu0 %v519
  %v521 = vpop.xlane.xlu0 %520
  %v522 = vadd.f32 %v512, %v513
  %523 = vadd.xlane.f32.xlu0 %v522
  %v524 = vpop.xlane.xlu0 %523
  %v525 = vadd.f32 %v514, %v515
  %526 = vadd.xlane.f32.xlu0 %v525
  %v527 = vpop.xlane.xlu0 %526
  %528 = vst.msk [vmem:[%s6] sm:$0xff] %vm503, %v518
  %529 = vst.msk [vmem:[%s6 + $0x8] sm:$0xff] %vm503, %v521
  %530 = vst.msk [vmem:[%s6 + $0x10] sm:$0xff] %vm503, %v524
  %531 = vst.msk [vmem:[%s6 + $0x18] sm:$0xff] %vm503, %v527
  %v532 = vpack.c.bf16 %v484, %v483
  %v533 = vpack.c.bf16 %v486, %v485
  %v534 = vpack.c.bf16 %v488, %v487
  %v535 = vpack.c.bf16 %v490, %v489
  %536 = vst [vmem:[%s4] sm:$0xff] %v532
  %537 = vst [vmem:[%s4 + $0x8] sm:$0xff] %v533
  %538 = vst [vmem:[%s4 + $0x10] sm:$0xff] %v534
  %539 = vst [vmem:[%s4 + $0x18] sm:$0xff] %v535
  // Predicated region
  $region18: #{model_forward.17} parent=0 // pred_check
    _
  $region19: #{model_forward.17} parent=0 // pred_check_branch
    %541 = sbr.rel (0) target = $region21
  $region20: #{model_forward.17} parent=0 // pred_region
    _
  $region21: #{model_forward.17} parent=0 // pred_fallthru
    _
  // Predicated region
  $region22: #{model_forward.17} parent=0 // pred_check
    _
  $region23: #{model_forward.17} parent=0 // pred_check_branch
    %543 = sbr.rel (0) target = $region25
  $region24: #{model_forward.17} parent=0 // pred_region
    _
  $region25: #{model_forward.17} parent=0 // pred_fallthru
    _
  // Predicated region
  $region26: #{model_forward.17} parent=0 // pred_check
    _
  $region27: #{model_forward.17} parent=0 // pred_check_branch
    %545 = sbr.rel (0) target = $region29
  $region28: #{model_forward.17} parent=0 // pred_region
    _
  $region29: #{model_forward.17} parent=0 // pred_fallthru
    _
  // Predicated region
  $region30: #{model_forward.17} parent=0 // pred_check
    _
  $region31: #{model_forward.17} parent=0 // pred_check_branch
    %547 = sbr.rel (0) target = $region33
  $region32: #{model_forward.17} parent=0 // pred_region
    _
  $region33: #{model_forward.17} parent=0 // pred_fallthru
    _
  // Predicated region
  $region34: #{model_forward.17} parent=0 // pred_check
    _
  $region35: #{model_forward.17} parent=0 // pred_check_branch
    %549 = sbr.rel (0) target = $region37
  $region36: #{model_forward.17} parent=0 // pred_region
    _
  $region37: #{model_forward.17} parent=0 // pred_fallthru
    _
  // Predicated region
  $region38: #{model_forward.17} parent=0 // pred_check
    _
  $region39: #{model_forward.17} parent=0 // pred_check_branch
    %551 = sbr.rel (0) target = $region41
  $region40: #{model_forward.17} parent=0 // pred_region
    _
  $region41: #{model_forward.17} parent=0 // pred_fallthru
    _

// kernel: model_forward.18
$region0: #{model_forward.18}
  #allocation0 [shape = 'u32[]', space=smem, size = 0x4, offset = 0x4, fixed_abs, tag = 'smem constant byte address 0x4 - core index']
  #allocation1 [shape = 'u32[72,128]{1,0:T(1,128)}', space=vmem, size = 0x9000, scoped, tag = 'internal scratch']
  #allocation2 [shape = 'f32[288,256]{1,0:T(8,128)}', space=vmem, size = 0x48000, scoped, tag = 'scratch operand']
  %s0 = inlined_call_operand.vmem [shape: bf16[32,256], index: 0, kind: input, shape index: {}]
  %s1 = inlined_call_operand.vmem [shape: bf16[32,288], index: 1, kind: input, shape index: {}]
  %s2 = inlined_call_operand.vmem [shape: f32[32,1], index: 2, kind: input, shape index: {}]
  %s3 = inlined_call_operand.vmem [shape: f32[32,1], index: 3, kind: input, shape index: {}]
  %s4 = inlined_call_operand.vmem [shape: f32[32,1], index: 4, kind: input, shape index: {}]
  %s5 = inlined_call_operand.vmem [shape: f32[1,256], index: 5, kind: input, shape index: {}]
  %s6 = inlined_call_operand.vmem [shape: bf16[32,256], index: 6, kind: output, shape index: {0}]
  %s7 = inlined_call_operand.vmem [shape: f32[32,1], index: 7, kind: output, shape index: {1}]
  %s8 = inlined_call_operand.vmem [shape: f32[32,1], index: 8, kind: output, shape index: {2}]
  %9 = xla_tuple %s6, %s7, %s8
  %s10 = sld [smem:[#allocation0]]
  $region50: #{model_forward.18} parent=0
    _
  %s12 = ssub.s32 1, %s10
  %s13 = scalar_select 0, %s12, %s10
  // Predicated region
  $region2: #{model_forward.18} parent=0 // pred_check
    _
  $region3: #{model_forward.18} parent=0 // pred_check_branch
    %15 = sbr.rel (0) target = $region5
  $region4: #{model_forward.18} parent=0 // pred_region
    _
  $region5: #{model_forward.18} parent=0 // pred_fallthru
    _
  // Predicated region
  $region6: #{model_forward.18} parent=0 // pred_check
    _
  $region7: #{model_forward.18} parent=0 // pred_check_branch
    %17 = sbr.rel (0) target = $region9
  $region8: #{model_forward.18} parent=0 // pred_region
    _
  $region9: #{model_forward.18} parent=0 // pred_fallthru
    _
  // Predicated region
  $region10: #{model_forward.18} parent=0 // pred_check
    _
  $region11: #{model_forward.18} parent=0 // pred_check_branch
    %19 = sbr.rel (0) target = $region13
  $region12: #{model_forward.18} parent=0 // pred_region
    _
  $region13: #{model_forward.18} parent=0 // pred_fallthru
    _
  // Predicated region
  $region14: #{model_forward.18} parent=0 // pred_check
    _
  $region15: #{model_forward.18} parent=0 // pred_check_branch
    %21 = sbr.rel (0) target = $region17
  $region16: #{model_forward.18} parent=0 // pred_region
    _
  $region17: #{model_forward.18} parent=0 // pred_fallthru
    _
  // Predicated region
  $region18: #{model_forward.18} parent=0 // pred_check
    _
  $region19: #{model_forward.18} parent=0 // pred_check_branch
    %23 = sbr.rel (0) target = $region21
  $region20: #{model_forward.18} parent=0 // pred_region
    _
  $region21: #{model_forward.18} parent=0 // pred_fallthru
    _
  // Predicated region
  $region22: #{model_forward.18} parent=0 // pred_check
    _
  $region23: #{model_forward.18} parent=0 // pred_check_branch
    %25 = sbr.rel (0) target = $region25
  $region24: #{model_forward.18} parent=0 // pred_region
    _
  $region25: #{model_forward.18} parent=0 // pred_fallthru
    _
  %v27 = vld [vmem:[%s5] sm:$0x3]
  %v28 = vld [vmem:[%s0] sm:$0xff]
  %v29 = vld [vmem:[%s0 + $0x8] sm:$0xff]
  %v30 = vld [vmem:[%s0 + $0x10] sm:$0xff]
  %v31 = vld [vmem:[%s0 + $0x18] sm:$0xff]
  %v32 = vunpack.c.l.bf16 %v28
  %v33 = vunpack.c.h.bf16 %v28
  %v34 = vunpack.c.l.bf16 %v29
  %v35 = vunpack.c.h.bf16 %v29
  %v36 = vunpack.c.l.bf16 %v30
  %v37 = vunpack.c.h.bf16 %v30
  %v38 = vunpack.c.l.bf16 %v31
  %v39 = vunpack.c.h.bf16 %v31
  %v40 = vld [vmem:[%s3] sm:$0xff]
  %v41 = vld [vmem:[%s3 + $0x8] sm:$0xff]
  %v42 = vld [vmem:[%s3 + $0x10] sm:$0xff]
  %v43 = vld [vmem:[%s3 + $0x18] sm:$0xff]
  %45 = vset.pattern.permute.xlu0 0
  %46 = vperm.xlu0 %45, %v40
  %v47 = vpop.permute.xlu0 %46
  %50 = vset.pattern.permute.xlu0 0
  %51 = vperm.xlu0 %50, %v41
  %v52 = vpop.permute.xlu0 %51
  %55 = vset.pattern.permute.xlu0 0
  %56 = vperm.xlu0 %55, %v42
  %v57 = vpop.permute.xlu0 %56
  %60 = vset.pattern.permute.xlu0 0
  %61 = vperm.xlu0 %60, %v43
  %v62 = vpop.permute.xlu0 %61
  %v64 = vmul.f32 %v32, %v47
  %v65 = vmul.f32 %v33, %v47
  %v66 = vmul.f32 %v34, %v52
  %v67 = vmul.f32 %v35, %v52
  %v68 = vmul.f32 %v36, %v57
  %v69 = vmul.f32 %v37, %v57
  %v70 = vmul.f32 %v38, %v62
  %v71 = vmul.f32 %v39, %v62
  %v72 = vld [vmem:[%s4] sm:$0xff]
  %v73 = vld [vmem:[%s4 + $0x8] sm:$0xff]
  %v74 = vld [vmem:[%s4 + $0x10] sm:$0xff]
  %v75 = vld [vmem:[%s4 + $0x18] sm:$0xff]
  %77 = vset.pattern.permute.xlu0 0
  %78 = vperm.xlu0 %77, %v72
  %v79 = vpop.permute.xlu0 %78
  %82 = vset.pattern.permute.xlu0 0
  %83 = vperm.xlu0 %82, %v73
  %v84 = vpop.permute.xlu0 %83
  %87 = vset.pattern.permute.xlu0 0
  %88 = vperm.xlu0 %87, %v74
  %v89 = vpop.permute.xlu0 %88
  %92 = vset.pattern.permute.xlu0 0
  %93 = vperm.xlu0 %92, %v75
  %v94 = vpop.permute.xlu0 %93
  %v96 = vadd.f32 %v64, %v79
  %v97 = vadd.f32 %v65, %v79
  %v98 = vadd.f32 %v66, %v84
  %v99 = vadd.f32 %v67, %v84
  %v100 = vadd.f32 %v68, %v89
  %v101 = vadd.f32 %v69, %v89
  %v102 = vadd.f32 %v70, %v94
  %v103 = vadd.f32 %v71, %v94
  %v104 = vmax.f32 %v96, 0.0
  %v105 = vmax.f32 %v97, 0.0
  %v106 = vmax.f32 %v98, 0.0
  %v107 = vmax.f32 %v99, 0.0
  %v108 = vmax.f32 %v100, 0.0
  %v109 = vmax.f32 %v101, 0.0
  %v110 = vmax.f32 %v102, 0.0
  %v111 = vmax.f32 %v103, 0.0
  %v113 = vperm.slane %v27, 0
  %v114 = vperm.slane %v27, 1
  %v117 = vmul.f32 %v104, %v113
  %v118 = vmul.f32 %v105, %v114
  %v119 = vmul.f32 %v106, %v113
  %v120 = vmul.f32 %v107, %v114
  %v121 = vmul.f32 %v108, %v113
  %v122 = vmul.f32 %v109, %v114
  %v123 = vmul.f32 %v110, %v113
  %v124 = vmul.f32 %v111, %v114
  %125 = vrot.lane.b32.xlu0 %v117, 7
  %v126 = vpop.permute.xlu0 %125
  %127 = vrot.lane.b32.xlu0 %v119, 7
  %v128 = vpop.permute.xlu0 %127
  %129 = vrot.lane.b32.xlu0 %v121, 7
  %v130 = vpop.permute.xlu0 %129
  %131 = vrot.lane.b32.xlu0 %v123, 7
  %v132 = vpop.permute.xlu0 %131
  %133 = vrot.lane.b32.xlu0 %v118, 7
  %v134 = vpop.permute.xlu0 %133
  %135 = vrot.lane.b32.xlu0 %v120, 7
  %v136 = vpop.permute.xlu0 %135
  %137 = vrot.lane.b32.xlu0 %v122, 7
  %v138 = vpop.permute.xlu0 %137
  %139 = vrot.lane.b32.xlu0 %v124, 7
  %v140 = vpop.permute.xlu0 %139
  %v141 = vlaneseq
  %v142 = vand.u32 %v141, 127
  %vm143 = vcmp.lt.s32.totalorder %v142, 7
  %v144 = vsel %vm143, %v126, %v134
  %v145 = vsel %vm143, %v128, %v136
  %v146 = vsel %vm143, %v130, %v138
  %v147 = vsel %vm143, %v132, %v140
  %v148 = vsel %vm143, %v134, %v126
  %v149 = vsel %vm143, %v136, %v128
  %v150 = vsel %vm143, %v138, %v130
  %v151 = vsel %vm143, %v140, %v132
  %152 = vst [vmem:[#allocation2] sm:$0xff] %v148
  %153 = vst [vmem:[#allocation2 + $0x8] sm:$0xff] %v144
  %154 = vst [vmem:[#allocation2 + $0x10] sm:$0xff] %v149
  %155 = vst [vmem:[#allocation2 + $0x18] sm:$0xff] %v145
  %156 = vst [vmem:[#allocation2 + $0x20] sm:$0xff] %v150
  %157 = vst [vmem:[#allocation2 + $0x28] sm:$0xff] %v146
  %158 = vst [vmem:[#allocation2 + $0x30] sm:$0xff] %v151
  %159 = vst [vmem:[#allocation2 + $0x38] sm:$0xff] %v147
  %160 = vrot.lane.b32.xlu0 %v117, 6
  %v161 = vpop.permute.xlu0 %160
  %162 = vrot.lane.b32.xlu0 %v119, 6
  %v163 = vpop.permute.xlu0 %162
  %164 = vrot.lane.b32.xlu0 %v121, 6
  %v165 = vpop.permute.xlu0 %164
  %166 = vrot.lane.b32.xlu0 %v123, 6
  %v167 = vpop.permute.xlu0 %166
  %168 = vrot.lane.b32.xlu0 %v118, 6
  %v169 = vpop.permute.xlu0 %168
  %170 = vrot.lane.b32.xlu0 %v120, 6
  %v171 = vpop.permute.xlu0 %170
  %172 = vrot.lane.b32.xlu0 %v122, 6
  %v173 = vpop.permute.xlu0 %172
  %174 = vrot.lane.b32.xlu0 %v124, 6
  %v175 = vpop.permute.xlu0 %174
  %vm176 = vcmp.lt.s32.totalorder %v142, 6
  %v177 = vsel %vm176, %v161, %v169
  %v178 = vsel %vm176, %v163, %v171
  %v179 = vsel %vm176, %v165, %v173
  %v180 = vsel %vm176, %v167, %v175
  %v181 = vsel %vm176, %v169, %v161
  %v182 = vsel %vm176, %v171, %v163
  %v183 = vsel %vm176, %v173, %v165
  %v184 = vsel %vm176, %v175, %v167
  %185 = vst [vmem:[#allocation2 + $0x40] sm:$0xff] %v181
  %186 = vst [vmem:[#allocation2 + $0x48] sm:$0xff] %v177
  %187 = vst [vmem:[#allocation2 + $0x50] sm:$0xff] %v182
  %188 = vst [vmem:[#allocation2 + $0x58] sm:$0xff] %v178
  %189 = vst [vmem:[#allocation2 + $0x60] sm:$0xff] %v183
  %190 = vst [vmem:[#allocation2 + $0x68] sm:$0xff] %v179
  %191 = vst [vmem:[#allocation2 + $0x70] sm:$0xff] %v184
  %192 = vst [vmem:[#allocation2 + $0x78] sm:$0xff] %v180
  %193 = vrot.lane.b32.xlu0 %v117, 5
  %v194 = vpop.permute.xlu0 %193
  %195 = vrot.lane.b32.xlu0 %v119, 5
  %v196 = vpop.permute.xlu0 %195
  %197 = vrot.lane.b32.xlu0 %v121, 5
  %v198 = vpop.permute.xlu0 %197
  %199 = vrot.lane.b32.xlu0 %v123, 5
  %v200 = vpop.permute.xlu0 %199
  %201 = vrot.lane.b32.xlu0 %v118, 5
  %v202 = vpop.permute.xlu0 %201
  %203 = vrot.lane.b32.xlu0 %v120, 5
  %v204 = vpop.permute.xlu0 %203
  %205 = vrot.lane.b32.xlu0 %v122, 5
  %v206 = vpop.permute.xlu0 %205
  %207 = vrot.lane.b32.xlu0 %v124, 5
  %v208 = vpop.permute.xlu0 %207
  %vm209 = vcmp.lt.s32.totalorder %v142, 5
  %v210 = vsel %vm209, %v194, %v202
  %v211 = vsel %vm209, %v196, %v204
  %v212 = vsel %vm209, %v198, %v206
  %v213 = vsel %vm209, %v200, %v208
  %v214 = vsel %vm209, %v202, %v194
  %v215 = vsel %vm209, %v204, %v196
  %v216 = vsel %vm209, %v206, %v198
  %v217 = vsel %vm209, %v208, %v200
  %218 = vst [vmem:[#allocation2 + $0x80] sm:$0xff] %v214
  %219 = vst [vmem:[#allocation2 + $0x88] sm:$0xff] %v210
  %220 = vst [vmem:[#allocation2 + $0x90] sm:$0xff] %v215
  %221 = vst [vmem:[#allocation2 + $0x98] sm:$0xff] %v211
  %222 = vst [vmem:[#allocation2 + $0xa0] sm:$0xff] %v216
  %223 = vst [vmem:[#allocation2 + $0xa8] sm:$0xff] %v212
  %224 = vst [vmem:[#allocation2 + $0xb0] sm:$0xff] %v217
  %225 = vst [vmem:[#allocation2 + $0xb8] sm:$0xff] %v213
  %226 = vrot.lane.b32.xlu0 %v117, 1
  %v227 = vpop.permute.xlu0 %226
  %228 = vrot.lane.b32.xlu0 %v119, 1
  %v229 = vpop.permute.xlu0 %228
  %230 = vrot.lane.b32.xlu0 %v121, 1
  %v231 = vpop.permute.xlu0 %230
  %232 = vrot.lane.b32.xlu0 %v123, 1
  %v233 = vpop.permute.xlu0 %232
  %234 = vrot.lane.b32.xlu0 %v118, 1
  %v235 = vpop.permute.xlu0 %234
  %236 = vrot.lane.b32.xlu0 %v120, 1
  %v237 = vpop.permute.xlu0 %236
  %238 = vrot.lane.b32.xlu0 %v122, 1
  %v239 = vpop.permute.xlu0 %238
  %240 = vrot.lane.b32.xlu0 %v124, 1
  %v241 = vpop.permute.xlu0 %240
  %vm242 = vcmp.lt.s32.totalorder %v142, 1
  %v243 = vsel %vm242, %v227, %v235
  %v244 = vsel %vm242, %v229, %v237
  %v245 = vsel %vm242, %v231, %v239
  %v246 = vsel %vm242, %v233, %v241
  %v247 = vsel %vm242, %v235, %v227
  %v248 = vsel %vm242, %v237, %v229
  %v249 = vsel %vm242, %v239, %v231
  %v250 = vsel %vm242, %v241, %v233
  %251 = vst [vmem:[#allocation2 + $0xc0] sm:$0xff] %v247
  %252 = vst [vmem:[#allocation2 + $0xc8] sm:$0xff] %v243
  %253 = vst [vmem:[#allocation2 + $0xd0] sm:$0xff] %v248
  %254 = vst [vmem:[#allocation2 + $0xd8] sm:$0xff] %v244
  %255 = vst [vmem:[#allocation2 + $0xe0] sm:$0xff] %v249
  %256 = vst [vmem:[#allocation2 + $0xe8] sm:$0xff] %v245
  %257 = vst [vmem:[#allocation2 + $0xf0] sm:$0xff] %v250
  %258 = vst [vmem:[#allocation2 + $0xf8] sm:$0xff] %v246
  %259 = vst [vmem:[#allocation2 + $0x100] sm:$0xff] %v117
  %260 = vst [vmem:[#allocation2 + $0x108] sm:$0xff] %v118
  %261 = vst [vmem:[#allocation2 + $0x110] sm:$0xff] %v119
  %262 = vst [vmem:[#allocation2 + $0x118] sm:$0xff] %v120
  %263 = vst [vmem:[#allocation2 + $0x120] sm:$0xff] %v121
  %264 = vst [vmem:[#allocation2 + $0x128] sm:$0xff] %v122
  %265 = vst [vmem:[#allocation2 + $0x130] sm:$0xff] %v123
  %266 = vst [vmem:[#allocation2 + $0x138] sm:$0xff] %v124
  %267 = vrot.lane.b32.xlu0 %v117, 127
  %v268 = vpop.permute.xlu0 %267
  %269 = vrot.lane.b32.xlu0 %v119, 127
  %v270 = vpop.permute.xlu0 %269
  %271 = vrot.lane.b32.xlu0 %v121, 127
  %v272 = vpop.permute.xlu0 %271
  %273 = vrot.lane.b32.xlu0 %v123, 127
  %v274 = vpop.permute.xlu0 %273
  %275 = vrot.lane.b32.xlu0 %v118, 127
  %v276 = vpop.permute.xlu0 %275
  %277 = vrot.lane.b32.xlu0 %v120, 127
  %v278 = vpop.permute.xlu0 %277
  %279 = vrot.lane.b32.xlu0 %v122, 127
  %v280 = vpop.permute.xlu0 %279
  %281 = vrot.lane.b32.xlu0 %v124, 127
  %v282 = vpop.permute.xlu0 %281
  %vm283 = vcmp.lt.s32.totalorder %v142, 127
  %v284 = vsel %vm283, %v268, %v276
  %v285 = vsel %vm283, %v270, %v278
  %v286 = vsel %vm283, %v272, %v280
  %v287 = vsel %vm283, %v274, %v282
  %v288 = vsel %vm283, %v276, %v268
  %v289 = vsel %vm283, %v278, %v270
  %v290 = vsel %vm283, %v280, %v272
  %v291 = vsel %vm283, %v282, %v274
  %292 = vst [vmem:[#allocation2 + $0x140] sm:$0xff] %v284
  %293 = vst [vmem:[#allocation2 + $0x148] sm:$0xff] %v288
  %294 = vst [vmem:[#allocation2 + $0x150] sm:$0xff] %v285
  %295 = vst [vmem:[#allocation2 + $0x158] sm:$0xff] %v289
  %296 = vst [vmem:[#allocation2 + $0x160] sm:$0xff] %v286
  %297 = vst [vmem:[#allocation2 + $0x168] sm:$0xff] %v290
  %298 = vst [vmem:[#allocation2 + $0x170] sm:$0xff] %v287
  %299 = vst [vmem:[#allocation2 + $0x178] sm:$0xff] %v291
  %300 = vrot.lane.b32.xlu0 %v117, 123
  %v301 = vpop.permute.xlu0 %300
  %302 = vrot.lane.b32.xlu0 %v119, 123
  %v303 = vpop.permute.xlu0 %302
  %304 = vrot.lane.b32.xlu0 %v121, 123
  %v305 = vpop.permute.xlu0 %304
  %306 = vrot.lane.b32.xlu0 %v123, 123
  %v307 = vpop.permute.xlu0 %306
  %308 = vrot.lane.b32.xlu0 %v118, 123
  %v309 = vpop.permute.xlu0 %308
  %310 = vrot.lane.b32.xlu0 %v120, 123
  %v311 = vpop.permute.xlu0 %310
  %312 = vrot.lane.b32.xlu0 %v122, 123
  %v313 = vpop.permute.xlu0 %312
  %314 = vrot.lane.b32.xlu0 %v124, 123
  %v315 = vpop.permute.xlu0 %314
  %vm316 = vcmp.lt.s32.totalorder %v142, 123
  %v317 = vsel %vm316, %v301, %v309
  %v318 = vsel %vm316, %v303, %v311
  %v319 = vsel %vm316, %v305, %v313
  %v320 = vsel %vm316, %v307, %v315
  %v321 = vsel %vm316, %v309, %v301
  %v322 = vsel %vm316, %v311, %v303
  %v323 = vsel %vm316, %v313, %v305
  %v324 = vsel %vm316, %v315, %v307
  %325 = vst [vmem:[#allocation2 + $0x180] sm:$0xff] %v317
  %326 = vst [vmem:[#allocation2 + $0x188] sm:$0xff] %v321
  %327 = vst [vmem:[#allocation2 + $0x190] sm:$0xff] %v318
  %328 = vst [vmem:[#allocation2 + $0x198] sm:$0xff] %v322
  %329 = vst [vmem:[#allocation2 + $0x1a0] sm:$0xff] %v319
  %330 = vst [vmem:[#allocation2 + $0x1a8] sm:$0xff] %v323
  %331 = vst [vmem:[#allocation2 + $0x1b0] sm:$0xff] %v320
  %332 = vst [vmem:[#allocation2 + $0x1b8] sm:$0xff] %v324
  %333 = vrot.lane.b32.xlu0 %v117, 122
  %v334 = vpop.permute.xlu0 %333
  %335 = vrot.lane.b32.xlu0 %v119, 122
  %v336 = vpop.permute.xlu0 %335
  %337 = vrot.lane.b32.xlu0 %v121, 122
  %v338 = vpop.permute.xlu0 %337
  %339 = vrot.lane.b32.xlu0 %v123, 122
  %v340 = vpop.permute.xlu0 %339
  %341 = vrot.lane.b32.xlu0 %v118, 122
  %v342 = vpop.permute.xlu0 %341
  %343 = vrot.lane.b32.xlu0 %v120, 122
  %v344 = vpop.permute.xlu0 %343
  %345 = vrot.lane.b32.xlu0 %v122, 122
  %v346 = vpop.permute.xlu0 %345
  %347 = vrot.lane.b32.xlu0 %v124, 122
  %v348 = vpop.permute.xlu0 %347
  %vm349 = vcmp.lt.s32.totalorder %v142, 122
  %v350 = vsel %vm349, %v334, %v342
  %v351 = vsel %vm349, %v336, %v344
  %v352 = vsel %vm349, %v338, %v346
  %v353 = vsel %vm349, %v340, %v348
  %v354 = vsel %vm349, %v342, %v334
  %v355 = vsel %vm349, %v344, %v336
  %v356 = vsel %vm349, %v346, %v338
  %v357 = vsel %vm349, %v348, %v340
  %358 = vst [vmem:[#allocation2 + $0x1c0] sm:$0xff] %v350
  %359 = vst [vmem:[#allocation2 + $0x1c8] sm:$0xff] %v354
  %360 = vst [vmem:[#allocation2 + $0x1d0] sm:$0xff] %v351
  %361 = vst [vmem:[#allocation2 + $0x1d8] sm:$0xff] %v355
  %362 = vst [vmem:[#allocation2 + $0x1e0] sm:$0xff] %v352
  %363 = vst [vmem:[#allocation2 + $0x1e8] sm:$0xff] %v356
  %364 = vst [vmem:[#allocation2 + $0x1f0] sm:$0xff] %v353
  %365 = vst [vmem:[#allocation2 + $0x1f8] sm:$0xff] %v357
  %366 = vrot.lane.b32.xlu0 %v117, 121
  %v367 = vpop.permute.xlu0 %366
  %368 = vrot.lane.b32.xlu0 %v119, 121
  %v369 = vpop.permute.xlu0 %368
  %370 = vrot.lane.b32.xlu0 %v121, 121
  %v371 = vpop.permute.xlu0 %370
  %372 = vrot.lane.b32.xlu0 %v123, 121
  %v373 = vpop.permute.xlu0 %372
  %374 = vrot.lane.b32.xlu0 %v118, 121
  %v375 = vpop.permute.xlu0 %374
  %376 = vrot.lane.b32.xlu0 %v120, 121
  %v377 = vpop.permute.xlu0 %376
  %378 = vrot.lane.b32.xlu0 %v122, 121
  %v379 = vpop.permute.xlu0 %378
  %380 = vrot.lane.b32.xlu0 %v124, 121
  %v381 = vpop.permute.xlu0 %380
  %vm382 = vcmp.lt.s32.totalorder %v142, 121
  %v383 = vsel %vm382, %v367, %v375
  %v384 = vsel %vm382, %v369, %v377
  %v385 = vsel %vm382, %v371, %v379
  %v386 = vsel %vm382, %v373, %v381
  %v387 = vsel %vm382, %v375, %v367
  %v388 = vsel %vm382, %v377, %v369
  %v389 = vsel %vm382, %v379, %v371
  %v390 = vsel %vm382, %v381, %v373
  %391 = vst [vmem:[#allocation2 + $0x200] sm:$0xff] %v383
  %392 = vst [vmem:[#allocation2 + $0x208] sm:$0xff] %v387
  %393 = vst [vmem:[#allocation2 + $0x210] sm:$0xff] %v384
  %394 = vst [vmem:[#allocation2 + $0x218] sm:$0xff] %v388
  %395 = vst [vmem:[#allocation2 + $0x220] sm:$0xff] %v385
  %396 = vst [vmem:[#allocation2 + $0x228] sm:$0xff] %v389
  %397 = vst [vmem:[#allocation2 + $0x230] sm:$0xff] %v386
  %398 = vst [vmem:[#allocation2 + $0x238] sm:$0xff] %v390
  %v399 = vld [vmem:[#allocation2] sm:$0xff]
  %v400 = vld [vmem:[#allocation2 + $0x8] sm:$0xff]
  %v401 = vld [vmem:[#allocation2 + $0x10] sm:$0xff]
  %v402 = vld [vmem:[#allocation2 + $0x18] sm:$0xff]
  %v403 = vld [vmem:[#allocation2 + $0x20] sm:$0xff]
  %v404 = vld [vmem:[#allocation2 + $0x28] sm:$0xff]
  %v405 = vld [vmem:[#allocation2 + $0x30] sm:$0xff]
  %v406 = vld [vmem:[#allocation2 + $0x38] sm:$0xff]
  %v407 = vld [vmem:[#allocation2 + $0x40] sm:$0xff]
  %v408 = vld [vmem:[#allocation2 + $0x48] sm:$0xff]
  %v409 = vld [vmem:[#allocation2 + $0x50] sm:$0xff]
  %v410 = vld [vmem:[#allocation2 + $0x58] sm:$0xff]
  %v411 = vld [vmem:[#allocation2 + $0x60] sm:$0xff]
  %v412 = vld [vmem:[#allocation2 + $0x68] sm:$0xff]
  %v413 = vld [vmem:[#allocation2 + $0x70] sm:$0xff]
  %v414 = vld [vmem:[#allocation2 + $0x78] sm:$0xff]
  %v415 = vld [vmem:[#allocation2 + $0x80] sm:$0xff]
  %v416 = vld [vmem:[#allocation2 + $0x88] sm:$0xff]
  %v417 = vld [vmem:[#allocation2 + $0x90] sm:$0xff]
  %v418 = vld [vmem:[#allocation2 + $0x98] sm:$0xff]
  %v419 = vld [vmem:[#allocation2 + $0xa0] sm:$0xff]
  %v420 = vld [vmem:[#allocation2 + $0xa8] sm:$0xff]
  %v421 = vld [vmem:[#allocation2 + $0xb0] sm:$0xff]
  %v422 = vld [vmem:[#allocation2 + $0xb8] sm:$0xff]
  %v423 = vld [vmem:[#allocation2 + $0xc0] sm:$0xff]
  %v424 = vld [vmem:[#allocation2 + $0xc8] sm:$0xff]
  %v425 = vld [vmem:[#allocation2 + $0xd0] sm:$0xff]
  %v426 = vld [vmem:[#allocation2 + $0xd8] sm:$0xff]
  %v427 = vld [vmem:[#allocation2 + $0xe0] sm:$0xff]
  %v428 = vld [vmem:[#allocation2 + $0xe8] sm:$0xff]
  %v429 = vld [vmem:[#allocation2 + $0xf0] sm:$0xff]
  %v430 = vld [vmem:[#allocation2 + $0xf8] sm:$0xff]
  %v431 = vld [vmem:[#allocation2 + $0x100] sm:$0xff]
  %v432 = vld [vmem:[#allocation2 + $0x108] sm:$0xff]
  %v433 = vld [vmem:[#allocation2 + $0x110] sm:$0xff]
  %v434 = vld [vmem:[#allocation2 + $0x118] sm:$0xff]
  %v435 = vld [vmem:[#allocation2 + $0x120] sm:$0xff]
  %v436 = vld [vmem:[#allocation2 + $0x128] sm:$0xff]
  %v437 = vld [vmem:[#allocation2 + $0x130] sm:$0xff]
  %v438 = vld [vmem:[#allocation2 + $0x138] sm:$0xff]
  %v439 = vld [vmem:[#allocation2 + $0x140] sm:$0xff]
  %v440 = vld [vmem:[#allocation2 + $0x148] sm:$0xff]
  %v441 = vld [vmem:[#allocation2 + $0x150] sm:$0xff]
  %v442 = vld [vmem:[#allocation2 + $0x158] sm:$0xff]
  %v443 = vld [vmem:[#allocation2 + $0x160] sm:$0xff]
  %v444 = vld [vmem:[#allocation2 + $0x168] sm:$0xff]
  %v445 = vld [vmem:[#allocation2 + $0x170] sm:$0xff]
  %v446 = vld [vmem:[#allocation2 + $0x178] sm:$0xff]
  %v447 = vld [vmem:[#allocation2 + $0x180] sm:$0xff]
  %v448 = vld [vmem:[#allocation2 + $0x188] sm:$0xff]
  %v449 = vld [vmem:[#allocation2 + $0x190] sm:$0xff]
  %v450 = vld [vmem:[#allocation2 + $0x198] sm:$0xff]
  %v451 = vld [vmem:[#allocation2 + $0x1a0] sm:$0xff]
  %v452 = vld [vmem:[#allocation2 + $0x1a8] sm:$0xff]
  %v453 = vld [vmem:[#allocation2 + $0x1b0] sm:$0xff]
  %v454 = vld [vmem:[#allocation2 + $0x1b8] sm:$0xff]
  %v455 = vld [vmem:[#allocation2 + $0x1c0] sm:$0xff]
  %v456 = vld [vmem:[#allocation2 + $0x1c8] sm:$0xff]
  %v457 = vld [vmem:[#allocation2 + $0x1d0] sm:$0xff]
  %v458 = vld [vmem:[#allocation2 + $0x1d8] sm:$0xff]
  %v459 = vld [vmem:[#allocation2 + $0x1e0] sm:$0xff]
  %v460 = vld [vmem:[#allocation2 + $0x1e8] sm:$0xff]
  %v461 = vld [vmem:[#allocation2 + $0x1f0] sm:$0xff]
  %v462 = vld [vmem:[#allocation2 + $0x1f8] sm:$0xff]
  %v463 = vld [vmem:[#allocation2 + $0x200] sm:$0xff]
  %v464 = vld [vmem:[#allocation2 + $0x208] sm:$0xff]
  %v465 = vld [vmem:[#allocation2 + $0x210] sm:$0xff]
  %v466 = vld [vmem:[#allocation2 + $0x218] sm:$0xff]
  %v467 = vld [vmem:[#allocation2 + $0x220] sm:$0xff]
  %v468 = vld [vmem:[#allocation2 + $0x228] sm:$0xff]
  %v469 = vld [vmem:[#allocation2 + $0x230] sm:$0xff]
  %v470 = vld [vmem:[#allocation2 + $0x238] sm:$0xff]
  %v471 = vpack.c.bf16 %v401, %v399
  %v472 = vpack.c.bf16 %v402, %v400
  %v473 = vpack.c.bf16 %v405, %v403
  %v474 = vpack.c.bf16 %v406, %v404
  %v475 = vpack.c.bf16 %v409, %v407
  %v476 = vpack.c.bf16 %v410, %v408
  %v477 = vpack.c.bf16 %v413, %v411
  %v478 = vpack.c.bf16 %v414, %v412
  %v479 = vpack.c.bf16 %v417, %v415
  %v480 = vpack.c.bf16 %v418, %v416
  %v481 = vpack.c.bf16 %v421, %v419
  %v482 = vpack.c.bf16 %v422, %v420
  %v483 = vpack.c.bf16 %v425, %v423
  %v484 = vpack.c.bf16 %v426, %v424
  %v485 = vpack.c.bf16 %v429, %v427
  %v486 = vpack.c.bf16 %v430, %v428
  %v487 = vpack.c.bf16 %v433, %v431
  %v488 = vpack.c.bf16 %v434, %v432
  %v489 = vpack.c.bf16 %v437, %v435
  %v490 = vpack.c.bf16 %v438, %v436
  %v491 = vpack.c.bf16 %v441, %v439
  %v492 = vpack.c.bf16 %v442, %v440
  %v493 = vpack.c.bf16 %v445, %v443
  %v494 = vpack.c.bf16 %v446, %v444
  %v495 = vpack.c.bf16 %v449, %v447
  %v496 = vpack.c.bf16 %v450, %v448
  %v497 = vpack.c.bf16 %v453, %v451
  %v498 = vpack.c.bf16 %v454, %v452
  %v499 = vpack.c.bf16 %v457, %v455
  %v500 = vpack.c.bf16 %v458, %v456
  %v501 = vpack.c.bf16 %v461, %v459
  %v502 = vpack.c.bf16 %v462, %v460
  %v503 = vpack.c.bf16 %v465, %v463
  %v504 = vpack.c.bf16 %v466, %v464
  %v505 = vpack.c.bf16 %v469, %v467
  %v506 = vpack.c.bf16 %v470, %v468
  %v507 = vld [vmem:[%s1] sm:$0xff]
  %v508 = vld [vmem:[%s1 + $0x8] sm:$0xf]
  %v509 = vld [vmem:[%s1 + $0xc] sm:$0xff]
  %v510 = vld [vmem:[%s1 + $0x14] sm:$0xf]
  %v511 = vld [vmem:[%s1 + $0x18] sm:$0xff]
  %v512 = vld [vmem:[%s1 + $0x20] sm:$0xf]
  %v513 = vld [vmem:[%s1 + $0x24] sm:$0xff]
  %v514 = vld [vmem:[%s1 + $0x2c] sm:$0xf]
  %v515 = vld [vmem:[%s2] sm:$0xff]
  %v516 = vld [vmem:[%s2 + $0x8] sm:$0xff]
  %v517 = vld [vmem:[%s2 + $0x10] sm:$0xff]
  %v518 = vld [vmem:[%s2 + $0x18] sm:$0xff]
  %520 = vset.pattern.permute.xlu0 0
  %521 = vperm.xlu0 %520, %v515
  %v522 = vpop.permute.xlu0 %521
  %525 = vset.pattern.permute.xlu0 0
  %526 = vperm.xlu0 %525, %v516
  %v527 = vpop.permute.xlu0 %526
  %530 = vset.pattern.permute.xlu0 0
  %531 = vperm.xlu0 %530, %v517
  %v532 = vpop.permute.xlu0 %531
  %535 = vset.pattern.permute.xlu0 0
  %536 = vperm.xlu0 %535, %v518
  %v537 = vpop.permute.xlu0 %536
  %v547 = vunpack.c.l.b16 %v507
  %v548 = vunpack.c.h.b16 %v507
  %v549 = vunpack.c.l.b16 %v508
  %v550 = vunpack.c.l.b16 %v509
  %v551 = vunpack.c.h.b16 %v509
  %v552 = vunpack.c.l.b16 %v510
  %v553 = vunpack.c.l.b16 %v511
  %v554 = vunpack.c.h.b16 %v511
  %v555 = vunpack.c.l.b16 %v512
  %v556 = vunpack.c.l.b16 %v513
  %v557 = vunpack.c.h.b16 %v513
  %v558 = vunpack.c.l.b16 %v514
  %v559 = vpack.c.b16 %v550, %v547
  %v560 = vpack.c.b16 %v551, %v548
  %v561 = vpack.c.b16 %v552, %v549
  %v562 = vpack.c.b16 %v556, %v553
  %v563 = vpack.c.b16 %v557, %v554
  %v564 = vpack.c.b16 %v558, %v555
  %vm569 = vcmask 261120
  %v571 = vsel %vm569, %v561, 0
  %v574 = vsel %vm569, %v564, 0
  %576 = vmatpush.bf16.msra.mxu0 %v485
  %577 = vmatpush.bf16.msra.mxu0 %v483
  %578 = vmatpush.bf16.msra.mxu0 %v481
  %579 = vmatpush.bf16.msra.mxu0 %v479
  %580 = vmatpush.bf16.msra.mxu0 %v477
  %581 = vmatpush.bf16.msra.mxu0 %v475
  %582 = vmatpush.bf16.msra.mxu0 %v473
  %583 = vmatpush.bf16.msra.mxu0 %v471
  %584 = vmatmul.bf16.gmra.mxu0 %v559
  %v585 = vpop.f32.mrf.mxu0
  %v586 = vadd.f32 %v522, %v585
  %v587 = vpop.f32.mrf.mxu0
  %v588 = vadd.f32 %v527, %v587
  %589 = vmatmul.bf16.gmra.mxu0 %v562
  %v590 = vpop.f32.mrf.mxu0
  %v591 = vadd.f32 %v532, %v590
  %v592 = vpop.f32.mrf.mxu0
  %v593 = vadd.f32 %v537, %v592
  %594 = vdwg.mxu0
  %595 = vmatpush.bf16.msra.mxu0 %v501
  %596 = vmatpush.bf16.msra.mxu0 %v499
  %597 = vmatpush.bf16.msra.mxu0 %v497
  %598 = vmatpush.bf16.msra.mxu0 %v495
  %599 = vmatpush.bf16.msra.mxu0 %v493
  %600 = vmatpush.bf16.msra.mxu0 %v491
  %601 = vmatpush.bf16.msra.mxu0 %v489
  %602 = vmatpush.bf16.msra.mxu0 %v487
  %603 = vmatmul.bf16.gmra.mxu0 %v560
  %v604 = vpop.f32.mrf.mxu0
  %v605 = vadd.f32 %v586, %v604
  %v606 = vpop.f32.mrf.mxu0
  %v607 = vadd.f32 %v588, %v606
  %608 = vmatmul.bf16.gmra.mxu0 %v563
  %v609 = vpop.f32.mrf.mxu0
  %v610 = vadd.f32 %v591, %v609
  %v611 = vpop.f32.mrf.mxu0
  %v612 = vadd.f32 %v593, %v611
  %613 = vdwg.mxu0
  %614 = vmatpush.bf16.msra.mxu0 0
  %615 = vmatpush.bf16.msra.mxu0 0
  %616 = vmatpush.bf16.msra.mxu0 0
  %617 = vmatpush.bf16.msra.mxu0 0
  %618 = vmatpush.bf16.msra.mxu0 0
  %619 = vmatpush.bf16.msra.mxu0 0
  %620 = vmatpush.bf16.msra.mxu0 %v505
  %621 = vmatpush.bf16.msra.mxu0 %v503
  %622 = vmatmul.bf16.gmra.mxu0 %v571
  %v623 = vpop.f32.mrf.mxu0
  %v624 = vadd.f32 %v605, %v623
  %v625 = vpop.f32.mrf.mxu0
  %v626 = vadd.f32 %v607, %v625
  %627 = vmatmul.bf16.gmra.mxu0 %v574
  %v628 = vpop.f32.mrf.mxu0
  %v629 = vadd.f32 %v610, %v628
  %v630 = vpop.f32.mrf.mxu0
  %v631 = vadd.f32 %v612, %v630
  %632 = vdwg.mxu0
  %633 = vmatpush.bf16.msra.mxu0 %v486
  %634 = vmatpush.bf16.msra.mxu0 %v484
  %635 = vmatpush.bf16.msra.mxu0 %v482
  %636 = vmatpush.bf16.msra.mxu0 %v480
  %637 = vmatpush.bf16.msra.mxu0 %v478
  %638 = vmatpush.bf16.msra.mxu0 %v476
  %639 = vmatpush.bf16.msra.mxu0 %v474
  %640 = vmatpush.bf16.msra.mxu0 %v472
  %641 = vmatmul.bf16.gmra.mxu0 %v559
  %v642 = vpop.f32.mrf.mxu0
  %v643 = vadd.f32 %v522, %v642
  %v644 = vpop.f32.mrf.mxu0
  %v645 = vadd.f32 %v527, %v644
  %646 = vmatmul.bf16.gmra.mxu0 %v562
  %v647 = vpop.f32.mrf.mxu0
  %v648 = vadd.f32 %v532, %v647
  %v649 = vpop.f32.mrf.mxu0
  %v650 = vadd.f32 %v537, %v649
  %651 = vdwg.mxu0
  %652 = vmatpush.bf16.msra.mxu0 %v502
  %653 = vmatpush.bf16.msra.mxu0 %v500
  %654 = vmatpush.bf16.msra.mxu0 %v498
  %655 = vmatpush.bf16.msra.mxu0 %v496
  %656 = vmatpush.bf16.msra.mxu0 %v494
  %657 = vmatpush.bf16.msra.mxu0 %v492
  %658 = vmatpush.bf16.msra.mxu0 %v490
  %659 = vmatpush.bf16.msra.mxu0 %v488
  %660 = vmatmul.bf16.gmra.mxu0 %v560
  %v661 = vpop.f32.mrf.mxu0
  %v662 = vadd.f32 %v643, %v661
  %v663 = vpop.f32.mrf.mxu0
  %v664 = vadd.f32 %v645, %v663
  %665 = vmatmul.bf16.gmra.mxu0 %v563
  %v666 = vpop.f32.mrf.mxu0
  %v667 = vadd.f32 %v648, %v666
  %v668 = vpop.f32.mrf.mxu0
  %v669 = vadd.f32 %v650, %v668
  %670 = vdwg.mxu0
  %671 = vmatpush.bf16.msra.mxu0 0
  %672 = vmatpush.bf16.msra.mxu0 0
  %673 = vmatpush.bf16.msra.mxu0 0
  %674 = vmatpush.bf16.msra.mxu0 0
  %675 = vmatpush.bf16.msra.mxu0 0
  %676 = vmatpush.bf16.msra.mxu0 0
  %677 = vmatpush.bf16.msra.mxu0 %v506
  %678 = vmatpush.bf16.msra.mxu0 %v504
  %679 = vmatmul.bf16.gmra.mxu0 %v571
  %v680 = vpop.f32.mrf.mxu0
  %v681 = vadd.f32 %v662, %v680
  %v682 = vpop.f32.mrf.mxu0
  %v683 = vadd.f32 %v664, %v682
  %684 = vmatmul.bf16.gmra.mxu0 %v574
  %v685 = vpop.f32.mrf.mxu0
  %v686 = vadd.f32 %v667, %v685
  %v687 = vpop.f32.mrf.mxu0
  %v688 = vadd.f32 %v669, %v687
  %689 = vdwg.mxu0
  %v690 = vmul.f32 %v624, %v113
  %v691 = vmul.f32 %v681, %v114
  %v692 = vmul.f32 %v626, %v113
  %v693 = vmul.f32 %v683, %v114
  %v694 = vmul.f32 %v629, %v113
  %v695 = vmul.f32 %v686, %v114
  %v696 = vmul.f32 %v631, %v113
  %v697 = vmul.f32 %v688, %v114
  %v698 = vadd.f32 %v690, %v691
  %699 = vadd.xlane.f32.xlu0 %v698
  %v700 = vpop.xlane.xlu0 %699
  %v701 = vadd.f32 %v692, %v693
  %702 = vadd.xlane.f32.xlu0 %v701
  %v703 = vpop.xlane.xlu0 %702
  %v704 = vadd.f32 %v694, %v695
  %705 = vadd.xlane.f32.xlu0 %v704
  %v706 = vpop.xlane.xlu0 %705
  %v707 = vadd.f32 %v696, %v697
  %708 = vadd.xlane.f32.xlu0 %v707
  %v709 = vpop.xlane.xlu0 %708
  %vm710 = vcmask 7168
  %711 = vst.msk [vmem:[%s7] sm:$0xff] %vm710, %v700
  %712 = vst.msk [vmem:[%s7 + $0x8] sm:$0xff] %vm710, %v703
  %713 = vst.msk [vmem:[%s7 + $0x10] sm:$0xff] %vm710, %v706
  %714 = vst.msk [vmem:[%s7 + $0x18] sm:$0xff] %vm710, %v709
  %v715 = vmul.f32 %v690, %v690
  %v716 = vmul.f32 %v691, %v691
  %v717 = vmul.f32 %v692, %v692
  %v718 = vmul.f32 %v693, %v693
  %v719 = vmul.f32 %v694, %v694
  %v720 = vmul.f32 %v695, %v695
  %v721 = vmul.f32 %v696, %v696
  %v722 = vmul.f32 %v697, %v697
  %v723 = vadd.f32 %v715, %v716
  %724 = vadd.xlane.f32.xlu0 %v723
  %v725 = vpop.xlane.xlu0 %724
  %v726 = vadd.f32 %v717, %v718
  %727 = vadd.xlane.f32.xlu0 %v726
  %v728 = vpop.xlane.xlu0 %727
  %v729 = vadd.f32 %v719, %v720
  %730 = vadd.xlane.f32.xlu0 %v729
  %v731 = vpop.xlane.xlu0 %730
  %v732 = vadd.f32 %v721, %v722
  %733 = vadd.xlane.f32.xlu0 %v732
  %v734 = vpop.xlane.xlu0 %733
  %735 = vst.msk [vmem:[%s8] sm:$0xff] %vm710, %v725
  %736 = vst.msk [vmem:[%s8 + $0x8] sm:$0xff] %vm710, %v728
  %737 = vst.msk [vmem:[%s8 + $0x10] sm:$0xff] %vm710, %v731
  %738 = vst.msk [vmem:[%s8 + $0x18] sm:$0xff] %vm710, %v734
  %v739 = vpack.c.bf16 %v691, %v690
  %v740 = vpack.c.bf16 %v693, %v692
  %v741 = vpack.c.bf16 %v695, %v694
  %v742 = vpack.c.bf16 %v697, %v696
  %743 = vst [vmem:[%s6] sm:$0xff] %v739
  %744 = vst [vmem:[%s6 + $0x8] sm:$0xff] %v740
  %745 = vst [vmem:[%s6 + $0x10] sm:$0xff] %v741
  %746 = vst [vmem:[%s6 + $0x18] sm:$0xff] %v742
  // Predicated region
  $region26: #{model_forward.18} parent=0 // pred_check
    _
  $region27: #{model_forward.18} parent=0 // pred_check_branch
    %748 = sbr.rel (0) target = $region29
  $region28: #{model_forward.18} parent=0 // pred_region
    _
  $region29: #{model_forward.18} parent=0 // pred_fallthru
    _
  // Predicated region
  $region30: #{model_forward.18} parent=0 // pred_check
    _
  $region31: #{model_forward.18} parent=0 // pred_check_branch
    %750 = sbr.rel (0) target = $region33
  $region32: #{model_forward.18} parent=0 // pred_region
    _
  $region33: #{model_forward.18} parent=0 // pred_fallthru
    _
  // Predicated region
  $region34: #{model_forward.18} parent=0 // pred_check
    _
  $region35: #{model_forward.18} parent=0 // pred_check_branch
    %752 = sbr.rel (0) target = $region37
  $region36: #{model_forward.18} parent=0 // pred_region
    _
  $region37: #{model_forward.18} parent=0 // pred_fallthru
    _
  // Predicated region
  $region38: #{model_forward.18} parent=0 // pred_check
    _
  $region39: #{model_forward.18} parent=0 // pred_check_branch
    %754 = sbr.rel (0) target = $region41
  $region40: #{model_forward.18} parent=0 // pred_region
    _
  $region41: #{model_forward.18} parent=0 // pred_fallthru
    _
  // Predicated region
  $region42: #{model_forward.18} parent=0 // pred_check
    _
  $region43: #{model_forward.18} parent=0 // pred_check_branch
    %756 = sbr.rel (0) target = $region45
  $region44: #{model_forward.18} parent=0 // pred_region
    _
  $region45: #{model_forward.18} parent=0 // pred_fallthru
    _
  // Predicated region
  $region46: #{model_forward.18} parent=0 // pred_check
    _
  $region47: #{model_forward.18} parent=0 // pred_check_branch
    %758 = sbr.rel (0) target = $region49
  $region48: #{model_forward.18} parent=0 // pred_region
    _
  $region49: #{model_forward.18} parent=0 // pred_fallthru
    _

// kernel: model_forward.23
$region0: #{model_forward.23}
  #allocation0 [shape = 'u32[]', space=smem, size = 0x4, offset = 0x4, fixed_abs, tag = 'smem constant byte address 0x4 - core index']
  #allocation1 [shape = 'u32[72,128]{1,0:T(1,128)}', space=vmem, size = 0x9000, scoped, tag = 'internal scratch']
  #allocation2 [shape = 'f32[32,256]{1,0:T(8,128)}', space=vmem, size = 0x8000, scoped, tag = 'scratch operand']
  %s0 = inlined_call_operand.vmem [shape: bf16[32,256], index: 0, kind: input, shape index: {}]
  %s1 = inlined_call_operand.vmem [shape: bf16[64,32], index: 1, kind: input, shape index: {}]
  %s2 = inlined_call_operand.vmem [shape: f32[64,1], index: 2, kind: input, shape index: {}]
  %s3 = inlined_call_operand.vmem [shape: f32[32,1], index: 3, kind: input, shape index: {}]
  %s4 = inlined_call_operand.vmem [shape: f32[32,1], index: 4, kind: input, shape index: {}]
  %s5 = inlined_call_operand.vmem [shape: f32[1,256], index: 5, kind: input, shape index: {}]
  %s6 = inlined_call_operand.vmem [shape: bf16[64,256], index: 6, kind: output, shape index: {0}]
  %s7 = inlined_call_operand.vmem [shape: f32[64,1], index: 7, kind: output, shape index: {1}]
  %s8 = inlined_call_operand.vmem [shape: f32[64,1], index: 8, kind: output, shape index: {2}]
  %9 = xla_tuple %s6, %s7, %s8
  %s10 = sld [smem:[#allocation0]]
  $region50: #{model_forward.23} parent=0
    _
  %s12 = ssub.s32 1, %s10
  %s13 = scalar_select 0, %s12, %s10
  // Predicated region
  $region2: #{model_forward.23} parent=0 // pred_check
    _
  $region3: #{model_forward.23} parent=0 // pred_check_branch
    %15 = sbr.rel (0) target = $region5
  $region4: #{model_forward.23} parent=0 // pred_region
    _
  $region5: #{model_forward.23} parent=0 // pred_fallthru
    _
  // Predicated region
  $region6: #{model_forward.23} parent=0 // pred_check
    _
  $region7: #{model_forward.23} parent=0 // pred_check_branch
    %17 = sbr.rel (0) target = $region9
  $region8: #{model_forward.23} parent=0 // pred_region
    _
  $region9: #{model_forward.23} parent=0 // pred_fallthru
    _
  // Predicated region
  $region10: #{model_forward.23} parent=0 // pred_check
    _
  $region11: #{model_forward.23} parent=0 // pred_check_branch
    %19 = sbr.rel (0) target = $region13
  $region12: #{model_forward.23} parent=0 // pred_region
    _
  $region13: #{model_forward.23} parent=0 // pred_fallthru
    _
  // Predicated region
  $region14: #{model_forward.23} parent=0 // pred_check
    _
  $region15: #{model_forward.23} parent=0 // pred_check_branch
    %21 = sbr.rel (0) target = $region17
  $region16: #{model_forward.23} parent=0 // pred_region
    _
  $region17: #{model_forward.23} parent=0 // pred_fallthru
    _
  // Predicated region
  $region18: #{model_forward.23} parent=0 // pred_check
    _
  $region19: #{model_forward.23} parent=0 // pred_check_branch
    %23 = sbr.rel (0) target = $region21
  $region20: #{model_forward.23} parent=0 // pred_region
    _
  $region21: #{model_forward.23} parent=0 // pred_fallthru
    _
  // Predicated region
  $region22: #{model_forward.23} parent=0 // pred_check
    _
  $region23: #{model_forward.23} parent=0 // pred_check_branch
    %25 = sbr.rel (0) target = $region25
  $region24: #{model_forward.23} parent=0 // pred_region
    _
  $region25: #{model_forward.23} parent=0 // pred_fallthru
    _
  %v27 = vld [vmem:[%s5] sm:$0x3]
  %v28 = vld [vmem:[%s0] sm:$0xff]
  %v29 = vld [vmem:[%s0 + $0x8] sm:$0xff]
  %v30 = vld [vmem:[%s0 + $0x10] sm:$0xff]
  %v31 = vld [vmem:[%s0 + $0x18] sm:$0xff]
  %v32 = vunpack.c.l.bf16 %v28
  %v33 = vunpack.c.h.bf16 %v28
  %v34 = vunpack.c.l.bf16 %v29
  %v35 = vunpack.c.h.bf16 %v29
  %v36 = vunpack.c.l.bf16 %v30
  %v37 = vunpack.c.h.bf16 %v30
  %v38 = vunpack.c.l.bf16 %v31
  %v39 = vunpack.c.h.bf16 %v31
  %v40 = vld [vmem:[%s3] sm:$0xff]
  %v41 = vld [vmem:[%s3 + $0x8] sm:$0xff]
  %v42 = vld [vmem:[%s3 + $0x10] sm:$0xff]
  %v43 = vld [vmem:[%s3 + $0x18] sm:$0xff]
  %45 = vset.pattern.permute.xlu0 0
  %46 = vperm.xlu0 %45, %v40
  %v47 = vpop.permute.xlu0 %46
  %50 = vset.pattern.permute.xlu0 0
  %51 = vperm.xlu0 %50, %v41
  %v52 = vpop.permute.xlu0 %51
  %55 = vset.pattern.permute.xlu0 0
  %56 = vperm.xlu0 %55, %v42
  %v57 = vpop.permute.xlu0 %56
  %60 = vset.pattern.permute.xlu0 0
  %61 = vperm.xlu0 %60, %v43
  %v62 = vpop.permute.xlu0 %61
  %v64 = vmul.f32 %v32, %v47
  %v65 = vmul.f32 %v33, %v47
  %v66 = vmul.f32 %v34, %v52
  %v67 = vmul.f32 %v35, %v52
  %v68 = vmul.f32 %v36, %v57
  %v69 = vmul.f32 %v37, %v57
  %v70 = vmul.f32 %v38, %v62
  %v71 = vmul.f32 %v39, %v62
  %v72 = vld [vmem:[%s4] sm:$0xff]
  %v73 = vld [vmem:[%s4 + $0x8] sm:$0xff]
  %v74 = vld [vmem:[%s4 + $0x10] sm:$0xff]
  %v75 = vld [vmem:[%s4 + $0x18] sm:$0xff]
  %77 = vset.pattern.permute.xlu0 0
  %78 = vperm.xlu0 %77, %v72
  %v79 = vpop.permute.xlu0 %78
  %82 = vset.pattern.permute.xlu0 0
  %83 = vperm.xlu0 %82, %v73
  %v84 = vpop.permute.xlu0 %83
  %87 = vset.pattern.permute.xlu0 0
  %88 = vperm.xlu0 %87, %v74
  %v89 = vpop.permute.xlu0 %88
  %92 = vset.pattern.permute.xlu0 0
  %93 = vperm.xlu0 %92, %v75
  %v94 = vpop.permute.xlu0 %93
  %v96 = vadd.f32 %v64, %v79
  %v97 = vadd.f32 %v65, %v79
  %v98 = vadd.f32 %v66, %v84
  %v99 = vadd.f32 %v67, %v84
  %v100 = vadd.f32 %v68, %v89
  %v101 = vadd.f32 %v69, %v89
  %v102 = vadd.f32 %v70, %v94
  %v103 = vadd.f32 %v71, %v94
  %v104 = vmax.f32 %v96, 0.0
  %v105 = vmax.f32 %v97, 0.0
  %v106 = vmax.f32 %v98, 0.0
  %v107 = vmax.f32 %v99, 0.0
  %v108 = vmax.f32 %v100, 0.0
  %v109 = vmax.f32 %v101, 0.0
  %v110 = vmax.f32 %v102, 0.0
  %v111 = vmax.f32 %v103, 0.0
  %v113 = vperm.slane %v27, 0
  %v114 = vperm.slane %v27, 1
  %v117 = vmul.f32 %v104, %v113
  %v118 = vmul.f32 %v105, %v114
  %v119 = vmul.f32 %v106, %v113
  %v120 = vmul.f32 %v107, %v114
  %v121 = vmul.f32 %v108, %v113
  %v122 = vmul.f32 %v109, %v114
  %v123 = vmul.f32 %v110, %v113
  %v124 = vmul.f32 %v111, %v114
  %125 = vst [vmem:[#allocation2] sm:$0xff] %v117
  %126 = vst [vmem:[#allocation2 + $0x8] sm:$0xff] %v118
  %127 = vst [vmem:[#allocation2 + $0x10] sm:$0xff] %v119
  %128 = vst [vmem:[#allocation2 + $0x18] sm:$0xff] %v120
  %129 = vst [vmem:[#allocation2 + $0x20] sm:$0xff] %v121
  %130 = vst [vmem:[#allocation2 + $0x28] sm:$0xff] %v122
  %131 = vst [vmem:[#allocation2 + $0x30] sm:$0xff] %v123
  %132 = vst [vmem:[#allocation2 + $0x38] sm:$0xff] %v124
  %v133 = vld [vmem:[#allocation2] sm:$0xff]
  %v134 = vld [vmem:[#allocation2 + $0x8] sm:$0xff]
  %v135 = vld [vmem:[#allocation2 + $0x10] sm:$0xff]
  %v136 = vld [vmem:[#allocation2 + $0x18] sm:$0xff]
  %v137 = vld [vmem:[#allocation2 + $0x20] sm:$0xff]
  %v138 = vld [vmem:[#allocation2 + $0x28] sm:$0xff]
  %v139 = vld [vmem:[#allocation2 + $0x30] sm:$0xff]
  %v140 = vld [vmem:[#allocation2 + $0x38] sm:$0xff]
  %v141 = vpack.c.bf16 %v135, %v133
  %v142 = vpack.c.bf16 %v136, %v134
  %v143 = vpack.c.bf16 %v139, %v137
  %v144 = vpack.c.bf16 %v140, %v138
  %v145 = vld [vmem:[%s1] sm:$0xf]
  %v146 = vld [vmem:[%s1 + $0x4] sm:$0xf]
  %v147 = vld [vmem:[%s1 + $0x8] sm:$0xf]
  %v148 = vld [vmem:[%s1 + $0xc] sm:$0xf]
  %v149 = vld [vmem:[%s1 + $0x10] sm:$0xf]
  %v150 = vld [vmem:[%s1 + $0x14] sm:$0xf]
  %v151 = vld [vmem:[%s1 + $0x18] sm:$0xf]
  %v152 = vld [vmem:[%s1 + $0x1c] sm:$0xf]
  %v153 = vld [vmem:[%s2] sm:$0xff]
  %v154 = vld [vmem:[%s2 + $0x8] sm:$0xff]
  %v155 = vld [vmem:[%s2 + $0x10] sm:$0xff]
  %v156 = vld [vmem:[%s2 + $0x18] sm:$0xff]
  %v157 = vld [vmem:[%s2 + $0x20] sm:$0xff]
  %v158 = vld [vmem:[%s2 + $0x28] sm:$0xff]
  %v159 = vld [vmem:[%s2 + $0x30] sm:$0xff]
  %v160 = vld [vmem:[%s2 + $0x38] sm:$0xff]
  %162 = vset.pattern.permute.xlu0 0
  %163 = vperm.xlu0 %162, %v153
  %v164 = vpop.permute.xlu0 %163
  %167 = vset.pattern.permute.xlu0 0
  %168 = vperm.xlu0 %167, %v154
  %v169 = vpop.permute.xlu0 %168
  %172 = vset.pattern.permute.xlu0 0
  %173 = vperm.xlu0 %172, %v155
  %v174 = vpop.permute.xlu0 %173
  %177 = vset.pattern.permute.xlu0 0
  %178 = vperm.xlu0 %177, %v156
  %v179 = vpop.permute.xlu0 %178
  %182 = vset.pattern.permute.xlu0 0
  %183 = vperm.xlu0 %182, %v157
  %v184 = vpop.permute.xlu0 %183
  %187 = vset.pattern.permute.xlu0 0
  %188 = vperm.xlu0 %187, %v158
  %v189 = vpop.permute.xlu0 %188
  %192 = vset.pattern.permute.xlu0 0
  %193 = vperm.xlu0 %192, %v159
  %v194 = vpop.permute.xlu0 %193
  %197 = vset.pattern.permute.xlu0 0
  %198 = vperm.xlu0 %197, %v160
  %v199 = vpop.permute.xlu0 %198
  %v209 = vunpack.c.l.b16 %v145
  %v210 = vunpack.c.l.b16 %v146
  %v211 = vunpack.c.l.b16 %v147
  %v212 = vunpack.c.l.b16 %v148
  %v213 = vunpack.c.l.b16 %v149
  %v214 = vunpack.c.l.b16 %v150
  %v215 = vunpack.c.l.b16 %v151
  %v216 = vunpack.c.l.b16 %v152
  %v217 = vpack.c.b16 %v210, %v209
  %v218 = vpack.c.b16 %v212, %v211
  %v219 = vpack.c.b16 %v214, %v213
  %v220 = vpack.c.b16 %v216, %v215
  %vm221 = vcmask 261120
  %v223 = vsel %vm221, %v217, 0
  %v226 = vsel %vm221, %v218, 0
  %v229 = vsel %vm221, %v219, 0
  %v232 = vsel %vm221, %v220, 0
  %234 = vmatpush.bf16.msra.mxu0 0
  %235 = vmatpush.bf16.msra.mxu0 0
  %236 = vmatpush.bf16.msra.mxu0 0
  %237 = vmatpush.bf16.msra.mxu0 0
  %238 = vmatpush.bf16.msra.mxu0 0
  %239 = vmatpush.bf16.msra.mxu0 0
  %240 = vmatpush.bf16.msra.mxu0 %v143
  %241 = vmatpush.bf16.msra.mxu0 %v141
  %242 = vmatmul.bf16.gmra.mxu0 %v223
  %v243 = vpop.f32.mrf.mxu0
  %v244 = vadd.f32 %v164, %v243
  %v245 = vpop.f32.mrf.mxu0
  %v246 = vadd.f32 %v169, %v245
  %247 = vmatmul.bf16.gmra.mxu0 %v226
  %v248 = vpop.f32.mrf.mxu0
  %v249 = vadd.f32 %v174, %v248
  %v250 = vpop.f32.mrf.mxu0
  %v251 = vadd.f32 %v179, %v250
  %252 = vmatmul.bf16.gmra.mxu0 %v229
  %v253 = vpop.f32.mrf.mxu0
  %v254 = vadd.f32 %v184, %v253
  %v255 = vpop.f32.mrf.mxu0
  %v256 = vadd.f32 %v189, %v255
  %257 = vmatmul.bf16.gmra.mxu0 %v232
  %v258 = vpop.f32.mrf.mxu0
  %v259 = vadd.f32 %v194, %v258
  %v260 = vpop.f32.mrf.mxu0
  %v261 = vadd.f32 %v199, %v260
  %262 = vdwg.mxu0
  %263 = vmatpush.bf16.msra.mxu0 0
  %264 = vmatpush.bf16.msra.mxu0 0
  %265 = vmatpush.bf16.msra.mxu0 0
  %266 = vmatpush.bf16.msra.mxu0 0
  %267 = vmatpush.bf16.msra.mxu0 0
  %268 = vmatpush.bf16.msra.mxu0 0
  %269 = vmatpush.bf16.msra.mxu0 %v144
  %270 = vmatpush.bf16.msra.mxu0 %v142
  %271 = vmatmul.bf16.gmra.mxu0 %v223
  %v272 = vpop.f32.mrf.mxu0
  %v273 = vadd.f32 %v164, %v272
  %v274 = vpop.f32.mrf.mxu0
  %v275 = vadd.f32 %v169, %v274
  %276 = vmatmul.bf16.gmra.mxu0 %v226
  %v277 = vpop.f32.mrf.mxu0
  %v278 = vadd.f32 %v174, %v277
  %v279 = vpop.f32.mrf.mxu0
  %v280 = vadd.f32 %v179, %v279
  %281 = vmatmul.bf16.gmra.mxu0 %v229
  %v282 = vpop.f32.mrf.mxu0
  %v283 = vadd.f32 %v184, %v282
  %v284 = vpop.f32.mrf.mxu0
  %v285 = vadd.f32 %v189, %v284
  %286 = vmatmul.bf16.gmra.mxu0 %v232
  %v287 = vpop.f32.mrf.mxu0
  %v288 = vadd.f32 %v194, %v287
  %v289 = vpop.f32.mrf.mxu0
  %v290 = vadd.f32 %v199, %v289
  %291 = vdwg.mxu0
  %v292 = vmul.f32 %v244, %v113
  %v293 = vmul.f32 %v273, %v114
  %v294 = vmul.f32 %v246, %v113
  %v295 = vmul.f32 %v275, %v114
  %v296 = vmul.f32 %v249, %v113
  %v297 = vmul.f32 %v278, %v114
  %v298 = vmul.f32 %v251, %v113
  %v299 = vmul.f32 %v280, %v114
  %v300 = vmul.f32 %v254, %v113
  %v301 = vmul.f32 %v283, %v114
  %v302 = vmul.f32 %v256, %v113
  %v303 = vmul.f32 %v285, %v114
  %v304 = vmul.f32 %v259, %v113
  %v305 = vmul.f32 %v288, %v114
  %v306 = vmul.f32 %v261, %v113
  %v307 = vmul.f32 %v290, %v114
  %v308 = vadd.f32 %v292, %v293
  %309 = vadd.xlane.f32.xlu0 %v308
  %v310 = vpop.xlane.xlu0 %309
  %v311 = vadd.f32 %v294, %v295
  %312 = vadd.xlane.f32.xlu0 %v311
  %v313 = vpop.xlane.xlu0 %312
  %v314 = vadd.f32 %v296, %v297
  %315 = vadd.xlane.f32.xlu0 %v314
  %v316 = vpop.xlane.xlu0 %315
  %v317 = vadd.f32 %v298, %v299
  %318 = vadd.xlane.f32.xlu0 %v317
  %v319 = vpop.xlane.xlu0 %318
  %v320 = vadd.f32 %v300, %v301
  %321 = vadd.xlane.f32.xlu0 %v320
  %v322 = vpop.xlane.xlu0 %321
  %v323 = vadd.f32 %v302, %v303
  %324 = vadd.xlane.f32.xlu0 %v323
  %v325 = vpop.xlane.xlu0 %324
  %v326 = vadd.f32 %v304, %v305
  %327 = vadd.xlane.f32.xlu0 %v326
  %v328 = vpop.xlane.xlu0 %327
  %v329 = vadd.f32 %v306, %v307
  %330 = vadd.xlane.f32.xlu0 %v329
  %v331 = vpop.xlane.xlu0 %330
  %vm332 = vcmask 7168
  %333 = vst.msk [vmem:[%s7] sm:$0xff] %vm332, %v310
  %334 = vst.msk [vmem:[%s7 + $0x8] sm:$0xff] %vm332, %v313
  %335 = vst.msk [vmem:[%s7 + $0x10] sm:$0xff] %vm332, %v316
  %336 = vst.msk [vmem:[%s7 + $0x18] sm:$0xff] %vm332, %v319
  %337 = vst.msk [vmem:[%s7 + $0x20] sm:$0xff] %vm332, %v322
  %338 = vst.msk [vmem:[%s7 + $0x28] sm:$0xff] %vm332, %v325
  %339 = vst.msk [vmem:[%s7 + $0x30] sm:$0xff] %vm332, %v328
  %340 = vst.msk [vmem:[%s7 + $0x38] sm:$0xff] %vm332, %v331
  %v341 = vmul.f32 %v292, %v292
  %v342 = vmul.f32 %v293, %v293
  %v343 = vmul.f32 %v294, %v294
  %v344 = vmul.f32 %v295, %v295
  %v345 = vmul.f32 %v296, %v296
  %v346 = vmul.f32 %v297, %v297
  %v347 = vmul.f32 %v298, %v298
  %v348 = vmul.f32 %v299, %v299
  %v349 = vmul.f32 %v300, %v300
  %v350 = vmul.f32 %v301, %v301
  %v351 = vmul.f32 %v302, %v302
  %v352 = vmul.f32 %v303, %v303
  %v353 = vmul.f32 %v304, %v304
  %v354 = vmul.f32 %v305, %v305
  %v355 = vmul.f32 %v306, %v306
  %v356 = vmul.f32 %v307, %v307
  %v357 = vadd.f32 %v341, %v342
  %358 = vadd.xlane.f32.xlu0 %v357
  %v359 = vpop.xlane.xlu0 %358
  %v360 = vadd.f32 %v343, %v344
  %361 = vadd.xlane.f32.xlu0 %v360
  %v362 = vpop.xlane.xlu0 %361
  %v363 = vadd.f32 %v345, %v346
  %364 = vadd.xlane.f32.xlu0 %v363
  %v365 = vpop.xlane.xlu0 %364
  %v366 = vadd.f32 %v347, %v348
  %367 = vadd.xlane.f32.xlu0 %v366
  %v368 = vpop.xlane.xlu0 %367
  %v369 = vadd.f32 %v349, %v350
  %370 = vadd.xlane.f32.xlu0 %v369
  %v371 = vpop.xlane.xlu0 %370
  %v372 = vadd.f32 %v351, %v352
  %373 = vadd.xlane.f32.xlu0 %v372
  %v374 = vpop.xlane.xlu0 %373
  %v375 = vadd.f32 %v353, %v354
  %376 = vadd.xlane.f32.xlu0 %v375
  %v377 = vpop.xlane.xlu0 %376
  %v378 = vadd.f32 %v355, %v356
  %379 = vadd.xlane.f32.xlu0 %v378
  %v380 = vpop.xlane.xlu0 %379
  %381 = vst.msk [vmem:[%s8] sm:$0xff] %vm332, %v359
  %382 = vst.msk [vmem:[%s8 + $0x8] sm:$0xff] %vm332, %v362
  %383 = vst.msk [vmem:[%s8 + $0x10] sm:$0xff] %vm332, %v365
  %384 = vst.msk [vmem:[%s8 + $0x18] sm:$0xff] %vm332, %v368
  %385 = vst.msk [vmem:[%s8 + $0x20] sm:$0xff] %vm332, %v371
  %386 = vst.msk [vmem:[%s8 + $0x28] sm:$0xff] %vm332, %v374
  %387 = vst.msk [vmem:[%s8 + $0x30] sm:$0xff] %vm332, %v377
  %388 = vst.msk [vmem:[%s8 + $0x38] sm:$0xff] %vm332, %v380
  %v389 = vpack.c.bf16 %v293, %v292
  %v390 = vpack.c.bf16 %v295, %v294
  %v391 = vpack.c.bf16 %v297, %v296
  %v392 = vpack.c.bf16 %v299, %v298
  %v393 = vpack.c.bf16 %v301, %v300
  %v394 = vpack.c.bf16 %v303, %v302
  %v395 = vpack.c.bf16 %v305, %v304
  %v396 = vpack.c.bf16 %v307, %v306
  %397 = vst [vmem:[%s6] sm:$0xff] %v389
  %398 = vst [vmem:[%s6 + $0x8] sm:$0xff] %v390
  %399 = vst [vmem:[%s6 + $0x10] sm:$0xff] %v391
  %400 = vst [vmem:[%s6 + $0x18] sm:$0xff] %v392
  %401 = vst [vmem:[%s6 + $0x20] sm:$0xff] %v393
  %402 = vst [vmem:[%s6 + $0x28] sm:$0xff] %v394
  %403 = vst [vmem:[%s6 + $0x30] sm:$0xff] %v395
  %404 = vst [vmem:[%s6 + $0x38] sm:$0xff] %v396
  // Predicated region
  $region26: #{model_forward.23} parent=0 // pred_check
    _
  $region27: #{model_forward.23} parent=0 // pred_check_branch
    %406 = sbr.rel (0) target = $region29
  $region28: #{model_forward.23} parent=0 // pred_region
    _
  $region29: #{model_forward.23} parent=0 // pred_fallthru
    _
  // Predicated region
  $region30: #{model_forward.23} parent=0 // pred_check
    _
  $region31: #{model_forward.23} parent=0 // pred_check_branch
    %408 = sbr.rel (0) target = $region33
  $region32: #{model_forward.23} parent=0 // pred_region
    _
  $region33: #{model_forward.23} parent=0 // pred_fallthru
    _
  // Predicated region
  $region34: #{model_forward.23} parent=0 // pred_check
    _
  $region35: #{model_forward.23} parent=0 // pred_check_branch
    %410 = sbr.rel (0) target = $region37
  $region36: #{model_forward.23} parent=0 // pred_region
    _
  $region37: #{model_forward.23} parent=0 // pred_fallthru
    _
  // Predicated region
  $region38: #{model_forward.23} parent=0 // pred_check
    _
  $region39: #{model_forward.23} parent=0 // pred_check_branch
    %412 = sbr.rel (0) target = $region41
  $region40: #{model_forward.23} parent=0 // pred_region
    _
  $region41: #{model_forward.23} parent=0 // pred_fallthru
    _
  // Predicated region
  $region42: #{model_forward.23} parent=0 // pred_check
    _
  $region43: #{model_forward.23} parent=0 // pred_check_branch
    %414 = sbr.rel (0) target = $region45
  $region44: #{model_forward.23} parent=0 // pred_region
    _
  $region45: #{model_forward.23} parent=0 // pred_fallthru
    _
  // Predicated region
  $region46: #{model_forward.23} parent=0 // pred_check
    _
  $region47: #{model_forward.23} parent=0 // pred_check_branch
    %416 = sbr.rel (0) target = $region49
  $region48: #{model_forward.23} parent=0 // pred_region
    _
  $region49: #{model_forward.23} parent=0 // pred_fallthru
    _

// kernel: model_forward.20
$region0: #{model_forward.20}
  #allocation0 [shape = 'u32[]', space=smem, size = 0x4, offset = 0x4, fixed_abs, tag = 'smem constant byte address 0x4 - core index']
  #allocation1 [shape = 'u32[72,128]{1,0:T(1,128)}', space=vmem, size = 0x9000, scoped, tag = 'internal scratch']
  #allocation2 [shape = 'f32[288,256]{1,0:T(8,128)}', space=vmem, size = 0x48000, scoped, tag = 'scratch operand']
  %s0 = inlined_call_operand.vmem [shape: bf16[32,256], index: 0, kind: input, shape index: {}]
  %s1 = inlined_call_operand.vmem [shape: bf16[32,288], index: 1, kind: input, shape index: {}]
  %s2 = inlined_call_operand.vmem [shape: f32[32,1], index: 2, kind: input, shape index: {}]
  %s3 = inlined_call_operand.vmem [shape: f32[32,1], index: 3, kind: input, shape index: {}]
  %s4 = inlined_call_operand.vmem [shape: f32[32,1], index: 4, kind: input, shape index: {}]
  %s5 = inlined_call_operand.vmem [shape: bf16[32,256], index: 5, kind: input, shape index: {}]
  %s6 = inlined_call_operand.vmem [shape: f32[32,1], index: 6, kind: input, shape index: {}]
  %s7 = inlined_call_operand.vmem [shape: f32[32,1], index: 7, kind: input, shape index: {}]
  %s8 = inlined_call_operand.vmem [shape: f32[1,256], index: 8, kind: input, shape index: {}]
  %s9 = inlined_call_operand.vmem [shape: bf16[32,256], index: 9, kind: output, shape index: {0}]
  %s10 = inlined_call_operand.vmem [shape: f32[32,1], index: 10, kind: output, shape index: {1}]
  %s11 = inlined_call_operand.vmem [shape: f32[32,1], index: 11, kind: output, shape index: {2}]
  %12 = xla_tuple %s9, %s10, %s11
  %s13 = sld [smem:[#allocation0]]
  $region62: #{model_forward.20} parent=0
    _
  %s15 = ssub.s32 1, %s13
  %s16 = scalar_select 0, %s15, %s13
  // Predicated region
  $region2: #{model_forward.20} parent=0 // pred_check
    _
  $region3: #{model_forward.20} parent=0 // pred_check_branch
    %18 = sbr.rel (0) target = $region5
  $region4: #{model_forward.20} parent=0 // pred_region
    _
  $region5: #{model_forward.20} parent=0 // pred_fallthru
    _
  // Predicated region
  $region6: #{model_forward.20} parent=0 // pred_check
    _
  $region7: #{model_forward.20} parent=0 // pred_check_branch
    %20 = sbr.rel (0) target = $region9
  $region8: #{model_forward.20} parent=0 // pred_region
    _
  $region9: #{model_forward.20} parent=0 // pred_fallthru
    _
  // Predicated region
  $region10: #{model_forward.20} parent=0 // pred_check
    _
  $region11: #{model_forward.20} parent=0 // pred_check_branch
    %22 = sbr.rel (0) target = $region13
  $region12: #{model_forward.20} parent=0 // pred_region
    _
  $region13: #{model_forward.20} parent=0 // pred_fallthru
    _
  // Predicated region
  $region14: #{model_forward.20} parent=0 // pred_check
    _
  $region15: #{model_forward.20} parent=0 // pred_check_branch
    %24 = sbr.rel (0) target = $region17
  $region16: #{model_forward.20} parent=0 // pred_region
    _
  $region17: #{model_forward.20} parent=0 // pred_fallthru
    _
  // Predicated region
  $region18: #{model_forward.20} parent=0 // pred_check
    _
  $region19: #{model_forward.20} parent=0 // pred_check_branch
    %26 = sbr.rel (0) target = $region21
  $region20: #{model_forward.20} parent=0 // pred_region
    _
  $region21: #{model_forward.20} parent=0 // pred_fallthru
    _
  // Predicated region
  $region22: #{model_forward.20} parent=0 // pred_check
    _
  $region23: #{model_forward.20} parent=0 // pred_check_branch
    %28 = sbr.rel (0) target = $region25
  $region24: #{model_forward.20} parent=0 // pred_region
    _
  $region25: #{model_forward.20} parent=0 // pred_fallthru
    _
  // Predicated region
  $region26: #{model_forward.20} parent=0 // pred_check
    _
  $region27: #{model_forward.20} parent=0 // pred_check_branch
    %30 = sbr.rel (0) target = $region29
  $region28: #{model_forward.20} parent=0 // pred_region
    _
  $region29: #{model_forward.20} parent=0 // pred_fallthru
    _
  // Predicated region
  $region30: #{model_forward.20} parent=0 // pred_check
    _
  $region31: #{model_forward.20} parent=0 // pred_check_branch
    %32 = sbr.rel (0) target = $region33
  $region32: #{model_forward.20} parent=0 // pred_region
    _
  $region33: #{model_forward.20} parent=0 // pred_fallthru
    _
  // Predicated region
  $region34: #{model_forward.20} parent=0 // pred_check
    _
  $region35: #{model_forward.20} parent=0 // pred_check_branch
    %34 = sbr.rel (0) target = $region37
  $region36: #{model_forward.20} parent=0 // pred_region
    _
  $region37: #{model_forward.20} parent=0 // pred_fallthru
    _
  %v36 = vld [vmem:[%s8] sm:$0x3]
  %v37 = vld [vmem:[%s0] sm:$0xff]
  %v38 = vld [vmem:[%s0 + $0x8] sm:$0xff]
  %v39 = vld [vmem:[%s0 + $0x10] sm:$0xff]
  %v40 = vld [vmem:[%s0 + $0x18] sm:$0xff]
  %v41 = vunpack.c.l.bf16 %v37
  %v42 = vunpack.c.h.bf16 %v37
  %v43 = vunpack.c.l.bf16 %v38
  %v44 = vunpack.c.h.bf16 %v38
  %v45 = vunpack.c.l.bf16 %v39
  %v46 = vunpack.c.h.bf16 %v39
  %v47 = vunpack.c.l.bf16 %v40
  %v48 = vunpack.c.h.bf16 %v40
  %v49 = vld [vmem:[%s3] sm:$0xff]
  %v50 = vld [vmem:[%s3 + $0x8] sm:$0xff]
  %v51 = vld [vmem:[%s3 + $0x10] sm:$0xff]
  %v52 = vld [vmem:[%s3 + $0x18] sm:$0xff]
  %54 = vset.pattern.permute.xlu0 0
  %55 = vperm.xlu0 %54, %v49
  %v56 = vpop.permute.xlu0 %55
  %59 = vset.pattern.permute.xlu0 0
  %60 = vperm.xlu0 %59, %v50
  %v61 = vpop.permute.xlu0 %60
  %64 = vset.pattern.permute.xlu0 0
  %65 = vperm.xlu0 %64, %v51
  %v66 = vpop.permute.xlu0 %65
  %69 = vset.pattern.permute.xlu0 0
  %70 = vperm.xlu0 %69, %v52
  %v71 = vpop.permute.xlu0 %70
  %v73 = vmul.f32 %v41, %v56
  %v74 = vmul.f32 %v42, %v56
  %v75 = vmul.f32 %v43, %v61
  %v76 = vmul.f32 %v44, %v61
  %v77 = vmul.f32 %v45, %v66
  %v78 = vmul.f32 %v46, %v66
  %v79 = vmul.f32 %v47, %v71
  %v80 = vmul.f32 %v48, %v71
  %v81 = vld [vmem:[%s4] sm:$0xff]
  %v82 = vld [vmem:[%s4 + $0x8] sm:$0xff]
  %v83 = vld [vmem:[%s4 + $0x10] sm:$0xff]
  %v84 = vld [vmem:[%s4 + $0x18] sm:$0xff]
  %86 = vset.pattern.permute.xlu0 0
  %87 = vperm.xlu0 %86, %v81
  %v88 = vpop.permute.xlu0 %87
  %91 = vset.pattern.permute.xlu0 0
  %92 = vperm.xlu0 %91, %v82
  %v93 = vpop.permute.xlu0 %92
  %96 = vset.pattern.permute.xlu0 0
  %97 = vperm.xlu0 %96, %v83
  %v98 = vpop.permute.xlu0 %97
  %101 = vset.pattern.permute.xlu0 0
  %102 = vperm.xlu0 %101, %v84
  %v103 = vpop.permute.xlu0 %102
  %v105 = vadd.f32 %v73, %v88
  %v106 = vadd.f32 %v74, %v88
  %v107 = vadd.f32 %v75, %v93
  %v108 = vadd.f32 %v76, %v93
  %v109 = vadd.f32 %v77, %v98
  %v110 = vadd.f32 %v78, %v98
  %v111 = vadd.f32 %v79, %v103
  %v112 = vadd.f32 %v80, %v103
  %v113 = vmax.f32 %v105, 0.0
  %v114 = vmax.f32 %v106, 0.0
  %v115 = vmax.f32 %v107, 0.0
  %v116 = vmax.f32 %v108, 0.0
  %v117 = vmax.f32 %v109, 0.0
  %v118 = vmax.f32 %v110, 0.0
  %v119 = vmax.f32 %v111, 0.0
  %v120 = vmax.f32 %v112, 0.0
  %v122 = vperm.slane %v36, 0
  %v123 = vperm.slane %v36, 1
  %v126 = vmul.f32 %v113, %v122
  %v127 = vmul.f32 %v114, %v123
  %v128 = vmul.f32 %v115, %v122
  %v129 = vmul.f32 %v116, %v123
  %v130 = vmul.f32 %v117, %v122
  %v131 = vmul.f32 %v118, %v123
  %v132 = vmul.f32 %v119, %v122
  %v133 = vmul.f32 %v120, %v123
  %134 = vrot.lane.b32.xlu0 %v126, 7
  %v135 = vpop.permute.xlu0 %134
  %136 = vrot.lane.b32.xlu0 %v128, 7
  %v137 = vpop.permute.xlu0 %136
  %138 = vrot.lane.b32.xlu0 %v130, 7
  %v139 = vpop.permute.xlu0 %138
  %140 = vrot.lane.b32.xlu0 %v132, 7
  %v141 = vpop.permute.xlu0 %140
  %142 = vrot.lane.b32.xlu0 %v127, 7
  %v143 = vpop.permute.xlu0 %142
  %144 = vrot.lane.b32.xlu0 %v129, 7
  %v145 = vpop.permute.xlu0 %144
  %146 = vrot.lane.b32.xlu0 %v131, 7
  %v147 = vpop.permute.xlu0 %146
  %148 = vrot.lane.b32.xlu0 %v133, 7
  %v149 = vpop.permute.xlu0 %148
  %v150 = vlaneseq
  %v151 = vand.u32 %v150, 127
  %vm152 = vcmp.lt.s32.totalorder %v151, 7
  %v153 = vsel %vm152, %v135, %v143
  %v154 = vsel %vm152, %v137, %v145
  %v155 = vsel %vm152, %v139, %v147
  %v156 = vsel %vm152, %v141, %v149
  %v157 = vsel %vm152, %v143, %v135
  %v158 = vsel %vm152, %v145, %v137
  %v159 = vsel %vm152, %v147, %v139
  %v160 = vsel %vm152, %v149, %v141
  %161 = vst [vmem:[#allocation2] sm:$0xff] %v157
  %162 = vst [vmem:[#allocation2 + $0x8] sm:$0xff] %v153
  %163 = vst [vmem:[#allocation2 + $0x10] sm:$0xff] %v158
  %164 = vst [vmem:[#allocation2 + $0x18] sm:$0xff] %v154
  %165 = vst [vmem:[#allocation2 + $0x20] sm:$0xff] %v159
  %166 = vst [vmem:[#allocation2 + $0x28] sm:$0xff] %v155
  %167 = vst [vmem:[#allocation2 + $0x30] sm:$0xff] %v160
  %168 = vst [vmem:[#allocation2 + $0x38] sm:$0xff] %v156
  %169 = vrot.lane.b32.xlu0 %v126, 6
  %v170 = vpop.permute.xlu0 %169
  %171 = vrot.lane.b32.xlu0 %v128, 6
  %v172 = vpop.permute.xlu0 %171
  %173 = vrot.lane.b32.xlu0 %v130, 6
  %v174 = vpop.permute.xlu0 %173
  %175 = vrot.lane.b32.xlu0 %v132, 6
  %v176 = vpop.permute.xlu0 %175
  %177 = vrot.lane.b32.xlu0 %v127, 6
  %v178 = vpop.permute.xlu0 %177
  %179 = vrot.lane.b32.xlu0 %v129, 6
  %v180 = vpop.permute.xlu0 %179
  %181 = vrot.lane.b32.xlu0 %v131, 6
  %v182 = vpop.permute.xlu0 %181
  %183 = vrot.lane.b32.xlu0 %v133, 6
  %v184 = vpop.permute.xlu0 %183
  %vm185 = vcmp.lt.s32.totalorder %v151, 6
  %v186 = vsel %vm185, %v170, %v178
  %v187 = vsel %vm185, %v172, %v180
  %v188 = vsel %vm185, %v174, %v182
  %v189 = vsel %vm185, %v176, %v184
  %v190 = vsel %vm185, %v178, %v170
  %v191 = vsel %vm185, %v180, %v172
  %v192 = vsel %vm185, %v182, %v174
  %v193 = vsel %vm185, %v184, %v176
  %194 = vst [vmem:[#allocation2 + $0x40] sm:$0xff] %v190
  %195 = vst [vmem:[#allocation2 + $0x48] sm:$0xff] %v186
  %196 = vst [vmem:[#allocation2 + $0x50] sm:$0xff] %v191
  %197 = vst [vmem:[#allocation2 + $0x58] sm:$0xff] %v187
  %198 = vst [vmem:[#allocation2 + $0x60] sm:$0xff] %v192
  %199 = vst [vmem:[#allocation2 + $0x68] sm:$0xff] %v188
  %200 = vst [vmem:[#allocation2 + $0x70] sm:$0xff] %v193
  %201 = vst [vmem:[#allocation2 + $0x78] sm:$0xff] %v189
  %202 = vrot.lane.b32.xlu0 %v126, 5
  %v203 = vpop.permute.xlu0 %202
  %204 = vrot.lane.b32.xlu0 %v128, 5
  %v205 = vpop.permute.xlu0 %204
  %206 = vrot.lane.b32.xlu0 %v130, 5
  %v207 = vpop.permute.xlu0 %206
  %208 = vrot.lane.b32.xlu0 %v132, 5
  %v209 = vpop.permute.xlu0 %208
  %210 = vrot.lane.b32.xlu0 %v127, 5
  %v211 = vpop.permute.xlu0 %210
  %212 = vrot.lane.b32.xlu0 %v129, 5
  %v213 = vpop.permute.xlu0 %212
  %214 = vrot.lane.b32.xlu0 %v131, 5
  %v215 = vpop.permute.xlu0 %214
  %216 = vrot.lane.b32.xlu0 %v133, 5
  %v217 = vpop.permute.xlu0 %216
  %vm218 = vcmp.lt.s32.totalorder %v151, 5
  %v219 = vsel %vm218, %v203, %v211
  %v220 = vsel %vm218, %v205, %v213
  %v221 = vsel %vm218, %v207, %v215
  %v222 = vsel %vm218, %v209, %v217
  %v223 = vsel %vm218, %v211, %v203
  %v224 = vsel %vm218, %v213, %v205
  %v225 = vsel %vm218, %v215, %v207
  %v226 = vsel %vm218, %v217, %v209
  %227 = vst [vmem:[#allocation2 + $0x80] sm:$0xff] %v223
  %228 = vst [vmem:[#allocation2 + $0x88] sm:$0xff] %v219
  %229 = vst [vmem:[#allocation2 + $0x90] sm:$0xff] %v224
  %230 = vst [vmem:[#allocation2 + $0x98] sm:$0xff] %v220
  %231 = vst [vmem:[#allocation2 + $0xa0] sm:$0xff] %v225
  %232 = vst [vmem:[#allocation2 + $0xa8] sm:$0xff] %v221
  %233 = vst [vmem:[#allocation2 + $0xb0] sm:$0xff] %v226
  %234 = vst [vmem:[#allocation2 + $0xb8] sm:$0xff] %v222
  %235 = vrot.lane.b32.xlu0 %v126, 1
  %v236 = vpop.permute.xlu0 %235
  %237 = vrot.lane.b32.xlu0 %v128, 1
  %v238 = vpop.permute.xlu0 %237
  %239 = vrot.lane.b32.xlu0 %v130, 1
  %v240 = vpop.permute.xlu0 %239
  %241 = vrot.lane.b32.xlu0 %v132, 1
  %v242 = vpop.permute.xlu0 %241
  %243 = vrot.lane.b32.xlu0 %v127, 1
  %v244 = vpop.permute.xlu0 %243
  %245 = vrot.lane.b32.xlu0 %v129, 1
  %v246 = vpop.permute.xlu0 %245
  %247 = vrot.lane.b32.xlu0 %v131, 1
  %v248 = vpop.permute.xlu0 %247
  %249 = vrot.lane.b32.xlu0 %v133, 1
  %v250 = vpop.permute.xlu0 %249
  %vm251 = vcmp.lt.s32.totalorder %v151, 1
  %v252 = vsel %vm251, %v236, %v244
  %v253 = vsel %vm251, %v238, %v246
  %v254 = vsel %vm251, %v240, %v248
  %v255 = vsel %vm251, %v242, %v250
  %v256 = vsel %vm251, %v244, %v236
  %v257 = vsel %vm251, %v246, %v238
  %v258 = vsel %vm251, %v248, %v240
  %v259 = vsel %vm251, %v250, %v242
  %260 = vst [vmem:[#allocation2 + $0xc0] sm:$0xff] %v256
  %261 = vst [vmem:[#allocation2 + $0xc8] sm:$0xff] %v252
  %262 = vst [vmem:[#allocation2 + $0xd0] sm:$0xff] %v257
  %263 = vst [vmem:[#allocation2 + $0xd8] sm:$0xff] %v253
  %264 = vst [vmem:[#allocation2 + $0xe0] sm:$0xff] %v258
  %265 = vst [vmem:[#allocation2 + $0xe8] sm:$0xff] %v254
  %266 = vst [vmem:[#allocation2 + $0xf0] sm:$0xff] %v259
  %267 = vst [vmem:[#allocation2 + $0xf8] sm:$0xff] %v255
  %268 = vst [vmem:[#allocation2 + $0x100] sm:$0xff] %v126
  %269 = vst [vmem:[#allocation2 + $0x108] sm:$0xff] %v127
  %270 = vst [vmem:[#allocation2 + $0x110] sm:$0xff] %v128
  %271 = vst [vmem:[#allocation2 + $0x118] sm:$0xff] %v129
  %272 = vst [vmem:[#allocation2 + $0x120] sm:$0xff] %v130
  %273 = vst [vmem:[#allocation2 + $0x128] sm:$0xff] %v131
  %274 = vst [vmem:[#allocation2 + $0x130] sm:$0xff] %v132
  %275 = vst [vmem:[#allocation2 + $0x138] sm:$0xff] %v133
  %276 = vrot.lane.b32.xlu0 %v126, 127
  %v277 = vpop.permute.xlu0 %276
  %278 = vrot.lane.b32.xlu0 %v128, 127
  %v279 = vpop.permute.xlu0 %278
  %280 = vrot.lane.b32.xlu0 %v130, 127
  %v281 = vpop.permute.xlu0 %280
  %282 = vrot.lane.b32.xlu0 %v132, 127
  %v283 = vpop.permute.xlu0 %282
  %284 = vrot.lane.b32.xlu0 %v127, 127
  %v285 = vpop.permute.xlu0 %284
  %286 = vrot.lane.b32.xlu0 %v129, 127
  %v287 = vpop.permute.xlu0 %286
  %288 = vrot.lane.b32.xlu0 %v131, 127
  %v289 = vpop.permute.xlu0 %288
  %290 = vrot.lane.b32.xlu0 %v133, 127
  %v291 = vpop.permute.xlu0 %290
  %vm292 = vcmp.lt.s32.totalorder %v151, 127
  %v293 = vsel %vm292, %v277, %v285
  %v294 = vsel %vm292, %v279, %v287
  %v295 = vsel %vm292, %v281, %v289
  %v296 = vsel %vm292, %v283, %v291
  %v297 = vsel %vm292, %v285, %v277
  %v298 = vsel %vm292, %v287, %v279
  %v299 = vsel %vm292, %v289, %v281
  %v300 = vsel %vm292, %v291, %v283
  %301 = vst [vmem:[#allocation2 + $0x140] sm:$0xff] %v293
  %302 = vst [vmem:[#allocation2 + $0x148] sm:$0xff] %v297
  %303 = vst [vmem:[#allocation2 + $0x150] sm:$0xff] %v294
  %304 = vst [vmem:[#allocation2 + $0x158] sm:$0xff] %v298
  %305 = vst [vmem:[#allocation2 + $0x160] sm:$0xff] %v295
  %306 = vst [vmem:[#allocation2 + $0x168] sm:$0xff] %v299
  %307 = vst [vmem:[#allocation2 + $0x170] sm:$0xff] %v296
  %308 = vst [vmem:[#allocation2 + $0x178] sm:$0xff] %v300
  %309 = vrot.lane.b32.xlu0 %v126, 123
  %v310 = vpop.permute.xlu0 %309
  %311 = vrot.lane.b32.xlu0 %v128, 123
  %v312 = vpop.permute.xlu0 %311
  %313 = vrot.lane.b32.xlu0 %v130, 123
  %v314 = vpop.permute.xlu0 %313
  %315 = vrot.lane.b32.xlu0 %v132, 123
  %v316 = vpop.permute.xlu0 %315
  %317 = vrot.lane.b32.xlu0 %v127, 123
  %v318 = vpop.permute.xlu0 %317
  %319 = vrot.lane.b32.xlu0 %v129, 123
  %v320 = vpop.permute.xlu0 %319
  %321 = vrot.lane.b32.xlu0 %v131, 123
  %v322 = vpop.permute.xlu0 %321
  %323 = vrot.lane.b32.xlu0 %v133, 123
  %v324 = vpop.permute.xlu0 %323
  %vm325 = vcmp.lt.s32.totalorder %v151, 123
  %v326 = vsel %vm325, %v310, %v318
  %v327 = vsel %vm325, %v312, %v320
  %v328 = vsel %vm325, %v314, %v322
  %v329 = vsel %vm325, %v316, %v324
  %v330 = vsel %vm325, %v318, %v310
  %v331 = vsel %vm325, %v320, %v312
  %v332 = vsel %vm325, %v322, %v314
  %v333 = vsel %vm325, %v324, %v316
  %334 = vst [vmem:[#allocation2 + $0x180] sm:$0xff] %v326
  %335 = vst [vmem:[#allocation2 + $0x188] sm:$0xff] %v330
  %336 = vst [vmem:[#allocation2 + $0x190] sm:$0xff] %v327
  %337 = vst [vmem:[#allocation2 + $0x198] sm:$0xff] %v331
  %338 = vst [vmem:[#allocation2 + $0x1a0] sm:$0xff] %v328
  %339 = vst [vmem:[#allocation2 + $0x1a8] sm:$0xff] %v332
  %340 = vst [vmem:[#allocation2 + $0x1b0] sm:$0xff] %v329
  %341 = vst [vmem:[#allocation2 + $0x1b8] sm:$0xff] %v333
  %342 = vrot.lane.b32.xlu0 %v126, 122
  %v343 = vpop.permute.xlu0 %342
  %344 = vrot.lane.b32.xlu0 %v128, 122
  %v345 = vpop.permute.xlu0 %344
  %346 = vrot.lane.b32.xlu0 %v130, 122
  %v347 = vpop.permute.xlu0 %346
  %348 = vrot.lane.b32.xlu0 %v132, 122
  %v349 = vpop.permute.xlu0 %348
  %350 = vrot.lane.b32.xlu0 %v127, 122
  %v351 = vpop.permute.xlu0 %350
  %352 = vrot.lane.b32.xlu0 %v129, 122
  %v353 = vpop.permute.xlu0 %352
  %354 = vrot.lane.b32.xlu0 %v131, 122
  %v355 = vpop.permute.xlu0 %354
  %356 = vrot.lane.b32.xlu0 %v133, 122
  %v357 = vpop.permute.xlu0 %356
  %vm358 = vcmp.lt.s32.totalorder %v151, 122
  %v359 = vsel %vm358, %v343, %v351
  %v360 = vsel %vm358, %v345, %v353
  %v361 = vsel %vm358, %v347, %v355
  %v362 = vsel %vm358, %v349, %v357
  %v363 = vsel %vm358, %v351, %v343
  %v364 = vsel %vm358, %v353, %v345
  %v365 = vsel %vm358, %v355, %v347
  %v366 = vsel %vm358, %v357, %v349
  %367 = vst [vmem:[#allocation2 + $0x1c0] sm:$0xff] %v359
  %368 = vst [vmem:[#allocation2 + $0x1c8] sm:$0xff] %v363
  %369 = vst [vmem:[#allocation2 + $0x1d0] sm:$0xff] %v360
  %370 = vst [vmem:[#allocation2 + $0x1d8] sm:$0xff] %v364
  %371 = vst [vmem:[#allocation2 + $0x1e0] sm:$0xff] %v361
  %372 = vst [vmem:[#allocation2 + $0x1e8] sm:$0xff] %v365
  %373 = vst [vmem:[#allocation2 + $0x1f0] sm:$0xff] %v362
  %374 = vst [vmem:[#allocation2 + $0x1f8] sm:$0xff] %v366
  %375 = vrot.lane.b32.xlu0 %v126, 121
  %v376 = vpop.permute.xlu0 %375
  %377 = vrot.lane.b32.xlu0 %v128, 121
  %v378 = vpop.permute.xlu0 %377
  %379 = vrot.lane.b32.xlu0 %v130, 121
  %v380 = vpop.permute.xlu0 %379
  %381 = vrot.lane.b32.xlu0 %v132, 121
  %v382 = vpop.permute.xlu0 %381
  %383 = vrot.lane.b32.xlu0 %v127, 121
  %v384 = vpop.permute.xlu0 %383
  %385 = vrot.lane.b32.xlu0 %v129, 121
  %v386 = vpop.permute.xlu0 %385
  %387 = vrot.lane.b32.xlu0 %v131, 121
  %v388 = vpop.permute.xlu0 %387
  %389 = vrot.lane.b32.xlu0 %v133, 121
  %v390 = vpop.permute.xlu0 %389
  %vm391 = vcmp.lt.s32.totalorder %v151, 121
  %v392 = vsel %vm391, %v376, %v384
  %v393 = vsel %vm391, %v378, %v386
  %v394 = vsel %vm391, %v380, %v388
  %v395 = vsel %vm391, %v382, %v390
  %v396 = vsel %vm391, %v384, %v376
  %v397 = vsel %vm391, %v386, %v378
  %v398 = vsel %vm391, %v388, %v380
  %v399 = vsel %vm391, %v390, %v382
  %400 = vst [vmem:[#allocation2 + $0x200] sm:$0xff] %v392
  %401 = vst [vmem:[#allocation2 + $0x208] sm:$0xff] %v396
  %402 = vst [vmem:[#allocation2 + $0x210] sm:$0xff] %v393
  %403 = vst [vmem:[#allocation2 + $0x218] sm:$0xff] %v397
  %404 = vst [vmem:[#allocation2 + $0x220] sm:$0xff] %v394
  %405 = vst [vmem:[#allocation2 + $0x228] sm:$0xff] %v398
  %406 = vst [vmem:[#allocation2 + $0x230] sm:$0xff] %v395
  %407 = vst [vmem:[#allocation2 + $0x238] sm:$0xff] %v399
  %v408 = vld [vmem:[#allocation2] sm:$0xff]
  %v409 = vld [vmem:[#allocation2 + $0x8] sm:$0xff]
  %v410 = vld [vmem:[#allocation2 + $0x10] sm:$0xff]
  %v411 = vld [vmem:[#allocation2 + $0x18] sm:$0xff]
  %v412 = vld [vmem:[#allocation2 + $0x20] sm:$0xff]
  %v413 = vld [vmem:[#allocation2 + $0x28] sm:$0xff]
  %v414 = vld [vmem:[#allocation2 + $0x30] sm:$0xff]
  %v415 = vld [vmem:[#allocation2 + $0x38] sm:$0xff]
  %v416 = vld [vmem:[#allocation2 + $0x40] sm:$0xff]
  %v417 = vld [vmem:[#allocation2 + $0x48] sm:$0xff]
  %v418 = vld [vmem:[#allocation2 + $0x50] sm:$0xff]
  %v419 = vld [vmem:[#allocation2 + $0x58] sm:$0xff]
  %v420 = vld [vmem:[#allocation2 + $0x60] sm:$0xff]
  %v421 = vld [vmem:[#allocation2 + $0x68] sm:$0xff]
  %v422 = vld [vmem:[#allocation2 + $0x70] sm:$0xff]
  %v423 = vld [vmem:[#allocation2 + $0x78] sm:$0xff]
  %v424 = vld [vmem:[#allocation2 + $0x80] sm:$0xff]
  %v425 = vld [vmem:[#allocation2 + $0x88] sm:$0xff]
  %v426 = vld [vmem:[#allocation2 + $0x90] sm:$0xff]
  %v427 = vld [vmem:[#allocation2 + $0x98] sm:$0xff]
  %v428 = vld [vmem:[#allocation2 + $0xa0] sm:$0xff]
  %v429 = vld [vmem:[#allocation2 + $0xa8] sm:$0xff]
  %v430 = vld [vmem:[#allocation2 + $0xb0] sm:$0xff]
  %v431 = vld [vmem:[#allocation2 + $0xb8] sm:$0xff]
  %v432 = vld [vmem:[#allocation2 + $0xc0] sm:$0xff]
  %v433 = vld [vmem:[#allocation2 + $0xc8] sm:$0xff]
  %v434 = vld [vmem:[#allocation2 + $0xd0] sm:$0xff]
  %v435 = vld [vmem:[#allocation2 + $0xd8] sm:$0xff]
  %v436 = vld [vmem:[#allocation2 + $0xe0] sm:$0xff]
  %v437 = vld [vmem:[#allocation2 + $0xe8] sm:$0xff]
  %v438 = vld [vmem:[#allocation2 + $0xf0] sm:$0xff]
  %v439 = vld [vmem:[#allocation2 + $0xf8] sm:$0xff]
  %v440 = vld [vmem:[#allocation2 + $0x100] sm:$0xff]
  %v441 = vld [vmem:[#allocation2 + $0x108] sm:$0xff]
  %v442 = vld [vmem:[#allocation2 + $0x110] sm:$0xff]
  %v443 = vld [vmem:[#allocation2 + $0x118] sm:$0xff]
  %v444 = vld [vmem:[#allocation2 + $0x120] sm:$0xff]
  %v445 = vld [vmem:[#allocation2 + $0x128] sm:$0xff]
  %v446 = vld [vmem:[#allocation2 + $0x130] sm:$0xff]
  %v447 = vld [vmem:[#allocation2 + $0x138] sm:$0xff]
  %v448 = vld [vmem:[#allocation2 + $0x140] sm:$0xff]
  %v449 = vld [vmem:[#allocation2 + $0x148] sm:$0xff]
  %v450 = vld [vmem:[#allocation2 + $0x150] sm:$0xff]
  %v451 = vld [vmem:[#allocation2 + $0x158] sm:$0xff]
  %v452 = vld [vmem:[#allocation2 + $0x160] sm:$0xff]
  %v453 = vld [vmem:[#allocation2 + $0x168] sm:$0xff]
  %v454 = vld [vmem:[#allocation2 + $0x170] sm:$0xff]
  %v455 = vld [vmem:[#allocation2 + $0x178] sm:$0xff]
  %v456 = vld [vmem:[#allocation2 + $0x180] sm:$0xff]
  %v457 = vld [vmem:[#allocation2 + $0x188] sm:$0xff]
  %v458 = vld [vmem:[#allocation2 + $0x190] sm:$0xff]
  %v459 = vld [vmem:[#allocation2 + $0x198] sm:$0xff]
  %v460 = vld [vmem:[#allocation2 + $0x1a0] sm:$0xff]
  %v461 = vld [vmem:[#allocation2 + $0x1a8] sm:$0xff]
  %v462 = vld [vmem:[#allocation2 + $0x1b0] sm:$0xff]
  %v463 = vld [vmem:[#allocation2 + $0x1b8] sm:$0xff]
  %v464 = vld [vmem:[#allocation2 + $0x1c0] sm:$0xff]
  %v465 = vld [vmem:[#allocation2 + $0x1c8] sm:$0xff]
  %v466 = vld [vmem:[#allocation2 + $0x1d0] sm:$0xff]
  %v467 = vld [vmem:[#allocation2 + $0x1d8] sm:$0xff]
  %v468 = vld [vmem:[#allocation2 + $0x1e0] sm:$0xff]
  %v469 = vld [vmem:[#allocation2 + $0x1e8] sm:$0xff]
  %v470 = vld [vmem:[#allocation2 + $0x1f0] sm:$0xff]
  %v471 = vld [vmem:[#allocation2 + $0x1f8] sm:$0xff]
  %v472 = vld [vmem:[#allocation2 + $0x200] sm:$0xff]
  %v473 = vld [vmem:[#allocation2 + $0x208] sm:$0xff]
  %v474 = vld [vmem:[#allocation2 + $0x210] sm:$0xff]
  %v475 = vld [vmem:[#allocation2 + $0x218] sm:$0xff]
  %v476 = vld [vmem:[#allocation2 + $0x220] sm:$0xff]
  %v477 = vld [vmem:[#allocation2 + $0x228] sm:$0xff]
  %v478 = vld [vmem:[#allocation2 + $0x230] sm:$0xff]
  %v479 = vld [vmem:[#allocation2 + $0x238] sm:$0xff]
  %v480 = vpack.c.bf16 %v410, %v408
  %v481 = vpack.c.bf16 %v411, %v409
  %v482 = vpack.c.bf16 %v414, %v412
  %v483 = vpack.c.bf16 %v415, %v413
  %v484 = vpack.c.bf16 %v418, %v416
  %v485 = vpack.c.bf16 %v419, %v417
  %v486 = vpack.c.bf16 %v422, %v420
  %v487 = vpack.c.bf16 %v423, %v421
  %v488 = vpack.c.bf16 %v426, %v424
  %v489 = vpack.c.bf16 %v427, %v425
  %v490 = vpack.c.bf16 %v430, %v428
  %v491 = vpack.c.bf16 %v431, %v429
  %v492 = vpack.c.bf16 %v434, %v432
  %v493 = vpack.c.bf16 %v435, %v433
  %v494 = vpack.c.bf16 %v438, %v436
  %v495 = vpack.c.bf16 %v439, %v437
  %v496 = vpack.c.bf16 %v442, %v440
  %v497 = vpack.c.bf16 %v443, %v441
  %v498 = vpack.c.bf16 %v446, %v444
  %v499 = vpack.c.bf16 %v447, %v445
  %v500 = vpack.c.bf16 %v450, %v448
  %v501 = vpack.c.bf16 %v451, %v449
  %v502 = vpack.c.bf16 %v454, %v452
  %v503 = vpack.c.bf16 %v455, %v453
  %v504 = vpack.c.bf16 %v458, %v456
  %v505 = vpack.c.bf16 %v459, %v457
  %v506 = vpack.c.bf16 %v462, %v460
  %v507 = vpack.c.bf16 %v463, %v461
  %v508 = vpack.c.bf16 %v466, %v464
  %v509 = vpack.c.bf16 %v467, %v465
  %v510 = vpack.c.bf16 %v470, %v468
  %v511 = vpack.c.bf16 %v471, %v469
  %v512 = vpack.c.bf16 %v474, %v472
  %v513 = vpack.c.bf16 %v475, %v473
  %v514 = vpack.c.bf16 %v478, %v476
  %v515 = vpack.c.bf16 %v479, %v477
  %v516 = vld [vmem:[%s1] sm:$0xff]
  %v517 = vld [vmem:[%s1 + $0x8] sm:$0xf]
  %v518 = vld [vmem:[%s1 + $0xc] sm:$0xff]
  %v519 = vld [vmem:[%s1 + $0x14] sm:$0xf]
  %v520 = vld [vmem:[%s1 + $0x18] sm:$0xff]
  %v521 = vld [vmem:[%s1 + $0x20] sm:$0xf]
  %v522 = vld [vmem:[%s1 + $0x24] sm:$0xff]
  %v523 = vld [vmem:[%s1 + $0x2c] sm:$0xf]
  %v524 = vld [vmem:[%s2] sm:$0xff]
  %v525 = vld [vmem:[%s2 + $0x8] sm:$0xff]
  %v526 = vld [vmem:[%s2 + $0x10] sm:$0xff]
  %v527 = vld [vmem:[%s2 + $0x18] sm:$0xff]
  %529 = vset.pattern.permute.xlu0 0
  %530 = vperm.xlu0 %529, %v524
  %v531 = vpop.permute.xlu0 %530
  %534 = vset.pattern.permute.xlu0 0
  %535 = vperm.xlu0 %534, %v525
  %v536 = vpop.permute.xlu0 %535
  %539 = vset.pattern.permute.xlu0 0
  %540 = vperm.xlu0 %539, %v526
  %v541 = vpop.permute.xlu0 %540
  %544 = vset.pattern.permute.xlu0 0
  %545 = vperm.xlu0 %544, %v527
  %v546 = vpop.permute.xlu0 %545
  %v556 = vunpack.c.l.b16 %v516
  %v557 = vunpack.c.h.b16 %v516
  %v558 = vunpack.c.l.b16 %v517
  %v559 = vunpack.c.l.b16 %v518
  %v560 = vunpack.c.h.b16 %v518
  %v561 = vunpack.c.l.b16 %v519
  %v562 = vunpack.c.l.b16 %v520
  %v563 = vunpack.c.h.b16 %v520
  %v564 = vunpack.c.l.b16 %v521
  %v565 = vunpack.c.l.b16 %v522
  %v566 = vunpack.c.h.b16 %v522
  %v567 = vunpack.c.l.b16 %v523
  %v568 = vpack.c.b16 %v559, %v556
  %v569 = vpack.c.b16 %v560, %v557
  %v570 = vpack.c.b16 %v561, %v558
  %v571 = vpack.c.b16 %v565, %v562
  %v572 = vpack.c.b16 %v566, %v563
  %v573 = vpack.c.b16 %v567, %v564
  %vm578 = vcmask 261120
  %v580 = vsel %vm578, %v570, 0
  %v583 = vsel %vm578, %v573, 0
  %585 = vmatpush.bf16.msra.mxu0 %v494
  %586 = vmatpush.bf16.msra.mxu0 %v492
  %587 = vmatpush.bf16.msra.mxu0 %v490
  %588 = vmatpush.bf16.msra.mxu0 %v488
  %589 = vmatpush.bf16.msra.mxu0 %v486
  %590 = vmatpush.bf16.msra.mxu0 %v484
  %591 = vmatpush.bf16.msra.mxu0 %v482
  %592 = vmatpush.bf16.msra.mxu0 %v480
  %593 = vmatmul.bf16.gmra.mxu0 %v568
  %v594 = vpop.f32.mrf.mxu0
  %v595 = vadd.f32 %v531, %v594
  %v596 = vpop.f32.mrf.mxu0
  %v597 = vadd.f32 %v536, %v596
  %598 = vmatmul.bf16.gmra.mxu0 %v571
  %v599 = vpop.f32.mrf.mxu0
  %v600 = vadd.f32 %v541, %v599
  %v601 = vpop.f32.mrf.mxu0
  %v602 = vadd.f32 %v546, %v601
  %603 = vdwg.mxu0
  %604 = vmatpush.bf16.msra.mxu0 %v510
  %605 = vmatpush.bf16.msra.mxu0 %v508
  %606 = vmatpush.bf16.msra.mxu0 %v506
  %607 = vmatpush.bf16.msra.mxu0 %v504
  %608 = vmatpush.bf16.msra.mxu0 %v502
  %609 = vmatpush.bf16.msra.mxu0 %v500
  %610 = vmatpush.bf16.msra.mxu0 %v498
  %611 = vmatpush.bf16.msra.mxu0 %v496
  %612 = vmatmul.bf16.gmra.mxu0 %v569
  %v613 = vpop.f32.mrf.mxu0
  %v614 = vadd.f32 %v595, %v613
  %v615 = vpop.f32.mrf.mxu0
  %v616 = vadd.f32 %v597, %v615
  %617 = vmatmul.bf16.gmra.mxu0 %v572
  %v618 = vpop.f32.mrf.mxu0
  %v619 = vadd.f32 %v600, %v618
  %v620 = vpop.f32.mrf.mxu0
  %v621 = vadd.f32 %v602, %v620
  %622 = vdwg.mxu0
  %623 = vmatpush.bf16.msra.mxu0 0
  %624 = vmatpush.bf16.msra.mxu0 0
  %625 = vmatpush.bf16.msra.mxu0 0
  %626 = vmatpush.bf16.msra.mxu0 0
  %627 = vmatpush.bf16.msra.mxu0 0
  %628 = vmatpush.bf16.msra.mxu0 0
  %629 = vmatpush.bf16.msra.mxu0 %v514
  %630 = vmatpush.bf16.msra.mxu0 %v512
  %631 = vmatmul.bf16.gmra.mxu0 %v580
  %v632 = vpop.f32.mrf.mxu0
  %v633 = vadd.f32 %v614, %v632
  %v634 = vpop.f32.mrf.mxu0
  %v635 = vadd.f32 %v616, %v634
  %636 = vmatmul.bf16.gmra.mxu0 %v583
  %v637 = vpop.f32.mrf.mxu0
  %v638 = vadd.f32 %v619, %v637
  %v639 = vpop.f32.mrf.mxu0
  %v640 = vadd.f32 %v621, %v639
  %641 = vdwg.mxu0
  %642 = vmatpush.bf16.msra.mxu0 %v495
  %643 = vmatpush.bf16.msra.mxu0 %v493
  %644 = vmatpush.bf16.msra.mxu0 %v491
  %645 = vmatpush.bf16.msra.mxu0 %v489
  %646 = vmatpush.bf16.msra.mxu0 %v487
  %647 = vmatpush.bf16.msra.mxu0 %v485
  %648 = vmatpush.bf16.msra.mxu0 %v483
  %649 = vmatpush.bf16.msra.mxu0 %v481
  %650 = vmatmul.bf16.gmra.mxu0 %v568
  %v651 = vpop.f32.mrf.mxu0
  %v652 = vadd.f32 %v531, %v651
  %v653 = vpop.f32.mrf.mxu0
  %v654 = vadd.f32 %v536, %v653
  %655 = vmatmul.bf16.gmra.mxu0 %v571
  %v656 = vpop.f32.mrf.mxu0
  %v657 = vadd.f32 %v541, %v656
  %v658 = vpop.f32.mrf.mxu0
  %v659 = vadd.f32 %v546, %v658
  %660 = vdwg.mxu0
  %661 = vmatpush.bf16.msra.mxu0 %v511
  %662 = vmatpush.bf16.msra.mxu0 %v509
  %663 = vmatpush.bf16.msra.mxu0 %v507
  %664 = vmatpush.bf16.msra.mxu0 %v505
  %665 = vmatpush.bf16.msra.mxu0 %v503
  %666 = vmatpush.bf16.msra.mxu0 %v501
  %667 = vmatpush.bf16.msra.mxu0 %v499
  %668 = vmatpush.bf16.msra.mxu0 %v497
  %669 = vmatmul.bf16.gmra.mxu0 %v569
  %v670 = vpop.f32.mrf.mxu0
  %v671 = vadd.f32 %v652, %v670
  %v672 = vpop.f32.mrf.mxu0
  %v673 = vadd.f32 %v654, %v672
  %674 = vmatmul.bf16.gmra.mxu0 %v572
  %v675 = vpop.f32.mrf.mxu0
  %v676 = vadd.f32 %v657, %v675
  %v677 = vpop.f32.mrf.mxu0
  %v678 = vadd.f32 %v659, %v677
  %679 = vdwg.mxu0
  %680 = vmatpush.bf16.msra.mxu0 0
  %681 = vmatpush.bf16.msra.mxu0 0
  %682 = vmatpush.bf16.msra.mxu0 0
  %683 = vmatpush.bf16.msra.mxu0 0
  %684 = vmatpush.bf16.msra.mxu0 0
  %685 = vmatpush.bf16.msra.mxu0 0
  %686 = vmatpush.bf16.msra.mxu0 %v515
  %687 = vmatpush.bf16.msra.mxu0 %v513
  %688 = vmatmul.bf16.gmra.mxu0 %v580
  %v689 = vpop.f32.mrf.mxu0
  %v690 = vadd.f32 %v671, %v689
  %v691 = vpop.f32.mrf.mxu0
  %v692 = vadd.f32 %v673, %v691
  %693 = vmatmul.bf16.gmra.mxu0 %v583
  %v694 = vpop.f32.mrf.mxu0
  %v695 = vadd.f32 %v676, %v694
  %v696 = vpop.f32.mrf.mxu0
  %v697 = vadd.f32 %v678, %v696
  %698 = vdwg.mxu0
  %v699 = vld [vmem:[%s5] sm:$0xff]
  %v700 = vld [vmem:[%s5 + $0x8] sm:$0xff]
  %v701 = vld [vmem:[%s5 + $0x10] sm:$0xff]
  %v702 = vld [vmem:[%s5 + $0x18] sm:$0xff]
  %v703 = vunpack.c.l.bf16 %v699
  %v704 = vunpack.c.h.bf16 %v699
  %v705 = vunpack.c.l.bf16 %v700
  %v706 = vunpack.c.h.bf16 %v700
  %v707 = vunpack.c.l.bf16 %v701
  %v708 = vunpack.c.h.bf16 %v701
  %v709 = vunpack.c.l.bf16 %v702
  %v710 = vunpack.c.h.bf16 %v702
  %v711 = vld [vmem:[%s6] sm:$0xff]
  %v712 = vld [vmem:[%s6 + $0x8] sm:$0xff]
  %v713 = vld [vmem:[%s6 + $0x10] sm:$0xff]
  %v714 = vld [vmem:[%s6 + $0x18] sm:$0xff]
  %716 = vset.pattern.permute.xlu0 0
  %717 = vperm.xlu0 %716, %v711
  %v718 = vpop.permute.xlu0 %717
  %721 = vset.pattern.permute.xlu0 0
  %722 = vperm.xlu0 %721, %v712
  %v723 = vpop.permute.xlu0 %722
  %726 = vset.pattern.permute.xlu0 0
  %727 = vperm.xlu0 %726, %v713
  %v728 = vpop.permute.xlu0 %727
  %731 = vset.pattern.permute.xlu0 0
  %732 = vperm.xlu0 %731, %v714
  %v733 = vpop.permute.xlu0 %732
  %v735 = vmul.f32 %v703, %v718
  %v736 = vmul.f32 %v704, %v718
  %v737 = vmul.f32 %v705, %v723
  %v738 = vmul.f32 %v706, %v723
  %v739 = vmul.f32 %v707, %v728
  %v740 = vmul.f32 %v708, %v728
  %v741 = vmul.f32 %v709, %v733
  %v742 = vmul.f32 %v710, %v733
  %v743 = vld [vmem:[%s7] sm:$0xff]
  %v744 = vld [vmem:[%s7 + $0x8] sm:$0xff]
  %v745 = vld [vmem:[%s7 + $0x10] sm:$0xff]
  %v746 = vld [vmem:[%s7 + $0x18] sm:$0xff]
  %748 = vset.pattern.permute.xlu0 0
  %749 = vperm.xlu0 %748, %v743
  %v750 = vpop.permute.xlu0 %749
  %753 = vset.pattern.permute.xlu0 0
  %754 = vperm.xlu0 %753, %v744
  %v755 = vpop.permute.xlu0 %754
  %758 = vset.pattern.permute.xlu0 0
  %759 = vperm.xlu0 %758, %v745
  %v760 = vpop.permute.xlu0 %759
  %763 = vset.pattern.permute.xlu0 0
  %764 = vperm.xlu0 %763, %v746
  %v765 = vpop.permute.xlu0 %764
  %v767 = vadd.f32 %v735, %v750
  %v768 = vadd.f32 %v736, %v750
  %v769 = vadd.f32 %v737, %v755
  %v770 = vadd.f32 %v738, %v755
  %v771 = vadd.f32 %v739, %v760
  %v772 = vadd.f32 %v740, %v760
  %v773 = vadd.f32 %v741, %v765
  %v774 = vadd.f32 %v742, %v765
  %v775 = vmax.f32 %v767, 0.0
  %v776 = vmax.f32 %v768, 0.0
  %v777 = vmax.f32 %v769, 0.0
  %v778 = vmax.f32 %v770, 0.0
  %v779 = vmax.f32 %v771, 0.0
  %v780 = vmax.f32 %v772, 0.0
  %v781 = vmax.f32 %v773, 0.0
  %v782 = vmax.f32 %v774, 0.0
  %v783 = vadd.f32 %v633, %v775
  %v784 = vadd.f32 %v690, %v776
  %v785 = vadd.f32 %v635, %v777
  %v786 = vadd.f32 %v692, %v778
  %v787 = vadd.f32 %v638, %v779
  %v788 = vadd.f32 %v695, %v780
  %v789 = vadd.f32 %v640, %v781
  %v790 = vadd.f32 %v697, %v782
  %v791 = vmul.f32 %v783, %v122
  %v792 = vmul.f32 %v784, %v123
  %v793 = vmul.f32 %v785, %v122
  %v794 = vmul.f32 %v786, %v123
  %v795 = vmul.f32 %v787, %v122
  %v796 = vmul.f32 %v788, %v123
  %v797 = vmul.f32 %v789, %v122
  %v798 = vmul.f32 %v790, %v123
  %v799 = vadd.f32 %v791, %v792
  %800 = vadd.xlane.f32.xlu0 %v799
  %v801 = vpop.xlane.xlu0 %800
  %v802 = vadd.f32 %v793, %v794
  %803 = vadd.xlane.f32.xlu0 %v802
  %v804 = vpop.xlane.xlu0 %803
  %v805 = vadd.f32 %v795, %v796
  %806 = vadd.xlane.f32.xlu0 %v805
  %v807 = vpop.xlane.xlu0 %806
  %v808 = vadd.f32 %v797, %v798
  %809 = vadd.xlane.f32.xlu0 %v808
  %v810 = vpop.xlane.xlu0 %809
  %vm811 = vcmask 7168
  %812 = vst.msk [vmem:[%s10] sm:$0xff] %vm811, %v801
  %813 = vst.msk [vmem:[%s10 + $0x8] sm:$0xff] %vm811, %v804
  %814 = vst.msk [vmem:[%s10 + $0x10] sm:$0xff] %vm811, %v807
  %815 = vst.msk [vmem:[%s10 + $0x18] sm:$0xff] %vm811, %v810
  %v816 = vmul.f32 %v791, %v791
  %v817 = vmul.f32 %v792, %v792
  %v818 = vmul.f32 %v793, %v793
  %v819 = vmul.f32 %v794, %v794
  %v820 = vmul.f32 %v795, %v795
  %v821 = vmul.f32 %v796, %v796
  %v822 = vmul.f32 %v797, %v797
  %v823 = vmul.f32 %v798, %v798
  %v824 = vadd.f32 %v816, %v817
  %825 = vadd.xlane.f32.xlu0 %v824
  %v826 = vpop.xlane.xlu0 %825
  %v827 = vadd.f32 %v818, %v819
  %828 = vadd.xlane.f32.xlu0 %v827
  %v829 = vpop.xlane.xlu0 %828
  %v830 = vadd.f32 %v820, %v821
  %831 = vadd.xlane.f32.xlu0 %v830
  %v832 = vpop.xlane.xlu0 %831
  %v833 = vadd.f32 %v822, %v823
  %834 = vadd.xlane.f32.xlu0 %v833
  %v835 = vpop.xlane.xlu0 %834
  %836 = vst.msk [vmem:[%s11] sm:$0xff] %vm811, %v826
  %837 = vst.msk [vmem:[%s11 + $0x8] sm:$0xff] %vm811, %v829
  %838 = vst.msk [vmem:[%s11 + $0x10] sm:$0xff] %vm811, %v832
  %839 = vst.msk [vmem:[%s11 + $0x18] sm:$0xff] %vm811, %v835
  %v840 = vpack.c.bf16 %v792, %v791
  %v841 = vpack.c.bf16 %v794, %v793
  %v842 = vpack.c.bf16 %v796, %v795
  %v843 = vpack.c.bf16 %v798, %v797
  %844 = vst [vmem:[%s9] sm:$0xff] %v840
  %845 = vst [vmem:[%s9 + $0x8] sm:$0xff] %v841
  %846 = vst [vmem:[%s9 + $0x10] sm:$0xff] %v842
  %847 = vst [vmem:[%s9 + $0x18] sm:$0xff] %v843
  // Predicated region
  $region38: #{model_forward.20} parent=0 // pred_check
    _
  $region39: #{model_forward.20} parent=0 // pred_check_branch
    %849 = sbr.rel (0) target = $region41
  $region40: #{model_forward.20} parent=0 // pred_region
    _
  $region41: #{model_forward.20} parent=0 // pred_fallthru
    _
  // Predicated region
  $region42: #{model_forward.20} parent=0 // pred_check
    _
  $region43: #{model_forward.20} parent=0 // pred_check_branch
    %851 = sbr.rel (0) target = $region45
  $region44: #{model_forward.20} parent=0 // pred_region
    _
  $region45: #{model_forward.20} parent=0 // pred_fallthru
    _
  // Predicated region
  $region46: #{model_forward.20} parent=0 // pred_check
    _
  $region47: #{model_forward.20} parent=0 // pred_check_branch
    %853 = sbr.rel (0) target = $region49
  $region48: #{model_forward.20} parent=0 // pred_region
    _
  $region49: #{model_forward.20} parent=0 // pred_fallthru
    _
  // Predicated region
  $region50: #{model_forward.20} parent=0 // pred_check
    _
  $region51: #{model_forward.20} parent=0 // pred_check_branch
    %855 = sbr.rel (0) target = $region53
  $region52: #{model_forward.20} parent=0 // pred_region
    _
  $region53: #{model_forward.20} parent=0 // pred_fallthru
    _
  // Predicated region
  $region54: #{model_forward.20} parent=0 // pred_check
    _
  $region55: #{model_forward.20} parent=0 // pred_check_branch
    %857 = sbr.rel (0) target = $region57
  $region56: #{model_forward.20} parent=0 // pred_region
    _
  $region57: #{model_forward.20} parent=0 // pred_fallthru
    _
  // Predicated region
  $region58: #{model_forward.20} parent=0 // pred_check
    _
  $region59: #{model_forward.20} parent=0 // pred_check_branch
    %859 = sbr.rel (0) target = $region61
  $region60: #{model_forward.20} parent=0 // pred_region
    _
  $region61: #{model_forward.20} parent=0 // pred_fallthru
    _

// kernel: model_forward.25
$region0: #{model_forward.25}
  #allocation0 [shape = 'u32[]', space=smem, size = 0x4, offset = 0x4, fixed_abs, tag = 'smem constant byte address 0x4 - core index']
  #allocation1 [shape = 'u32[72,128]{1,0:T(1,128)}', space=vmem, size = 0x9000, scoped, tag = 'internal scratch']
  #allocation2 [shape = 'f32[16,256]{1,0:T(8,128)}', space=vmem, size = 0x4000, scoped, tag = 'scratch operand']
  %s0 = inlined_call_operand.vmem [shape: bf16[16,256], index: 0, kind: input, shape index: {}]
  %s1 = inlined_call_operand.vmem [shape: bf16[32,16], index: 1, kind: input, shape index: {}]
  %s2 = inlined_call_operand.vmem [shape: f32[32,1], index: 2, kind: input, shape index: {}]
  %s3 = inlined_call_operand.vmem [shape: f32[16,1], index: 3, kind: input, shape index: {}]
  %s4 = inlined_call_operand.vmem [shape: f32[16,1], index: 4, kind: input, shape index: {}]
  %s5 = inlined_call_operand.vmem [shape: f32[1,256], index: 5, kind: input, shape index: {}]
  %s6 = inlined_call_operand.vmem [shape: bf16[32,256], index: 6, kind: output, shape index: {0}]
  %s7 = inlined_call_operand.vmem [shape: f32[32,1], index: 7, kind: output, shape index: {1}]
  %s8 = inlined_call_operand.vmem [shape: f32[32,1], index: 8, kind: output, shape index: {2}]
  %9 = xla_tuple %s6, %s7, %s8
  %s10 = sld [smem:[#allocation0]]
  $region50: #{model_forward.25} parent=0
    _
  %s12 = ssub.s32 1, %s10
  %s13 = scalar_select 0, %s12, %s10
  // Predicated region
  $region2: #{model_forward.25} parent=0 // pred_check
    _
  $region3: #{model_forward.25} parent=0 // pred_check_branch
    %15 = sbr.rel (0) target = $region5
  $region4: #{model_forward.25} parent=0 // pred_region
    _
  $region5: #{model_forward.25} parent=0 // pred_fallthru
    _
  // Predicated region
  $region6: #{model_forward.25} parent=0 // pred_check
    _
  $region7: #{model_forward.25} parent=0 // pred_check_branch
    %17 = sbr.rel (0) target = $region9
  $region8: #{model_forward.25} parent=0 // pred_region
    _
  $region9: #{model_forward.25} parent=0 // pred_fallthru
    _
  // Predicated region
  $region10: #{model_forward.25} parent=0 // pred_check
    _
  $region11: #{model_forward.25} parent=0 // pred_check_branch
    %19 = sbr.rel (0) target = $region13
  $region12: #{model_forward.25} parent=0 // pred_region
    _
  $region13: #{model_forward.25} parent=0 // pred_fallthru
    _
  // Predicated region
  $region14: #{model_forward.25} parent=0 // pred_check
    _
  $region15: #{model_forward.25} parent=0 // pred_check_branch
    %21 = sbr.rel (0) target = $region17
  $region16: #{model_forward.25} parent=0 // pred_region
    _
  $region17: #{model_forward.25} parent=0 // pred_fallthru
    _
  // Predicated region
  $region18: #{model_forward.25} parent=0 // pred_check
    _
  $region19: #{model_forward.25} parent=0 // pred_check_branch
    %23 = sbr.rel (0) target = $region21
  $region20: #{model_forward.25} parent=0 // pred_region
    _
  $region21: #{model_forward.25} parent=0 // pred_fallthru
    _
  // Predicated region
  $region22: #{model_forward.25} parent=0 // pred_check
    _
  $region23: #{model_forward.25} parent=0 // pred_check_branch
    %25 = sbr.rel (0) target = $region25
  $region24: #{model_forward.25} parent=0 // pred_region
    _
  $region25: #{model_forward.25} parent=0 // pred_fallthru
    _
  %v27 = vld [vmem:[%s5] sm:$0x3]
  %v28 = vld [vmem:[%s0] sm:$0xff]
  %v29 = vld [vmem:[%s0 + $0x8] sm:$0xff]
  %v30 = vunpack.c.l.bf16 %v28
  %v31 = vunpack.c.h.bf16 %v28
  %v32 = vunpack.c.l.bf16 %v29
  %v33 = vunpack.c.h.bf16 %v29
  %v34 = vld [vmem:[%s3] sm:$0xff]
  %v35 = vld [vmem:[%s3 + $0x8] sm:$0xff]
  %37 = vset.pattern.permute.xlu0 0
  %38 = vperm.xlu0 %37, %v34
  %v39 = vpop.permute.xlu0 %38
  %42 = vset.pattern.permute.xlu0 0
  %43 = vperm.xlu0 %42, %v35
  %v44 = vpop.permute.xlu0 %43
  %v46 = vmul.f32 %v30, %v39
  %v47 = vmul.f32 %v31, %v39
  %v48 = vmul.f32 %v32, %v44
  %v49 = vmul.f32 %v33, %v44
  %v50 = vld [vmem:[%s4] sm:$0xff]
  %v51 = vld [vmem:[%s4 + $0x8] sm:$0xff]
  %53 = vset.pattern.permute.xlu0 0
  %54 = vperm.xlu0 %53, %v50
  %v55 = vpop.permute.xlu0 %54
  %58 = vset.pattern.permute.xlu0 0
  %59 = vperm.xlu0 %58, %v51
  %v60 = vpop.permute.xlu0 %59
  %v62 = vadd.f32 %v46, %v55
  %v63 = vadd.f32 %v47, %v55
  %v64 = vadd.f32 %v48, %v60
  %v65 = vadd.f32 %v49, %v60
  %v66 = vmax.f32 %v62, 0.0
  %v67 = vmax.f32 %v63, 0.0
  %v68 = vmax.f32 %v64, 0.0
  %v69 = vmax.f32 %v65, 0.0
  %v71 = vperm.slane %v27, 0
  %v72 = vperm.slane %v27, 1
  %v75 = vmul.f32 %v66, %v71
  %v76 = vmul.f32 %v67, %v72
  %v77 = vmul.f32 %v68, %v71
  %v78 = vmul.f32 %v69, %v72
  %79 = vst [vmem:[#allocation2] sm:$0xff] %v75
  %80 = vst [vmem:[#allocation2 + $0x8] sm:$0xff] %v76
  %81 = vst [vmem:[#allocation2 + $0x10] sm:$0xff] %v77
  %82 = vst [vmem:[#allocation2 + $0x18] sm:$0xff] %v78
  %v83 = vld [vmem:[#allocation2] sm:$0xff]
  %v84 = vld [vmem:[#allocation2 + $0x8] sm:$0xff]
  %v85 = vld [vmem:[#allocation2 + $0x10] sm:$0xff]
  %v86 = vld [vmem:[#allocation2 + $0x18] sm:$0xff]
  %v87 = vpack.c.bf16 %v85, %v83
  %v88 = vpack.c.bf16 %v86, %v84
  %v89 = vld [vmem:[%s1] sm:$0xf]
  %v90 = vld [vmem:[%s1 + $0x4] sm:$0xf]
  %v91 = vld [vmem:[%s1 + $0x8] sm:$0xf]
  %v92 = vld [vmem:[%s1 + $0xc] sm:$0xf]
  %v93 = vld [vmem:[%s2] sm:$0xff]
  %v94 = vld [vmem:[%s2 + $0x8] sm:$0xff]
  %v95 = vld [vmem:[%s2 + $0x10] sm:$0xff]
  %v96 = vld [vmem:[%s2 + $0x18] sm:$0xff]
  %98 = vset.pattern.permute.xlu0 0
  %99 = vperm.xlu0 %98, %v93
  %v100 = vpop.permute.xlu0 %99
  %103 = vset.pattern.permute.xlu0 0
  %104 = vperm.xlu0 %103, %v94
  %v105 = vpop.permute.xlu0 %104
  %108 = vset.pattern.permute.xlu0 0
  %109 = vperm.xlu0 %108, %v95
  %v110 = vpop.permute.xlu0 %109
  %113 = vset.pattern.permute.xlu0 0
  %114 = vperm.xlu0 %113, %v96
  %v115 = vpop.permute.xlu0 %114
  %v121 = vunpack.c.l.b16 %v89
  %v122 = vunpack.c.l.b16 %v90
  %v123 = vunpack.c.l.b16 %v91
  %v124 = vunpack.c.l.b16 %v92
  %v125 = vpack.c.b16 %v122, %v121
  %v126 = vpack.c.b16 %v124, %v123
  %vm127 = vcmask 130048
  %v129 = vsel %vm127, %v125, 0
  %v132 = vsel %vm127, %v126, 0
  %134 = vmatpush.bf16.msra.mxu0 0
  %135 = vmatpush.bf16.msra.mxu0 0
  %136 = vmatpush.bf16.msra.mxu0 0
  %137 = vmatpush.bf16.msra.mxu0 0
  %138 = vmatpush.bf16.msra.mxu0 0
  %139 = vmatpush.bf16.msra.mxu0 0
  %140 = vmatpush.bf16.msra.mxu0 0
  %141 = vmatpush.bf16.msra.mxu0 %v87
  %142 = vmatmul.bf16.gmra.mxu0 %v129
  %v143 = vpop.f32.mrf.mxu0
  %v144 = vadd.f32 %v100, %v143
  %v145 = vpop.f32.mrf.mxu0
  %v146 = vadd.f32 %v105, %v145
  %147 = vmatmul.bf16.gmra.mxu0 %v132
  %v148 = vpop.f32.mrf.mxu0
  %v149 = vadd.f32 %v110, %v148
  %v150 = vpop.f32.mrf.mxu0
  %v151 = vadd.f32 %v115, %v150
  %152 = vdwg.mxu0
  %153 = vmatpush.bf16.msra.mxu0 0
  %154 = vmatpush.bf16.msra.mxu0 0
  %155 = vmatpush.bf16.msra.mxu0 0
  %156 = vmatpush.bf16.msra.mxu0 0
  %157 = vmatpush.bf16.msra.mxu0 0
  %158 = vmatpush.bf16.msra.mxu0 0
  %159 = vmatpush.bf16.msra.mxu0 0
  %160 = vmatpush.bf16.msra.mxu0 %v88
  %161 = vmatmul.bf16.gmra.mxu0 %v129
  %v162 = vpop.f32.mrf.mxu0
  %v163 = vadd.f32 %v100, %v162
  %v164 = vpop.f32.mrf.mxu0
  %v165 = vadd.f32 %v105, %v164
  %166 = vmatmul.bf16.gmra.mxu0 %v132
  %v167 = vpop.f32.mrf.mxu0
  %v168 = vadd.f32 %v110, %v167
  %v169 = vpop.f32.mrf.mxu0
  %v170 = vadd.f32 %v115, %v169
  %171 = vdwg.mxu0
  %v172 = vmul.f32 %v144, %v71
  %v173 = vmul.f32 %v163, %v72
  %v174 = vmul.f32 %v146, %v71
  %v175 = vmul.f32 %v165, %v72
  %v176 = vmul.f32 %v149, %v71
  %v177 = vmul.f32 %v168, %v72
  %v178 = vmul.f32 %v151, %v71
  %v179 = vmul.f32 %v170, %v72
  %v180 = vadd.f32 %v172, %v173
  %181 = vadd.xlane.f32.xlu0 %v180
  %v182 = vpop.xlane.xlu0 %181
  %v183 = vadd.f32 %v174, %v175
  %184 = vadd.xlane.f32.xlu0 %v183
  %v185 = vpop.xlane.xlu0 %184
  %v186 = vadd.f32 %v176, %v177
  %187 = vadd.xlane.f32.xlu0 %v186
  %v188 = vpop.xlane.xlu0 %187
  %v189 = vadd.f32 %v178, %v179
  %190 = vadd.xlane.f32.xlu0 %v189
  %v191 = vpop.xlane.xlu0 %190
  %vm192 = vcmask 7168
  %193 = vst.msk [vmem:[%s7] sm:$0xff] %vm192, %v182
  %194 = vst.msk [vmem:[%s7 + $0x8] sm:$0xff] %vm192, %v185
  %195 = vst.msk [vmem:[%s7 + $0x10] sm:$0xff] %vm192, %v188
  %196 = vst.msk [vmem:[%s7 + $0x18] sm:$0xff] %vm192, %v191
  %v197 = vmul.f32 %v172, %v172
  %v198 = vmul.f32 %v173, %v173
  %v199 = vmul.f32 %v174, %v174
  %v200 = vmul.f32 %v175, %v175
  %v201 = vmul.f32 %v176, %v176
  %v202 = vmul.f32 %v177, %v177
  %v203 = vmul.f32 %v178, %v178
  %v204 = vmul.f32 %v179, %v179
  %v205 = vadd.f32 %v197, %v198
  %206 = vadd.xlane.f32.xlu0 %v205
  %v207 = vpop.xlane.xlu0 %206
  %v208 = vadd.f32 %v199, %v200
  %209 = vadd.xlane.f32.xlu0 %v208
  %v210 = vpop.xlane.xlu0 %209
  %v211 = vadd.f32 %v201, %v202
  %212 = vadd.xlane.f32.xlu0 %v211
  %v213 = vpop.xlane.xlu0 %212
  %v214 = vadd.f32 %v203, %v204
  %215 = vadd.xlane.f32.xlu0 %v214
  %v216 = vpop.xlane.xlu0 %215
  %217 = vst.msk [vmem:[%s8] sm:$0xff] %vm192, %v207
  %218 = vst.msk [vmem:[%s8 + $0x8] sm:$0xff] %vm192, %v210
  %219 = vst.msk [vmem:[%s8 + $0x10] sm:$0xff] %vm192, %v213
  %220 = vst.msk [vmem:[%s8 + $0x18] sm:$0xff] %vm192, %v216
  %v221 = vpack.c.bf16 %v173, %v172
  %v222 = vpack.c.bf16 %v175, %v174
  %v223 = vpack.c.bf16 %v177, %v176
  %v224 = vpack.c.bf16 %v179, %v178
  %225 = vst [vmem:[%s6] sm:$0xff] %v221
  %226 = vst [vmem:[%s6 + $0x8] sm:$0xff] %v222
  %227 = vst [vmem:[%s6 + $0x10] sm:$0xff] %v223
  %228 = vst [vmem:[%s6 + $0x18] sm:$0xff] %v224
  // Predicated region
  $region26: #{model_forward.25} parent=0 // pred_check
    _
  $region27: #{model_forward.25} parent=0 // pred_check_branch
    %230 = sbr.rel (0) target = $region29
  $region28: #{model_forward.25} parent=0 // pred_region
    _
  $region29: #{model_forward.25} parent=0 // pred_fallthru
    _
  // Predicated region
  $region30: #{model_forward.25} parent=0 // pred_check
    _
  $region31: #{model_forward.25} parent=0 // pred_check_branch
    %232 = sbr.rel (0) target = $region33
  $region32: #{model_forward.25} parent=0 // pred_region
    _
  $region33: #{model_forward.25} parent=0 // pred_fallthru
    _
  // Predicated region
  $region34: #{model_forward.25} parent=0 // pred_check
    _
  $region35: #{model_forward.25} parent=0 // pred_check_branch
    %234 = sbr.rel (0) target = $region37
  $region36: #{model_forward.25} parent=0 // pred_region
    _
  $region37: #{model_forward.25} parent=0 // pred_fallthru
    _
  // Predicated region
  $region38: #{model_forward.25} parent=0 // pred_check
    _
  $region39: #{model_forward.25} parent=0 // pred_check_branch
    %236 = sbr.rel (0) target = $region41
  $region40: #{model_forward.25} parent=0 // pred_region
    _
  $region41: #{model_forward.25} parent=0 // pred_fallthru
    _
  // Predicated region
  $region42: #{model_forward.25} parent=0 // pred_check
    _
  $region43: #{model_forward.25} parent=0 // pred_check_branch
    %238 = sbr.rel (0) target = $region45
  $region44: #{model_forward.25} parent=0 // pred_region
    _
  $region45: #{model_forward.25} parent=0 // pred_fallthru
    _
  // Predicated region
  $region46: #{model_forward.25} parent=0 // pred_check
    _
  $region47: #{model_forward.25} parent=0 // pred_check_branch
    %240 = sbr.rel (0) target = $region49
  $region48: #{model_forward.25} parent=0 // pred_region
    _
  $region49: #{model_forward.25} parent=0 // pred_fallthru
    _

// kernel: model_forward.24
$region0: #{model_forward.24}
  #allocation0 [shape = 'u32[]', space=smem, size = 0x4, offset = 0x4, fixed_abs, tag = 'smem constant byte address 0x4 - core index']
  #allocation1 [shape = 'u32[72,128]{1,0:T(1,128)}', space=vmem, size = 0x9000, scoped, tag = 'internal scratch']
  #allocation2 [shape = 'f32[288,256]{1,0:T(8,128)}', space=vmem, size = 0x48000, scoped, tag = 'scratch operand']
  %s0 = inlined_call_operand.vmem [shape: bf16[16,256], index: 0, kind: input, shape index: {}]
  %s1 = inlined_call_operand.vmem [shape: bf16[16,256], index: 1, kind: input, shape index: {}]
  %s2 = inlined_call_operand.vmem [shape: bf16[16,288], index: 2, kind: input, shape index: {}]
  %s3 = inlined_call_operand.vmem [shape: f32[16,1], index: 3, kind: input, shape index: {}]
  %s4 = inlined_call_operand.vmem [shape: f32[16,1], index: 4, kind: input, shape index: {}]
  %s5 = inlined_call_operand.vmem [shape: f32[16,1], index: 5, kind: input, shape index: {}]
  %s6 = inlined_call_operand.vmem [shape: f32[16,1], index: 6, kind: input, shape index: {}]
  %s7 = inlined_call_operand.vmem [shape: f32[16,1], index: 7, kind: input, shape index: {}]
  %s8 = inlined_call_operand.vmem [shape: f32[1,256], index: 8, kind: input, shape index: {}]
  %s9 = inlined_call_operand.vmem [shape: bf16[16,256], index: 9, kind: output, shape index: {0}]
  %s10 = inlined_call_operand.vmem [shape: f32[16,1], index: 10, kind: output, shape index: {1}]
  %s11 = inlined_call_operand.vmem [shape: f32[16,1], index: 11, kind: output, shape index: {2}]
  %12 = xla_tuple %s9, %s10, %s11
  %s13 = sld [smem:[#allocation0]]
  $region62: #{model_forward.24} parent=0
    _
  %s15 = ssub.s32 1, %s13
  %s16 = scalar_select 0, %s15, %s13
  // Predicated region
  $region2: #{model_forward.24} parent=0 // pred_check
    _
  $region3: #{model_forward.24} parent=0 // pred_check_branch
    %18 = sbr.rel (0) target = $region5
  $region4: #{model_forward.24} parent=0 // pred_region
    _
  $region5: #{model_forward.24} parent=0 // pred_fallthru
    _
  // Predicated region
  $region6: #{model_forward.24} parent=0 // pred_check
    _
  $region7: #{model_forward.24} parent=0 // pred_check_branch
    %20 = sbr.rel (0) target = $region9
  $region8: #{model_forward.24} parent=0 // pred_region
    _
  $region9: #{model_forward.24} parent=0 // pred_fallthru
    _
  // Predicated region
  $region10: #{model_forward.24} parent=0 // pred_check
    _
  $region11: #{model_forward.24} parent=0 // pred_check_branch
    %22 = sbr.rel (0) target = $region13
  $region12: #{model_forward.24} parent=0 // pred_region
    _
  $region13: #{model_forward.24} parent=0 // pred_fallthru
    _
  // Predicated region
  $region14: #{model_forward.24} parent=0 // pred_check
    _
  $region15: #{model_forward.24} parent=0 // pred_check_branch
    %24 = sbr.rel (0) target = $region17
  $region16: #{model_forward.24} parent=0 // pred_region
    _
  $region17: #{model_forward.24} parent=0 // pred_fallthru
    _
  // Predicated region
  $region18: #{model_forward.24} parent=0 // pred_check
    _
  $region19: #{model_forward.24} parent=0 // pred_check_branch
    %26 = sbr.rel (0) target = $region21
  $region20: #{model_forward.24} parent=0 // pred_region
    _
  $region21: #{model_forward.24} parent=0 // pred_fallthru
    _
  // Predicated region
  $region22: #{model_forward.24} parent=0 // pred_check
    _
  $region23: #{model_forward.24} parent=0 // pred_check_branch
    %28 = sbr.rel (0) target = $region25
  $region24: #{model_forward.24} parent=0 // pred_region
    _
  $region25: #{model_forward.24} parent=0 // pred_fallthru
    _
  // Predicated region
  $region26: #{model_forward.24} parent=0 // pred_check
    _
  $region27: #{model_forward.24} parent=0 // pred_check_branch
    %30 = sbr.rel (0) target = $region29
  $region28: #{model_forward.24} parent=0 // pred_region
    _
  $region29: #{model_forward.24} parent=0 // pred_fallthru
    _
  // Predicated region
  $region30: #{model_forward.24} parent=0 // pred_check
    _
  $region31: #{model_forward.24} parent=0 // pred_check_branch
    %32 = sbr.rel (0) target = $region33
  $region32: #{model_forward.24} parent=0 // pred_region
    _
  $region33: #{model_forward.24} parent=0 // pred_fallthru
    _
  // Predicated region
  $region34: #{model_forward.24} parent=0 // pred_check
    _
  $region35: #{model_forward.24} parent=0 // pred_check_branch
    %34 = sbr.rel (0) target = $region37
  $region36: #{model_forward.24} parent=0 // pred_region
    _
  $region37: #{model_forward.24} parent=0 // pred_fallthru
    _
  %v36 = vld [vmem:[%s8] sm:$0x3]
  %v37 = vld [vmem:[%s0] sm:$0xff]
  %v38 = vld [vmem:[%s0 + $0x8] sm:$0xff]
  %v39 = vunpack.c.l.bf16 %v37
  %v40 = vunpack.c.h.bf16 %v37
  %v41 = vunpack.c.l.bf16 %v38
  %v42 = vunpack.c.h.bf16 %v38
  %v43 = vld [vmem:[%s4] sm:$0xff]
  %v44 = vld [vmem:[%s4 + $0x8] sm:$0xff]
  %46 = vset.pattern.permute.xlu0 0
  %47 = vperm.xlu0 %46, %v43
  %v48 = vpop.permute.xlu0 %47
  %51 = vset.pattern.permute.xlu0 0
  %52 = vperm.xlu0 %51, %v44
  %v53 = vpop.permute.xlu0 %52
  %v55 = vmul.f32 %v39, %v48
  %v56 = vmul.f32 %v40, %v48
  %v57 = vmul.f32 %v41, %v53
  %v58 = vmul.f32 %v42, %v53
  %v59 = vld [vmem:[%s5] sm:$0xff]
  %v60 = vld [vmem:[%s5 + $0x8] sm:$0xff]
  %62 = vset.pattern.permute.xlu0 0
  %63 = vperm.xlu0 %62, %v59
  %v64 = vpop.permute.xlu0 %63
  %67 = vset.pattern.permute.xlu0 0
  %68 = vperm.xlu0 %67, %v60
  %v69 = vpop.permute.xlu0 %68
  %v71 = vadd.f32 %v55, %v64
  %v72 = vadd.f32 %v56, %v64
  %v73 = vadd.f32 %v57, %v69
  %v74 = vadd.f32 %v58, %v69
  %v75 = vmax.f32 %v71, 0.0
  %v76 = vmax.f32 %v72, 0.0
  %v77 = vmax.f32 %v73, 0.0
  %v78 = vmax.f32 %v74, 0.0
  %v80 = vperm.slane %v36, 0
  %v81 = vperm.slane %v36, 1
  %v84 = vmul.f32 %v75, %v80
  %v85 = vmul.f32 %v76, %v81
  %v86 = vmul.f32 %v77, %v80
  %v87 = vmul.f32 %v78, %v81
  %88 = vrot.lane.b32.xlu0 %v84, 11
  %v89 = vpop.permute.xlu0 %88
  %90 = vrot.lane.b32.xlu0 %v86, 11
  %v91 = vpop.permute.xlu0 %90
  %92 = vrot.lane.b32.xlu0 %v85, 11
  %v93 = vpop.permute.xlu0 %92
  %94 = vrot.lane.b32.xlu0 %v87, 11
  %v95 = vpop.permute.xlu0 %94
  %v96 = vlaneseq
  %v97 = vand.u32 %v96, 127
  %vm98 = vcmp.lt.s32.totalorder %v97, 11
  %v99 = vsel %vm98, %v89, %v93
  %v100 = vsel %vm98, %v91, %v95
  %v101 = vsel %vm98, %v93, %v89
  %v102 = vsel %vm98, %v95, %v91
  %103 = vst [vmem:[#allocation2] sm:$0xff] %v101
  %104 = vst [vmem:[#allocation2 + $0x8] sm:$0xff] %v99
  %105 = vst [vmem:[#allocation2 + $0x10] sm:$0xff] %v102
  %106 = vst [vmem:[#allocation2 + $0x18] sm:$0xff] %v100
  %107 = vrot.lane.b32.xlu0 %v84, 10
  %v108 = vpop.permute.xlu0 %107
  %109 = vrot.lane.b32.xlu0 %v86, 10
  %v110 = vpop.permute.xlu0 %109
  %111 = vrot.lane.b32.xlu0 %v85, 10
  %v112 = vpop.permute.xlu0 %111
  %113 = vrot.lane.b32.xlu0 %v87, 10
  %v114 = vpop.permute.xlu0 %113
  %vm115 = vcmp.lt.s32.totalorder %v97, 10
  %v116 = vsel %vm115, %v108, %v112
  %v117 = vsel %vm115, %v110, %v114
  %v118 = vsel %vm115, %v112, %v108
  %v119 = vsel %vm115, %v114, %v110
  %120 = vst [vmem:[#allocation2 + $0x40] sm:$0xff] %v118
  %121 = vst [vmem:[#allocation2 + $0x48] sm:$0xff] %v116
  %122 = vst [vmem:[#allocation2 + $0x50] sm:$0xff] %v119
  %123 = vst [vmem:[#allocation2 + $0x58] sm:$0xff] %v117
  %124 = vrot.lane.b32.xlu0 %v84, 9
  %v125 = vpop.permute.xlu0 %124
  %126 = vrot.lane.b32.xlu0 %v86, 9
  %v127 = vpop.permute.xlu0 %126
  %128 = vrot.lane.b32.xlu0 %v85, 9
  %v129 = vpop.permute.xlu0 %128
  %130 = vrot.lane.b32.xlu0 %v87, 9
  %v131 = vpop.permute.xlu0 %130
  %vm132 = vcmp.lt.s32.totalorder %v97, 9
  %v133 = vsel %vm132, %v125, %v129
  %v134 = vsel %vm132, %v127, %v131
  %v135 = vsel %vm132, %v129, %v125
  %v136 = vsel %vm132, %v131, %v127
  %137 = vst [vmem:[#allocation2 + $0x80] sm:$0xff] %v135
  %138 = vst [vmem:[#allocation2 + $0x88] sm:$0xff] %v133
  %139 = vst [vmem:[#allocation2 + $0x90] sm:$0xff] %v136
  %140 = vst [vmem:[#allocation2 + $0x98] sm:$0xff] %v134
  %141 = vrot.lane.b32.xlu0 %v84, 1
  %v142 = vpop.permute.xlu0 %141
  %143 = vrot.lane.b32.xlu0 %v86, 1
  %v144 = vpop.permute.xlu0 %143
  %145 = vrot.lane.b32.xlu0 %v85, 1
  %v146 = vpop.permute.xlu0 %145
  %147 = vrot.lane.b32.xlu0 %v87, 1
  %v148 = vpop.permute.xlu0 %147
  %vm149 = vcmp.lt.s32.totalorder %v97, 1
  %v150 = vsel %vm149, %v142, %v146
  %v151 = vsel %vm149, %v144, %v148
  %v152 = vsel %vm149, %v146, %v142
  %v153 = vsel %vm149, %v148, %v144
  %154 = vst [vmem:[#allocation2 + $0xc0] sm:$0xff] %v152
  %155 = vst [vmem:[#allocation2 + $0xc8] sm:$0xff] %v150
  %156 = vst [vmem:[#allocation2 + $0xd0] sm:$0xff] %v153
  %157 = vst [vmem:[#allocation2 + $0xd8] sm:$0xff] %v151
  %158 = vst [vmem:[#allocation2 + $0x100] sm:$0xff] %v84
  %159 = vst [vmem:[#allocation2 + $0x108] sm:$0xff] %v85
  %160 = vst [vmem:[#allocation2 + $0x110] sm:$0xff] %v86
  %161 = vst [vmem:[#allocation2 + $0x118] sm:$0xff] %v87
  %162 = vrot.lane.b32.xlu0 %v84, 127
  %v163 = vpop.permute.xlu0 %162
  %164 = vrot.lane.b32.xlu0 %v86, 127
  %v165 = vpop.permute.xlu0 %164
  %166 = vrot.lane.b32.xlu0 %v85, 127
  %v167 = vpop.permute.xlu0 %166
  %168 = vrot.lane.b32.xlu0 %v87, 127
  %v169 = vpop.permute.xlu0 %168
  %vm170 = vcmp.lt.s32.totalorder %v97, 127
  %v171 = vsel %vm170, %v163, %v167
  %v172 = vsel %vm170, %v165, %v169
  %v173 = vsel %vm170, %v167, %v163
  %v174 = vsel %vm170, %v169, %v165
  %175 = vst [vmem:[#allocation2 + $0x140] sm:$0xff] %v171
  %176 = vst [vmem:[#allocation2 + $0x148] sm:$0xff] %v173
  %177 = vst [vmem:[#allocation2 + $0x150] sm:$0xff] %v172
  %178 = vst [vmem:[#allocation2 + $0x158] sm:$0xff] %v174
  %179 = vrot.lane.b32.xlu0 %v84, 119
  %v180 = vpop.permute.xlu0 %179
  %181 = vrot.lane.b32.xlu0 %v86, 119
  %v182 = vpop.permute.xlu0 %181
  %183 = vrot.lane.b32.xlu0 %v85, 119
  %v184 = vpop.permute.xlu0 %183
  %185 = vrot.lane.b32.xlu0 %v87, 119
  %v186 = vpop.permute.xlu0 %185
  %vm187 = vcmp.lt.s32.totalorder %v97, 119
  %v188 = vsel %vm187, %v180, %v184
  %v189 = vsel %vm187, %v182, %v186
  %v190 = vsel %vm187, %v184, %v180
  %v191 = vsel %vm187, %v186, %v182
  %192 = vst [vmem:[#allocation2 + $0x180] sm:$0xff] %v188
  %193 = vst [vmem:[#allocation2 + $0x188] sm:$0xff] %v190
  %194 = vst [vmem:[#allocation2 + $0x190] sm:$0xff] %v189
  %195 = vst [vmem:[#allocation2 + $0x198] sm:$0xff] %v191
  %196 = vrot.lane.b32.xlu0 %v84, 118
  %v197 = vpop.permute.xlu0 %196
  %198 = vrot.lane.b32.xlu0 %v86, 118
  %v199 = vpop.permute.xlu0 %198
  %200 = vrot.lane.b32.xlu0 %v85, 118
  %v201 = vpop.permute.xlu0 %200
  %202 = vrot.lane.b32.xlu0 %v87, 118
  %v203 = vpop.permute.xlu0 %202
  %vm204 = vcmp.lt.s32.totalorder %v97, 118
  %v205 = vsel %vm204, %v197, %v201
  %v206 = vsel %vm204, %v199, %v203
  %v207 = vsel %vm204, %v201, %v197
  %v208 = vsel %vm204, %v203, %v199
  %209 = vst [vmem:[#allocation2 + $0x1c0] sm:$0xff] %v205
  %210 = vst [vmem:[#allocation2 + $0x1c8] sm:$0xff] %v207
  %211 = vst [vmem:[#allocation2 + $0x1d0] sm:$0xff] %v206
  %212 = vst [vmem:[#allocation2 + $0x1d8] sm:$0xff] %v208
  %213 = vrot.lane.b32.xlu0 %v84, 117
  %v214 = vpop.permute.xlu0 %213
  %215 = vrot.lane.b32.xlu0 %v86, 117
  %v216 = vpop.permute.xlu0 %215
  %217 = vrot.lane.b32.xlu0 %v85, 117
  %v218 = vpop.permute.xlu0 %217
  %219 = vrot.lane.b32.xlu0 %v87, 117
  %v220 = vpop.permute.xlu0 %219
  %vm221 = vcmp.lt.s32.totalorder %v97, 117
  %v222 = vsel %vm221, %v214, %v218
  %v223 = vsel %vm221, %v216, %v220
  %v224 = vsel %vm221, %v218, %v214
  %v225 = vsel %vm221, %v220, %v216
  %226 = vst [vmem:[#allocation2 + $0x200] sm:$0xff] %v222
  %227 = vst [vmem:[#allocation2 + $0x208] sm:$0xff] %v224
  %228 = vst [vmem:[#allocation2 + $0x210] sm:$0xff] %v223
  %229 = vst [vmem:[#allocation2 + $0x218] sm:$0xff] %v225
  %v230 = vld [vmem:[%s1] sm:$0xff]
  %v231 = vld [vmem:[%s1 + $0x8] sm:$0xff]
  %v232 = vunpack.c.l.bf16 %v230
  %v233 = vunpack.c.h.bf16 %v230
  %v234 = vunpack.c.l.bf16 %v231
  %v235 = vunpack.c.h.bf16 %v231
  %v236 = vld [vmem:[%s6] sm:$0xff]
  %v237 = vld [vmem:[%s6 + $0x8] sm:$0xff]
  %239 = vset.pattern.permute.xlu0 0
  %240 = vperm.xlu0 %239, %v236
  %v241 = vpop.permute.xlu0 %240
  %244 = vset.pattern.permute.xlu0 0
  %245 = vperm.xlu0 %244, %v237
  %v246 = vpop.permute.xlu0 %245
  %v248 = vmul.f32 %v232, %v241
  %v249 = vmul.f32 %v233, %v241
  %v250 = vmul.f32 %v234, %v246
  %v251 = vmul.f32 %v235, %v246
  %v252 = vld [vmem:[%s7] sm:$0xff]
  %v253 = vld [vmem:[%s7 + $0x8] sm:$0xff]
  %255 = vset.pattern.permute.xlu0 0
  %256 = vperm.xlu0 %255, %v252
  %v257 = vpop.permute.xlu0 %256
  %260 = vset.pattern.permute.xlu0 0
  %261 = vperm.xlu0 %260, %v253
  %v262 = vpop.permute.xlu0 %261
  %v264 = vadd.f32 %v248, %v257
  %v265 = vadd.f32 %v249, %v257
  %v266 = vadd.f32 %v250, %v262
  %v267 = vadd.f32 %v251, %v262
  %v268 = vmax.f32 %v264, 0.0
  %v269 = vmax.f32 %v265, 0.0
  %v270 = vmax.f32 %v266, 0.0
  %v271 = vmax.f32 %v267, 0.0
  %v272 = vmul.f32 %v268, %v80
  %v273 = vmul.f32 %v269, %v81
  %v274 = vmul.f32 %v270, %v80
  %v275 = vmul.f32 %v271, %v81
  %276 = vrot.lane.b32.xlu0 %v272, 11
  %v277 = vpop.permute.xlu0 %276
  %278 = vrot.lane.b32.xlu0 %v274, 11
  %v279 = vpop.permute.xlu0 %278
  %280 = vrot.lane.b32.xlu0 %v273, 11
  %v281 = vpop.permute.xlu0 %280
  %282 = vrot.lane.b32.xlu0 %v275, 11
  %v283 = vpop.permute.xlu0 %282
  %v284 = vsel %vm98, %v277, %v281
  %v285 = vsel %vm98, %v279, %v283
  %v286 = vsel %vm98, %v281, %v277
  %v287 = vsel %vm98, %v283, %v279
  %288 = vst [vmem:[#allocation2 + $0x20] sm:$0xff] %v286
  %289 = vst [vmem:[#allocation2 + $0x28] sm:$0xff] %v284
  %290 = vst [vmem:[#allocation2 + $0x30] sm:$0xff] %v287
  %291 = vst [vmem:[#allocation2 + $0x38] sm:$0xff] %v285
  %292 = vrot.lane.b32.xlu0 %v272, 10
  %v293 = vpop.permute.xlu0 %292
  %294 = vrot.lane.b32.xlu0 %v274, 10
  %v295 = vpop.permute.xlu0 %294
  %296 = vrot.lane.b32.xlu0 %v273, 10
  %v297 = vpop.permute.xlu0 %296
  %298 = vrot.lane.b32.xlu0 %v275, 10
  %v299 = vpop.permute.xlu0 %298
  %v300 = vsel %vm115, %v293, %v297
  %v301 = vsel %vm115, %v295, %v299
  %v302 = vsel %vm115, %v297, %v293
  %v303 = vsel %vm115, %v299, %v295
  %304 = vst [vmem:[#allocation2 + $0x60] sm:$0xff] %v302
  %305 = vst [vmem:[#allocation2 + $0x68] sm:$0xff] %v300
  %306 = vst [vmem:[#allocation2 + $0x70] sm:$0xff] %v303
  %307 = vst [vmem:[#allocation2 + $0x78] sm:$0xff] %v301
  %308 = vrot.lane.b32.xlu0 %v272, 9
  %v309 = vpop.permute.xlu0 %308
  %310 = vrot.lane.b32.xlu0 %v274, 9
  %v311 = vpop.permute.xlu0 %310
  %312 = vrot.lane.b32.xlu0 %v273, 9
  %v313 = vpop.permute.xlu0 %312
  %314 = vrot.lane.b32.xlu0 %v275, 9
  %v315 = vpop.permute.xlu0 %314
  %v316 = vsel %vm132, %v309, %v313
  %v317 = vsel %vm132, %v311, %v315
  %v318 = vsel %vm132, %v313, %v309
  %v319 = vsel %vm132, %v315, %v311
  %320 = vst [vmem:[#allocation2 + $0xa0] sm:$0xff] %v318
  %321 = vst [vmem:[#allocation2 + $0xa8] sm:$0xff] %v316
  %322 = vst [vmem:[#allocation2 + $0xb0] sm:$0xff] %v319
  %323 = vst [vmem:[#allocation2 + $0xb8] sm:$0xff] %v317
  %324 = vrot.lane.b32.xlu0 %v272, 1
  %v325 = vpop.permute.xlu0 %324
  %326 = vrot.lane.b32.xlu0 %v274, 1
  %v327 = vpop.permute.xlu0 %326
  %328 = vrot.lane.b32.xlu0 %v273, 1
  %v329 = vpop.permute.xlu0 %328
  %330 = vrot.lane.b32.xlu0 %v275, 1
  %v331 = vpop.permute.xlu0 %330
  %v332 = vsel %vm149, %v325, %v329
  %v333 = vsel %vm149, %v327, %v331
  %v334 = vsel %vm149, %v329, %v325
  %v335 = vsel %vm149, %v331, %v327
  %336 = vst [vmem:[#allocation2 + $0xe0] sm:$0xff] %v334
  %337 = vst [vmem:[#allocation2 + $0xe8] sm:$0xff] %v332
  %338 = vst [vmem:[#allocation2 + $0xf0] sm:$0xff] %v335
  %339 = vst [vmem:[#allocation2 + $0xf8] sm:$0xff] %v333
  %340 = vst [vmem:[#allocation2 + $0x120] sm:$0xff] %v272
  %341 = vst [vmem:[#allocation2 + $0x128] sm:$0xff] %v273
  %342 = vst [vmem:[#allocation2 + $0x130] sm:$0xff] %v274
  %343 = vst [vmem:[#allocation2 + $0x138] sm:$0xff] %v275
  %344 = vrot.lane.b32.xlu0 %v272, 127
  %v345 = vpop.permute.xlu0 %344
  %346 = vrot.lane.b32.xlu0 %v274, 127
  %v347 = vpop.permute.xlu0 %346
  %348 = vrot.lane.b32.xlu0 %v273, 127
  %v349 = vpop.permute.xlu0 %348
  %350 = vrot.lane.b32.xlu0 %v275, 127
  %v351 = vpop.permute.xlu0 %350
  %v352 = vsel %vm170, %v345, %v349
  %v353 = vsel %vm170, %v347, %v351
  %v354 = vsel %vm170, %v349, %v345
  %v355 = vsel %vm170, %v351, %v347
  %356 = vst [vmem:[#allocation2 + $0x160] sm:$0xff] %v352
  %357 = vst [vmem:[#allocation2 + $0x168] sm:$0xff] %v354
  %358 = vst [vmem:[#allocation2 + $0x170] sm:$0xff] %v353
  %359 = vst [vmem:[#allocation2 + $0x178] sm:$0xff] %v355
  %360 = vrot.lane.b32.xlu0 %v272, 119
  %v361 = vpop.permute.xlu0 %360
  %362 = vrot.lane.b32.xlu0 %v274, 119
  %v363 = vpop.permute.xlu0 %362
  %364 = vrot.lane.b32.xlu0 %v273, 119
  %v365 = vpop.permute.xlu0 %364
  %366 = vrot.lane.b32.xlu0 %v275, 119
  %v367 = vpop.permute.xlu0 %366
  %v368 = vsel %vm187, %v361, %v365
  %v369 = vsel %vm187, %v363, %v367
  %v370 = vsel %vm187, %v365, %v361
  %v371 = vsel %vm187, %v367, %v363
  %372 = vst [vmem:[#allocation2 + $0x1a0] sm:$0xff] %v368
  %373 = vst [vmem:[#allocation2 + $0x1a8] sm:$0xff] %v370
  %374 = vst [vmem:[#allocation2 + $0x1b0] sm:$0xff] %v369
  %375 = vst [vmem:[#allocation2 + $0x1b8] sm:$0xff] %v371
  %376 = vrot.lane.b32.xlu0 %v272, 118
  %v377 = vpop.permute.xlu0 %376
  %378 = vrot.lane.b32.xlu0 %v274, 118
  %v379 = vpop.permute.xlu0 %378
  %380 = vrot.lane.b32.xlu0 %v273, 118
  %v381 = vpop.permute.xlu0 %380
  %382 = vrot.lane.b32.xlu0 %v275, 118
  %v383 = vpop.permute.xlu0 %382
  %v384 = vsel %vm204, %v377, %v381
  %v385 = vsel %vm204, %v379, %v383
  %v386 = vsel %vm204, %v381, %v377
  %v387 = vsel %vm204, %v383, %v379
  %388 = vst [vmem:[#allocation2 + $0x1e0] sm:$0xff] %v384
  %389 = vst [vmem:[#allocation2 + $0x1e8] sm:$0xff] %v386
  %390 = vst [vmem:[#allocation2 + $0x1f0] sm:$0xff] %v385
  %391 = vst [vmem:[#allocation2 + $0x1f8] sm:$0xff] %v387
  %392 = vrot.lane.b32.xlu0 %v272, 117
  %v393 = vpop.permute.xlu0 %392
  %394 = vrot.lane.b32.xlu0 %v274, 117
  %v395 = vpop.permute.xlu0 %394
  %396 = vrot.lane.b32.xlu0 %v273, 117
  %v397 = vpop.permute.xlu0 %396
  %398 = vrot.lane.b32.xlu0 %v275, 117
  %v399 = vpop.permute.xlu0 %398
  %v400 = vsel %vm221, %v393, %v397
  %v401 = vsel %vm221, %v395, %v399
  %v402 = vsel %vm221, %v397, %v393
  %v403 = vsel %vm221, %v399, %v395
  %404 = vst [vmem:[#allocation2 + $0x220] sm:$0xff] %v400
  %405 = vst [vmem:[#allocation2 + $0x228] sm:$0xff] %v402
  %406 = vst [vmem:[#allocation2 + $0x230] sm:$0xff] %v401
  %407 = vst [vmem:[#allocation2 + $0x238] sm:$0xff] %v403
  %v408 = vld [vmem:[#allocation2] sm:$0xff]
  %v409 = vld [vmem:[#allocation2 + $0x8] sm:$0xff]
  %v410 = vld [vmem:[#allocation2 + $0x10] sm:$0xff]
  %v411 = vld [vmem:[#allocation2 + $0x18] sm:$0xff]
  %v412 = vld [vmem:[#allocation2 + $0x20] sm:$0xff]
  %v413 = vld [vmem:[#allocation2 + $0x28] sm:$0xff]
  %v414 = vld [vmem:[#allocation2 + $0x30] sm:$0xff]
  %v415 = vld [vmem:[#allocation2 + $0x38] sm:$0xff]
  %v416 = vld [vmem:[#allocation2 + $0x40] sm:$0xff]
  %v417 = vld [vmem:[#allocation2 + $0x48] sm:$0xff]
  %v418 = vld [vmem:[#allocation2 + $0x50] sm:$0xff]
  %v419 = vld [vmem:[#allocation2 + $0x58] sm:$0xff]
  %v420 = vld [vmem:[#allocation2 + $0x60] sm:$0xff]
  %v421 = vld [vmem:[#allocation2 + $0x68] sm:$0xff]
  %v422 = vld [vmem:[#allocation2 + $0x70] sm:$0xff]
  %v423 = vld [vmem:[#allocation2 + $0x78] sm:$0xff]
  %v424 = vld [vmem:[#allocation2 + $0x80] sm:$0xff]
  %v425 = vld [vmem:[#allocation2 + $0x88] sm:$0xff]
  %v426 = vld [vmem:[#allocation2 + $0x90] sm:$0xff]
  %v427 = vld [vmem:[#allocation2 + $0x98] sm:$0xff]
  %v428 = vld [vmem:[#allocation2 + $0xa0] sm:$0xff]
  %v429 = vld [vmem:[#allocation2 + $0xa8] sm:$0xff]
  %v430 = vld [vmem:[#allocation2 + $0xb0] sm:$0xff]
  %v431 = vld [vmem:[#allocation2 + $0xb8] sm:$0xff]
  %v432 = vld [vmem:[#allocation2 + $0xc0] sm:$0xff]
  %v433 = vld [vmem:[#allocation2 + $0xc8] sm:$0xff]
  %v434 = vld [vmem:[#allocation2 + $0xd0] sm:$0xff]
  %v435 = vld [vmem:[#allocation2 + $0xd8] sm:$0xff]
  %v436 = vld [vmem:[#allocation2 + $0xe0] sm:$0xff]
  %v437 = vld [vmem:[#allocation2 + $0xe8] sm:$0xff]
  %v438 = vld [vmem:[#allocation2 + $0xf0] sm:$0xff]
  %v439 = vld [vmem:[#allocation2 + $0xf8] sm:$0xff]
  %v440 = vld [vmem:[#allocation2 + $0x100] sm:$0xff]
  %v441 = vld [vmem:[#allocation2 + $0x108] sm:$0xff]
  %v442 = vld [vmem:[#allocation2 + $0x110] sm:$0xff]
  %v443 = vld [vmem:[#allocation2 + $0x118] sm:$0xff]
  %v444 = vld [vmem:[#allocation2 + $0x120] sm:$0xff]
  %v445 = vld [vmem:[#allocation2 + $0x128] sm:$0xff]
  %v446 = vld [vmem:[#allocation2 + $0x130] sm:$0xff]
  %v447 = vld [vmem:[#allocation2 + $0x138] sm:$0xff]
  %v448 = vld [vmem:[#allocation2 + $0x140] sm:$0xff]
  %v449 = vld [vmem:[#allocation2 + $0x148] sm:$0xff]
  %v450 = vld [vmem:[#allocation2 + $0x150] sm:$0xff]
  %v451 = vld [vmem:[#allocation2 + $0x158] sm:$0xff]
  %v452 = vld [vmem:[#allocation2 + $0x160] sm:$0xff]
  %v453 = vld [vmem:[#allocation2 + $0x168] sm:$0xff]
  %v454 = vld [vmem:[#allocation2 + $0x170] sm:$0xff]
  %v455 = vld [vmem:[#allocation2 + $0x178] sm:$0xff]
  %v456 = vld [vmem:[#allocation2 + $0x180] sm:$0xff]
  %v457 = vld [vmem:[#allocation2 + $0x188] sm:$0xff]
  %v458 = vld [vmem:[#allocation2 + $0x190] sm:$0xff]
  %v459 = vld [vmem:[#allocation2 + $0x198] sm:$0xff]
  %v460 = vld [vmem:[#allocation2 + $0x1a0] sm:$0xff]
  %v461 = vld [vmem:[#allocation2 + $0x1a8] sm:$0xff]
  %v462 = vld [vmem:[#allocation2 + $0x1b0] sm:$0xff]
  %v463 = vld [vmem:[#allocation2 + $0x1b8] sm:$0xff]
  %v464 = vld [vmem:[#allocation2 + $0x1c0] sm:$0xff]
  %v465 = vld [vmem:[#allocation2 + $0x1c8] sm:$0xff]
  %v466 = vld [vmem:[#allocation2 + $0x1d0] sm:$0xff]
  %v467 = vld [vmem:[#allocation2 + $0x1d8] sm:$0xff]
  %v468 = vld [vmem:[#allocation2 + $0x1e0] sm:$0xff]
  %v469 = vld [vmem:[#allocation2 + $0x1e8] sm:$0xff]
  %v470 = vld [vmem:[#allocation2 + $0x1f0] sm:$0xff]
  %v471 = vld [vmem:[#allocation2 + $0x1f8] sm:$0xff]
  %v472 = vld [vmem:[#allocation2 + $0x200] sm:$0xff]
  %v473 = vld [vmem:[#allocation2 + $0x208] sm:$0xff]
  %v474 = vld [vmem:[#allocation2 + $0x210] sm:$0xff]
  %v475 = vld [vmem:[#allocation2 + $0x218] sm:$0xff]
  %v476 = vld [vmem:[#allocation2 + $0x220] sm:$0xff]
  %v477 = vld [vmem:[#allocation2 + $0x228] sm:$0xff]
  %v478 = vld [vmem:[#allocation2 + $0x230] sm:$0xff]
  %v479 = vld [vmem:[#allocation2 + $0x238] sm:$0xff]
  %v480 = vpack.c.bf16 %v410, %v408
  %v481 = vpack.c.bf16 %v411, %v409
  %v482 = vpack.c.bf16 %v414, %v412
  %v483 = vpack.c.bf16 %v415, %v413
  %v484 = vpack.c.bf16 %v418, %v416
  %v485 = vpack.c.bf16 %v419, %v417
  %v486 = vpack.c.bf16 %v422, %v420
  %v487 = vpack.c.bf16 %v423, %v421
  %v488 = vpack.c.bf16 %v426, %v424
  %v489 = vpack.c.bf16 %v427, %v425
  %v490 = vpack.c.bf16 %v430, %v428
  %v491 = vpack.c.bf16 %v431, %v429
  %v492 = vpack.c.bf16 %v434, %v432
  %v493 = vpack.c.bf16 %v435, %v433
  %v494 = vpack.c.bf16 %v438, %v436
  %v495 = vpack.c.bf16 %v439, %v437
  %v496 = vpack.c.bf16 %v442, %v440
  %v497 = vpack.c.bf16 %v443, %v441
  %v498 = vpack.c.bf16 %v446, %v444
  %v499 = vpack.c.bf16 %v447, %v445
  %v500 = vpack.c.bf16 %v450, %v448
  %v501 = vpack.c.bf16 %v451, %v449
  %v502 = vpack.c.bf16 %v454, %v452
  %v503 = vpack.c.bf16 %v455, %v453
  %v504 = vpack.c.bf16 %v458, %v456
  %v505 = vpack.c.bf16 %v459, %v457
  %v506 = vpack.c.bf16 %v462, %v460
  %v507 = vpack.c.bf16 %v463, %v461
  %v508 = vpack.c.bf16 %v466, %v464
  %v509 = vpack.c.bf16 %v467, %v465
  %v510 = vpack.c.bf16 %v470, %v468
  %v511 = vpack.c.bf16 %v471, %v469
  %v512 = vpack.c.bf16 %v474, %v472
  %v513 = vpack.c.bf16 %v475, %v473
  %v514 = vpack.c.bf16 %v478, %v476
  %v515 = vpack.c.bf16 %v479, %v477
  %v516 = vld [vmem:[%s2] sm:$0xff]
  %v517 = vld [vmem:[%s2 + $0x8] sm:$0xf]
  %v518 = vld [vmem:[%s2 + $0xc] sm:$0xff]
  %v519 = vld [vmem:[%s2 + $0x14] sm:$0xf]
  %v520 = vld [vmem:[%s3] sm:$0xff]
  %v521 = vld [vmem:[%s3 + $0x8] sm:$0xff]
  %523 = vset.pattern.permute.xlu0 0
  %524 = vperm.xlu0 %523, %v520
  %v525 = vpop.permute.xlu0 %524
  %528 = vset.pattern.permute.xlu0 0
  %529 = vperm.xlu0 %528, %v521
  %v530 = vpop.permute.xlu0 %529
  %v536 = vunpack.c.l.b16 %v516
  %v537 = vunpack.c.h.b16 %v516
  %v538 = vunpack.c.l.b16 %v517
  %v539 = vunpack.c.l.b16 %v518
  %v540 = vunpack.c.h.b16 %v518
  %v541 = vunpack.c.l.b16 %v519
  %v542 = vpack.c.b16 %v539, %v536
  %v543 = vpack.c.b16 %v540, %v537
  %v544 = vpack.c.b16 %v541, %v538
  %vm547 = vcmask 261120
  %v549 = vsel %vm547, %v544, 0
  %551 = vmatpush.bf16.msra.mxu0 %v494
  %552 = vmatpush.bf16.msra.mxu0 %v492
  %553 = vmatpush.bf16.msra.mxu0 %v490
  %554 = vmatpush.bf16.msra.mxu0 %v488
  %555 = vmatpush.bf16.msra.mxu0 %v486
  %556 = vmatpush.bf16.msra.mxu0 %v484
  %557 = vmatpush.bf16.msra.mxu0 %v482
  %558 = vmatpush.bf16.msra.mxu0 %v480
  %559 = vmatmul.bf16.gmra.mxu0 %v542
  %v560 = vpop.f32.mrf.mxu0
  %v561 = vadd.f32 %v525, %v560
  %v562 = vpop.f32.mrf.mxu0
  %v563 = vadd.f32 %v530, %v562
  %564 = vdwg.mxu0
  %565 = vmatpush.bf16.msra.mxu0 %v510
  %566 = vmatpush.bf16.msra.mxu0 %v508
  %567 = vmatpush.bf16.msra.mxu0 %v506
  %568 = vmatpush.bf16.msra.mxu0 %v504
  %569 = vmatpush.bf16.msra.mxu0 %v502
  %570 = vmatpush.bf16.msra.mxu0 %v500
  %571 = vmatpush.bf16.msra.mxu0 %v498
  %572 = vmatpush.bf16.msra.mxu0 %v496
  %573 = vmatmul.bf16.gmra.mxu0 %v543
  %v574 = vpop.f32.mrf.mxu0
  %v575 = vadd.f32 %v561, %v574
  %v576 = vpop.f32.mrf.mxu0
  %v577 = vadd.f32 %v563, %v576
  %578 = vdwg.mxu0
  %579 = vmatpush.bf16.msra.mxu0 0
  %580 = vmatpush.bf16.msra.mxu0 0
  %581 = vmatpush.bf16.msra.mxu0 0
  %582 = vmatpush.bf16.msra.mxu0 0
  %583 = vmatpush.bf16.msra.mxu0 0
  %584 = vmatpush.bf16.msra.mxu0 0
  %585 = vmatpush.bf16.msra.mxu0 %v514
  %586 = vmatpush.bf16.msra.mxu0 %v512
  %587 = vmatmul.bf16.gmra.mxu0 %v549
  %v588 = vpop.f32.mrf.mxu0
  %v589 = vadd.f32 %v575, %v588
  %v590 = vpop.f32.mrf.mxu0
  %v591 = vadd.f32 %v577, %v590
  %592 = vdwg.mxu0
  %593 = vmatpush.bf16.msra.mxu0 %v495
  %594 = vmatpush.bf16.msra.mxu0 %v493
  %595 = vmatpush.bf16.msra.mxu0 %v491
  %596 = vmatpush.bf16.msra.mxu0 %v489
  %597 = vmatpush.bf16.msra.mxu0 %v487
  %598 = vmatpush.bf16.msra.mxu0 %v485
  %599 = vmatpush.bf16.msra.mxu0 %v483
  %600 = vmatpush.bf16.msra.mxu0 %v481
  %601 = vmatmul.bf16.gmra.mxu0 %v542
  %v602 = vpop.f32.mrf.mxu0
  %v603 = vadd.f32 %v525, %v602
  %v604 = vpop.f32.mrf.mxu0
  %v605 = vadd.f32 %v530, %v604
  %606 = vdwg.mxu0
  %607 = vmatpush.bf16.msra.mxu0 %v511
  %608 = vmatpush.bf16.msra.mxu0 %v509
  %609 = vmatpush.bf16.msra.mxu0 %v507
  %610 = vmatpush.bf16.msra.mxu0 %v505
  %611 = vmatpush.bf16.msra.mxu0 %v503
  %612 = vmatpush.bf16.msra.mxu0 %v501
  %613 = vmatpush.bf16.msra.mxu0 %v499
  %614 = vmatpush.bf16.msra.mxu0 %v497
  %615 = vmatmul.bf16.gmra.mxu0 %v543
  %v616 = vpop.f32.mrf.mxu0
  %v617 = vadd.f32 %v603, %v616
  %v618 = vpop.f32.mrf.mxu0
  %v619 = vadd.f32 %v605, %v618
  %620 = vdwg.mxu0
  %621 = vmatpush.bf16.msra.mxu0 0
  %622 = vmatpush.bf16.msra.mxu0 0
  %623 = vmatpush.bf16.msra.mxu0 0
  %624 = vmatpush.bf16.msra.mxu0 0
  %625 = vmatpush.bf16.msra.mxu0 0
  %626 = vmatpush.bf16.msra.mxu0 0
  %627 = vmatpush.bf16.msra.mxu0 %v515
  %628 = vmatpush.bf16.msra.mxu0 %v513
  %629 = vmatmul.bf16.gmra.mxu0 %v549
  %v630 = vpop.f32.mrf.mxu0
  %v631 = vadd.f32 %v617, %v630
  %v632 = vpop.f32.mrf.mxu0
  %v633 = vadd.f32 %v619, %v632
  %634 = vdwg.mxu0
  %v635 = vmul.f32 %v589, %v80
  %v636 = vmul.f32 %v631, %v81
  %v637 = vmul.f32 %v591, %v80
  %v638 = vmul.f32 %v633, %v81
  %v639 = vadd.f32 %v635, %v636
  %640 = vadd.xlane.f32.xlu0 %v639
  %v641 = vpop.xlane.xlu0 %640
  %v642 = vadd.f32 %v637, %v638
  %643 = vadd.xlane.f32.xlu0 %v642
  %v644 = vpop.xlane.xlu0 %643
  %vm645 = vcmask 7168
  %646 = vst.msk [vmem:[%s10] sm:$0xff] %vm645, %v641
  %647 = vst.msk [vmem:[%s10 + $0x8] sm:$0xff] %vm645, %v644
  %v648 = vmul.f32 %v635, %v635
  %v649 = vmul.f32 %v636, %v636
  %v650 = vmul.f32 %v637, %v637
  %v651 = vmul.f32 %v638, %v638
  %v652 = vadd.f32 %v648, %v649
  %653 = vadd.xlane.f32.xlu0 %v652
  %v654 = vpop.xlane.xlu0 %653
  %v655 = vadd.f32 %v650, %v651
  %656 = vadd.xlane.f32.xlu0 %v655
  %v657 = vpop.xlane.xlu0 %656
  %658 = vst.msk [vmem:[%s11] sm:$0xff] %vm645, %v654
  %659 = vst.msk [vmem:[%s11 + $0x8] sm:$0xff] %vm645, %v657
  %v660 = vpack.c.bf16 %v636, %v635
  %v661 = vpack.c.bf16 %v638, %v637
  %662 = vst [vmem:[%s9] sm:$0xff] %v660
  %663 = vst [vmem:[%s9 + $0x8] sm:$0xff] %v661
  // Predicated region
  $region38: #{model_forward.24} parent=0 // pred_check
    _
  $region39: #{model_forward.24} parent=0 // pred_check_branch
    %665 = sbr.rel (0) target = $region41
  $region40: #{model_forward.24} parent=0 // pred_region
    _
  $region41: #{model_forward.24} parent=0 // pred_fallthru
    _
  // Predicated region
  $region42: #{model_forward.24} parent=0 // pred_check
    _
  $region43: #{model_forward.24} parent=0 // pred_check_branch
    %667 = sbr.rel (0) target = $region45
  $region44: #{model_forward.24} parent=0 // pred_region
    _
  $region45: #{model_forward.24} parent=0 // pred_fallthru
    _
  // Predicated region
  $region46: #{model_forward.24} parent=0 // pred_check
    _
  $region47: #{model_forward.24} parent=0 // pred_check_branch
    %669 = sbr.rel (0) target = $region49
  $region48: #{model_forward.24} parent=0 // pred_region
    _
  $region49: #{model_forward.24} parent=0 // pred_fallthru
    _
  // Predicated region
  $region50: #{model_forward.24} parent=0 // pred_check
    _
  $region51: #{model_forward.24} parent=0 // pred_check_branch
    %671 = sbr.rel (0) target = $region53
  $region52: #{model_forward.24} parent=0 // pred_region
    _
  $region53: #{model_forward.24} parent=0 // pred_fallthru
    _
  // Predicated region
  $region54: #{model_forward.24} parent=0 // pred_check
    _
  $region55: #{model_forward.24} parent=0 // pred_check_branch
    %673 = sbr.rel (0) target = $region57
  $region56: #{model_forward.24} parent=0 // pred_region
    _
  $region57: #{model_forward.24} parent=0 // pred_fallthru
    _
  // Predicated region
  $region58: #{model_forward.24} parent=0 // pred_check
    _
  $region59: #{model_forward.24} parent=0 // pred_check_branch
    %675 = sbr.rel (0) target = $region61
  $region60: #{model_forward.24} parent=0 // pred_region
    _
  $region61: #{model_forward.24} parent=0 // pred_fallthru
    _

// kernel: model_forward.27
$region0: #{model_forward.27}
  #allocation0 [shape = 'u32[]', space=smem, size = 0x4, offset = 0x4, fixed_abs, tag = 'smem constant byte address 0x4 - core index']
  #allocation1 [shape = 'u32[72,128]{1,0:T(1,128)}', space=vmem, size = 0x9000, scoped, tag = 'internal scratch']
  #allocation2 [shape = 'f32[72,768]{1,0:T(8,128)}', space=vmem, size = 0x36000, scoped, tag = 'scratch operand']
  %s0 = inlined_call_operand.vmem [shape: bf16[8,768], index: 0, kind: input, shape index: {}]
  %s1 = inlined_call_operand.vmem [shape: bf16[4,72], index: 1, kind: input, shape index: {}]
  %s2 = inlined_call_operand.vmem [shape: f32[4,1], index: 2, kind: input, shape index: {}]
  %s3 = inlined_call_operand.vmem [shape: f32[8,1], index: 3, kind: input, shape index: {}]
  %s4 = inlined_call_operand.vmem [shape: f32[8,1], index: 4, kind: input, shape index: {}]
  %s5 = inlined_call_operand.vmem [shape: f32[1,768], index: 5, kind: input, shape index: {}]
  %s6 = inlined_call_operand.vmem [shape: bf16[4,768], index: 6, kind: output, shape index: {0}]
  %s7 = inlined_call_operand.hbm [shape: f32[4,1], index: 7, kind: output, shape index: {1}]
  %s8 = inlined_call_operand.hbm [shape: f32[4,1], index: 8, kind: output, shape index: {2}]
  %9 = xla_tuple %s6, %s7, %s8
  %s10 = sld [smem:[#allocation0]]
  $region50: #{model_forward.27} parent=0
    _
  %s12 = ssub.s32 1, %s10
  %s13 = scalar_select 0, %s12, %s10
  $region1: #{model_forward.27} parent=0
    #allocation3 [shape = 'u8[2048]{0}', space=vmem, size = 0x800, scoped, tag = 'output window, operand 1, single buffered']
    #allocation4 [shape = 's32[1]{0}', space=sflag, size = 0x4, scoped, tag = 'scoped memory for model_forward.27']
    #allocation5 [shape = 'u8[2048]{0}', space=vmem, size = 0x800, scoped, tag = 'output window, operand 2, single buffered']
    #allocation6 [shape = 's32[1]{0}', space=sflag, size = 0x4, scoped, tag = 'scoped memory for model_forward.27']
    %14 = vsyncpa [#allocation4], 0
    %15 = vsyncpa [#allocation6], 0
    // Predicated region
    $region2: #{model_forward.27} parent=1 // pred_check
      _
    $region3: #{model_forward.27} parent=1 // pred_check_branch
      %17 = sbr.rel (0) target = $region5
    $region4: #{model_forward.27} parent=1 // pred_region
      _
    $region5: #{model_forward.27} parent=1 // pred_fallthru
      _
    // Predicated region
    $region6: #{model_forward.27} parent=1 // pred_check
      _
    $region7: #{model_forward.27} parent=1 // pred_check_branch
      %19 = sbr.rel (0) target = $region9
    $region8: #{model_forward.27} parent=1 // pred_region
      _
    $region9: #{model_forward.27} parent=1 // pred_fallthru
      _
    // Predicated region
    $region10: #{model_forward.27} parent=1 // pred_check
      _
    $region11: #{model_forward.27} parent=1 // pred_check_branch
      %21 = sbr.rel (0) target = $region13
    $region12: #{model_forward.27} parent=1 // pred_region
      _
    $region13: #{model_forward.27} parent=1 // pred_fallthru
      _
    // Predicated region
    $region14: #{model_forward.27} parent=1 // pred_check
      _
    $region15: #{model_forward.27} parent=1 // pred_check_branch
      %23 = sbr.rel (0) target = $region17
    $region16: #{model_forward.27} parent=1 // pred_region
      _
    $region17: #{model_forward.27} parent=1 // pred_fallthru
      _
    // Predicated region
    $region18: #{model_forward.27} parent=1 // pred_check
      _
    $region19: #{model_forward.27} parent=1 // pred_check_branch
      %25 = sbr.rel (0) target = $region21
    $region20: #{model_forward.27} parent=1 // pred_region
      _
    $region21: #{model_forward.27} parent=1 // pred_fallthru
      _
    // Predicated region
    $region22: #{model_forward.27} parent=1 // pred_check
      _
    $region23: #{model_forward.27} parent=1 // pred_check_branch
      %27 = sbr.rel (0) target = $region25
    $region24: #{model_forward.27} parent=1 // pred_region
      _
    $region25: #{model_forward.27} parent=1 // pred_fallthru
      _
    %v29 = vld [vmem:[%s5] sm:$0x3f]
    %v30 = vld [vmem:[%s0] sm:$0xff]
    %v31 = vld [vmem:[%s0 + $0x8] sm:$0xff]
    %v32 = vld [vmem:[%s0 + $0x10] sm:$0xff]
    %v33 = vunpack.c.l.bf16 %v30
    %v34 = vunpack.c.h.bf16 %v30
    %v35 = vunpack.c.l.bf16 %v31
    %v36 = vunpack.c.h.bf16 %v31
    %v37 = vunpack.c.l.bf16 %v32
    %v38 = vunpack.c.h.bf16 %v32
    %v39 = vld [vmem:[%s3] sm:$0xff]
    %41 = vset.pattern.permute.xlu0 0
    %42 = vperm.xlu0 %41, %v39
    %v43 = vpop.permute.xlu0 %42
    %v45 = vmul.f32 %v33, %v43
    %v46 = vmul.f32 %v34, %v43
    %v47 = vmul.f32 %v35, %v43
    %v48 = vmul.f32 %v36, %v43
    %v49 = vmul.f32 %v37, %v43
    %v50 = vmul.f32 %v38, %v43
    %v51 = vld [vmem:[%s4] sm:$0xff]
    %53 = vset.pattern.permute.xlu0 0
    %54 = vperm.xlu0 %53, %v51
    %v55 = vpop.permute.xlu0 %54
    %v57 = vadd.f32 %v45, %v55
    %v58 = vadd.f32 %v46, %v55
    %v59 = vadd.f32 %v47, %v55
    %v60 = vadd.f32 %v48, %v55
    %v61 = vadd.f32 %v49, %v55
    %v62 = vadd.f32 %v50, %v55
    %v63 = vmax.f32 %v57, 0.0
    %v64 = vmax.f32 %v58, 0.0
    %v65 = vmax.f32 %v59, 0.0
    %v66 = vmax.f32 %v60, 0.0
    %v67 = vmax.f32 %v61, 0.0
    %v68 = vmax.f32 %v62, 0.0
    %v70 = vperm.slane %v29, 0
    %v71 = vperm.slane %v29, 1
    %v72 = vperm.slane %v29, 2
    %v73 = vperm.slane %v29, 3
    %v74 = vperm.slane %v29, 4
    %v75 = vperm.slane %v29, 5
    %v82 = vmul.f32 %v63, %v70
    %v83 = vmul.f32 %v64, %v71
    %v84 = vmul.f32 %v65, %v72
    %v85 = vmul.f32 %v66, %v73
    %v86 = vmul.f32 %v67, %v74
    %v87 = vmul.f32 %v68, %v75
    %88 = vrot.lane.b32.xlu0 %v82, 19
    %v89 = vpop.permute.xlu0 %88
    %90 = vrot.lane.b32.xlu0 %v83, 19
    %v91 = vpop.permute.xlu0 %90
    %92 = vrot.lane.b32.xlu0 %v84, 19
    %v93 = vpop.permute.xlu0 %92
    %94 = vrot.lane.b32.xlu0 %v85, 19
    %v95 = vpop.permute.xlu0 %94
    %96 = vrot.lane.b32.xlu0 %v86, 19
    %v97 = vpop.permute.xlu0 %96
    %98 = vrot.lane.b32.xlu0 %v87, 19
    %v99 = vpop.permute.xlu0 %98
    %v100 = vlaneseq
    %v101 = vand.u32 %v100, 127
    %vm102 = vcmp.lt.s32.totalorder %v101, 19
    %v103 = vsel %vm102, %v97, %v99
    %v104 = vsel %vm102, %v95, %v97
    %v105 = vsel %vm102, %v93, %v95
    %v106 = vsel %vm102, %v91, %v93
    %v107 = vsel %vm102, %v89, %v91
    %v108 = vsel %vm102, %v99, %v89
    %109 = vst [vmem:[#allocation2] sm:$0xff] %v108
    %110 = vst [vmem:[#allocation2 + $0x8] sm:$0xff] %v107
    %111 = vst [vmem:[#allocation2 + $0x10] sm:$0xff] %v106
    %112 = vst [vmem:[#allocation2 + $0x18] sm:$0xff] %v105
    %113 = vst [vmem:[#allocation2 + $0x20] sm:$0xff] %v104
    %114 = vst [vmem:[#allocation2 + $0x28] sm:$0xff] %v103
    %115 = vrot.lane.b32.xlu0 %v82, 18
    %v116 = vpop.permute.xlu0 %115
    %117 = vrot.lane.b32.xlu0 %v83, 18
    %v118 = vpop.permute.xlu0 %117
    %119 = vrot.lane.b32.xlu0 %v84, 18
    %v120 = vpop.permute.xlu0 %119
    %121 = vrot.lane.b32.xlu0 %v85, 18
    %v122 = vpop.permute.xlu0 %121
    %123 = vrot.lane.b32.xlu0 %v86, 18
    %v124 = vpop.permute.xlu0 %123
    %125 = vrot.lane.b32.xlu0 %v87, 18
    %v126 = vpop.permute.xlu0 %125
    %vm127 = vcmp.lt.s32.totalorder %v101, 18
    %v128 = vsel %vm127, %v124, %v126
    %v129 = vsel %vm127, %v122, %v124
    %v130 = vsel %vm127, %v120, %v122
    %v131 = vsel %vm127, %v118, %v120
    %v132 = vsel %vm127, %v116, %v118
    %v133 = vsel %vm127, %v126, %v116
    %134 = vst [vmem:[#allocation2 + $0x30] sm:$0xff] %v133
    %135 = vst [vmem:[#allocation2 + $0x38] sm:$0xff] %v132
    %136 = vst [vmem:[#allocation2 + $0x40] sm:$0xff] %v131
    %137 = vst [vmem:[#allocation2 + $0x48] sm:$0xff] %v130
    %138 = vst [vmem:[#allocation2 + $0x50] sm:$0xff] %v129
    %139 = vst [vmem:[#allocation2 + $0x58] sm:$0xff] %v128
    %140 = vrot.lane.b32.xlu0 %v82, 17
    %v141 = vpop.permute.xlu0 %140
    %142 = vrot.lane.b32.xlu0 %v83, 17
    %v143 = vpop.permute.xlu0 %142
    %144 = vrot.lane.b32.xlu0 %v84, 17
    %v145 = vpop.permute.xlu0 %144
    %146 = vrot.lane.b32.xlu0 %v85, 17
    %v147 = vpop.permute.xlu0 %146
    %148 = vrot.lane.b32.xlu0 %v86, 17
    %v149 = vpop.permute.xlu0 %148
    %150 = vrot.lane.b32.xlu0 %v87, 17
    %v151 = vpop.permute.xlu0 %150
    %vm152 = vcmp.lt.s32.totalorder %v101, 17
    %v153 = vsel %vm152, %v149, %v151
    %v154 = vsel %vm152, %v147, %v149
    %v155 = vsel %vm152, %v145, %v147
    %v156 = vsel %vm152, %v143, %v145
    %v157 = vsel %vm152, %v141, %v143
    %v158 = vsel %vm152, %v151, %v141
    %159 = vst [vmem:[#allocation2 + $0x60] sm:$0xff] %v158
    %160 = vst [vmem:[#allocation2 + $0x68] sm:$0xff] %v157
    %161 = vst [vmem:[#allocation2 + $0x70] sm:$0xff] %v156
    %162 = vst [vmem:[#allocation2 + $0x78] sm:$0xff] %v155
    %163 = vst [vmem:[#allocation2 + $0x80] sm:$0xff] %v154
    %164 = vst [vmem:[#allocation2 + $0x88] sm:$0xff] %v153
    %165 = vrot.lane.b32.xlu0 %v82, 1
    %v166 = vpop.permute.xlu0 %165
    %167 = vrot.lane.b32.xlu0 %v83, 1
    %v168 = vpop.permute.xlu0 %167
    %169 = vrot.lane.b32.xlu0 %v84, 1
    %v170 = vpop.permute.xlu0 %169
    %171 = vrot.lane.b32.xlu0 %v85, 1
    %v172 = vpop.permute.xlu0 %171
    %173 = vrot.lane.b32.xlu0 %v86, 1
    %v174 = vpop.permute.xlu0 %173
    %175 = vrot.lane.b32.xlu0 %v87, 1
    %v176 = vpop.permute.xlu0 %175
    %vm177 = vcmp.lt.s32.totalorder %v101, 1
    %v178 = vsel %vm177, %v174, %v176
    %v179 = vsel %vm177, %v172, %v174
    %v180 = vsel %vm177, %v170, %v172
    %v181 = vsel %vm177, %v168, %v170
    %v182 = vsel %vm177, %v166, %v168
    %v183 = vsel %vm177, %v176, %v166
    %184 = vst [vmem:[#allocation2 + $0x90] sm:$0xff] %v183
    %185 = vst [vmem:[#allocation2 + $0x98] sm:$0xff] %v182
    %186 = vst [vmem:[#allocation2 + $0xa0] sm:$0xff] %v181
    %187 = vst [vmem:[#allocation2 + $0xa8] sm:$0xff] %v180
    %188 = vst [vmem:[#allocation2 + $0xb0] sm:$0xff] %v179
    %189 = vst [vmem:[#allocation2 + $0xb8] sm:$0xff] %v178
    %190 = vst [vmem:[#allocation2 + $0xc0] sm:$0xff] %v82
    %191 = vst [vmem:[#allocation2 + $0xc8] sm:$0xff] %v83
    %192 = vst [vmem:[#allocation2 + $0xd0] sm:$0xff] %v84
    %193 = vst [vmem:[#allocation2 + $0xd8] sm:$0xff] %v85
    %194 = vst [vmem:[#allocation2 + $0xe0] sm:$0xff] %v86
    %195 = vst [vmem:[#allocation2 + $0xe8] sm:$0xff] %v87
    %196 = vrot.lane.b32.xlu0 %v82, 127
    %v197 = vpop.permute.xlu0 %196
    %198 = vrot.lane.b32.xlu0 %v83, 127
    %v199 = vpop.permute.xlu0 %198
    %200 = vrot.lane.b32.xlu0 %v84, 127
    %v201 = vpop.permute.xlu0 %200
    %202 = vrot.lane.b32.xlu0 %v85, 127
    %v203 = vpop.permute.xlu0 %202
    %204 = vrot.lane.b32.xlu0 %v86, 127
    %v205 = vpop.permute.xlu0 %204
    %206 = vrot.lane.b32.xlu0 %v87, 127
    %v207 = vpop.permute.xlu0 %206
    %vm208 = vcmp.lt.s32.totalorder %v101, 127
    %v209 = vsel %vm208, %v205, %v207
    %v210 = vsel %vm208, %v203, %v205
    %v211 = vsel %vm208, %v201, %v203
    %v212 = vsel %vm208, %v199, %v201
    %v213 = vsel %vm208, %v197, %v199
    %v214 = vsel %vm208, %v207, %v197
    %215 = vst [vmem:[#allocation2 + $0xf0] sm:$0xff] %v213
    %216 = vst [vmem:[#allocation2 + $0xf8] sm:$0xff] %v212
    %217 = vst [vmem:[#allocation2 + $0x100] sm:$0xff] %v211
    %218 = vst [vmem:[#allocation2 + $0x108] sm:$0xff] %v210
    %219 = vst [vmem:[#allocation2 + $0x110] sm:$0xff] %v209
    %220 = vst [vmem:[#allocation2 + $0x118] sm:$0xff] %v214
    %221 = vrot.lane.b32.xlu0 %v82, 111
    %v222 = vpop.permute.xlu0 %221
    %223 = vrot.lane.b32.xlu0 %v83, 111
    %v224 = vpop.permute.xlu0 %223
    %225 = vrot.lane.b32.xlu0 %v84, 111
    %v226 = vpop.permute.xlu0 %225
    %227 = vrot.lane.b32.xlu0 %v85, 111
    %v228 = vpop.permute.xlu0 %227
    %229 = vrot.lane.b32.xlu0 %v86, 111
    %v230 = vpop.permute.xlu0 %229
    %231 = vrot.lane.b32.xlu0 %v87, 111
    %v232 = vpop.permute.xlu0 %231
    %vm233 = vcmp.lt.s32.totalorder %v101, 111
    %v234 = vsel %vm233, %v230, %v232
    %v235 = vsel %vm233, %v228, %v230
    %v236 = vsel %vm233, %v226, %v228
    %v237 = vsel %vm233, %v224, %v226
    %v238 = vsel %vm233, %v222, %v224
    %v239 = vsel %vm233, %v232, %v222
    %240 = vst [vmem:[#allocation2 + $0x120] sm:$0xff] %v238
    %241 = vst [vmem:[#allocation2 + $0x128] sm:$0xff] %v237
    %242 = vst [vmem:[#allocation2 + $0x130] sm:$0xff] %v236
    %243 = vst [vmem:[#allocation2 + $0x138] sm:$0xff] %v235
    %244 = vst [vmem:[#allocation2 + $0x140] sm:$0xff] %v234
    %245 = vst [vmem:[#allocation2 + $0x148] sm:$0xff] %v239
    %246 = vrot.lane.b32.xlu0 %v82, 110
    %v247 = vpop.permute.xlu0 %246
    %248 = vrot.lane.b32.xlu0 %v83, 110
    %v249 = vpop.permute.xlu0 %248
    %250 = vrot.lane.b32.xlu0 %v84, 110
    %v251 = vpop.permute.xlu0 %250
    %252 = vrot.lane.b32.xlu0 %v85, 110
    %v253 = vpop.permute.xlu0 %252
    %254 = vrot.lane.b32.xlu0 %v86, 110
    %v255 = vpop.permute.xlu0 %254
    %256 = vrot.lane.b32.xlu0 %v87, 110
    %v257 = vpop.permute.xlu0 %256
    %vm258 = vcmp.lt.s32.totalorder %v101, 110
    %v259 = vsel %vm258, %v255, %v257
    %v260 = vsel %vm258, %v253, %v255
    %v261 = vsel %vm258, %v251, %v253
    %v262 = vsel %vm258, %v249, %v251
    %v263 = vsel %vm258, %v247, %v249
    %v264 = vsel %vm258, %v257, %v247
    %265 = vst [vmem:[#allocation2 + $0x150] sm:$0xff] %v263
    %266 = vst [vmem:[#allocation2 + $0x158] sm:$0xff] %v262
    %267 = vst [vmem:[#allocation2 + $0x160] sm:$0xff] %v261
    %268 = vst [vmem:[#allocation2 + $0x168] sm:$0xff] %v260
    %269 = vst [vmem:[#allocation2 + $0x170] sm:$0xff] %v259
    %270 = vst [vmem:[#allocation2 + $0x178] sm:$0xff] %v264
    %271 = vrot.lane.b32.xlu0 %v82, 109
    %v272 = vpop.permute.xlu0 %271
    %273 = vrot.lane.b32.xlu0 %v83, 109
    %v274 = vpop.permute.xlu0 %273
    %275 = vrot.lane.b32.xlu0 %v84, 109
    %v276 = vpop.permute.xlu0 %275
    %277 = vrot.lane.b32.xlu0 %v85, 109
    %v278 = vpop.permute.xlu0 %277
    %279 = vrot.lane.b32.xlu0 %v86, 109
    %v280 = vpop.permute.xlu0 %279
    %281 = vrot.lane.b32.xlu0 %v87, 109
    %v282 = vpop.permute.xlu0 %281
    %vm283 = vcmp.lt.s32.totalorder %v101, 109
    %v284 = vsel %vm283, %v280, %v282
    %v285 = vsel %vm283, %v278, %v280
    %v286 = vsel %vm283, %v276, %v278
    %v287 = vsel %vm283, %v274, %v276
    %v288 = vsel %vm283, %v272, %v274
    %v289 = vsel %vm283, %v282, %v272
    %290 = vst [vmem:[#allocation2 + $0x180] sm:$0xff] %v288
    %291 = vst [vmem:[#allocation2 + $0x188] sm:$0xff] %v287
    %292 = vst [vmem:[#allocation2 + $0x190] sm:$0xff] %v286
    %293 = vst [vmem:[#allocation2 + $0x198] sm:$0xff] %v285
    %294 = vst [vmem:[#allocation2 + $0x1a0] sm:$0xff] %v284
    %295 = vst [vmem:[#allocation2 + $0x1a8] sm:$0xff] %v289
    %v296 = vld [vmem:[#allocation2] sm:$0xff]
    %v297 = vld [vmem:[#allocation2 + $0x8] sm:$0xff]
    %v298 = vld [vmem:[#allocation2 + $0x10] sm:$0xff]
    %v299 = vld [vmem:[#allocation2 + $0x18] sm:$0xff]
    %v300 = vld [vmem:[#allocation2 + $0x20] sm:$0xff]
    %v301 = vld [vmem:[#allocation2 + $0x28] sm:$0xff]
    %v302 = vld [vmem:[#allocation2 + $0x30] sm:$0xff]
    %v303 = vld [vmem:[#allocation2 + $0x38] sm:$0xff]
    %v304 = vld [vmem:[#allocation2 + $0x40] sm:$0xff]
    %v305 = vld [vmem:[#allocation2 + $0x48] sm:$0xff]
    %v306 = vld [vmem:[#allocation2 + $0x50] sm:$0xff]
    %v307 = vld [vmem:[#allocation2 + $0x58] sm:$0xff]
    %v308 = vld [vmem:[#allocation2 + $0x60] sm:$0xff]
    %v309 = vld [vmem:[#allocation2 + $0x68] sm:$0xff]
    %v310 = vld [vmem:[#allocation2 + $0x70] sm:$0xff]
    %v311 = vld [vmem:[#allocation2 + $0x78] sm:$0xff]
    %v312 = vld [vmem:[#allocation2 + $0x80] sm:$0xff]
    %v313 = vld [vmem:[#allocation2 + $0x88] sm:$0xff]
    %v314 = vld [vmem:[#allocation2 + $0x90] sm:$0xff]
    %v315 = vld [vmem:[#allocation2 + $0x98] sm:$0xff]
    %v316 = vld [vmem:[#allocation2 + $0xa0] sm:$0xff]
    %v317 = vld [vmem:[#allocation2 + $0xa8] sm:$0xff]
    %v318 = vld [vmem:[#allocation2 + $0xb0] sm:$0xff]
    %v319 = vld [vmem:[#allocation2 + $0xb8] sm:$0xff]
    %v320 = vld [vmem:[#allocation2 + $0xc0] sm:$0xff]
    %v321 = vld [vmem:[#allocation2 + $0xc8] sm:$0xff]
    %v322 = vld [vmem:[#allocation2 + $0xd0] sm:$0xff]
    %v323 = vld [vmem:[#allocation2 + $0xd8] sm:$0xff]
    %v324 = vld [vmem:[#allocation2 + $0xe0] sm:$0xff]
    %v325 = vld [vmem:[#allocation2 + $0xe8] sm:$0xff]
    %v326 = vld [vmem:[#allocation2 + $0xf0] sm:$0xff]
    %v327 = vld [vmem:[#allocation2 + $0xf8] sm:$0xff]
    %v328 = vld [vmem:[#allocation2 + $0x100] sm:$0xff]
    %v329 = vld [vmem:[#allocation2 + $0x108] sm:$0xff]
    %v330 = vld [vmem:[#allocation2 + $0x110] sm:$0xff]
    %v331 = vld [vmem:[#allocation2 + $0x118] sm:$0xff]
    %v332 = vld [vmem:[#allocation2 + $0x120] sm:$0xff]
    %v333 = vld [vmem:[#allocation2 + $0x128] sm:$0xff]
    %v334 = vld [vmem:[#allocation2 + $0x130] sm:$0xff]
    %v335 = vld [vmem:[#allocation2 + $0x138] sm:$0xff]
    %v336 = vld [vmem:[#allocation2 + $0x140] sm:$0xff]
    %v337 = vld [vmem:[#allocation2 + $0x148] sm:$0xff]
    %v338 = vld [vmem:[#allocation2 + $0x150] sm:$0xff]
    %v339 = vld [vmem:[#allocation2 + $0x158] sm:$0xff]
    %v340 = vld [vmem:[#allocation2 + $0x160] sm:$0xff]
    %v341 = vld [vmem:[#allocation2 + $0x168] sm:$0xff]
    %v342 = vld [vmem:[#allocation2 + $0x170] sm:$0xff]
    %v343 = vld [vmem:[#allocation2 + $0x178] sm:$0xff]
    %v344 = vld [vmem:[#allocation2 + $0x180] sm:$0xff]
    %v345 = vld [vmem:[#allocation2 + $0x188] sm:$0xff]
    %v346 = vld [vmem:[#allocation2 + $0x190] sm:$0xff]
    %v347 = vld [vmem:[#allocation2 + $0x198] sm:$0xff]
    %v348 = vld [vmem:[#allocation2 + $0x1a0] sm:$0xff]
    %v349 = vld [vmem:[#allocation2 + $0x1a8] sm:$0xff]
    %v350 = vpack.c.bf16 %v302, %v296
    %v351 = vpack.c.bf16 %v303, %v297
    %v352 = vpack.c.bf16 %v304, %v298
    %v353 = vpack.c.bf16 %v305, %v299
    %v354 = vpack.c.bf16 %v306, %v300
    %v355 = vpack.c.bf16 %v307, %v301
    %v356 = vpack.c.bf16 %v314, %v308
    %v357 = vpack.c.bf16 %v315, %v309
    %v358 = vpack.c.bf16 %v316, %v310
    %v359 = vpack.c.bf16 %v317, %v311
    %v360 = vpack.c.bf16 %v318, %v312
    %v361 = vpack.c.bf16 %v319, %v313
    %v362 = vpack.c.bf16 %v326, %v320
    %v363 = vpack.c.bf16 %v327, %v321
    %v364 = vpack.c.bf16 %v328, %v322
    %v365 = vpack.c.bf16 %v329, %v323
    %v366 = vpack.c.bf16 %v330, %v324
    %v367 = vpack.c.bf16 %v331, %v325
    %v368 = vpack.c.bf16 %v338, %v332
    %v369 = vpack.c.bf16 %v339, %v333
    %v370 = vpack.c.bf16 %v340, %v334
    %v371 = vpack.c.bf16 %v341, %v335
    %v372 = vpack.c.bf16 %v342, %v336
    %v373 = vpack.c.bf16 %v343, %v337
    %v374 = vpack.c.bf16 %v344, %v344
    %v375 = vpack.c.bf16 %v345, %v345
    %v376 = vpack.c.bf16 %v346, %v346
    %v377 = vpack.c.bf16 %v347, %v347
    %v378 = vpack.c.bf16 %v348, %v348
    %v379 = vpack.c.bf16 %v349, %v349
    %v380 = vld [vmem:[%s1] sm:$0x3]
    %v381 = vld [vmem:[%s2] sm:$0xf]
    %383 = vset.pattern.permute.xlu0 0
    %384 = vperm.xlu0 %383, %v381
    %v385 = vpop.permute.xlu0 %384
    %vm387 = vcmask 588800
    %v389 = vsel %vm387, %v380, 0
    %vm391 = vcmask 1043456
    %v393 = vsel %vm391, %v374, 0
    %v396 = vsel %vm391, %v375, 0
    %v399 = vsel %vm391, %v376, 0
    %v402 = vsel %vm391, %v377, 0
    %v405 = vsel %vm391, %v378, 0
    %v408 = vsel %vm391, %v379, 0
    %410 = vmatpush.bf16.msra.mxu0 0
    %411 = vmatpush.bf16.msra.mxu0 0
    %412 = vmatpush.bf16.msra.mxu0 0
    %413 = vmatpush.bf16.msra.mxu0 %v393
    %414 = vmatpush.bf16.msra.mxu0 %v368
    %415 = vmatpush.bf16.msra.mxu0 %v362
    %416 = vmatpush.bf16.msra.mxu0 %v356
    %417 = vmatpush.bf16.msra.mxu0 %v350
    %418 = vmatmul.bf16.gmra.mxu0 %v389
    %v419 = vpop.f32.mrf.mxu0
    %v420 = vadd.f32 %v385, %v419
    %v421 = vpop.f32.mrf.mxu0
    %422 = vdwg.mxu0
    %423 = vmatpush.bf16.msra.mxu0 0
    %424 = vmatpush.bf16.msra.mxu0 0
    %425 = vmatpush.bf16.msra.mxu0 0
    %426 = vmatpush.bf16.msra.mxu0 %v396
    %427 = vmatpush.bf16.msra.mxu0 %v369
    %428 = vmatpush.bf16.msra.mxu0 %v363
    %429 = vmatpush.bf16.msra.mxu0 %v357
    %430 = vmatpush.bf16.msra.mxu0 %v351
    %431 = vmatmul.bf16.gmra.mxu0 %v389
    %v432 = vpop.f32.mrf.mxu0
    %v433 = vadd.f32 %v385, %v432
    %v434 = vpop.f32.mrf.mxu0
    %435 = vdwg.mxu0
    %436 = vmatpush.bf16.msra.mxu0 0
    %437 = vmatpush.bf16.msra.mxu0 0
    %438 = vmatpush.bf16.msra.mxu0 0
    %439 = vmatpush.bf16.msra.mxu0 %v399
    %440 = vmatpush.bf16.msra.mxu0 %v370
    %441 = vmatpush.bf16.msra.mxu0 %v364
    %442 = vmatpush.bf16.msra.mxu0 %v358
    %443 = vmatpush.bf16.msra.mxu0 %v352
    %444 = vmatmul.bf16.gmra.mxu0 %v389
    %v445 = vpop.f32.mrf.mxu0
    %v446 = vadd.f32 %v385, %v445
    %v447 = vpop.f32.mrf.mxu0
    %448 = vdwg.mxu0
    %449 = vmatpush.bf16.msra.mxu0 0
    %450 = vmatpush.bf16.msra.mxu0 0
    %451 = vmatpush.bf16.msra.mxu0 0
    %452 = vmatpush.bf16.msra.mxu0 %v402
    %453 = vmatpush.bf16.msra.mxu0 %v371
    %454 = vmatpush.bf16.msra.mxu0 %v365
    %455 = vmatpush.bf16.msra.mxu0 %v359
    %456 = vmatpush.bf16.msra.mxu0 %v353
    %457 = vmatmul.bf16.gmra.mxu0 %v389
    %v458 = vpop.f32.mrf.mxu0
    %v459 = vadd.f32 %v385, %v458
    %v460 = vpop.f32.mrf.mxu0
    %461 = vdwg.mxu0
    %462 = vmatpush.bf16.msra.mxu0 0
    %463 = vmatpush.bf16.msra.mxu0 0
    %464 = vmatpush.bf16.msra.mxu0 0
    %465 = vmatpush.bf16.msra.mxu0 %v405
    %466 = vmatpush.bf16.msra.mxu0 %v372
    %467 = vmatpush.bf16.msra.mxu0 %v366
    %468 = vmatpush.bf16.msra.mxu0 %v360
    %469 = vmatpush.bf16.msra.mxu0 %v354
    %470 = vmatmul.bf16.gmra.mxu0 %v389
    %v471 = vpop.f32.mrf.mxu0
    %v472 = vadd.f32 %v385, %v471
    %v473 = vpop.f32.mrf.mxu0
    %474 = vdwg.mxu0
    %475 = vmatpush.bf16.msra.mxu0 0
    %476 = vmatpush.bf16.msra.mxu0 0
    %477 = vmatpush.bf16.msra.mxu0 0
    %478 = vmatpush.bf16.msra.mxu0 %v408
    %479 = vmatpush.bf16.msra.mxu0 %v373
    %480 = vmatpush.bf16.msra.mxu0 %v367
    %481 = vmatpush.bf16.msra.mxu0 %v361
    %482 = vmatpush.bf16.msra.mxu0 %v355
    %483 = vmatmul.bf16.gmra.mxu0 %v389
    %v484 = vpop.f32.mrf.mxu0
    %v485 = vadd.f32 %v385, %v484
    %v486 = vpop.f32.mrf.mxu0
    %487 = vdwg.mxu0
    %v488 = vmul.f32 %v420, %v70
    %v489 = vmul.f32 %v433, %v71
    %v490 = vmul.f32 %v446, %v72
    %v491 = vmul.f32 %v459, %v73
    %v492 = vmul.f32 %v472, %v74
    %v493 = vmul.f32 %v485, %v75
    %v494 = vsel %vm391, %v488, 0.0
    %v495 = vsel %vm391, %v489, 0.0
    %v496 = vadd.f32 %v494, %v495
    %v497 = vsel %vm391, %v490, 0.0
    %v498 = vadd.f32 %v496, %v497
    %v499 = vsel %vm391, %v491, 0.0
    %v500 = vadd.f32 %v498, %v499
    %v501 = vsel %vm391, %v492, 0.0
    %v502 = vadd.f32 %v500, %v501
    %v503 = vsel %vm391, %v493, 0.0
    %v504 = vadd.f32 %v502, %v503
    %505 = vadd.xlane.f32.xlu0 %v504
    %v506 = vpop.xlane.xlu0 %505
    %vm507 = vcmask 3072
    %508 = vst.msk [vmem:[#allocation3] sm:$0xf] %vm507, %v506
    %v509 = vmul.f32 %v488, %v488
    %v510 = vmul.f32 %v489, %v489
    %v511 = vmul.f32 %v490, %v490
    %v512 = vmul.f32 %v491, %v491
    %v513 = vmul.f32 %v492, %v492
    %v514 = vmul.f32 %v493, %v493
    %v515 = vsel %vm391, %v509, 0.0
    %v516 = vsel %vm391, %v510, 0.0
    %v517 = vadd.f32 %v515, %v516
    %v518 = vsel %vm391, %v511, 0.0
    %v519 = vadd.f32 %v517, %v518
    %v520 = vsel %vm391, %v512, 0.0
    %v521 = vadd.f32 %v519, %v520
    %v522 = vsel %vm391, %v513, 0.0
    %v523 = vadd.f32 %v521, %v522
    %v524 = vsel %vm391, %v514, 0.0
    %v525 = vadd.f32 %v523, %v524
    %526 = vadd.xlane.f32.xlu0 %v525
    %v527 = vpop.xlane.xlu0 %526
    %528 = vst.msk [vmem:[#allocation5] sm:$0xf] %vm507, %v527
    %v529 = vpack.c.bf16 %v489, %v488
    %v530 = vpack.c.bf16 %v491, %v490
    %v531 = vpack.c.bf16 %v493, %v492
    %v535 = vrot.slane %v529, 2
    %v536 = vrot.slane %v530, 4
    %v537 = vrot.slane %v530, 6
    %v538 = vrot.slane %v531, 2
    %vm539 = vcmask 1041408
    %v542 = vsel %vm539, %v529, %v535
    %vm543 = vcmask 1045508
    %v546 = vsel %vm543, %v536, %v537
    %v547 = vsel %vm391, %v542, %v546
    %v550 = vsel %vm539, %v531, %v538
    %553 = vst [vmem:[%s6] sm:$0xff] %v547
    %554 = vst [vmem:[%s6 + $0x8] sm:$0xf] %v550
    // Predicated region
    $region26: #{model_forward.27} parent=1 // pred_check
      _
    $region27: #{model_forward.27} parent=1 // pred_check_branch
      %556 = sbr.rel (0) target = $region29
    $region28: #{model_forward.27} parent=1 // pred_region
      _
    $region29: #{model_forward.27} parent=1 // pred_fallthru
      _
    // Predicated region
    $region30: #{model_forward.27} parent=1 // pred_check
      _
    $region31: #{model_forward.27} parent=1 // pred_check_branch
      %558 = sbr.rel (0) target = $region33
    $region32: #{model_forward.27} parent=1 // pred_region
      %560 = vsyncadd [#allocation4], 0
      %s562 = sshll.u32 [#allocation3], 4
      %s563 = int_to_ptr.vmem [resolvable:$true] %s562
      %s564 = sshll.u32 %s7, 4
      %s565 = int_to_ptr.hbm [resolvable:$true] %s564
      %567 = dma.vmem_to_hbm [thread:$0]  %s563, 64, %s565, [#allocation4]
    $region33: #{model_forward.27} parent=1 // pred_fallthru
      _
    // Predicated region
    $region34: #{model_forward.27} parent=1 // pred_check
      _
    $region35: #{model_forward.27} parent=1 // pred_check_branch
      %569 = sbr.rel (0) target = $region37
    $region36: #{model_forward.27} parent=1 // pred_region
      %571 = vsyncadd [#allocation6], 0
      %s573 = sshll.u32 [#allocation5], 4
      %s574 = int_to_ptr.vmem [resolvable:$true] %s573
      %s575 = sshll.u32 %s8, 4
      %s576 = int_to_ptr.hbm [resolvable:$true] %s575
      %578 = dma.vmem_to_hbm [thread:$0]  %s574, 64, %s576, [#allocation6]
    $region37: #{model_forward.27} parent=1 // pred_fallthru
      _
    // Predicated region
    $region38: #{model_forward.27} parent=1 // pred_check
      _
    $region39: #{model_forward.27} parent=1 // pred_check_branch
      %580 = sbr.rel (0) target = $region41
    $region40: #{model_forward.27} parent=1 // pred_region
      _
    $region41: #{model_forward.27} parent=1 // pred_fallthru
      _
    // Predicated region
    $region42: #{model_forward.27} parent=1 // pred_check
      _
    $region43: #{model_forward.27} parent=1 // pred_check_branch
      %582 = sbr.rel (0) target = $region45
    $region44: #{model_forward.27} parent=1 // pred_region
      %584 = dma.done [#allocation4], 64
    $region45: #{model_forward.27} parent=1 // pred_fallthru
      _
    // Predicated region
    $region46: #{model_forward.27} parent=1 // pred_check
      _
    $region47: #{model_forward.27} parent=1 // pred_check_branch
      %586 = sbr.rel (0) target = $region49
    $region48: #{model_forward.27} parent=1 // pred_region
      %588 = dma.done [#allocation6], 64
    $region49: #{model_forward.27} parent=1 // pred_fallthru
      _
    %589 = vsyncpa [#allocation4], 1
    %590 = vsyncpa [#allocation6], 1

// kernel: model_forward.26
$region0: #{model_forward.26}
  #allocation0 [shape = 'u32[]', space=smem, size = 0x4, offset = 0x4, fixed_abs, tag = 'smem constant byte address 0x4 - core index']
  #allocation1 [shape = 'u32[72,128]{1,0:T(1,128)}', space=vmem, size = 0x9000, scoped, tag = 'internal scratch']
  #allocation2 [shape = 'f32[144,768]{1,0:T(8,128)}', space=vmem, size = 0x6c000, scoped, tag = 'scratch operand']
  %s0 = inlined_call_operand.vmem [shape: bf16[8,768], index: 0, kind: input, shape index: {}]
  %s1 = inlined_call_operand.vmem [shape: bf16[8,768], index: 1, kind: input, shape index: {}]
  %s2 = inlined_call_operand.vmem [shape: bf16[8,144], index: 2, kind: input, shape index: {}]
  %s3 = inlined_call_operand.vmem [shape: f32[8,1], index: 3, kind: input, shape index: {}]
  %s4 = inlined_call_operand.vmem [shape: f32[8,1], index: 4, kind: input, shape index: {}]
  %s5 = inlined_call_operand.vmem [shape: f32[8,1], index: 5, kind: input, shape index: {}]
  %s6 = inlined_call_operand.vmem [shape: f32[8,1], index: 6, kind: input, shape index: {}]
  %s7 = inlined_call_operand.vmem [shape: f32[8,1], index: 7, kind: input, shape index: {}]
  %s8 = inlined_call_operand.vmem [shape: f32[1,768], index: 8, kind: input, shape index: {}]
  %s9 = inlined_call_operand.vmem [shape: bf16[8,768], index: 9, kind: output, shape index: {0}]
  %s10 = inlined_call_operand.vmem [shape: f32[8,1], index: 10, kind: output, shape index: {1}]
  %s11 = inlined_call_operand.vmem [shape: f32[8,1], index: 11, kind: output, shape index: {2}]
  %12 = xla_tuple %s9, %s10, %s11
  %s13 = sld [smem:[#allocation0]]
  $region62: #{model_forward.26} parent=0
    _
  %s15 = ssub.s32 1, %s13
  %s16 = scalar_select 0, %s15, %s13
  // Predicated region
  $region2: #{model_forward.26} parent=0 // pred_check
    _
  $region3: #{model_forward.26} parent=0 // pred_check_branch
    %18 = sbr.rel (0) target = $region5
  $region4: #{model_forward.26} parent=0 // pred_region
    _
  $region5: #{model_forward.26} parent=0 // pred_fallthru
    _
  // Predicated region
  $region6: #{model_forward.26} parent=0 // pred_check
    _
  $region7: #{model_forward.26} parent=0 // pred_check_branch
    %20 = sbr.rel (0) target = $region9
  $region8: #{model_forward.26} parent=0 // pred_region
    _
  $region9: #{model_forward.26} parent=0 // pred_fallthru
    _
  // Predicated region
  $region10: #{model_forward.26} parent=0 // pred_check
    _
  $region11: #{model_forward.26} parent=0 // pred_check_branch
    %22 = sbr.rel (0) target = $region13
  $region12: #{model_forward.26} parent=0 // pred_region
    _
  $region13: #{model_forward.26} parent=0 // pred_fallthru
    _
  // Predicated region
  $region14: #{model_forward.26} parent=0 // pred_check
    _
  $region15: #{model_forward.26} parent=0 // pred_check_branch
    %24 = sbr.rel (0) target = $region17
  $region16: #{model_forward.26} parent=0 // pred_region
    _
  $region17: #{model_forward.26} parent=0 // pred_fallthru
    _
  // Predicated region
  $region18: #{model_forward.26} parent=0 // pred_check
    _
  $region19: #{model_forward.26} parent=0 // pred_check_branch
    %26 = sbr.rel (0) target = $region21
  $region20: #{model_forward.26} parent=0 // pred_region
    _
  $region21: #{model_forward.26} parent=0 // pred_fallthru
    _
  // Predicated region
  $region22: #{model_forward.26} parent=0 // pred_check
    _
  $region23: #{model_forward.26} parent=0 // pred_check_branch
    %28 = sbr.rel (0) target = $region25
  $region24: #{model_forward.26} parent=0 // pred_region
    _
  $region25: #{model_forward.26} parent=0 // pred_fallthru
    _
  // Predicated region
  $region26: #{model_forward.26} parent=0 // pred_check
    _
  $region27: #{model_forward.26} parent=0 // pred_check_branch
    %30 = sbr.rel (0) target = $region29
  $region28: #{model_forward.26} parent=0 // pred_region
    _
  $region29: #{model_forward.26} parent=0 // pred_fallthru
    _
  // Predicated region
  $region30: #{model_forward.26} parent=0 // pred_check
    _
  $region31: #{model_forward.26} parent=0 // pred_check_branch
    %32 = sbr.rel (0) target = $region33
  $region32: #{model_forward.26} parent=0 // pred_region
    _
  $region33: #{model_forward.26} parent=0 // pred_fallthru
    _
  // Predicated region
  $region34: #{model_forward.26} parent=0 // pred_check
    _
  $region35: #{model_forward.26} parent=0 // pred_check_branch
    %34 = sbr.rel (0) target = $region37
  $region36: #{model_forward.26} parent=0 // pred_region
    _
  $region37: #{model_forward.26} parent=0 // pred_fallthru
    _
  %v36 = vld [vmem:[%s8] sm:$0x3f]
  %v37 = vld [vmem:[%s0] sm:$0xff]
  %v38 = vld [vmem:[%s0 + $0x8] sm:$0xff]
  %v39 = vld [vmem:[%s0 + $0x10] sm:$0xff]
  %v40 = vunpack.c.l.bf16 %v37
  %v41 = vunpack.c.h.bf16 %v37
  %v42 = vunpack.c.l.bf16 %v38
  %v43 = vunpack.c.h.bf16 %v38
  %v44 = vunpack.c.l.bf16 %v39
  %v45 = vunpack.c.h.bf16 %v39
  %v46 = vld [vmem:[%s4] sm:$0xff]
  %48 = vset.pattern.permute.xlu0 0
  %49 = vperm.xlu0 %48, %v46
  %v50 = vpop.permute.xlu0 %49
  %v52 = vmul.f32 %v40, %v50
  %v53 = vmul.f32 %v41, %v50
  %v54 = vmul.f32 %v42, %v50
  %v55 = vmul.f32 %v43, %v50
  %v56 = vmul.f32 %v44, %v50
  %v57 = vmul.f32 %v45, %v50
  %v58 = vld [vmem:[%s5] sm:$0xff]
  %60 = vset.pattern.permute.xlu0 0
  %61 = vperm.xlu0 %60, %v58
  %v62 = vpop.permute.xlu0 %61
  %v64 = vadd.f32 %v52, %v62
  %v65 = vadd.f32 %v53, %v62
  %v66 = vadd.f32 %v54, %v62
  %v67 = vadd.f32 %v55, %v62
  %v68 = vadd.f32 %v56, %v62
  %v69 = vadd.f32 %v57, %v62
  %v70 = vmax.f32 %v64, 0.0
  %v71 = vmax.f32 %v65, 0.0
  %v72 = vmax.f32 %v66, 0.0
  %v73 = vmax.f32 %v67, 0.0
  %v74 = vmax.f32 %v68, 0.0
  %v75 = vmax.f32 %v69, 0.0
  %v77 = vperm.slane %v36, 0
  %v78 = vperm.slane %v36, 1
  %v79 = vperm.slane %v36, 2
  %v80 = vperm.slane %v36, 3
  %v81 = vperm.slane %v36, 4
  %v82 = vperm.slane %v36, 5
  %v89 = vmul.f32 %v70, %v77
  %v90 = vmul.f32 %v71, %v78
  %v91 = vmul.f32 %v72, %v79
  %v92 = vmul.f32 %v73, %v80
  %v93 = vmul.f32 %v74, %v81
  %v94 = vmul.f32 %v75, %v82
  %95 = vrot.lane.b32.xlu0 %v89, 19
  %v96 = vpop.permute.xlu0 %95
  %97 = vrot.lane.b32.xlu0 %v90, 19
  %v98 = vpop.permute.xlu0 %97
  %99 = vrot.lane.b32.xlu0 %v91, 19
  %v100 = vpop.permute.xlu0 %99
  %101 = vrot.lane.b32.xlu0 %v92, 19
  %v102 = vpop.permute.xlu0 %101
  %103 = vrot.lane.b32.xlu0 %v93, 19
  %v104 = vpop.permute.xlu0 %103
  %105 = vrot.lane.b32.xlu0 %v94, 19
  %v106 = vpop.permute.xlu0 %105
  %v107 = vlaneseq
  %v108 = vand.u32 %v107, 127
  %vm109 = vcmp.lt.s32.totalorder %v108, 19
  %v110 = vsel %vm109, %v104, %v106
  %v111 = vsel %vm109, %v102, %v104
  %v112 = vsel %vm109, %v100, %v102
  %v113 = vsel %vm109, %v98, %v100
  %v114 = vsel %vm109, %v96, %v98
  %v115 = vsel %vm109, %v106, %v96
  %116 = vst [vmem:[#allocation2] sm:$0xff] %v115
  %117 = vst [vmem:[#allocation2 + $0x8] sm:$0xff] %v114
  %118 = vst [vmem:[#allocation2 + $0x10] sm:$0xff] %v113
  %119 = vst [vmem:[#allocation2 + $0x18] sm:$0xff] %v112
  %120 = vst [vmem:[#allocation2 + $0x20] sm:$0xff] %v111
  %121 = vst [vmem:[#allocation2 + $0x28] sm:$0xff] %v110
  %122 = vrot.lane.b32.xlu0 %v89, 18
  %v123 = vpop.permute.xlu0 %122
  %124 = vrot.lane.b32.xlu0 %v90, 18
  %v125 = vpop.permute.xlu0 %124
  %126 = vrot.lane.b32.xlu0 %v91, 18
  %v127 = vpop.permute.xlu0 %126
  %128 = vrot.lane.b32.xlu0 %v92, 18
  %v129 = vpop.permute.xlu0 %128
  %130 = vrot.lane.b32.xlu0 %v93, 18
  %v131 = vpop.permute.xlu0 %130
  %132 = vrot.lane.b32.xlu0 %v94, 18
  %v133 = vpop.permute.xlu0 %132
  %vm134 = vcmp.lt.s32.totalorder %v108, 18
  %v135 = vsel %vm134, %v131, %v133
  %v136 = vsel %vm134, %v129, %v131
  %v137 = vsel %vm134, %v127, %v129
  %v138 = vsel %vm134, %v125, %v127
  %v139 = vsel %vm134, %v123, %v125
  %v140 = vsel %vm134, %v133, %v123
  %141 = vst [vmem:[#allocation2 + $0x60] sm:$0xff] %v140
  %142 = vst [vmem:[#allocation2 + $0x68] sm:$0xff] %v139
  %143 = vst [vmem:[#allocation2 + $0x70] sm:$0xff] %v138
  %144 = vst [vmem:[#allocation2 + $0x78] sm:$0xff] %v137
  %145 = vst [vmem:[#allocation2 + $0x80] sm:$0xff] %v136
  %146 = vst [vmem:[#allocation2 + $0x88] sm:$0xff] %v135
  %147 = vrot.lane.b32.xlu0 %v89, 17
  %v148 = vpop.permute.xlu0 %147
  %149 = vrot.lane.b32.xlu0 %v90, 17
  %v150 = vpop.permute.xlu0 %149
  %151 = vrot.lane.b32.xlu0 %v91, 17
  %v152 = vpop.permute.xlu0 %151
  %153 = vrot.lane.b32.xlu0 %v92, 17
  %v154 = vpop.permute.xlu0 %153
  %155 = vrot.lane.b32.xlu0 %v93, 17
  %v156 = vpop.permute.xlu0 %155
  %157 = vrot.lane.b32.xlu0 %v94, 17
  %v158 = vpop.permute.xlu0 %157
  %vm159 = vcmp.lt.s32.totalorder %v108, 17
  %v160 = vsel %vm159, %v156, %v158
  %v161 = vsel %vm159, %v154, %v156
  %v162 = vsel %vm159, %v152, %v154
  %v163 = vsel %vm159, %v150, %v152
  %v164 = vsel %vm159, %v148, %v150
  %v165 = vsel %vm159, %v158, %v148
  %166 = vst [vmem:[#allocation2 + $0xc0] sm:$0xff] %v165
  %167 = vst [vmem:[#allocation2 + $0xc8] sm:$0xff] %v164
  %168 = vst [vmem:[#allocation2 + $0xd0] sm:$0xff] %v163
  %169 = vst [vmem:[#allocation2 + $0xd8] sm:$0xff] %v162
  %170 = vst [vmem:[#allocation2 + $0xe0] sm:$0xff] %v161
  %171 = vst [vmem:[#allocation2 + $0xe8] sm:$0xff] %v160
  %172 = vrot.lane.b32.xlu0 %v89, 1
  %v173 = vpop.permute.xlu0 %172
  %174 = vrot.lane.b32.xlu0 %v90, 1
  %v175 = vpop.permute.xlu0 %174
  %176 = vrot.lane.b32.xlu0 %v91, 1
  %v177 = vpop.permute.xlu0 %176
  %178 = vrot.lane.b32.xlu0 %v92, 1
  %v179 = vpop.permute.xlu0 %178
  %180 = vrot.lane.b32.xlu0 %v93, 1
  %v181 = vpop.permute.xlu0 %180
  %182 = vrot.lane.b32.xlu0 %v94, 1
  %v183 = vpop.permute.xlu0 %182
  %vm184 = vcmp.lt.s32.totalorder %v108, 1
  %v185 = vsel %vm184, %v181, %v183
  %v186 = vsel %vm184, %v179, %v181
  %v187 = vsel %vm184, %v177, %v179
  %v188 = vsel %vm184, %v175, %v177
  %v189 = vsel %vm184, %v173, %v175
  %v190 = vsel %vm184, %v183, %v173
  %191 = vst [vmem:[#allocation2 + $0x120] sm:$0xff] %v190
  %192 = vst [vmem:[#allocation2 + $0x128] sm:$0xff] %v189
  %193 = vst [vmem:[#allocation2 + $0x130] sm:$0xff] %v188
  %194 = vst [vmem:[#allocation2 + $0x138] sm:$0xff] %v187
  %195 = vst [vmem:[#allocation2 + $0x140] sm:$0xff] %v186
  %196 = vst [vmem:[#allocation2 + $0x148] sm:$0xff] %v185
  %197 = vst [vmem:[#allocation2 + $0x180] sm:$0xff] %v89
  %198 = vst [vmem:[#allocation2 + $0x188] sm:$0xff] %v90
  %199 = vst [vmem:[#allocation2 + $0x190] sm:$0xff] %v91
  %200 = vst [vmem:[#allocation2 + $0x198] sm:$0xff] %v92
  %201 = vst [vmem:[#allocation2 + $0x1a0] sm:$0xff] %v93
  %202 = vst [vmem:[#allocation2 + $0x1a8] sm:$0xff] %v94
  %203 = vrot.lane.b32.xlu0 %v89, 127
  %v204 = vpop.permute.xlu0 %203
  %205 = vrot.lane.b32.xlu0 %v90, 127
  %v206 = vpop.permute.xlu0 %205
  %207 = vrot.lane.b32.xlu0 %v91, 127
  %v208 = vpop.permute.xlu0 %207
  %209 = vrot.lane.b32.xlu0 %v92, 127
  %v210 = vpop.permute.xlu0 %209
  %211 = vrot.lane.b32.xlu0 %v93, 127
  %v212 = vpop.permute.xlu0 %211
  %213 = vrot.lane.b32.xlu0 %v94, 127
  %v214 = vpop.permute.xlu0 %213
  %vm215 = vcmp.lt.s32.totalorder %v108, 127
  %v216 = vsel %vm215, %v212, %v214
  %v217 = vsel %vm215, %v210, %v212
  %v218 = vsel %vm215, %v208, %v210
  %v219 = vsel %vm215, %v206, %v208
  %v220 = vsel %vm215, %v204, %v206
  %v221 = vsel %vm215, %v214, %v204
  %222 = vst [vmem:[#allocation2 + $0x1e0] sm:$0xff] %v220
  %223 = vst [vmem:[#allocation2 + $0x1e8] sm:$0xff] %v219
  %224 = vst [vmem:[#allocation2 + $0x1f0] sm:$0xff] %v218
  %225 = vst [vmem:[#allocation2 + $0x1f8] sm:$0xff] %v217
  %226 = vst [vmem:[#allocation2 + $0x200] sm:$0xff] %v216
  %227 = vst [vmem:[#allocation2 + $0x208] sm:$0xff] %v221
  %228 = vrot.lane.b32.xlu0 %v89, 111
  %v229 = vpop.permute.xlu0 %228
  %230 = vrot.lane.b32.xlu0 %v90, 111
  %v231 = vpop.permute.xlu0 %230
  %232 = vrot.lane.b32.xlu0 %v91, 111
  %v233 = vpop.permute.xlu0 %232
  %234 = vrot.lane.b32.xlu0 %v92, 111
  %v235 = vpop.permute.xlu0 %234
  %236 = vrot.lane.b32.xlu0 %v93, 111
  %v237 = vpop.permute.xlu0 %236
  %238 = vrot.lane.b32.xlu0 %v94, 111
  %v239 = vpop.permute.xlu0 %238
  %vm240 = vcmp.lt.s32.totalorder %v108, 111
  %v241 = vsel %vm240, %v237, %v239
  %v242 = vsel %vm240, %v235, %v237
  %v243 = vsel %vm240, %v233, %v235
  %v244 = vsel %vm240, %v231, %v233
  %v245 = vsel %vm240, %v229, %v231
  %v246 = vsel %vm240, %v239, %v229
  %247 = vst [vmem:[#allocation2 + $0x240] sm:$0xff] %v245
  %248 = vst [vmem:[#allocation2 + $0x248] sm:$0xff] %v244
  %249 = vst [vmem:[#allocation2 + $0x250] sm:$0xff] %v243
  %250 = vst [vmem:[#allocation2 + $0x258] sm:$0xff] %v242
  %251 = vst [vmem:[#allocation2 + $0x260] sm:$0xff] %v241
  %252 = vst [vmem:[#allocation2 + $0x268] sm:$0xff] %v246
  %253 = vrot.lane.b32.xlu0 %v89, 110
  %v254 = vpop.permute.xlu0 %253
  %255 = vrot.lane.b32.xlu0 %v90, 110
  %v256 = vpop.permute.xlu0 %255
  %257 = vrot.lane.b32.xlu0 %v91, 110
  %v258 = vpop.permute.xlu0 %257
  %259 = vrot.lane.b32.xlu0 %v92, 110
  %v260 = vpop.permute.xlu0 %259
  %261 = vrot.lane.b32.xlu0 %v93, 110
  %v262 = vpop.permute.xlu0 %261
  %263 = vrot.lane.b32.xlu0 %v94, 110
  %v264 = vpop.permute.xlu0 %263
  %vm265 = vcmp.lt.s32.totalorder %v108, 110
  %v266 = vsel %vm265, %v262, %v264
  %v267 = vsel %vm265, %v260, %v262
  %v268 = vsel %vm265, %v258, %v260
  %v269 = vsel %vm265, %v256, %v258
  %v270 = vsel %vm265, %v254, %v256
  %v271 = vsel %vm265, %v264, %v254
  %272 = vst [vmem:[#allocation2 + $0x2a0] sm:$0xff] %v270
  %273 = vst [vmem:[#allocation2 + $0x2a8] sm:$0xff] %v269
  %274 = vst [vmem:[#allocation2 + $0x2b0] sm:$0xff] %v268
  %275 = vst [vmem:[#allocation2 + $0x2b8] sm:$0xff] %v267
  %276 = vst [vmem:[#allocation2 + $0x2c0] sm:$0xff] %v266
  %277 = vst [vmem:[#allocation2 + $0x2c8] sm:$0xff] %v271
  %278 = vrot.lane.b32.xlu0 %v89, 109
  %v279 = vpop.permute.xlu0 %278
  %280 = vrot.lane.b32.xlu0 %v90, 109
  %v281 = vpop.permute.xlu0 %280
  %282 = vrot.lane.b32.xlu0 %v91, 109
  %v283 = vpop.permute.xlu0 %282
  %284 = vrot.lane.b32.xlu0 %v92, 109
  %v285 = vpop.permute.xlu0 %284
  %286 = vrot.lane.b32.xlu0 %v93, 109
  %v287 = vpop.permute.xlu0 %286
  %288 = vrot.lane.b32.xlu0 %v94, 109
  %v289 = vpop.permute.xlu0 %288
  %vm290 = vcmp.lt.s32.totalorder %v108, 109
  %v291 = vsel %vm290, %v287, %v289
  %v292 = vsel %vm290, %v285, %v287
  %v293 = vsel %vm290, %v283, %v285
  %v294 = vsel %vm290, %v281, %v283
  %v295 = vsel %vm290, %v279, %v281
  %v296 = vsel %vm290, %v289, %v279
  %297 = vst [vmem:[#allocation2 + $0x300] sm:$0xff] %v295
  %298 = vst [vmem:[#allocation2 + $0x308] sm:$0xff] %v294
  %299 = vst [vmem:[#allocation2 + $0x310] sm:$0xff] %v293
  %300 = vst [vmem:[#allocation2 + $0x318] sm:$0xff] %v292
  %301 = vst [vmem:[#allocation2 + $0x320] sm:$0xff] %v291
  %302 = vst [vmem:[#allocation2 + $0x328] sm:$0xff] %v296
  %v303 = vld [vmem:[%s1] sm:$0xff]
  %v304 = vld [vmem:[%s1 + $0x8] sm:$0xff]
  %v305 = vld [vmem:[%s1 + $0x10] sm:$0xff]
  %v306 = vunpack.c.l.bf16 %v303
  %v307 = vunpack.c.h.bf16 %v303
  %v308 = vunpack.c.l.bf16 %v304
  %v309 = vunpack.c.h.bf16 %v304
  %v310 = vunpack.c.l.bf16 %v305
  %v311 = vunpack.c.h.bf16 %v305
  %v312 = vld [vmem:[%s6] sm:$0xff]
  %314 = vset.pattern.permute.xlu0 0
  %315 = vperm.xlu0 %314, %v312
  %v316 = vpop.permute.xlu0 %315
  %v318 = vmul.f32 %v306, %v316
  %v319 = vmul.f32 %v307, %v316
  %v320 = vmul.f32 %v308, %v316
  %v321 = vmul.f32 %v309, %v316
  %v322 = vmul.f32 %v310, %v316
  %v323 = vmul.f32 %v311, %v316
  %v324 = vld [vmem:[%s7] sm:$0xff]
  %326 = vset.pattern.permute.xlu0 0
  %327 = vperm.xlu0 %326, %v324
  %v328 = vpop.permute.xlu0 %327
  %v330 = vadd.f32 %v318, %v328
  %v331 = vadd.f32 %v319, %v328
  %v332 = vadd.f32 %v320, %v328
  %v333 = vadd.f32 %v321, %v328
  %v334 = vadd.f32 %v322, %v328
  %v335 = vadd.f32 %v323, %v328
  %v336 = vmax.f32 %v330, 0.0
  %v337 = vmax.f32 %v331, 0.0
  %v338 = vmax.f32 %v332, 0.0
  %v339 = vmax.f32 %v333, 0.0
  %v340 = vmax.f32 %v334, 0.0
  %v341 = vmax.f32 %v335, 0.0
  %v342 = vmul.f32 %v336, %v77
  %v343 = vmul.f32 %v337, %v78
  %v344 = vmul.f32 %v338, %v79
  %v345 = vmul.f32 %v339, %v80
  %v346 = vmul.f32 %v340, %v81
  %v347 = vmul.f32 %v341, %v82
  %348 = vrot.lane.b32.xlu0 %v342, 19
  %v349 = vpop.permute.xlu0 %348
  %350 = vrot.lane.b32.xlu0 %v343, 19
  %v351 = vpop.permute.xlu0 %350
  %352 = vrot.lane.b32.xlu0 %v344, 19
  %v353 = vpop.permute.xlu0 %352
  %354 = vrot.lane.b32.xlu0 %v345, 19
  %v355 = vpop.permute.xlu0 %354
  %356 = vrot.lane.b32.xlu0 %v346, 19
  %v357 = vpop.permute.xlu0 %356
  %358 = vrot.lane.b32.xlu0 %v347, 19
  %v359 = vpop.permute.xlu0 %358
  %v360 = vsel %vm109, %v357, %v359
  %v361 = vsel %vm109, %v355, %v357
  %v362 = vsel %vm109, %v353, %v355
  %v363 = vsel %vm109, %v351, %v353
  %v364 = vsel %vm109, %v349, %v351
  %v365 = vsel %vm109, %v359, %v349
  %366 = vst [vmem:[#allocation2 + $0x30] sm:$0xff] %v365
  %367 = vst [vmem:[#allocation2 + $0x38] sm:$0xff] %v364
  %368 = vst [vmem:[#allocation2 + $0x40] sm:$0xff] %v363
  %369 = vst [vmem:[#allocation2 + $0x48] sm:$0xff] %v362
  %370 = vst [vmem:[#allocation2 + $0x50] sm:$0xff] %v361
  %371 = vst [vmem:[#allocation2 + $0x58] sm:$0xff] %v360
  %372 = vrot.lane.b32.xlu0 %v342, 18
  %v373 = vpop.permute.xlu0 %372
  %374 = vrot.lane.b32.xlu0 %v343, 18
  %v375 = vpop.permute.xlu0 %374
  %376 = vrot.lane.b32.xlu0 %v344, 18
  %v377 = vpop.permute.xlu0 %376
  %378 = vrot.lane.b32.xlu0 %v345, 18
  %v379 = vpop.permute.xlu0 %378
  %380 = vrot.lane.b32.xlu0 %v346, 18
  %v381 = vpop.permute.xlu0 %380
  %382 = vrot.lane.b32.xlu0 %v347, 18
  %v383 = vpop.permute.xlu0 %382
  %v384 = vsel %vm134, %v381, %v383
  %v385 = vsel %vm134, %v379, %v381
  %v386 = vsel %vm134, %v377, %v379
  %v387 = vsel %vm134, %v375, %v377
  %v388 = vsel %vm134, %v373, %v375
  %v389 = vsel %vm134, %v383, %v373
  %390 = vst [vmem:[#allocation2 + $0x90] sm:$0xff] %v389
  %391 = vst [vmem:[#allocation2 + $0x98] sm:$0xff] %v388
  %392 = vst [vmem:[#allocation2 + $0xa0] sm:$0xff] %v387
  %393 = vst [vmem:[#allocation2 + $0xa8] sm:$0xff] %v386
  %394 = vst [vmem:[#allocation2 + $0xb0] sm:$0xff] %v385
  %395 = vst [vmem:[#allocation2 + $0xb8] sm:$0xff] %v384
  %396 = vrot.lane.b32.xlu0 %v342, 17
  %v397 = vpop.permute.xlu0 %396
  %398 = vrot.lane.b32.xlu0 %v343, 17
  %v399 = vpop.permute.xlu0 %398
  %400 = vrot.lane.b32.xlu0 %v344, 17
  %v401 = vpop.permute.xlu0 %400
  %402 = vrot.lane.b32.xlu0 %v345, 17
  %v403 = vpop.permute.xlu0 %402
  %404 = vrot.lane.b32.xlu0 %v346, 17
  %v405 = vpop.permute.xlu0 %404
  %406 = vrot.lane.b32.xlu0 %v347, 17
  %v407 = vpop.permute.xlu0 %406
  %v408 = vsel %vm159, %v405, %v407
  %v409 = vsel %vm159, %v403, %v405
  %v410 = vsel %vm159, %v401, %v403
  %v411 = vsel %vm159, %v399, %v401
  %v412 = vsel %vm159, %v397, %v399
  %v413 = vsel %vm159, %v407, %v397
  %414 = vst [vmem:[#allocation2 + $0xf0] sm:$0xff] %v413
  %415 = vst [vmem:[#allocation2 + $0xf8] sm:$0xff] %v412
  %416 = vst [vmem:[#allocation2 + $0x100] sm:$0xff] %v411
  %417 = vst [vmem:[#allocation2 + $0x108] sm:$0xff] %v410
  %418 = vst [vmem:[#allocation2 + $0x110] sm:$0xff] %v409
  %419 = vst [vmem:[#allocation2 + $0x118] sm:$0xff] %v408
  %420 = vrot.lane.b32.xlu0 %v342, 1
  %v421 = vpop.permute.xlu0 %420
  %422 = vrot.lane.b32.xlu0 %v343, 1
  %v423 = vpop.permute.xlu0 %422
  %424 = vrot.lane.b32.xlu0 %v344, 1
  %v425 = vpop.permute.xlu0 %424
  %426 = vrot.lane.b32.xlu0 %v345, 1
  %v427 = vpop.permute.xlu0 %426
  %428 = vrot.lane.b32.xlu0 %v346, 1
  %v429 = vpop.permute.xlu0 %428
  %430 = vrot.lane.b32.xlu0 %v347, 1
  %v431 = vpop.permute.xlu0 %430
  %v432 = vsel %vm184, %v429, %v431
  %v433 = vsel %vm184, %v427, %v429
  %v434 = vsel %vm184, %v425, %v427
  %v435 = vsel %vm184, %v423, %v425
  %v436 = vsel %vm184, %v421, %v423
  %v437 = vsel %vm184, %v431, %v421
  %438 = vst [vmem:[#allocation2 + $0x150] sm:$0xff] %v437
  %439 = vst [vmem:[#allocation2 + $0x158] sm:$0xff] %v436
  %440 = vst [vmem:[#allocation2 + $0x160] sm:$0xff] %v435
  %441 = vst [vmem:[#allocation2 + $0x168] sm:$0xff] %v434
  %442 = vst [vmem:[#allocation2 + $0x170] sm:$0xff] %v433
  %443 = vst [vmem:[#allocation2 + $0x178] sm:$0xff] %v432
  %444 = vst [vmem:[#allocation2 + $0x1b0] sm:$0xff] %v342
  %445 = vst [vmem:[#allocation2 + $0x1b8] sm:$0xff] %v343
  %446 = vst [vmem:[#allocation2 + $0x1c0] sm:$0xff] %v344
  %447 = vst [vmem:[#allocation2 + $0x1c8] sm:$0xff] %v345
  %448 = vst [vmem:[#allocation2 + $0x1d0] sm:$0xff] %v346
  %449 = vst [vmem:[#allocation2 + $0x1d8] sm:$0xff] %v347
  %450 = vrot.lane.b32.xlu0 %v342, 127
  %v451 = vpop.permute.xlu0 %450
  %452 = vrot.lane.b32.xlu0 %v343, 127
  %v453 = vpop.permute.xlu0 %452
  %454 = vrot.lane.b32.xlu0 %v344, 127
  %v455 = vpop.permute.xlu0 %454
  %456 = vrot.lane.b32.xlu0 %v345, 127
  %v457 = vpop.permute.xlu0 %456
  %458 = vrot.lane.b32.xlu0 %v346, 127
  %v459 = vpop.permute.xlu0 %458
  %460 = vrot.lane.b32.xlu0 %v347, 127
  %v461 = vpop.permute.xlu0 %460
  %v462 = vsel %vm215, %v459, %v461
  %v463 = vsel %vm215, %v457, %v459
  %v464 = vsel %vm215, %v455, %v457
  %v465 = vsel %vm215, %v453, %v455
  %v466 = vsel %vm215, %v451, %v453
  %v467 = vsel %vm215, %v461, %v451
  %468 = vst [vmem:[#allocation2 + $0x210] sm:$0xff] %v466
  %469 = vst [vmem:[#allocation2 + $0x218] sm:$0xff] %v465
  %470 = vst [vmem:[#allocation2 + $0x220] sm:$0xff] %v464
  %471 = vst [vmem:[#allocation2 + $0x228] sm:$0xff] %v463
  %472 = vst [vmem:[#allocation2 + $0x230] sm:$0xff] %v462
  %473 = vst [vmem:[#allocation2 + $0x238] sm:$0xff] %v467
  %474 = vrot.lane.b32.xlu0 %v342, 111
  %v475 = vpop.permute.xlu0 %474
  %476 = vrot.lane.b32.xlu0 %v343, 111
  %v477 = vpop.permute.xlu0 %476
  %478 = vrot.lane.b32.xlu0 %v344, 111
  %v479 = vpop.permute.xlu0 %478
  %480 = vrot.lane.b32.xlu0 %v345, 111
  %v481 = vpop.permute.xlu0 %480
  %482 = vrot.lane.b32.xlu0 %v346, 111
  %v483 = vpop.permute.xlu0 %482
  %484 = vrot.lane.b32.xlu0 %v347, 111
  %v485 = vpop.permute.xlu0 %484
  %v486 = vsel %vm240, %v483, %v485
  %v487 = vsel %vm240, %v481, %v483
  %v488 = vsel %vm240, %v479, %v481
  %v489 = vsel %vm240, %v477, %v479
  %v490 = vsel %vm240, %v475, %v477
  %v491 = vsel %vm240, %v485, %v475
  %492 = vst [vmem:[#allocation2 + $0x270] sm:$0xff] %v490
  %493 = vst [vmem:[#allocation2 + $0x278] sm:$0xff] %v489
  %494 = vst [vmem:[#allocation2 + $0x280] sm:$0xff] %v488
  %495 = vst [vmem:[#allocation2 + $0x288] sm:$0xff] %v487
  %496 = vst [vmem:[#allocation2 + $0x290] sm:$0xff] %v486
  %497 = vst [vmem:[#allocation2 + $0x298] sm:$0xff] %v491
  %498 = vrot.lane.b32.xlu0 %v342, 110
  %v499 = vpop.permute.xlu0 %498
  %500 = vrot.lane.b32.xlu0 %v343, 110
  %v501 = vpop.permute.xlu0 %500
  %502 = vrot.lane.b32.xlu0 %v344, 110
  %v503 = vpop.permute.xlu0 %502
  %504 = vrot.lane.b32.xlu0 %v345, 110
  %v505 = vpop.permute.xlu0 %504
  %506 = vrot.lane.b32.xlu0 %v346, 110
  %v507 = vpop.permute.xlu0 %506
  %508 = vrot.lane.b32.xlu0 %v347, 110
  %v509 = vpop.permute.xlu0 %508
  %v510 = vsel %vm265, %v507, %v509
  %v511 = vsel %vm265, %v505, %v507
  %v512 = vsel %vm265, %v503, %v505
  %v513 = vsel %vm265, %v501, %v503
  %v514 = vsel %vm265, %v499, %v501
  %v515 = vsel %vm265, %v509, %v499
  %516 = vst [vmem:[#allocation2 + $0x2d0] sm:$0xff] %v514
  %517 = vst [vmem:[#allocation2 + $0x2d8] sm:$0xff] %v513
  %518 = vst [vmem:[#allocation2 + $0x2e0] sm:$0xff] %v512
  %519 = vst [vmem:[#allocation2 + $0x2e8] sm:$0xff] %v511
  %520 = vst [vmem:[#allocation2 + $0x2f0] sm:$0xff] %v510
  %521 = vst [vmem:[#allocation2 + $0x2f8] sm:$0xff] %v515
  %522 = vrot.lane.b32.xlu0 %v342, 109
  %v523 = vpop.permute.xlu0 %522
  %524 = vrot.lane.b32.xlu0 %v343, 109
  %v525 = vpop.permute.xlu0 %524
  %526 = vrot.lane.b32.xlu0 %v344, 109
  %v527 = vpop.permute.xlu0 %526
  %528 = vrot.lane.b32.xlu0 %v345, 109
  %v529 = vpop.permute.xlu0 %528
  %530 = vrot.lane.b32.xlu0 %v346, 109
  %v531 = vpop.permute.xlu0 %530
  %532 = vrot.lane.b32.xlu0 %v347, 109
  %v533 = vpop.permute.xlu0 %532
  %v534 = vsel %vm290, %v531, %v533
  %v535 = vsel %vm290, %v529, %v531
  %v536 = vsel %vm290, %v527, %v529
  %v537 = vsel %vm290, %v525, %v527
  %v538 = vsel %vm290, %v523, %v525
  %v539 = vsel %vm290, %v533, %v523
  %540 = vst [vmem:[#allocation2 + $0x330] sm:$0xff] %v538
  %541 = vst [vmem:[#allocation2 + $0x338] sm:$0xff] %v537
  %542 = vst [vmem:[#allocation2 + $0x340] sm:$0xff] %v536
  %543 = vst [vmem:[#allocation2 + $0x348] sm:$0xff] %v535
  %544 = vst [vmem:[#allocation2 + $0x350] sm:$0xff] %v534
  %545 = vst [vmem:[#allocation2 + $0x358] sm:$0xff] %v539
  %v546 = vld [vmem:[#allocation2] sm:$0xff]
  %v547 = vld [vmem:[#allocation2 + $0x8] sm:$0xff]
  %v548 = vld [vmem:[#allocation2 + $0x10] sm:$0xff]
  %v549 = vld [vmem:[#allocation2 + $0x18] sm:$0xff]
  %v550 = vld [vmem:[#allocation2 + $0x20] sm:$0xff]
  %v551 = vld [vmem:[#allocation2 + $0x28] sm:$0xff]
  %v552 = vld [vmem:[#allocation2 + $0x30] sm:$0xff]
  %v553 = vld [vmem:[#allocation2 + $0x38] sm:$0xff]
  %v554 = vld [vmem:[#allocation2 + $0x40] sm:$0xff]
  %v555 = vld [vmem:[#allocation2 + $0x48] sm:$0xff]
  %v556 = vld [vmem:[#allocation2 + $0x50] sm:$0xff]
  %v557 = vld [vmem:[#allocation2 + $0x58] sm:$0xff]
  %v558 = vld [vmem:[#allocation2 + $0x60] sm:$0xff]
  %v559 = vld [vmem:[#allocation2 + $0x68] sm:$0xff]
  %v560 = vld [vmem:[#allocation2 + $0x70] sm:$0xff]
  %v561 = vld [vmem:[#allocation2 + $0x78] sm:$0xff]
  %v562 = vld [vmem:[#allocation2 + $0x80] sm:$0xff]
  %v563 = vld [vmem:[#allocation2 + $0x88] sm:$0xff]
  %v564 = vld [vmem:[#allocation2 + $0x90] sm:$0xff]
  %v565 = vld [vmem:[#allocation2 + $0x98] sm:$0xff]
  %v566 = vld [vmem:[#allocation2 + $0xa0] sm:$0xff]
  %v567 = vld [vmem:[#allocation2 + $0xa8] sm:$0xff]
  %v568 = vld [vmem:[#allocation2 + $0xb0] sm:$0xff]
  %v569 = vld [vmem:[#allocation2 + $0xb8] sm:$0xff]
  %v570 = vld [vmem:[#allocation2 + $0xc0] sm:$0xff]
  %v571 = vld [vmem:[#allocation2 + $0xc8] sm:$0xff]
  %v572 = vld [vmem:[#allocation2 + $0xd0] sm:$0xff]
  %v573 = vld [vmem:[#allocation2 + $0xd8] sm:$0xff]
  %v574 = vld [vmem:[#allocation2 + $0xe0] sm:$0xff]
  %v575 = vld [vmem:[#allocation2 + $0xe8] sm:$0xff]
  %v576 = vld [vmem:[#allocation2 + $0xf0] sm:$0xff]
  %v577 = vld [vmem:[#allocation2 + $0xf8] sm:$0xff]
  %v578 = vld [vmem:[#allocation2 + $0x100] sm:$0xff]
  %v579 = vld [vmem:[#allocation2 + $0x108] sm:$0xff]
  %v580 = vld [vmem:[#allocation2 + $0x110] sm:$0xff]
  %v581 = vld [vmem:[#allocation2 + $0x118] sm:$0xff]
  %v582 = vld [vmem:[#allocation2 + $0x120] sm:$0xff]
  %v583 = vld [vmem:[#allocation2 + $0x128] sm:$0xff]
  %v584 = vld [vmem:[#allocation2 + $0x130] sm:$0xff]
  %v585 = vld [vmem:[#allocation2 + $0x138] sm:$0xff]
  %v586 = vld [vmem:[#allocation2 + $0x140] sm:$0xff]
  %v587 = vld [vmem:[#allocation2 + $0x148] sm:$0xff]
  %v588 = vld [vmem:[#allocation2 + $0x150] sm:$0xff]
  %v589 = vld [vmem:[#allocation2 + $0x158] sm:$0xff]
  %v590 = vld [vmem:[#allocation2 + $0x160] sm:$0xff]
  %v591 = vld [vmem:[#allocation2 + $0x168] sm:$0xff]
  %v592 = vld [vmem:[#allocation2 + $0x170] sm:$0xff]
  %v593 = vld [vmem:[#allocation2 + $0x178] sm:$0xff]
  %v594 = vld [vmem:[#allocation2 + $0x180] sm:$0xff]
  %v595 = vld [vmem:[#allocation2 + $0x188] sm:$0xff]
  %v596 = vld [vmem:[#allocation2 + $0x190] sm:$0xff]
  %v597 = vld [vmem:[#allocation2 + $0x198] sm:$0xff]
  %v598 = vld [vmem:[#allocation2 + $0x1a0] sm:$0xff]
  %v599 = vld [vmem:[#allocation2 + $0x1a8] sm:$0xff]
  %v600 = vld [vmem:[#allocation2 + $0x1b0] sm:$0xff]
  %v601 = vld [vmem:[#allocation2 + $0x1b8] sm:$0xff]
  %v602 = vld [vmem:[#allocation2 + $0x1c0] sm:$0xff]
  %v603 = vld [vmem:[#allocation2 + $0x1c8] sm:$0xff]
  %v604 = vld [vmem:[#allocation2 + $0x1d0] sm:$0xff]
  %v605 = vld [vmem:[#allocation2 + $0x1d8] sm:$0xff]
  %v606 = vld [vmem:[#allocation2 + $0x1e0] sm:$0xff]
  %v607 = vld [vmem:[#allocation2 + $0x1e8] sm:$0xff]
  %v608 = vld [vmem:[#allocation2 + $0x1f0] sm:$0xff]
  %v609 = vld [vmem:[#allocation2 + $0x1f8] sm:$0xff]
  %v610 = vld [vmem:[#allocation2 + $0x200] sm:$0xff]
  %v611 = vld [vmem:[#allocation2 + $0x208] sm:$0xff]
  %v612 = vld [vmem:[#allocation2 + $0x210] sm:$0xff]
  %v613 = vld [vmem:[#allocation2 + $0x218] sm:$0xff]
  %v614 = vld [vmem:[#allocation2 + $0x220] sm:$0xff]
  %v615 = vld [vmem:[#allocation2 + $0x228] sm:$0xff]
  %v616 = vld [vmem:[#allocation2 + $0x230] sm:$0xff]
  %v617 = vld [vmem:[#allocation2 + $0x238] sm:$0xff]
  %v618 = vld [vmem:[#allocation2 + $0x240] sm:$0xff]
  %v619 = vld [vmem:[#allocation2 + $0x248] sm:$0xff]
  %v620 = vld [vmem:[#allocation2 + $0x250] sm:$0xff]
  %v621 = vld [vmem:[#allocation2 + $0x258] sm:$0xff]
  %v622 = vld [vmem:[#allocation2 + $0x260] sm:$0xff]
  %v623 = vld [vmem:[#allocation2 + $0x268] sm:$0xff]
  %v624 = vld [vmem:[#allocation2 + $0x270] sm:$0xff]
  %v625 = vld [vmem:[#allocation2 + $0x278] sm:$0xff]
  %v626 = vld [vmem:[#allocation2 + $0x280] sm:$0xff]
  %v627 = vld [vmem:[#allocation2 + $0x288] sm:$0xff]
  %v628 = vld [vmem:[#allocation2 + $0x290] sm:$0xff]
  %v629 = vld [vmem:[#allocation2 + $0x298] sm:$0xff]
  %v630 = vld [vmem:[#allocation2 + $0x2a0] sm:$0xff]
  %v631 = vld [vmem:[#allocation2 + $0x2a8] sm:$0xff]
  %v632 = vld [vmem:[#allocation2 + $0x2b0] sm:$0xff]
  %v633 = vld [vmem:[#allocation2 + $0x2b8] sm:$0xff]
  %v634 = vld [vmem:[#allocation2 + $0x2c0] sm:$0xff]
  %v635 = vld [vmem:[#allocation2 + $0x2c8] sm:$0xff]
  %v636 = vld [vmem:[#allocation2 + $0x2d0] sm:$0xff]
  %v637 = vld [vmem:[#allocation2 + $0x2d8] sm:$0xff]
  %v638 = vld [vmem:[#allocation2 + $0x2e0] sm:$0xff]
  %v639 = vld [vmem:[#allocation2 + $0x2e8] sm:$0xff]
  %v640 = vld [vmem:[#allocation2 + $0x2f0] sm:$0xff]
  %v641 = vld [vmem:[#allocation2 + $0x2f8] sm:$0xff]
  %v642 = vld [vmem:[#allocation2 + $0x300] sm:$0xff]
  %v643 = vld [vmem:[#allocation2 + $0x308] sm:$0xff]
  %v644 = vld [vmem:[#allocation2 + $0x310] sm:$0xff]
  %v645 = vld [vmem:[#allocation2 + $0x318] sm:$0xff]
  %v646 = vld [vmem:[#allocation2 + $0x320] sm:$0xff]
  %v647 = vld [vmem:[#allocation2 + $0x328] sm:$0xff]
  %v648 = vld [vmem:[#allocation2 + $0x330] sm:$0xff]
  %v649 = vld [vmem:[#allocation2 + $0x338] sm:$0xff]
  %v650 = vld [vmem:[#allocation2 + $0x340] sm:$0xff]
  %v651 = vld [vmem:[#allocation2 + $0x348] sm:$0xff]
  %v652 = vld [vmem:[#allocation2 + $0x350] sm:$0xff]
  %v653 = vld [vmem:[#allocation2 + $0x358] sm:$0xff]
  %v654 = vpack.c.bf16 %v552, %v546
  %v655 = vpack.c.bf16 %v553, %v547
  %v656 = vpack.c.bf16 %v554, %v548
  %v657 = vpack.c.bf16 %v555, %v549
  %v658 = vpack.c.bf16 %v556, %v550
  %v659 = vpack.c.bf16 %v557, %v551
  %v660 = vpack.c.bf16 %v564, %v558
  %v661 = vpack.c.bf16 %v565, %v559
  %v662 = vpack.c.bf16 %v566, %v560
  %v663 = vpack.c.bf16 %v567, %v561
  %v664 = vpack.c.bf16 %v568, %v562
  %v665 = vpack.c.bf16 %v569, %v563
  %v666 = vpack.c.bf16 %v576, %v570
  %v667 = vpack.c.bf16 %v577, %v571
  %v668 = vpack.c.bf16 %v578, %v572
  %v669 = vpack.c.bf16 %v579, %v573
  %v670 = vpack.c.bf16 %v580, %v574
  %v671 = vpack.c.bf16 %v581, %v575
  %v672 = vpack.c.bf16 %v588, %v582
  %v673 = vpack.c.bf16 %v589, %v583
  %v674 = vpack.c.bf16 %v590, %v584
  %v675 = vpack.c.bf16 %v591, %v585
  %v676 = vpack.c.bf16 %v592, %v586
  %v677 = vpack.c.bf16 %v593, %v587
  %v678 = vpack.c.bf16 %v600, %v594
  %v679 = vpack.c.bf16 %v601, %v595
  %v680 = vpack.c.bf16 %v602, %v596
  %v681 = vpack.c.bf16 %v603, %v597
  %v682 = vpack.c.bf16 %v604, %v598
  %v683 = vpack.c.bf16 %v605, %v599
  %v684 = vpack.c.bf16 %v612, %v606
  %v685 = vpack.c.bf16 %v613, %v607
  %v686 = vpack.c.bf16 %v614, %v608
  %v687 = vpack.c.bf16 %v615, %v609
  %v688 = vpack.c.bf16 %v616, %v610
  %v689 = vpack.c.bf16 %v617, %v611
  %v690 = vpack.c.bf16 %v624, %v618
  %v691 = vpack.c.bf16 %v625, %v619
  %v692 = vpack.c.bf16 %v626, %v620
  %v693 = vpack.c.bf16 %v627, %v621
  %v694 = vpack.c.bf16 %v628, %v622
  %v695 = vpack.c.bf16 %v629, %v623
  %v696 = vpack.c.bf16 %v636, %v630
  %v697 = vpack.c.bf16 %v637, %v631
  %v698 = vpack.c.bf16 %v638, %v632
  %v699 = vpack.c.bf16 %v639, %v633
  %v700 = vpack.c.bf16 %v640, %v634
  %v701 = vpack.c.bf16 %v641, %v635
  %v702 = vpack.c.bf16 %v648, %v642
  %v703 = vpack.c.bf16 %v649, %v643
  %v704 = vpack.c.bf16 %v650, %v644
  %v705 = vpack.c.bf16 %v651, %v645
  %v706 = vpack.c.bf16 %v652, %v646
  %v707 = vpack.c.bf16 %v653, %v647
  %v708 = vld [vmem:[%s2] sm:$0xff]
  %v709 = vld [vmem:[%s3] sm:$0xff]
  %711 = vset.pattern.permute.xlu0 0
  %712 = vperm.xlu0 %711, %v709
  %v713 = vpop.permute.xlu0 %712
  %v716 = vunpack.c.l.b16 %v708
  %v717 = vunpack.c.h.b16 %v708
  %v718 = vpack.c.b16 %v716, %v716
  %v719 = vpack.c.b16 %v717, %v717
  %vm721 = vcmask 130048
  %v723 = vsel %vm721, %v719, 0
  %725 = vmatpush.bf16.msra.mxu0 %v696
  %726 = vmatpush.bf16.msra.mxu0 %v690
  %727 = vmatpush.bf16.msra.mxu0 %v684
  %728 = vmatpush.bf16.msra.mxu0 %v678
  %729 = vmatpush.bf16.msra.mxu0 %v672
  %730 = vmatpush.bf16.msra.mxu0 %v666
  %731 = vmatpush.bf16.msra.mxu0 %v660
  %732 = vmatpush.bf16.msra.mxu0 %v654
  %733 = vmatmul.bf16.gmra.mxu0 %v718
  %v734 = vpop.f32.mrf.mxu0
  %v735 = vadd.f32 %v713, %v734
  %v736 = vpop.f32.mrf.mxu0
  %737 = vdwg.mxu0
  %738 = vmatpush.bf16.msra.mxu0 0
  %739 = vmatpush.bf16.msra.mxu0 0
  %740 = vmatpush.bf16.msra.mxu0 0
  %741 = vmatpush.bf16.msra.mxu0 0
  %742 = vmatpush.bf16.msra.mxu0 0
  %743 = vmatpush.bf16.msra.mxu0 0
  %744 = vmatpush.bf16.msra.mxu0 0
  %745 = vmatpush.bf16.msra.mxu0 %v702
  %746 = vmatmul.bf16.gmra.mxu0 %v723
  %v747 = vpop.f32.mrf.mxu0
  %v748 = vadd.f32 %v735, %v747
  %v749 = vpop.f32.mrf.mxu0
  %750 = vdwg.mxu0
  %751 = vmatpush.bf16.msra.mxu0 %v697
  %752 = vmatpush.bf16.msra.mxu0 %v691
  %753 = vmatpush.bf16.msra.mxu0 %v685
  %754 = vmatpush.bf16.msra.mxu0 %v679
  %755 = vmatpush.bf16.msra.mxu0 %v673
  %756 = vmatpush.bf16.msra.mxu0 %v667
  %757 = vmatpush.bf16.msra.mxu0 %v661
  %758 = vmatpush.bf16.msra.mxu0 %v655
  %759 = vmatmul.bf16.gmra.mxu0 %v718
  %v760 = vpop.f32.mrf.mxu0
  %v761 = vadd.f32 %v713, %v760
  %v762 = vpop.f32.mrf.mxu0
  %763 = vdwg.mxu0
  %764 = vmatpush.bf16.msra.mxu0 0
  %765 = vmatpush.bf16.msra.mxu0 0
  %766 = vmatpush.bf16.msra.mxu0 0
  %767 = vmatpush.bf16.msra.mxu0 0
  %768 = vmatpush.bf16.msra.mxu0 0
  %769 = vmatpush.bf16.msra.mxu0 0
  %770 = vmatpush.bf16.msra.mxu0 0
  %771 = vmatpush.bf16.msra.mxu0 %v703
  %772 = vmatmul.bf16.gmra.mxu0 %v723
  %v773 = vpop.f32.mrf.mxu0
  %v774 = vadd.f32 %v761, %v773
  %v775 = vpop.f32.mrf.mxu0
  %776 = vdwg.mxu0
  %777 = vmatpush.bf16.msra.mxu0 %v698
  %778 = vmatpush.bf16.msra.mxu0 %v692
  %779 = vmatpush.bf16.msra.mxu0 %v686
  %780 = vmatpush.bf16.msra.mxu0 %v680
  %781 = vmatpush.bf16.msra.mxu0 %v674
  %782 = vmatpush.bf16.msra.mxu0 %v668
  %783 = vmatpush.bf16.msra.mxu0 %v662
  %784 = vmatpush.bf16.msra.mxu0 %v656
  %785 = vmatmul.bf16.gmra.mxu0 %v718
  %v786 = vpop.f32.mrf.mxu0
  %v787 = vadd.f32 %v713, %v786
  %v788 = vpop.f32.mrf.mxu0
  %789 = vdwg.mxu0
  %790 = vmatpush.bf16.msra.mxu0 0
  %791 = vmatpush.bf16.msra.mxu0 0
  %792 = vmatpush.bf16.msra.mxu0 0
  %793 = vmatpush.bf16.msra.mxu0 0
  %794 = vmatpush.bf16.msra.mxu0 0
  %795 = vmatpush.bf16.msra.mxu0 0
  %796 = vmatpush.bf16.msra.mxu0 0
  %797 = vmatpush.bf16.msra.mxu0 %v704
  %798 = vmatmul.bf16.gmra.mxu0 %v723
  %v799 = vpop.f32.mrf.mxu0
  %v800 = vadd.f32 %v787, %v799
  %v801 = vpop.f32.mrf.mxu0
  %802 = vdwg.mxu0
  %803 = vmatpush.bf16.msra.mxu0 %v699
  %804 = vmatpush.bf16.msra.mxu0 %v693
  %805 = vmatpush.bf16.msra.mxu0 %v687
  %806 = vmatpush.bf16.msra.mxu0 %v681
  %807 = vmatpush.bf16.msra.mxu0 %v675
  %808 = vmatpush.bf16.msra.mxu0 %v669
  %809 = vmatpush.bf16.msra.mxu0 %v663
  %810 = vmatpush.bf16.msra.mxu0 %v657
  %811 = vmatmul.bf16.gmra.mxu0 %v718
  %v812 = vpop.f32.mrf.mxu0
  %v813 = vadd.f32 %v713, %v812
  %v814 = vpop.f32.mrf.mxu0
  %815 = vdwg.mxu0
  %816 = vmatpush.bf16.msra.mxu0 0
  %817 = vmatpush.bf16.msra.mxu0 0
  %818 = vmatpush.bf16.msra.mxu0 0
  %819 = vmatpush.bf16.msra.mxu0 0
  %820 = vmatpush.bf16.msra.mxu0 0
  %821 = vmatpush.bf16.msra.mxu0 0
  %822 = vmatpush.bf16.msra.mxu0 0
  %823 = vmatpush.bf16.msra.mxu0 %v705
  %824 = vmatmul.bf16.gmra.mxu0 %v723
  %v825 = vpop.f32.mrf.mxu0
  %v826 = vadd.f32 %v813, %v825
  %v827 = vpop.f32.mrf.mxu0
  %828 = vdwg.mxu0
  %829 = vmatpush.bf16.msra.mxu0 %v700
  %830 = vmatpush.bf16.msra.mxu0 %v694
  %831 = vmatpush.bf16.msra.mxu0 %v688
  %832 = vmatpush.bf16.msra.mxu0 %v682
  %833 = vmatpush.bf16.msra.mxu0 %v676
  %834 = vmatpush.bf16.msra.mxu0 %v670
  %835 = vmatpush.bf16.msra.mxu0 %v664
  %836 = vmatpush.bf16.msra.mxu0 %v658
  %837 = vmatmul.bf16.gmra.mxu0 %v718
  %v838 = vpop.f32.mrf.mxu0
  %v839 = vadd.f32 %v713, %v838
  %v840 = vpop.f32.mrf.mxu0
  %841 = vdwg.mxu0
  %842 = vmatpush.bf16.msra.mxu0 0
  %843 = vmatpush.bf16.msra.mxu0 0
  %844 = vmatpush.bf16.msra.mxu0 0
  %845 = vmatpush.bf16.msra.mxu0 0
  %846 = vmatpush.bf16.msra.mxu0 0
  %847 = vmatpush.bf16.msra.mxu0 0
  %848 = vmatpush.bf16.msra.mxu0 0
  %849 = vmatpush.bf16.msra.mxu0 %v706
  %850 = vmatmul.bf16.gmra.mxu0 %v723
  %v851 = vpop.f32.mrf.mxu0
  %v852 = vadd.f32 %v839, %v851
  %v853 = vpop.f32.mrf.mxu0
  %854 = vdwg.mxu0
  %855 = vmatpush.bf16.msra.mxu0 %v701
  %856 = vmatpush.bf16.msra.mxu0 %v695
  %857 = vmatpush.bf16.msra.mxu0 %v689
  %858 = vmatpush.bf16.msra.mxu0 %v683
  %859 = vmatpush.bf16.msra.mxu0 %v677
  %860 = vmatpush.bf16.msra.mxu0 %v671
  %861 = vmatpush.bf16.msra.mxu0 %v665
  %862 = vmatpush.bf16.msra.mxu0 %v659
  %863 = vmatmul.bf16.gmra.mxu0 %v718
  %v864 = vpop.f32.mrf.mxu0
  %v865 = vadd.f32 %v713, %v864
  %v866 = vpop.f32.mrf.mxu0
  %867 = vdwg.mxu0
  %868 = vmatpush.bf16.msra.mxu0 0
  %869 = vmatpush.bf16.msra.mxu0 0
  %870 = vmatpush.bf16.msra.mxu0 0
  %871 = vmatpush.bf16.msra.mxu0 0
  %872 = vmatpush.bf16.msra.mxu0 0
  %873 = vmatpush.bf16.msra.mxu0 0
  %874 = vmatpush.bf16.msra.mxu0 0
  %875 = vmatpush.bf16.msra.mxu0 %v707
  %876 = vmatmul.bf16.gmra.mxu0 %v723
  %v877 = vpop.f32.mrf.mxu0
  %v878 = vadd.f32 %v865, %v877
  %v879 = vpop.f32.mrf.mxu0
  %880 = vdwg.mxu0
  %v881 = vmul.f32 %v748, %v77
  %v882 = vmul.f32 %v774, %v78
  %v883 = vmul.f32 %v800, %v79
  %v884 = vmul.f32 %v826, %v80
  %v885 = vmul.f32 %v852, %v81
  %v886 = vmul.f32 %v878, %v82
  %v887 = vadd.f32 %v881, %v882
  %v888 = vadd.f32 %v887, %v883
  %v889 = vadd.f32 %v888, %v884
  %v890 = vadd.f32 %v889, %v885
  %v891 = vadd.f32 %v890, %v886
  %892 = vadd.xlane.f32.xlu0 %v891
  %v893 = vpop.xlane.xlu0 %892
  %vm894 = vcmask 7168
  %895 = vst.msk [vmem:[%s10] sm:$0xff] %vm894, %v893
  %v896 = vmul.f32 %v881, %v881
  %v897 = vmul.f32 %v882, %v882
  %v898 = vmul.f32 %v883, %v883
  %v899 = vmul.f32 %v884, %v884
  %v900 = vmul.f32 %v885, %v885
  %v901 = vmul.f32 %v886, %v886
  %v902 = vadd.f32 %v896, %v897
  %v903 = vadd.f32 %v902, %v898
  %v904 = vadd.f32 %v903, %v899
  %v905 = vadd.f32 %v904, %v900
  %v906 = vadd.f32 %v905, %v901
  %907 = vadd.xlane.f32.xlu0 %v906
  %v908 = vpop.xlane.xlu0 %907
  %909 = vst.msk [vmem:[%s11] sm:$0xff] %vm894, %v908
  %v910 = vpack.c.bf16 %v882, %v881
  %v911 = vpack.c.bf16 %v884, %v883
  %v912 = vpack.c.bf16 %v886, %v885
  %913 = vst [vmem:[%s9] sm:$0xff] %v910
  %914 = vst [vmem:[%s9 + $0x8] sm:$0xff] %v911
  %915 = vst [vmem:[%s9 + $0x10] sm:$0xff] %v912
  // Predicated region
  $region38: #{model_forward.26} parent=0 // pred_check
    _
  $region39: #{model_forward.26} parent=0 // pred_check_branch
    %917 = sbr.rel (0) target = $region41
  $region40: #{model_forward.26} parent=0 // pred_region
    _
  $region41: #{model_forward.26} parent=0 // pred_fallthru
    _
  // Predicated region
  $region42: #{model_forward.26} parent=0 // pred_check
    _
  $region43: #{model_forward.26} parent=0 // pred_check_branch
    %919 = sbr.rel (0) target = $region45
  $region44: #{model_forward.26} parent=0 // pred_region
    _
  $region45: #{model_forward.26} parent=0 // pred_fallthru
    _
  // Predicated region
  $region46: #{model_forward.26} parent=0 // pred_check
    _
  $region47: #{model_forward.26} parent=0 // pred_check_branch
    %921 = sbr.rel (0) target = $region49
  $region48: #{model_forward.26} parent=0 // pred_region
    _
  $region49: #{model_forward.26} parent=0 // pred_fallthru
    _
  // Predicated region
  $region50: #{model_forward.26} parent=0 // pred_check
    _
  $region51: #{model_forward.26} parent=0 // pred_check_branch
    %923 = sbr.rel (0) target = $region53
  $region52: #{model_forward.26} parent=0 // pred_region
    _
  $region53: #{model_forward.26} parent=0 // pred_fallthru
    _
  // Predicated region
  $region54: #{model_forward.26} parent=0 // pred_check
    _
  $region55: #{model_forward.26} parent=0 // pred_check_branch
    %925 = sbr.rel (0) target = $region57
  $region56: #{model_forward.26} parent=0 // pred_region
    _
  $region57: #{model_forward.26} parent=0 // pred_fallthru
    _
  // Predicated region
  $region58: #{model_forward.26} parent=0 // pred_check
    _
  $region59: #{model_forward.26} parent=0 // pred_check_branch
    %927 = sbr.rel (0) target = $region61
  $region60: #{model_forward.26} parent=0 // pred_region
    _
  $region61: #{model_forward.26} parent=0 // pred_fallthru
    _

</llo_original>
